<compile_context>
chip_gen: v5e
topology: v5e:2x2
jax: 0.10.0
libtpu: 0.0.40
codegen_flags: <defaults>
</compile_context>

<pallas_src>
import functools

import jax
import jax.numpy as jnp
from jax.experimental import pallas as pl
from jax.experimental.pallas import tpu as pltpu


# --------------------------------------------------------------------------- #
# In-kernel helpers
# --------------------------------------------------------------------------- #

def _conv3x3_from_slab(slab_bf16, w_ref, th, Wo):
    """3x3 stride-1 conv over one row chunk.

    slab_bf16 : (th+2, Wo+2, Cin) bf16 value — zero-padded source rows.
    w_ref     : (3, 3, Cin, Cout) bf16 ref.
    Returns (th*Wo, Cout) f32 accumulator.
    """
    Cin = slab_bf16.shape[-1]
    Cout = w_ref.shape[-1]
    acc = jnp.zeros((th * Wo, Cout), jnp.float32)
    for kh in range(3):
        for kw in range(3):
            patch = jax.lax.slice(slab_bf16, (kh, kw, 0), (kh + th, kw + Wo, Cin))
            acc = acc + jnp.dot(
                patch.reshape(th * Wo, Cin), w_ref[kh, kw],
                preferred_element_type=jnp.float32,
            )
    return acc


def _resnet_fused_kernel(x_ref, w1_ref, w2_ref, w3_ref, o_ref,
                         h1_ref, h2_ref, *, th, stride, add_residual):
    """One batch element: conv1(+ReLU) -> conv2(+ReLU) -> conv3(+ReLU) [+ residual].

    stride == 1 : x_ref is (1, Hp, Wp, Cin) f32 zero-padded slab.
    stride  > 1 : x_ref is (1, 9, Ho, Wo, Cin) bf16 pre-gathered decimated taps.
    h1_ref/h2_ref : (Ho+2, Wo+2, Cp) bf16 VMEM scratch (zero-padded intermediates).
    """
    _, Ho, Wo, Cp = o_ref.shape
    n_chunks = Ho // th

    # Zero the padded intermediates every grid step (cheap; megacore-safe since each
    # core has its own scratch).  Interiors are fully overwritten below — only the
    # 1-pixel border needs to be zero for the next conv's taps.
    h1_ref[...] = jnp.zeros_like(h1_ref)
    h2_ref[...] = jnp.zeros_like(h2_ref)

    # ---- conv1 + ReLU -> h1 interior (bf16) -------------------------------------
    if stride == 1:
        for c in range(n_chunks):
            r0 = c * th
            slab = x_ref[0, pl.ds(r0, th + 2)].astype(jnp.bfloat16)
            acc = _conv3x3_from_slab(slab, w1_ref, th, Wo)
            h1_ref[pl.ds(r0 + 1, th), pl.ds(1, Wo), :] = (
                jnp.maximum(acc, 0.0).reshape(th, Wo, Cp).astype(h1_ref.dtype))
    else:
        Cin = x_ref.shape[-1]
        for c in range(n_chunks):
            r0 = c * th
            acc = jnp.zeros((th * Wo, Cp), jnp.float32)
            for kh in range(3):
                for kw in range(3):
                    patch = x_ref[0, kh * 3 + kw, pl.ds(r0, th)]  # (th, Wo, Cin) bf16
                    acc = acc + jnp.dot(
                        patch.reshape(th * Wo, Cin), w1_ref[kh, kw],
                        preferred_element_type=jnp.float32)
            h1_ref[pl.ds(r0 + 1, th), pl.ds(1, Wo), :] = (
                jnp.maximum(acc, 0.0).reshape(th, Wo, Cp).astype(h1_ref.dtype))

    # ---- conv2 + ReLU -> h2 interior (bf16) -------------------------------------
    for c in range(n_chunks):
        r0 = c * th
        slab = h1_ref[pl.ds(r0, th + 2)]
        acc = _conv3x3_from_slab(slab, w2_ref, th, Wo)
        h2_ref[pl.ds(r0 + 1, th), pl.ds(1, Wo), :] = (
            jnp.maximum(acc, 0.0).reshape(th, Wo, Cp).astype(h2_ref.dtype))

    # ---- conv3 + ReLU (+ residual, f32 epilogue) -> output ------------------------
    for c in range(n_chunks):
        r0 = c * th
        slab = h2_ref[pl.ds(r0, th + 2)]
        acc = _conv3x3_from_slab(slab, w3_ref, th, Wo)
        out = jnp.maximum(acc, 0.0).reshape(th, Wo, Cp)
        if add_residual:
            res = x_ref[0, pl.ds(r0 + 1, th), pl.ds(1, Wo), :]  # original x, f32
            out = out + res.astype(jnp.float32)
        o_ref[0, pl.ds(r0, th)] = out.astype(o_ref.dtype)


# --------------------------------------------------------------------------- #
# Wrapper
# --------------------------------------------------------------------------- #

def _round_up(x, m):
    return ((x + m - 1) // m) * m


def _pad_last(x, c_to):
    c = x.shape[-1]
    if c == c_to:
        return x
    pad = [(0, 0)] * (x.ndim - 1) + [(0, c_to - c)]
    return jnp.pad(x, pad)


def _pad_weight(w, cin_p, cout_p):
    _, _, cin, cout = w.shape
    return jnp.pad(w, ((0, 0), (0, 0), (0, cin_p - cin), (0, cout_p - cout)))


def _pick_row_tile(Ho, Wo):
    """Largest divisor of Ho keeping the (th*Wo, Cout) f32 accumulator at ~one
    (256, 128) MXU tile so it does not blow past the vector register file."""
    target = max(1, 256 // max(Wo, 1))
    best = 1
    for d in range(1, Ho + 1):
        if Ho % d == 0 and d <= target:
            best = d
    return best


def _tap_stack(xp, Ho, Wo, stride):
    """Pre-gather the 9 decimated taps in plain JAX (only used for stride > 1)."""
    taps = []
    for kh in range(3):
        for kw in range(3):
            taps.append(xp[:, kh:kh + (Ho - 1) * stride + 1:stride,
                           kw:kw + (Wo - 1) * stride + 1:stride, :])
    return jnp.stack(taps, axis=1)  # (N, 9, Ho, Wo, Cin)


def resnet_block(x_nhwc, w1p, w2p, w3p, *, stride=1, add_residual=False,
                 out_dtype=jnp.float32):
    """Fused 3x(conv3x3 pad=1 no-bias + ReLU) [+ identity residual] Pallas call.

    x_nhwc : (N, H, W, Cin_p) f32, channels already padded to a multiple of 128.
    w*p    : (3, 3, C, Cp) bf16, channels padded to a multiple of 128.
    """
    N, H, W, Cin_p = x_nhwc.shape
    Cp = w1p.shape[-1]
    assert Cin_p % 128 == 0 and Cp % 128 == 0, "channels must be padded to 128"
    assert not (add_residual and (stride != 1 or Cin_p != Cp))

    Ho = (H - 1) // stride + 1
    Wo = (W - 1) // stride + 1
    th = _pick_row_tile(Ho, Wo)

    xp = jnp.pad(x_nhwc, ((0, 0), (1, 1), (1, 1), (0, 0)))  # spatial zero pad, f32
    Hp, Wp = H + 2, W + 2

    if stride == 1:
        x_arg = xp
        x_spec = pl.BlockSpec((1, Hp, Wp, Cin_p), lambda n: (n, 0, 0, 0))
    else:
        x_arg = _tap_stack(xp.astype(jnp.bfloat16), Ho, Wo, stride)
        x_spec = pl.BlockSpec((1, 9, Ho, Wo, Cin_p), lambda n: (n, 0, 0, 0, 0))

    w1_spec = pl.BlockSpec((3, 3, Cin_p, Cp), lambda n: (0, 0, 0, 0))
    w_spec = pl.BlockSpec((3, 3, Cp, Cp), lambda n: (0, 0, 0, 0))
    out_spec = pl.BlockSpec((1, Ho, Wo, Cp), lambda n: (n, 0, 0, 0))

    kernel = functools.partial(_resnet_fused_kernel, th=th, stride=stride,
                               add_residual=add_residual)

    return pl.pallas_call(
        kernel,
        out_shape=jax.ShapeDtypeStruct((N, Ho, Wo, Cp), out_dtype),
        grid=(N,),
        in_specs=[x_spec, w1_spec, w_spec, w_spec],
        out_specs=out_spec,
        scratch_shapes=[
            pltpu.VMEM((Ho + 2, Wo + 2, Cp), jnp.bfloat16),  # conv1 output (padded)
            pltpu.VMEM((Ho + 2, Wo + 2, Cp), jnp.bfloat16),  # conv2 output (padded)
        ],
        compiler_params=pltpu.CompilerParams(
            dimension_semantics=("parallel",),
            # Comfortably below v7x's 64 MiB physical VMEM; plenty of headroom on
            # v5e/v6e (128 MiB) for larger images.
            vmem_limit_bytes=48 * 1024 * 1024,
        ),
    )(x_arg, w1p, w2p, w3p)


# --------------------------------------------------------------------------- #
# Model
# --------------------------------------------------------------------------- #

def init_resnet_params(key, inplanes, planes):
    """Deterministic He-normal-ish init.  HWIO layout, f32 master copies."""
    k1, k2, k3 = jax.random.split(key, 3)

    def _w(k, cin, cout):
        scale = (2.0 / (9 * cin)) ** 0.5
        return scale * jax.random.normal(k, (3, 3, cin, cout), jnp.float32)

    return (_w(k1, inplanes, planes), _w(k2, planes, planes), _w(k3, planes, planes))


def resnet_forward(x_nchw, params, *, stride=1):
    """Pallas implementation of ResNet.forward (NCHW in, NCHW out)."""
    w1, w2, w3 = params
    inplanes = w1.shape[2]
    planes = w3.shape[-1]

    x = jnp.transpose(x_nchw, (0, 2, 3, 1))  # NCHW -> NHWC (f32)
    Cin_p = _round_up(inplanes, 128)
    Cp = _round_up(planes, 128)

    # Channel-pad once; padded channels contribute exactly zero through all convs
    # and are sliced off once at the end.
    x_pad = _pad_last(x, Cin_p)                                     # f32
    w1p = _pad_weight(w1, Cin_p, Cp).astype(jnp.bfloat16)
    w2p = _pad_weight(w2, Cp, Cp).astype(jnp.bfloat16)
    w3p = _pad_weight(w3, Cp, Cp).astype(jnp.bfloat16)

    # TODO(synk): ResConnector is not defined in the source file; assumed to be an
    # identity skip (out = block(x) + x) applied only when shapes match
    # (stride == 1 and inplanes == planes).
    add_residual = (stride == 1 and inplanes == planes)

    out = resnet_block(x_pad, w1p, w2p, w3p, stride=stride,
                       add_residual=add_residual, out_dtype=x.dtype)  # f32 out
    out = out[..., :planes]
    return jnp.transpose(out, (0, 3, 1, 2))  # NHWC -> NCHW


# --------------------------------------------------------------------------- #
# Reference (same bf16-MXU / f32-accumulate regime) and self-test
# --------------------------------------------------------------------------- #

def _reference_forward(x_nchw, params, *, stride=1):
    w1, w2, w3 = params
    dn = jax.lax.conv_dimension_numbers(x_nchw.shape, w1.shape, ("NCHW", "HWIO", "NCHW"))

    def conv_relu(x, w, s):
        y = jax.lax.conv_general_dilated(
            x.astype(jnp.bfloat16), w.astype(jnp.bfloat16), (s, s), ((1, 1), (1, 1)),
            dimension_numbers=dn, preferred_element_type=jnp.float32)
        return jnp.maximum(y, 0.0)

    h = conv_relu(x_nchw, w1, stride).astype(jnp.bfloat16)
    h = conv_relu(h, w2, 1).astype(jnp.bfloat16)
    out = conv_relu(h, w3, 1)
    if stride == 1 and x_nchw.shape[1] == w3.shape[-1]:
        out = out + x_nchw
    return out


if __name__ == "__main__":
    # Small shapes: batch=2, inplanes=planes=4, spatial=16x16, stride=1 (module default).
    N, inplanes, planes, H, W = 2, 4, 4, 16, 16
    stride = 1

    key = jax.random.PRNGKey(0)
    kx, kp = jax.random.split(key)
    x = jax.random.normal(kx, (N, inplanes, H, W), jnp.float32)
    params = init_resnet_params(kp, inplanes, planes)

    out = jax.jit(lambda a: resnet_forward(a, params, stride=stride))(x)
    out = jax.block_until_ready(out)

    ref = _reference_forward(x, params, stride=stride)
    assert out.shape == ref.shape, (out.shape, ref.shape)
    err = float(jnp.max(jnp.abs(out - ref)))
    assert err < 1e-2, err

    print("KERNEL_OK")
</pallas_src>

<mosaic_0001>
module attributes {stable_mosaic.version = 11 : i64} {
  func.func @_resnet_fused_kernel(%arg0: i32, %arg1: memref<1x18x18x128xf32, #tpu.memory_space<vmem>>, %arg2: memref<3x3x128x128xbf16, #tpu.memory_space<vmem>>, %arg3: memref<3x3x128x128xbf16, #tpu.memory_space<vmem>>, %arg4: memref<3x3x128x128xbf16, #tpu.memory_space<vmem>>, %arg5: memref<1x16x16x128xf32, #tpu.memory_space<vmem>>, %arg6: memref<18x18x128xbf16, #tpu.memory_space<vmem>>, %arg7: memref<18x18x128xbf16, #tpu.memory_space<vmem>>) attributes {dimension_semantics = [#tpu.dimension_semantics<parallel>], iteration_bounds = array<i64: 2>, scalar_prefetch = 0 : i64, scratch_operands = 2 : i64, tpu.core_type = #tpu.core_type<tc>, window_params = [{transform_indices = @transform_0, window_bounds = array<i64: 1, 18, 18, 128>}, {pipeline_mode = #tpu.pipeline_mode<synchronous>, transform_indices = @transform_1, window_bounds = array<i64: 3, 3, 128, 128>}, {pipeline_mode = #tpu.pipeline_mode<synchronous>, transform_indices = @transform_2, window_bounds = array<i64: 3, 3, 128, 128>}, {pipeline_mode = #tpu.pipeline_mode<synchronous>, transform_indices = @transform_3, window_bounds = array<i64: 3, 3, 128, 128>}, {transform_indices = @transform_4, window_bounds = array<i64: 1, 16, 16, 128>}]} {
    %cst = arith.constant 0.000000e+00 : bf16
    %0 = vector.broadcast %cst : bf16 to vector<18x18x128xbf16>
    %c0 = arith.constant 0 : index
    %c0_0 = arith.constant 0 : index
    %c0_1 = arith.constant 0 : index
    %1 = vector.load %arg6[%c0, %c0_0, %c0_1] : memref<18x18x128xbf16, #tpu.memory_space<vmem>>, vector<18x18x128xbf16>
    tpu.vector_store %arg6[%c0, %c0_0, %c0_1], %0 {strides = array<i32>} : memref<18x18x128xbf16, #tpu.memory_space<vmem>>, vector<18x18x128xbf16>,
    %cst_2 = arith.constant 0.000000e+00 : bf16
    %2 = vector.broadcast %cst_2 : bf16 to vector<18x18x128xbf16>
    %c0_3 = arith.constant 0 : index
    %c0_4 = arith.constant 0 : index
    %c0_5 = arith.constant 0 : index
    %3 = vector.load %arg7[%c0_3, %c0_4, %c0_5] : memref<18x18x128xbf16, #tpu.memory_space<vmem>>, vector<18x18x128xbf16>
    tpu.vector_store %arg7[%c0_3, %c0_4, %c0_5], %2 {strides = array<i32>} : memref<18x18x128xbf16, #tpu.memory_space<vmem>>, vector<18x18x128xbf16>,
    %c0_6 = arith.constant 0 : index
    %c0_7 = arith.constant 0 : index
    %c0_8 = arith.constant 0 : index
    %c0_9 = arith.constant 0 : index
    %4 = vector.load %arg1[%c0_6, %c0_7, %c0_8, %c0_9] : memref<1x18x18x128xf32, #tpu.memory_space<vmem>>, vector<1x18x18x128xf32>
    %5 = vector.shape_cast %4 : vector<1x18x18x128xf32> to vector<18x18x128xf32>
    %6 = arith.truncf %5 : vector<18x18x128xf32> to vector<18x18x128xbf16>
    %cst_10 = arith.constant 0.000000e+00 : f32
    %7 = vector.broadcast %cst_10 : f32 to vector<256x128xf32>
    %8 = vector.extract_strided_slice %6 {offsets = [0, 0, 0], sizes = [16, 16, 128], strides = [1, 1, 1]} : vector<18x18x128xbf16> to vector<16x16x128xbf16>
    %9 = vector.shape_cast %8 : vector<16x16x128xbf16> to vector<256x128xbf16>
    %c0_11 = arith.constant 0 : index
    %c0_12 = arith.constant 0 : index
    %c0_13 = arith.constant 0 : index
    %c0_14 = arith.constant 0 : index
    %10 = vector.load %arg2[%c0_11, %c0_12, %c0_13, %c0_14] : memref<3x3x128x128xbf16, #tpu.memory_space<vmem>>, vector<1x1x128x128xbf16>
    %11 = vector.shape_cast %10 : vector<1x1x128x128xbf16> to vector<128x128xbf16>
    %cst_15 = arith.constant dense<0.000000e+00> : vector<256x128xf32>
    %12 = tpu.matmul %9, %11, %cst_15 {dimension_numbers = #tpu.dot_dimension_numbers<[1], [0], [0], [1], [0, 0, 1, 1], [], []>} : vector<256x128xbf16>, vector<128x128xbf16>, vector<256x128xf32> -> vector<256x128xf32>
    %13 = arith.addf %7, %12 : vector<256x128xf32>
    %14 = vector.extract_strided_slice %6 {offsets = [0, 1, 0], sizes = [16, 16, 128], strides = [1, 1, 1]} : vector<18x18x128xbf16> to vector<16x16x128xbf16>
    %15 = vector.shape_cast %14 : vector<16x16x128xbf16> to vector<256x128xbf16>
    %c0_16 = arith.constant 0 : index
    %c1 = arith.constant 1 : index
    %c0_17 = arith.constant 0 : index
    %c0_18 = arith.constant 0 : index
    %16 = vector.load %arg2[%c0_16, %c1, %c0_17, %c0_18] : memref<3x3x128x128xbf16, #tpu.memory_space<vmem>>, vector<1x1x128x128xbf16>
    %17 = vector.shape_cast %16 : vector<1x1x128x128xbf16> to vector<128x128xbf16>
    %cst_19 = arith.constant dense<0.000000e+00> : vector<256x128xf32>
    %18 = tpu.matmul %15, %17, %cst_19 {dimension_numbers = #tpu.dot_dimension_numbers<[1], [0], [0], [1], [0, 0, 1, 1], [], []>} : vector<256x128xbf16>, vector<128x128xbf16>, vector<256x128xf32> -> vector<256x128xf32>
    %19 = arith.addf %13, %18 : vector<256x128xf32>
    %20 = vector.extract_strided_slice %6 {offsets = [0, 2, 0], sizes = [16, 16, 128], strides = [1, 1, 1]} : vector<18x18x128xbf16> to vector<16x16x128xbf16>
    %21 = vector.shape_cast %20 : vector<16x16x128xbf16> to vector<256x128xbf16>
    %c0_20 = arith.constant 0 : index
    %c2 = arith.constant 2 : index
    %c0_21 = arith.constant 0 : index
    %c0_22 = arith.constant 0 : index
    %22 = vector.load %arg2[%c0_20, %c2, %c0_21, %c0_22] : memref<3x3x128x128xbf16, #tpu.memory_space<vmem>>, vector<1x1x128x128xbf16>
    %23 = vector.shape_cast %22 : vector<1x1x128x128xbf16> to vector<128x128xbf16>
    %cst_23 = arith.constant dense<0.000000e+00> : vector<256x128xf32>
    %24 = tpu.matmul %21, %23, %cst_23 {dimension_numbers = #tpu.dot_dimension_numbers<[1], [0], [0], [1], [0, 0, 1, 1], [], []>} : vector<256x128xbf16>, vector<128x128xbf16>, vector<256x128xf32> -> vector<256x128xf32>
    %25 = arith.addf %19, %24 : vector<256x128xf32>
    %26 = vector.extract_strided_slice %6 {offsets = [1, 0, 0], sizes = [16, 16, 128], strides = [1, 1, 1]} : vector<18x18x128xbf16> to vector<16x16x128xbf16>
    %27 = vector.shape_cast %26 : vector<16x16x128xbf16> to vector<256x128xbf16>
    %c1_24 = arith.constant 1 : index
    %c0_25 = arith.constant 0 : index
    %c0_26 = arith.constant 0 : index
    %c0_27 = arith.constant 0 : index
    %28 = vector.load %arg2[%c1_24, %c0_25, %c0_26, %c0_27] : memref<3x3x128x128xbf16, #tpu.memory_space<vmem>>, vector<1x1x128x128xbf16>
    %29 = vector.shape_cast %28 : vector<1x1x128x128xbf16> to vector<128x128xbf16>
    %cst_28 = arith.constant dense<0.000000e+00> : vector<256x128xf32>
    %30 = tpu.matmul %27, %29, %cst_28 {dimension_numbers = #tpu.dot_dimension_numbers<[1], [0], [0], [1], [0, 0, 1, 1], [], []>} : vector<256x128xbf16>, vector<128x128xbf16>, vector<256x128xf32> -> vector<256x128xf32>
    %31 = arith.addf %25, %30 : vector<256x128xf32>
    %32 = vector.extract_strided_slice %6 {offsets = [1, 1, 0], sizes = [16, 16, 128], strides = [1, 1, 1]} : vector<18x18x128xbf16> to vector<16x16x128xbf16>
    %33 = vector.shape_cast %32 : vector<16x16x128xbf16> to vector<256x128xbf16>
    %c1_29 = arith.constant 1 : index
    %c1_30 = arith.constant 1 : index
    %c0_31 = arith.constant 0 : index
    %c0_32 = arith.constant 0 : index
    %34 = vector.load %arg2[%c1_29, %c1_30, %c0_31, %c0_32] : memref<3x3x128x128xbf16, #tpu.memory_space<vmem>>, vector<1x1x128x128xbf16>
    %35 = vector.shape_cast %34 : vector<1x1x128x128xbf16> to vector<128x128xbf16>
    %cst_33 = arith.constant dense<0.000000e+00> : vector<256x128xf32>
    %36 = tpu.matmul %33, %35, %cst_33 {dimension_numbers = #tpu.dot_dimension_numbers<[1], [0], [0], [1], [0, 0, 1, 1], [], []>} : vector<256x128xbf16>, vector<128x128xbf16>, vector<256x128xf32> -> vector<256x128xf32>
    %37 = arith.addf %31, %36 : vector<256x128xf32>
    %38 = vector.extract_strided_slice %6 {offsets = [1, 2, 0], sizes = [16, 16, 128], strides = [1, 1, 1]} : vector<18x18x128xbf16> to vector<16x16x128xbf16>
    %39 = vector.shape_cast %38 : vector<16x16x128xbf16> to vector<256x128xbf16>
    %c1_34 = arith.constant 1 : index
    %c2_35 = arith.constant 2 : index
    %c0_36 = arith.constant 0 : index
    %c0_37 = arith.constant 0 : index
    %40 = vector.load %arg2[%c1_34, %c2_35, %c0_36, %c0_37] : memref<3x3x128x128xbf16, #tpu.memory_space<vmem>>, vector<1x1x128x128xbf16>
    %41 = vector.shape_cast %40 : vector<1x1x128x128xbf16> to vector<128x128xbf16>
    %cst_38 = arith.constant dense<0.000000e+00> : vector<256x128xf32>
    %42 = tpu.matmul %39, %41, %cst_38 {dimension_numbers = #tpu.dot_dimension_numbers<[1], [0], [0], [1], [0, 0, 1, 1], [], []>} : vector<256x128xbf16>, vector<128x128xbf16>, vector<256x128xf32> -> vector<256x128xf32>
    %43 = arith.addf %37, %42 : vector<256x128xf32>
    %44 = vector.extract_strided_slice %6 {offsets = [2, 0, 0], sizes = [16, 16, 128], strides = [1, 1, 1]} : vector<18x18x128xbf16> to vector<16x16x128xbf16>
    %45 = vector.shape_cast %44 : vector<16x16x128xbf16> to vector<256x128xbf16>
    %c2_39 = arith.constant 2 : index
    %c0_40 = arith.constant 0 : index
    %c0_41 = arith.constant 0 : index
    %c0_42 = arith.constant 0 : index
    %46 = vector.load %arg2[%c2_39, %c0_40, %c0_41, %c0_42] : memref<3x3x128x128xbf16, #tpu.memory_space<vmem>>, vector<1x1x128x128xbf16>
    %47 = vector.shape_cast %46 : vector<1x1x128x128xbf16> to vector<128x128xbf16>
    %cst_43 = arith.constant dense<0.000000e+00> : vector<256x128xf32>
    %48 = tpu.matmul %45, %47, %cst_43 {dimension_numbers = #tpu.dot_dimension_numbers<[1], [0], [0], [1], [0, 0, 1, 1], [], []>} : vector<256x128xbf16>, vector<128x128xbf16>, vector<256x128xf32> -> vector<256x128xf32>
    %49 = arith.addf %43, %48 : vector<256x128xf32>
    %50 = vector.extract_strided_slice %6 {offsets = [2, 1, 0], sizes = [16, 16, 128], strides = [1, 1, 1]} : vector<18x18x128xbf16> to vector<16x16x128xbf16>
    %51 = vector.shape_cast %50 : vector<16x16x128xbf16> to vector<256x128xbf16>
    %c2_44 = arith.constant 2 : index
    %c1_45 = arith.constant 1 : index
    %c0_46 = arith.constant 0 : index
    %c0_47 = arith.constant 0 : index
    %52 = vector.load %arg2[%c2_44, %c1_45, %c0_46, %c0_47] : memref<3x3x128x128xbf16, #tpu.memory_space<vmem>>, vector<1x1x128x128xbf16>
    %53 = vector.shape_cast %52 : vector<1x1x128x128xbf16> to vector<128x128xbf16>
    %cst_48 = arith.constant dense<0.000000e+00> : vector<256x128xf32>
    %54 = tpu.matmul %51, %53, %cst_48 {dimension_numbers = #tpu.dot_dimension_numbers<[1], [0], [0], [1], [0, 0, 1, 1], [], []>} : vector<256x128xbf16>, vector<128x128xbf16>, vector<256x128xf32> -> vector<256x128xf32>
    %55 = arith.addf %49, %54 : vector<256x128xf32>
    %56 = vector.extract_strided_slice %6 {offsets = [2, 2, 0], sizes = [16, 16, 128], strides = [1, 1, 1]} : vector<18x18x128xbf16> to vector<16x16x128xbf16>
    %57 = vector.shape_cast %56 : vector<16x16x128xbf16> to vector<256x128xbf16>
    %c2_49 = arith.constant 2 : index
    %c2_50 = arith.constant 2 : index
    %c0_51 = arith.constant 0 : index
    %c0_52 = arith.constant 0 : index
    %58 = vector.load %arg2[%c2_49, %c2_50, %c0_51, %c0_52] : memref<3x3x128x128xbf16, #tpu.memory_space<vmem>>, vector<1x1x128x128xbf16>
    %59 = vector.shape_cast %58 : vector<1x1x128x128xbf16> to vector<128x128xbf16>
    %cst_53 = arith.constant dense<0.000000e+00> : vector<256x128xf32>
    %60 = tpu.matmul %57, %59, %cst_53 {dimension_numbers = #tpu.dot_dimension_numbers<[1], [0], [0], [1], [0, 0, 1, 1], [], []>} : vector<256x128xbf16>, vector<128x128xbf16>, vector<256x128xf32> -> vector<256x128xf32>
    %61 = arith.addf %55, %60 : vector<256x128xf32>
    %cst_54 = arith.constant 0.000000e+00 : f32
    %62 = vector.broadcast %cst_54 : f32 to vector<256x128xf32>
    %63 = arith.maximumf %61, %62 : vector<256x128xf32>
    %64 = vector.shape_cast %63 : vector<256x128xf32> to vector<16x16x128xf32>
    %65 = arith.truncf %64 : vector<16x16x128xf32> to vector<16x16x128xbf16>
    %c1_55 = arith.constant 1 : index
    %c1_56 = arith.constant 1 : index
    %c0_57 = arith.constant 0 : index
    %66 = vector.load %arg6[%c1_55, %c1_56, %c0_57] : memref<18x18x128xbf16, #tpu.memory_space<vmem>>, vector<16x16x128xbf16>
    tpu.vector_store %arg6[%c1_55, %c1_56, %c0_57], %65 {strides = array<i32>} : memref<18x18x128xbf16, #tpu.memory_space<vmem>>, vector<16x16x128xbf16>,
    %c0_58 = arith.constant 0 : index
    %c0_59 = arith.constant 0 : index
    %c0_60 = arith.constant 0 : index
    %67 = vector.load %arg6[%c0_58, %c0_59, %c0_60] : memref<18x18x128xbf16, #tpu.memory_space<vmem>>, vector<18x18x128xbf16>
    %cst_61 = arith.constant 0.000000e+00 : f32
    %68 = vector.broadcast %cst_61 : f32 to vector<256x128xf32>
    %69 = vector.extract_strided_slice %67 {offsets = [0, 0, 0], sizes = [16, 16, 128], strides = [1, 1, 1]} : vector<18x18x128xbf16> to vector<16x16x128xbf16>
    %70 = vector.shape_cast %69 : vector<16x16x128xbf16> to vector<256x128xbf16>
    %c0_62 = arith.constant 0 : index
    %c0_63 = arith.constant 0 : index
    %c0_64 = arith.constant 0 : index
    %c0_65 = arith.constant 0 : index
    %71 = vector.load %arg3[%c0_62, %c0_63, %c0_64, %c0_65] : memref<3x3x128x128xbf16, #tpu.memory_space<vmem>>, vector<1x1x128x128xbf16>
    %72 = vector.shape_cast %71 : vector<1x1x128x128xbf16> to vector<128x128xbf16>
    %cst_66 = arith.constant dense<0.000000e+00> : vector<256x128xf32>
    %73 = tpu.matmul %70, %72, %cst_66 {dimension_numbers = #tpu.dot_dimension_numbers<[1], [0], [0], [1], [0, 0, 1, 1], [], []>} : vector<256x128xbf16>, vector<128x128xbf16>, vector<256x128xf32> -> vector<256x128xf32>
    %74 = arith.addf %68, %73 : vector<256x128xf32>
    %75 = vector.extract_strided_slice %67 {offsets = [0, 1, 0], sizes = [16, 16, 128], strides = [1, 1, 1]} : vector<18x18x128xbf16> to vector<16x16x128xbf16>
    %76 = vector.shape_cast %75 : vector<16x16x128xbf16> to vector<256x128xbf16>
    %c0_67 = arith.constant 0 : index
    %c1_68 = arith.constant 1 : index
    %c0_69 = arith.constant 0 : index
    %c0_70 = arith.constant 0 : index
    %77 = vector.load %arg3[%c0_67, %c1_68, %c0_69, %c0_70] : memref<3x3x128x128xbf16, #tpu.memory_space<vmem>>, vector<1x1x128x128xbf16>
    %78 = vector.shape_cast %77 : vector<1x1x128x128xbf16> to vector<128x128xbf16>
    %cst_71 = arith.constant dense<0.000000e+00> : vector<256x128xf32>
    %79 = tpu.matmul %76, %78, %cst_71 {dimension_numbers = #tpu.dot_dimension_numbers<[1], [0], [0], [1], [0, 0, 1, 1], [], []>} : vector<256x128xbf16>, vector<128x128xbf16>, vector<256x128xf32> -> vector<256x128xf32>
    %80 = arith.addf %74, %79 : vector<256x128xf32>
    %81 = vector.extract_strided_slice %67 {offsets = [0, 2, 0], sizes = [16, 16, 128], strides = [1, 1, 1]} : vector<18x18x128xbf16> to vector<16x16x128xbf16>
    %82 = vector.shape_cast %81 : vector<16x16x128xbf16> to vector<256x128xbf16>
    %c0_72 = arith.constant 0 : index
    %c2_73 = arith.constant 2 : index
    %c0_74 = arith.constant 0 : index
    %c0_75 = arith.constant 0 : index
    %83 = vector.load %arg3[%c0_72, %c2_73, %c0_74, %c0_75] : memref<3x3x128x128xbf16, #tpu.memory_space<vmem>>, vector<1x1x128x128xbf16>
    %84 = vector.shape_cast %83 : vector<1x1x128x128xbf16> to vector<128x128xbf16>
    %cst_76 = arith.constant dense<0.000000e+00> : vector<256x128xf32>
    %85 = tpu.matmul %82, %84, %cst_76 {dimension_numbers = #tpu.dot_dimension_numbers<[1], [0], [0], [1], [0, 0, 1, 1], [], []>} : vector<256x128xbf16>, vector<128x128xbf16>, vector<256x128xf32> -> vector<256x128xf32>
    %86 = arith.addf %80, %85 : vector<256x128xf32>
    %87 = vector.extract_strided_slice %67 {offsets = [1, 0, 0], sizes = [16, 16, 128], strides = [1, 1, 1]} : vector<18x18x128xbf16> to vector<16x16x128xbf16>
    %88 = vector.shape_cast %87 : vector<16x16x128xbf16> to vector<256x128xbf16>
    %c1_77 = arith.constant 1 : index
    %c0_78 = arith.constant 0 : index
    %c0_79 = arith.constant 0 : index
    %c0_80 = arith.constant 0 : index
    %89 = vector.load %arg3[%c1_77, %c0_78, %c0_79, %c0_80] : memref<3x3x128x128xbf16, #tpu.memory_space<vmem>>, vector<1x1x128x128xbf16>
    %90 = vector.shape_cast %89 : vector<1x1x128x128xbf16> to vector<128x128xbf16>
    %cst_81 = arith.constant dense<0.000000e+00> : vector<256x128xf32>
    %91 = tpu.matmul %88, %90, %cst_81 {dimension_numbers = #tpu.dot_dimension_numbers<[1], [0], [0], [1], [0, 0, 1, 1], [], []>} : vector<256x128xbf16>, vector<128x128xbf16>, vector<256x128xf32> -> vector<256x128xf32>
    %92 = arith.addf %86, %91 : vector<256x128xf32>
    %93 = vector.extract_strided_slice %67 {offsets = [1, 1, 0], sizes = [16, 16, 128], strides = [1, 1, 1]} : vector<18x18x128xbf16> to vector<16x16x128xbf16>
    %94 = vector.shape_cast %93 : vector<16x16x128xbf16> to vector<256x128xbf16>
    %c1_82 = arith.constant 1 : index
    %c1_83 = arith.constant 1 : index
    %c0_84 = arith.constant 0 : index
    %c0_85 = arith.constant 0 : index
    %95 = vector.load %arg3[%c1_82, %c1_83, %c0_84, %c0_85] : memref<3x3x128x128xbf16, #tpu.memory_space<vmem>>, vector<1x1x128x128xbf16>
    %96 = vector.shape_cast %95 : vector<1x1x128x128xbf16> to vector<128x128xbf16>
    %cst_86 = arith.constant dense<0.000000e+00> : vector<256x128xf32>
    %97 = tpu.matmul %94, %96, %cst_86 {dimension_numbers = #tpu.dot_dimension_numbers<[1], [0], [0], [1], [0, 0, 1, 1], [], []>} : vector<256x128xbf16>, vector<128x128xbf16>, vector<256x128xf32> -> vector<256x128xf32>
    %98 = arith.addf %92, %97 : vector<256x128xf32>
    %99 = vector.extract_strided_slice %67 {offsets = [1, 2, 0], sizes = [16, 16, 128], strides = [1, 1, 1]} : vector<18x18x128xbf16> to vector<16x16x128xbf16>
    %100 = vector.shape_cast %99 : vector<16x16x128xbf16> to vector<256x128xbf16>
    %c1_87 = arith.constant 1 : index
    %c2_88 = arith.constant 2 : index
    %c0_89 = arith.constant 0 : index
    %c0_90 = arith.constant 0 : index
    %101 = vector.load %arg3[%c1_87, %c2_88, %c0_89, %c0_90] : memref<3x3x128x128xbf16, #tpu.memory_space<vmem>>, vector<1x1x128x128xbf16>
    %102 = vector.shape_cast %101 : vector<1x1x128x128xbf16> to vector<128x128xbf16>
    %cst_91 = arith.constant dense<0.000000e+00> : vector<256x128xf32>
    %103 = tpu.matmul %100, %102, %cst_91 {dimension_numbers = #tpu.dot_dimension_numbers<[1], [0], [0], [1], [0, 0, 1, 1], [], []>} : vector<256x128xbf16>, vector<128x128xbf16>, vector<256x128xf32> -> vector<256x128xf32>
    %104 = arith.addf %98, %103 : vector<256x128xf32>
    %105 = vector.extract_strided_slice %67 {offsets = [2, 0, 0], sizes = [16, 16, 128], strides = [1, 1, 1]} : vector<18x18x128xbf16> to vector<16x16x128xbf16>
    %106 = vector.shape_cast %105 : vector<16x16x128xbf16> to vector<256x128xbf16>
    %c2_92 = arith.constant 2 : index
    %c0_93 = arith.constant 0 : index
    %c0_94 = arith.constant 0 : index
    %c0_95 = arith.constant 0 : index
    %107 = vector.load %arg3[%c2_92, %c0_93, %c0_94, %c0_95] : memref<3x3x128x128xbf16, #tpu.memory_space<vmem>>, vector<1x1x128x128xbf16>
    %108 = vector.shape_cast %107 : vector<1x1x128x128xbf16> to vector<128x128xbf16>
    %cst_96 = arith.constant dense<0.000000e+00> : vector<256x128xf32>
    %109 = tpu.matmul %106, %108, %cst_96 {dimension_numbers = #tpu.dot_dimension_numbers<[1], [0], [0], [1], [0, 0, 1, 1], [], []>} : vector<256x128xbf16>, vector<128x128xbf16>, vector<256x128xf32> -> vector<256x128xf32>
    %110 = arith.addf %104, %109 : vector<256x128xf32>
    %111 = vector.extract_strided_slice %67 {offsets = [2, 1, 0], sizes = [16, 16, 128], strides = [1, 1, 1]} : vector<18x18x128xbf16> to vector<16x16x128xbf16>
    %112 = vector.shape_cast %111 : vector<16x16x128xbf16> to vector<256x128xbf16>
    %c2_97 = arith.constant 2 : index
    %c1_98 = arith.constant 1 : index
    %c0_99 = arith.constant 0 : index
    %c0_100 = arith.constant 0 : index
    %113 = vector.load %arg3[%c2_97, %c1_98, %c0_99, %c0_100] : memref<3x3x128x128xbf16, #tpu.memory_space<vmem>>, vector<1x1x128x128xbf16>
    %114 = vector.shape_cast %113 : vector<1x1x128x128xbf16> to vector<128x128xbf16>
    %cst_101 = arith.constant dense<0.000000e+00> : vector<256x128xf32>
    %115 = tpu.matmul %112, %114, %cst_101 {dimension_numbers = #tpu.dot_dimension_numbers<[1], [0], [0], [1], [0, 0, 1, 1], [], []>} : vector<256x128xbf16>, vector<128x128xbf16>, vector<256x128xf32> -> vector<256x128xf32>
    %116 = arith.addf %110, %115 : vector<256x128xf32>
    %117 = vector.extract_strided_slice %67 {offsets = [2, 2, 0], sizes = [16, 16, 128], strides = [1, 1, 1]} : vector<18x18x128xbf16> to vector<16x16x128xbf16>
    %118 = vector.shape_cast %117 : vector<16x16x128xbf16> to vector<256x128xbf16>
    %c2_102 = arith.constant 2 : index
    %c2_103 = arith.constant 2 : index
    %c0_104 = arith.constant 0 : index
    %c0_105 = arith.constant 0 : index
    %119 = vector.load %arg3[%c2_102, %c2_103, %c0_104, %c0_105] : memref<3x3x128x128xbf16, #tpu.memory_space<vmem>>, vector<1x1x128x128xbf16>
    %120 = vector.shape_cast %119 : vector<1x1x128x128xbf16> to vector<128x128xbf16>
    %cst_106 = arith.constant dense<0.000000e+00> : vector<256x128xf32>
    %121 = tpu.matmul %118, %120, %cst_106 {dimension_numbers = #tpu.dot_dimension_numbers<[1], [0], [0], [1], [0, 0, 1, 1], [], []>} : vector<256x128xbf16>, vector<128x128xbf16>, vector<256x128xf32> -> vector<256x128xf32>
    %122 = arith.addf %116, %121 : vector<256x128xf32>
    %cst_107 = arith.constant 0.000000e+00 : f32
    %123 = vector.broadcast %cst_107 : f32 to vector<256x128xf32>
    %124 = arith.maximumf %122, %123 : vector<256x128xf32>
    %125 = vector.shape_cast %124 : vector<256x128xf32> to vector<16x16x128xf32>
    %126 = arith.truncf %125 : vector<16x16x128xf32> to vector<16x16x128xbf16>
    %c1_108 = arith.constant 1 : index
    %c1_109 = arith.constant 1 : index
    %c0_110 = arith.constant 0 : index
    %127 = vector.load %arg7[%c1_108, %c1_109, %c0_110] : memref<18x18x128xbf16, #tpu.memory_space<vmem>>, vector<16x16x128xbf16>
    tpu.vector_store %arg7[%c1_108, %c1_109, %c0_110], %126 {strides = array<i32>} : memref<18x18x128xbf16, #tpu.memory_space<vmem>>, vector<16x16x128xbf16>,
    %c0_111 = arith.constant 0 : index
    %c0_112 = arith.constant 0 : index
    %c0_113 = arith.constant 0 : index
    %128 = vector.load %arg7[%c0_111, %c0_112, %c0_113] : memref<18x18x128xbf16, #tpu.memory_space<vmem>>, vector<18x18x128xbf16>
    %cst_114 = arith.constant 0.000000e+00 : f32
    %129 = vector.broadcast %cst_114 : f32 to vector<256x128xf32>
    %130 = vector.extract_strided_slice %128 {offsets = [0, 0, 0], sizes = [16, 16, 128], strides = [1, 1, 1]} : vector<18x18x128xbf16> to vector<16x16x128xbf16>
    %131 = vector.shape_cast %130 : vector<16x16x128xbf16> to vector<256x128xbf16>
    %c0_115 = arith.constant 0 : index
    %c0_116 = arith.constant 0 : index
    %c0_117 = arith.constant 0 : index
    %c0_118 = arith.constant 0 : index
    %132 = vector.load %arg4[%c0_115, %c0_116, %c0_117, %c0_118] : memref<3x3x128x128xbf16, #tpu.memory_space<vmem>>, vector<1x1x128x128xbf16>
    %133 = vector.shape_cast %132 : vector<1x1x128x128xbf16> to vector<128x128xbf16>
    %cst_119 = arith.constant dense<0.000000e+00> : vector<256x128xf32>
    %134 = tpu.matmul %131, %133, %cst_119 {dimension_numbers = #tpu.dot_dimension_numbers<[1], [0], [0], [1], [0, 0, 1, 1], [], []>} : vector<256x128xbf16>, vector<128x128xbf16>, vector<256x128xf32> -> vector<256x128xf32>
    %135 = arith.addf %129, %134 : vector<256x128xf32>
    %136 = vector.extract_strided_slice %128 {offsets = [0, 1, 0], sizes = [16, 16, 128], strides = [1, 1, 1]} : vector<18x18x128xbf16> to vector<16x16x128xbf16>
    %137 = vector.shape_cast %136 : vector<16x16x128xbf16> to vector<256x128xbf16>
    %c0_120 = arith.constant 0 : index
    %c1_121 = arith.constant 1 : index
    %c0_122 = arith.constant 0 : index
    %c0_123 = arith.constant 0 : index
    %138 = vector.load %arg4[%c0_120, %c1_121, %c0_122, %c0_123] : memref<3x3x128x128xbf16, #tpu.memory_space<vmem>>, vector<1x1x128x128xbf16>
    %139 = vector.shape_cast %138 : vector<1x1x128x128xbf16> to vector<128x128xbf16>
    %cst_124 = arith.constant dense<0.000000e+00> : vector<256x128xf32>
    %140 = tpu.matmul %137, %139, %cst_124 {dimension_numbers = #tpu.dot_dimension_numbers<[1], [0], [0], [1], [0, 0, 1, 1], [], []>} : vector<256x128xbf16>, vector<128x128xbf16>, vector<256x128xf32> -> vector<256x128xf32>
    %141 = arith.addf %135, %140 : vector<256x128xf32>
    %142 = vector.extract_strided_slice %128 {offsets = [0, 2, 0], sizes = [16, 16, 128], strides = [1, 1, 1]} : vector<18x18x128xbf16> to vector<16x16x128xbf16>
    %143 = vector.shape_cast %142 : vector<16x16x128xbf16> to vector<256x128xbf16>
    %c0_125 = arith.constant 0 : index
    %c2_126 = arith.constant 2 : index
    %c0_127 = arith.constant 0 : index
    %c0_128 = arith.constant 0 : index
    %144 = vector.load %arg4[%c0_125, %c2_126, %c0_127, %c0_128] : memref<3x3x128x128xbf16, #tpu.memory_space<vmem>>, vector<1x1x128x128xbf16>
    %145 = vector.shape_cast %144 : vector<1x1x128x128xbf16> to vector<128x128xbf16>
    %cst_129 = arith.constant dense<0.000000e+00> : vector<256x128xf32>
    %146 = tpu.matmul %143, %145, %cst_129 {dimension_numbers = #tpu.dot_dimension_numbers<[1], [0], [0], [1], [0, 0, 1, 1], [], []>} : vector<256x128xbf16>, vector<128x128xbf16>, vector<256x128xf32> -> vector<256x128xf32>
    %147 = arith.addf %141, %146 : vector<256x128xf32>
    %148 = vector.extract_strided_slice %128 {offsets = [1, 0, 0], sizes = [16, 16, 128], strides = [1, 1, 1]} : vector<18x18x128xbf16> to vector<16x16x128xbf16>
    %149 = vector.shape_cast %148 : vector<16x16x128xbf16> to vector<256x128xbf16>
    %c1_130 = arith.constant 1 : index
    %c0_131 = arith.constant 0 : index
    %c0_132 = arith.constant 0 : index
    %c0_133 = arith.constant 0 : index
    %150 = vector.load %arg4[%c1_130, %c0_131, %c0_132, %c0_133] : memref<3x3x128x128xbf16, #tpu.memory_space<vmem>>, vector<1x1x128x128xbf16>
    %151 = vector.shape_cast %150 : vector<1x1x128x128xbf16> to vector<128x128xbf16>
    %cst_134 = arith.constant dense<0.000000e+00> : vector<256x128xf32>
    %152 = tpu.matmul %149, %151, %cst_134 {dimension_numbers = #tpu.dot_dimension_numbers<[1], [0], [0], [1], [0, 0, 1, 1], [], []>} : vector<256x128xbf16>, vector<128x128xbf16>, vector<256x128xf32> -> vector<256x128xf32>
    %153 = arith.addf %147, %152 : vector<256x128xf32>
    %154 = vector.extract_strided_slice %128 {offsets = [1, 1, 0], sizes = [16, 16, 128], strides = [1, 1, 1]} : vector<18x18x128xbf16> to vector<16x16x128xbf16>
    %155 = vector.shape_cast %154 : vector<16x16x128xbf16> to vector<256x128xbf16>
    %c1_135 = arith.constant 1 : index
    %c1_136 = arith.constant 1 : index
    %c0_137 = arith.constant 0 : index
    %c0_138 = arith.constant 0 : index
    %156 = vector.load %arg4[%c1_135, %c1_136, %c0_137, %c0_138] : memref<3x3x128x128xbf16, #tpu.memory_space<vmem>>, vector<1x1x128x128xbf16>
    %157 = vector.shape_cast %156 : vector<1x1x128x128xbf16> to vector<128x128xbf16>
    %cst_139 = arith.constant dense<0.000000e+00> : vector<256x128xf32>
    %158 = tpu.matmul %155, %157, %cst_139 {dimension_numbers = #tpu.dot_dimension_numbers<[1], [0], [0], [1], [0, 0, 1, 1], [], []>} : vector<256x128xbf16>, vector<128x128xbf16>, vector<256x128xf32> -> vector<256x128xf32>
    %159 = arith.addf %153, %158 : vector<256x128xf32>
    %160 = vector.extract_strided_slice %128 {offsets = [1, 2, 0], sizes = [16, 16, 128], strides = [1, 1, 1]} : vector<18x18x128xbf16> to vector<16x16x128xbf16>
    %161 = vector.shape_cast %160 : vector<16x16x128xbf16> to vector<256x128xbf16>
    %c1_140 = arith.constant 1 : index
    %c2_141 = arith.constant 2 : index
    %c0_142 = arith.constant 0 : index
    %c0_143 = arith.constant 0 : index
    %162 = vector.load %arg4[%c1_140, %c2_141, %c0_142, %c0_143] : memref<3x3x128x128xbf16, #tpu.memory_space<vmem>>, vector<1x1x128x128xbf16>
    %163 = vector.shape_cast %162 : vector<1x1x128x128xbf16> to vector<128x128xbf16>
    %cst_144 = arith.constant dense<0.000000e+00> : vector<256x128xf32>
    %164 = tpu.matmul %161, %163, %cst_144 {dimension_numbers = #tpu.dot_dimension_numbers<[1], [0], [0], [1], [0, 0, 1, 1], [], []>} : vector<256x128xbf16>, vector<128x128xbf16>, vector<256x128xf32> -> vector<256x128xf32>
    %165 = arith.addf %159, %164 : vector<256x128xf32>
    %166 = vector.extract_strided_slice %128 {offsets = [2, 0, 0], sizes = [16, 16, 128], strides = [1, 1, 1]} : vector<18x18x128xbf16> to vector<16x16x128xbf16>
    %167 = vector.shape_cast %166 : vector<16x16x128xbf16> to vector<256x128xbf16>
    %c2_145 = arith.constant 2 : index
    %c0_146 = arith.constant 0 : index
    %c0_147 = arith.constant 0 : index
    %c0_148 = arith.constant 0 : index
    %168 = vector.load %arg4[%c2_145, %c0_146, %c0_147, %c0_148] : memref<3x3x128x128xbf16, #tpu.memory_space<vmem>>, vector<1x1x128x128xbf16>
    %169 = vector.shape_cast %168 : vector<1x1x128x128xbf16> to vector<128x128xbf16>
    %cst_149 = arith.constant dense<0.000000e+00> : vector<256x128xf32>
    %170 = tpu.matmul %167, %169, %cst_149 {dimension_numbers = #tpu.dot_dimension_numbers<[1], [0], [0], [1], [0, 0, 1, 1], [], []>} : vector<256x128xbf16>, vector<128x128xbf16>, vector<256x128xf32> -> vector<256x128xf32>
    %171 = arith.addf %165, %170 : vector<256x128xf32>
    %172 = vector.extract_strided_slice %128 {offsets = [2, 1, 0], sizes = [16, 16, 128], strides = [1, 1, 1]} : vector<18x18x128xbf16> to vector<16x16x128xbf16>
    %173 = vector.shape_cast %172 : vector<16x16x128xbf16> to vector<256x128xbf16>
    %c2_150 = arith.constant 2 : index
    %c1_151 = arith.constant 1 : index
    %c0_152 = arith.constant 0 : index
    %c0_153 = arith.constant 0 : index
    %174 = vector.load %arg4[%c2_150, %c1_151, %c0_152, %c0_153] : memref<3x3x128x128xbf16, #tpu.memory_space<vmem>>, vector<1x1x128x128xbf16>
    %175 = vector.shape_cast %174 : vector<1x1x128x128xbf16> to vector<128x128xbf16>
    %cst_154 = arith.constant dense<0.000000e+00> : vector<256x128xf32>
    %176 = tpu.matmul %173, %175, %cst_154 {dimension_numbers = #tpu.dot_dimension_numbers<[1], [0], [0], [1], [0, 0, 1, 1], [], []>} : vector<256x128xbf16>, vector<128x128xbf16>, vector<256x128xf32> -> vector<256x128xf32>
    %177 = arith.addf %171, %176 : vector<256x128xf32>
    %178 = vector.extract_strided_slice %128 {offsets = [2, 2, 0], sizes = [16, 16, 128], strides = [1, 1, 1]} : vector<18x18x128xbf16> to vector<16x16x128xbf16>
    %179 = vector.shape_cast %178 : vector<16x16x128xbf16> to vector<256x128xbf16>
    %c2_155 = arith.constant 2 : index
    %c2_156 = arith.constant 2 : index
    %c0_157 = arith.constant 0 : index
    %c0_158 = arith.constant 0 : index
    %180 = vector.load %arg4[%c2_155, %c2_156, %c0_157, %c0_158] : memref<3x3x128x128xbf16, #tpu.memory_space<vmem>>, vector<1x1x128x128xbf16>
    %181 = vector.shape_cast %180 : vector<1x1x128x128xbf16> to vector<128x128xbf16>
    %cst_159 = arith.constant dense<0.000000e+00> : vector<256x128xf32>
    %182 = tpu.matmul %179, %181, %cst_159 {dimension_numbers = #tpu.dot_dimension_numbers<[1], [0], [0], [1], [0, 0, 1, 1], [], []>} : vector<256x128xbf16>, vector<128x128xbf16>, vector<256x128xf32> -> vector<256x128xf32>
    %183 = arith.addf %177, %182 : vector<256x128xf32>
    %cst_160 = arith.constant 0.000000e+00 : f32
    %184 = vector.broadcast %cst_160 : f32 to vector<256x128xf32>
    %185 = arith.maximumf %183, %184 : vector<256x128xf32>
    %186 = vector.shape_cast %185 : vector<256x128xf32> to vector<16x16x128xf32>
    %c0_161 = arith.constant 0 : index
    %c1_162 = arith.constant 1 : index
    %c1_163 = arith.constant 1 : index
    %c0_164 = arith.constant 0 : index
    %187 = vector.load %arg1[%c0_161, %c1_162, %c1_163, %c0_164] : memref<1x18x18x128xf32, #tpu.memory_space<vmem>>, vector<1x16x16x128xf32>
    %188 = vector.shape_cast %187 : vector<1x16x16x128xf32> to vector<16x16x128xf32>
    %189 = arith.addf %186, %188 : vector<16x16x128xf32>
    %c0_165 = arith.constant 0 : index
    %c0_166 = arith.constant 0 : index
    %c0_167 = arith.constant 0 : index
    %c0_168 = arith.constant 0 : index
    %190 = vector.load %arg5[%c0_165, %c0_166, %c0_167, %c0_168] : memref<1x16x16x128xf32, #tpu.memory_space<vmem>>, vector<1x16x16x128xf32>
    %191 = vector.shape_cast %190 : vector<1x16x16x128xf32> to vector<16x16x128xf32>
    %192 = vector.shape_cast %189 : vector<16x16x128xf32> to vector<1x16x16x128xf32>
    tpu.vector_store %arg5[%c0_165, %c0_166, %c0_167, %c0_168], %192 {strides = array<i32>} : memref<1x16x16x128xf32, #tpu.memory_space<vmem>>, vector<1x16x16x128xf32>,
    return
  }
  func.func @transform_0(%arg0: i32) -> (i32, i32, i32, i32) {
    %c0_i32 = arith.constant 0 : i32
    %c0_i32_0 = arith.constant 0 : i32
    %c0_i32_1 = arith.constant 0 : i32
    %c0_i32_2 = arith.constant 0 : i32
    return %arg0, %c0_i32, %c0_i32_0, %c0_i32_1 : i32, i32, i32, i32
  }
  func.func @transform_1(%arg0: i32) -> (i32, i32, i32, i32) {
    %c0_i32 = arith.constant 0 : i32
    %c0_i32_0 = arith.constant 0 : i32
    %c0_i32_1 = arith.constant 0 : i32
    %c0_i32_2 = arith.constant 0 : i32
    %c0_i32_3 = arith.constant 0 : i32
    return %c0_i32, %c0_i32_0, %c0_i32_1, %c0_i32_2 : i32, i32, i32, i32
  }
  func.func @transform_2(%arg0: i32) -> (i32, i32, i32, i32) {
    %c0_i32 = arith.constant 0 : i32
    %c0_i32_0 = arith.constant 0 : i32
    %c0_i32_1 = arith.constant 0 : i32
    %c0_i32_2 = arith.constant 0 : i32
    %c0_i32_3 = arith.constant 0 : i32
    return %c0_i32, %c0_i32_0, %c0_i32_1, %c0_i32_2 : i32, i32, i32, i32
  }
  func.func @transform_3(%arg0: i32) -> (i32, i32, i32, i32) {
    %c0_i32 = arith.constant 0 : i32
    %c0_i32_0 = arith.constant 0 : i32
    %c0_i32_1 = arith.constant 0 : i32
    %c0_i32_2 = arith.constant 0 : i32
    %c0_i32_3 = arith.constant 0 : i32
    return %c0_i32, %c0_i32_0, %c0_i32_1, %c0_i32_2 : i32, i32, i32, i32
  }
  func.func @transform_4(%arg0: i32) -> (i32, i32, i32, i32) {
    %c0_i32 = arith.constant 0 : i32
    %c0_i32_0 = arith.constant 0 : i32
    %c0_i32_1 = arith.constant 0 : i32
    %c0_i32_2 = arith.constant 0 : i32
    return %arg0, %c0_i32, %c0_i32_0, %c0_i32_1 : i32, i32, i32, i32
  }
}

</mosaic_0001>

<llo_original>
// kernel: _lambda_.1
$region0: #{_lambda_.1}
  #allocation0 [shape = 'u32[]', space=smem, size = 0x4, offset = 0x4, fixed_abs, tag = 'smem constant byte address 0x4 - core index']
  #allocation1 [shape = 'u32[72,128]{1,0:T(1,128)}', space=vmem, size = 0x9000, scoped, tag = 'internal scratch']
  #allocation2 [shape = 'bf16[18,18,128]{2,1,0:T(8,128)(2,1)}', space=vmem, size = 0x1b000, scoped, tag = 'scratch operand']
  #allocation3 [shape = 'bf16[18,18,128]{2,1,0:T(8,128)(2,1)}', space=vmem, size = 0x1b000, scoped, tag = 'scratch operand']
  %s0 = inlined_call_operand.vmem [shape: f32[2,18,18,128], index: 0, kind: input, shape index: {}]
  %s1 = inlined_call_operand.vmem [shape: bf16[3,3,128,128], index: 1, kind: input, shape index: {}]
  %s2 = inlined_call_operand.vmem [shape: bf16[3,3,128,128], index: 2, kind: input, shape index: {}]
  %s3 = inlined_call_operand.vmem [shape: bf16[3,3,128,128], index: 3, kind: input, shape index: {}]
  %s4 = inlined_call_operand.vmem [shape: f32[2,16,16,128], index: 4, kind: output, shape index: {}]
  %s5 = sld [smem:[#allocation0]]
  $region49: #{_lambda_.1} parent=0
    _
  %s7 = ssub.s32 1, %s5
  %s8 = scalar_select 0, %s7, %s5
  loop: start=0, step=1, limit=4
  $region2: #{_lambda_.1} parent=0 // loop_pre_header
    _
  $region3: #{_lambda_.1} parent=0 // loop_header
    %s10 = sphi 0, %s14
    %p11 = scmp.ge.s32.totalorder %s10, 4
    %s20 = sphi 0, %s22
    %s23 = sphi 0, %s20
    %s24 = sphi 0, %s23
    %s40 = sphi 0, %s24
    %s44 = sphi 0, %s44
    %s46 = sphi 0, %s44
    %s47 = sphi 0, %s46
    %s61 = sphi 0, %s47
    %s65 = sphi 0, %s65
    %s67 = sphi 0, %s65
    %s68 = sphi 0, %s67
    %s82 = sphi 0, %s68
    %s86 = sphi 0, %s86
    %s88 = sphi 0, %s86
    %s89 = sphi 0, %s88
    %s103 = sphi 0, %s89
    %s109 = sphi 0, %s111
    %s112 = sphi 0, %s109
    %s113 = sphi 0, %s112
    %s129 = sphi 0, %s113
  $region4: #{_lambda_.1} parent=0 // loop_header_branch
    %13 = sbr.rel (%p11) target = $region8
  $region5: #{_lambda_.1} parent=0 // loop_body
    %s15 = ssub.s32 %s10, 1
    %s16 = ssub.s32 %s10, 2
    %s17 = sadd.s32 %s10, 1
    %s18 = ssub.s32 %s10, %s17
    %p19 = scmp.eq.s32.totalorder %s18, 0
    %s21 = sadd.s32 %s20, 1
    %s22 = scalar_select %p19, %s20, %s21
    %p25 = pneg %p19
    %p26 = scmp.eq.s32.totalorder %s10, 1
    %p27 = por %p25, %p26
    %p28 = scmp.ne.s32.totalorder %s20, %s23
    %p29 = scmp.eq.s32.totalorder %s10, 0
    %p30 = por %p28, %p29
    %p31 = scmp.ne.s32.totalorder %s20, %s23
    %p32 = scmp.eq.s32.totalorder %s15, 1
    %p33 = por %p31, %p32
    %p34 = scmp.ne.s32.totalorder %s23, %s24
    %p35 = scmp.eq.s32.totalorder %s15, 0
    %p36 = por %p34, %p35
    %p37 = scmp.ne.s32.totalorder %s23, %s24
    %p38 = scmp.eq.s32.totalorder %s16, 1
    %p39 = por %p37, %p38
    %p41 = scmp.ne.s32.totalorder %s24, %s40
    %p42 = scmp.eq.s32.totalorder %s16, 0
    %p43 = por %p41, %p42
    %s45 = sadd.s32 %s44, 1
    %p48 = scmp.eq.s32.totalorder %s10, 1
    %p49 = scmp.ne.s32.totalorder %s44, %s46
    %p50 = scmp.eq.s32.totalorder %s10, 0
    %p51 = por %p49, %p50
    %p52 = scmp.ne.s32.totalorder %s44, %s46
    %p53 = scmp.eq.s32.totalorder %s15, 1
    %p54 = por %p52, %p53
    %p55 = scmp.ne.s32.totalorder %s46, %s47
    %p56 = scmp.eq.s32.totalorder %s15, 0
    %p57 = por %p55, %p56
    %p58 = scmp.ne.s32.totalorder %s46, %s47
    %p59 = scmp.eq.s32.totalorder %s16, 1
    %p60 = por %p58, %p59
    %p62 = scmp.ne.s32.totalorder %s47, %s61
    %p63 = scmp.eq.s32.totalorder %s16, 0
    %p64 = por %p62, %p63
    %s66 = sadd.s32 %s65, 1
    %p69 = scmp.eq.s32.totalorder %s10, 1
    %p70 = scmp.ne.s32.totalorder %s65, %s67
    %p71 = scmp.eq.s32.totalorder %s10, 0
    %p72 = por %p70, %p71
    %p73 = scmp.ne.s32.totalorder %s65, %s67
    %p74 = scmp.eq.s32.totalorder %s15, 1
    %p75 = por %p73, %p74
    %p76 = scmp.ne.s32.totalorder %s67, %s68
    %p77 = scmp.eq.s32.totalorder %s15, 0
    %p78 = por %p76, %p77
    %p79 = scmp.ne.s32.totalorder %s67, %s68
    %p80 = scmp.eq.s32.totalorder %s16, 1
    %p81 = por %p79, %p80
    %p83 = scmp.ne.s32.totalorder %s68, %s82
    %p84 = scmp.eq.s32.totalorder %s16, 0
    %p85 = por %p83, %p84
    %s87 = sadd.s32 %s86, 1
    %p90 = scmp.eq.s32.totalorder %s10, 1
    %p91 = scmp.ne.s32.totalorder %s86, %s88
    %p92 = scmp.eq.s32.totalorder %s10, 0
    %p93 = por %p91, %p92
    %p94 = scmp.ne.s32.totalorder %s86, %s88
    %p95 = scmp.eq.s32.totalorder %s15, 1
    %p96 = por %p94, %p95
    %p97 = scmp.ne.s32.totalorder %s88, %s89
    %p98 = scmp.eq.s32.totalorder %s15, 0
    %p99 = por %p97, %p98
    %p100 = scmp.ne.s32.totalorder %s88, %s89
    %p101 = scmp.eq.s32.totalorder %s16, 1
    %p102 = por %p100, %p101
    %p104 = scmp.ne.s32.totalorder %s89, %s103
    %p105 = scmp.eq.s32.totalorder %s16, 0
    %p106 = por %p104, %p105
    %s107 = ssub.s32 %s10, %s17
    %p108 = scmp.eq.s32.totalorder %s107, 0
    %s110 = sadd.s32 %s109, 1
    %s111 = scalar_select %p108, %s109, %s110
    %p114 = pneg %p108
    %p115 = scmp.eq.s32.totalorder %s10, 1
    %p116 = por %p114, %p115
    %p117 = scmp.ne.s32.totalorder %s109, %s112
    %p118 = scmp.eq.s32.totalorder %s10, 0
    %p119 = por %p117, %p118
    %p120 = scmp.ne.s32.totalorder %s109, %s112
    %p121 = scmp.eq.s32.totalorder %s15, 1
    %p122 = por %p120, %p121
    %p123 = scmp.ne.s32.totalorder %s112, %s113
    %p124 = scmp.eq.s32.totalorder %s15, 0
    %p125 = por %p123, %p124
    %p126 = scmp.ne.s32.totalorder %s112, %s113
    %p127 = scmp.eq.s32.totalorder %s16, 1
    %p128 = por %p126, %p127
    %p130 = scmp.ne.s32.totalorder %s113, %s129
    %p131 = scmp.eq.s32.totalorder %s16, 0
    %p132 = por %p130, %p131
    %p133 = scmp.le.s32.totalorder 1, %s10
    %p134 = scmp.lt.s32.totalorder %s10, 3
    %p135 = pnand %p133, %p134
    %p136 = pneg %p135
    // Predicated region
    $region9: #{_lambda_.1} parent=5 // pred_check
      _
    $region10: #{_lambda_.1} parent=5 // pred_check_branch
      %138 = sbr.rel (%p135) target = $region12
    $region11: #{_lambda_.1} parent=5 // pred_region
      %s139 = ssub.s32 %s10, 1
      // Predicated region
      $region13: #{_lambda_.1} parent=11 // pred_check
        %p140 = pneg %p57
      $region14: #{_lambda_.1} parent=11 // pred_check_branch
        %142 = sbr.rel (%p140) target = $region16
      $region15: #{_lambda_.1} parent=11 // pred_region
        _
      $region16: #{_lambda_.1} parent=11 // pred_fallthru
        _
      // Predicated region
      $region17: #{_lambda_.1} parent=11 // pred_check
        %p143 = pneg %p78
      $region18: #{_lambda_.1} parent=11 // pred_check_branch
        %145 = sbr.rel (%p143) target = $region20
      $region19: #{_lambda_.1} parent=11 // pred_region
        _
      $region20: #{_lambda_.1} parent=11 // pred_fallthru
        _
      // Predicated region
      $region21: #{_lambda_.1} parent=11 // pred_check
        %p146 = pneg %p99
      $region22: #{_lambda_.1} parent=11 // pred_check_branch
        %148 = sbr.rel (%p146) target = $region24
      $region23: #{_lambda_.1} parent=11 // pred_region
        _
      $region24: #{_lambda_.1} parent=11 // pred_fallthru
        _
    $region12: #{_lambda_.1} parent=5 // pred_fallthru
      _
    %p149 = scmp.lt.s32.totalorder %s10, 2
    // Predicated region
    $region25: #{_lambda_.1} parent=5 // pred_check
      %p150 = pneg %p149
    $region26: #{_lambda_.1} parent=5 // pred_check_branch
      %152 = sbr.rel (%p150) target = $region28
    $region27: #{_lambda_.1} parent=5 // pred_region
      // Predicated region
      $region29: #{_lambda_.1} parent=27 // pred_check
        %p153 = pneg %p30
      $region30: #{_lambda_.1} parent=27 // pred_check_branch
        %155 = sbr.rel (%p153) target = $region32
      $region31: #{_lambda_.1} parent=27 // pred_region
        %p156 = scmp.lt.s32.totalorder %s10, 1
        %s157 = scalar_select %p156, %s10, 1
        %s158 = smul.addr %s157, 54
        %s159 = smul.addr %s158, 8
        %s160 = scalar_lea.vmem %s0, %s159
      $region32: #{_lambda_.1} parent=27 // pred_fallthru
        _
    $region28: #{_lambda_.1} parent=5 // pred_fallthru
      _
    %p161 = scmp.le.s32.totalorder 1, %s10
    %p162 = scmp.lt.s32.totalorder %s10, 3
    %p163 = pnand %p161, %p162
    %p164 = pneg %p163
    // Predicated region
    $region33: #{_lambda_.1} parent=5 // pred_check
      _
    $region34: #{_lambda_.1} parent=5 // pred_check_branch
      %166 = sbr.rel (%p163) target = $region36
    $region35: #{_lambda_.1} parent=5 // pred_region
      %s167 = ssub.s32 %s10, 1
      %p168 = scmp.lt.s32.totalorder %s15, 1
      %s169 = scalar_select %p168, %s15, 1
      %s170 = smul.addr %s169, 54
      %s171 = smul.addr %s170, 8
      %s172 = scalar_lea.vmem %s0, %s171
      %p173 = pneg %p36
      %p174 = pneg %p33
      %p175 = pneg %p57
      %p176 = pneg %p54
      %p177 = pneg %p78
      %p178 = pneg %p75
      %p179 = pneg %p99
      %p180 = pneg %p96
      %p181 = pneg %p125
      %p182 = pneg %p122
      %p183 = scmp.lt.s32.totalorder %s15, 1
      %s184 = scalar_select %p183, %s15, 1
      %s185 = smul.addr %s184, 32
      %s186 = smul.addr %s185, 8
      %s187 = scalar_lea.vmem %s4, %s186
      %p188 = scmp.lt.s32.totalorder %s15, 1
      %s189 = scalar_select %p188, %s15, 1
      %s190 = smul.addr %s189, 54
      %s191 = smul.addr %s190, 8
      %s192 = scalar_lea.vmem %s0, %s191
      %p193 = scmp.lt.s32.totalorder %s15, 1
      %s194 = scalar_select %p193, %s15, 1
      %s195 = smul.addr %s194, 32
      %s196 = smul.addr %s195, 8
      %s197 = scalar_lea.vmem %s4, %s196
      %199 = vst [vmem:[#allocation2] sm:$0xf] 0
      %200 = vst [vmem:[#allocation2 + $0x4] sm:$0xf] 0
      %201 = vst [vmem:[#allocation2 + $0x8] sm:$0x1] 0
      %202 = vst [vmem:[#allocation2 + $0xc] sm:$0xf] 0
      %203 = vst [vmem:[#allocation2 + $0x10] sm:$0xf] 0
      %204 = vst [vmem:[#allocation2 + $0x14] sm:$0x1] 0
      %205 = vst [vmem:[#allocation2 + $0x18] sm:$0xf] 0
      %206 = vst [vmem:[#allocation2 + $0x1c] sm:$0xf] 0
      %207 = vst [vmem:[#allocation2 + $0x20] sm:$0x1] 0
      %208 = vst [vmem:[#allocation2 + $0x24] sm:$0xf] 0
      %209 = vst [vmem:[#allocation2 + $0x28] sm:$0xf] 0
      %210 = vst [vmem:[#allocation2 + $0x2c] sm:$0x1] 0
      %211 = vst [vmem:[#allocation2 + $0x30] sm:$0xf] 0
      %212 = vst [vmem:[#allocation2 + $0x34] sm:$0xf] 0
      %213 = vst [vmem:[#allocation2 + $0x38] sm:$0x1] 0
      %214 = vst [vmem:[#allocation2 + $0x3c] sm:$0xf] 0
      %215 = vst [vmem:[#allocation2 + $0x40] sm:$0xf] 0
      %216 = vst [vmem:[#allocation2 + $0x44] sm:$0x1] 0
      %217 = vst [vmem:[#allocation2 + $0x48] sm:$0xf] 0
      %218 = vst [vmem:[#allocation2 + $0x4c] sm:$0xf] 0
      %219 = vst [vmem:[#allocation2 + $0x50] sm:$0x1] 0
      %220 = vst [vmem:[#allocation2 + $0x54] sm:$0xf] 0
      %221 = vst [vmem:[#allocation2 + $0x58] sm:$0xf] 0
      %222 = vst [vmem:[#allocation2 + $0x5c] sm:$0x1] 0
      %223 = vst [vmem:[#allocation2 + $0x60] sm:$0xf] 0
      %224 = vst [vmem:[#allocation2 + $0x64] sm:$0xf] 0
      %225 = vst [vmem:[#allocation2 + $0x68] sm:$0x1] 0
      %226 = vst [vmem:[#allocation2 + $0x6c] sm:$0xf] 0
      %227 = vst [vmem:[#allocation2 + $0x70] sm:$0xf] 0
      %228 = vst [vmem:[#allocation2 + $0x74] sm:$0x1] 0
      %229 = vst [vmem:[#allocation2 + $0x78] sm:$0xf] 0
      %230 = vst [vmem:[#allocation2 + $0x7c] sm:$0xf] 0
      %231 = vst [vmem:[#allocation2 + $0x80] sm:$0x1] 0
      %232 = vst [vmem:[#allocation2 + $0x84] sm:$0xf] 0
      %233 = vst [vmem:[#allocation2 + $0x88] sm:$0xf] 0
      %234 = vst [vmem:[#allocation2 + $0x8c] sm:$0x1] 0
      %235 = vst [vmem:[#allocation2 + $0x90] sm:$0xf] 0
      %236 = vst [vmem:[#allocation2 + $0x94] sm:$0xf] 0
      %237 = vst [vmem:[#allocation2 + $0x98] sm:$0x1] 0
      %238 = vst [vmem:[#allocation2 + $0x9c] sm:$0xf] 0
      %239 = vst [vmem:[#allocation2 + $0xa0] sm:$0xf] 0
      %240 = vst [vmem:[#allocation2 + $0xa4] sm:$0x1] 0
      %241 = vst [vmem:[#allocation2 + $0xa8] sm:$0xf] 0
      %242 = vst [vmem:[#allocation2 + $0xac] sm:$0xf] 0
      %243 = vst [vmem:[#allocation2 + $0xb0] sm:$0x1] 0
      %244 = vst [vmem:[#allocation2 + $0xb4] sm:$0xf] 0
      %245 = vst [vmem:[#allocation2 + $0xb8] sm:$0xf] 0
      %246 = vst [vmem:[#allocation2 + $0xbc] sm:$0x1] 0
      %247 = vst [vmem:[#allocation2 + $0xc0] sm:$0xf] 0
      %248 = vst [vmem:[#allocation2 + $0xc4] sm:$0xf] 0
      %249 = vst [vmem:[#allocation2 + $0xc8] sm:$0x1] 0
      %250 = vst [vmem:[#allocation2 + $0xcc] sm:$0xf] 0
      %251 = vst [vmem:[#allocation2 + $0xd0] sm:$0xf] 0
      %252 = vst [vmem:[#allocation2 + $0xd4] sm:$0x1] 0
      %253 = vst [vmem:[#allocation3] sm:$0xf] 0
      %254 = vst [vmem:[#allocation3 + $0x4] sm:$0xf] 0
      %255 = vst [vmem:[#allocation3 + $0x8] sm:$0x1] 0
      %256 = vst [vmem:[#allocation3 + $0xc] sm:$0xf] 0
      %257 = vst [vmem:[#allocation3 + $0x10] sm:$0xf] 0
      %258 = vst [vmem:[#allocation3 + $0x14] sm:$0x1] 0
      %259 = vst [vmem:[#allocation3 + $0x18] sm:$0xf] 0
      %260 = vst [vmem:[#allocation3 + $0x1c] sm:$0xf] 0
      %261 = vst [vmem:[#allocation3 + $0x20] sm:$0x1] 0
      %262 = vst [vmem:[#allocation3 + $0x24] sm:$0xf] 0
      %263 = vst [vmem:[#allocation3 + $0x28] sm:$0xf] 0
      %264 = vst [vmem:[#allocation3 + $0x2c] sm:$0x1] 0
      %265 = vst [vmem:[#allocation3 + $0x30] sm:$0xf] 0
      %266 = vst [vmem:[#allocation3 + $0x34] sm:$0xf] 0
      %267 = vst [vmem:[#allocation3 + $0x38] sm:$0x1] 0
      %268 = vst [vmem:[#allocation3 + $0x3c] sm:$0xf] 0
      %269 = vst [vmem:[#allocation3 + $0x40] sm:$0xf] 0
      %270 = vst [vmem:[#allocation3 + $0x44] sm:$0x1] 0
      %271 = vst [vmem:[#allocation3 + $0x48] sm:$0xf] 0
      %272 = vst [vmem:[#allocation3 + $0x4c] sm:$0xf] 0
      %273 = vst [vmem:[#allocation3 + $0x50] sm:$0x1] 0
      %274 = vst [vmem:[#allocation3 + $0x54] sm:$0xf] 0
      %275 = vst [vmem:[#allocation3 + $0x58] sm:$0xf] 0
      %276 = vst [vmem:[#allocation3 + $0x5c] sm:$0x1] 0
      %277 = vst [vmem:[#allocation3 + $0x60] sm:$0xf] 0
      %278 = vst [vmem:[#allocation3 + $0x64] sm:$0xf] 0
      %279 = vst [vmem:[#allocation3 + $0x68] sm:$0x1] 0
      %280 = vst [vmem:[#allocation3 + $0x6c] sm:$0xf] 0
      %281 = vst [vmem:[#allocation3 + $0x70] sm:$0xf] 0
      %282 = vst [vmem:[#allocation3 + $0x74] sm:$0x1] 0
      %283 = vst [vmem:[#allocation3 + $0x78] sm:$0xf] 0
      %284 = vst [vmem:[#allocation3 + $0x7c] sm:$0xf] 0
      %285 = vst [vmem:[#allocation3 + $0x80] sm:$0x1] 0
      %286 = vst [vmem:[#allocation3 + $0x84] sm:$0xf] 0
      %287 = vst [vmem:[#allocation3 + $0x88] sm:$0xf] 0
      %288 = vst [vmem:[#allocation3 + $0x8c] sm:$0x1] 0
      %289 = vst [vmem:[#allocation3 + $0x90] sm:$0xf] 0
      %290 = vst [vmem:[#allocation3 + $0x94] sm:$0xf] 0
      %291 = vst [vmem:[#allocation3 + $0x98] sm:$0x1] 0
      %292 = vst [vmem:[#allocation3 + $0x9c] sm:$0xf] 0
      %293 = vst [vmem:[#allocation3 + $0xa0] sm:$0xf] 0
      %294 = vst [vmem:[#allocation3 + $0xa4] sm:$0x1] 0
      %295 = vst [vmem:[#allocation3 + $0xa8] sm:$0xf] 0
      %296 = vst [vmem:[#allocation3 + $0xac] sm:$0xf] 0
      %297 = vst [vmem:[#allocation3 + $0xb0] sm:$0x1] 0
      %298 = vst [vmem:[#allocation3 + $0xb4] sm:$0xf] 0
      %299 = vst [vmem:[#allocation3 + $0xb8] sm:$0xf] 0
      %300 = vst [vmem:[#allocation3 + $0xbc] sm:$0x1] 0
      %301 = vst [vmem:[#allocation3 + $0xc0] sm:$0xf] 0
      %302 = vst [vmem:[#allocation3 + $0xc4] sm:$0xf] 0
      %303 = vst [vmem:[#allocation3 + $0xc8] sm:$0x1] 0
      %304 = vst [vmem:[#allocation3 + $0xcc] sm:$0xf] 0
      %305 = vst [vmem:[#allocation3 + $0xd0] sm:$0xf] 0
      %306 = vst [vmem:[#allocation3 + $0xd4] sm:$0x1] 0
      %v307 = vld [vmem:[%s192] sm:$0xff]
      %v308 = vld [vmem:[%s192 + $0x8] sm:$0xff]
      %v309 = vld [vmem:[%s192 + $0x10] sm:$0x3]
      %v310 = vld [vmem:[%s192 + $0x18] sm:$0xff]
      %v311 = vld [vmem:[%s192 + $0x20] sm:$0xff]
      %v312 = vld [vmem:[%s192 + $0x28] sm:$0x3]
      %v313 = vld [vmem:[%s192 + $0x30] sm:$0xff]
      %v314 = vld [vmem:[%s192 + $0x38] sm:$0xff]
      %v315 = vld [vmem:[%s192 + $0x40] sm:$0x3]
      %v316 = vld [vmem:[%s192 + $0x48] sm:$0xff]
      %v317 = vld [vmem:[%s192 + $0x50] sm:$0xff]
      %v318 = vld [vmem:[%s192 + $0x58] sm:$0x3]
      %v319 = vld [vmem:[%s192 + $0x60] sm:$0xff]
      %v320 = vld [vmem:[%s192 + $0x68] sm:$0xff]
      %v321 = vld [vmem:[%s192 + $0x70] sm:$0x3]
      %v322 = vld [vmem:[%s192 + $0x78] sm:$0xff]
      %v323 = vld [vmem:[%s192 + $0x80] sm:$0xff]
      %v324 = vld [vmem:[%s192 + $0x88] sm:$0x3]
      %v325 = vld [vmem:[%s192 + $0x90] sm:$0xff]
      %v326 = vld [vmem:[%s192 + $0x98] sm:$0xff]
      %v327 = vld [vmem:[%s192 + $0xa0] sm:$0x3]
      %v328 = vld [vmem:[%s192 + $0xa8] sm:$0xff]
      %v329 = vld [vmem:[%s192 + $0xb0] sm:$0xff]
      %v330 = vld [vmem:[%s192 + $0xb8] sm:$0x3]
      %v331 = vld [vmem:[%s192 + $0xc0] sm:$0xff]
      %v332 = vld [vmem:[%s192 + $0xc8] sm:$0xff]
      %v333 = vld [vmem:[%s192 + $0xd0] sm:$0x3]
      %v334 = vld [vmem:[%s192 + $0xd8] sm:$0xff]
      %v335 = vld [vmem:[%s192 + $0xe0] sm:$0xff]
      %v336 = vld [vmem:[%s192 + $0xe8] sm:$0x3]
      %v337 = vld [vmem:[%s192 + $0xf0] sm:$0xff]
      %v338 = vld [vmem:[%s192 + $0xf8] sm:$0xff]
      %v339 = vld [vmem:[%s192 + $0x100] sm:$0x3]
      %v340 = vld [vmem:[%s192 + $0x108] sm:$0xff]
      %v341 = vld [vmem:[%s192 + $0x110] sm:$0xff]
      %v342 = vld [vmem:[%s192 + $0x118] sm:$0x3]
      %v343 = vld [vmem:[%s192 + $0x120] sm:$0xff]
      %v344 = vld [vmem:[%s192 + $0x128] sm:$0xff]
      %v345 = vld [vmem:[%s192 + $0x130] sm:$0x3]
      %v346 = vld [vmem:[%s192 + $0x138] sm:$0xff]
      %v347 = vld [vmem:[%s192 + $0x140] sm:$0xff]
      %v348 = vld [vmem:[%s192 + $0x148] sm:$0x3]
      %v349 = vld [vmem:[%s192 + $0x150] sm:$0xff]
      %v350 = vld [vmem:[%s192 + $0x158] sm:$0xff]
      %v351 = vld [vmem:[%s192 + $0x160] sm:$0x3]
      %v352 = vld [vmem:[%s192 + $0x168] sm:$0xff]
      %v353 = vld [vmem:[%s192 + $0x170] sm:$0xff]
      %v354 = vld [vmem:[%s192 + $0x178] sm:$0x3]
      %v355 = vld [vmem:[%s192 + $0x180] sm:$0xff]
      %v356 = vld [vmem:[%s192 + $0x188] sm:$0xff]
      %v357 = vld [vmem:[%s192 + $0x190] sm:$0x3]
      %v358 = vld [vmem:[%s192 + $0x198] sm:$0xff]
      %v359 = vld [vmem:[%s192 + $0x1a0] sm:$0xff]
      %v360 = vld [vmem:[%s192 + $0x1a8] sm:$0x3]
      %v361 = vpack.c.bf16 %v307, %v307
      %v362 = vpack.c.bf16 %v308, %v308
      %v363 = vpack.c.bf16 %v309, %v309
      %v364 = vpack.c.bf16 %v310, %v310
      %v365 = vpack.c.bf16 %v311, %v311
      %v366 = vpack.c.bf16 %v312, %v312
      %v367 = vpack.c.bf16 %v313, %v313
      %v368 = vpack.c.bf16 %v314, %v314
      %v369 = vpack.c.bf16 %v315, %v315
      %v370 = vpack.c.bf16 %v316, %v316
      %v371 = vpack.c.bf16 %v317, %v317
      %v372 = vpack.c.bf16 %v318, %v318
      %v373 = vpack.c.bf16 %v319, %v319
      %v374 = vpack.c.bf16 %v320, %v320
      %v375 = vpack.c.bf16 %v321, %v321
      %v376 = vpack.c.bf16 %v322, %v322
      %v377 = vpack.c.bf16 %v323, %v323
      %v378 = vpack.c.bf16 %v324, %v324
      %v379 = vpack.c.bf16 %v325, %v325
      %v380 = vpack.c.bf16 %v326, %v326
      %v381 = vpack.c.bf16 %v327, %v327
      %v382 = vpack.c.bf16 %v328, %v328
      %v383 = vpack.c.bf16 %v329, %v329
      %v384 = vpack.c.bf16 %v330, %v330
      %v385 = vpack.c.bf16 %v331, %v331
      %v386 = vpack.c.bf16 %v332, %v332
      %v387 = vpack.c.bf16 %v333, %v333
      %v388 = vpack.c.bf16 %v334, %v334
      %v389 = vpack.c.bf16 %v335, %v335
      %v390 = vpack.c.bf16 %v336, %v336
      %v391 = vpack.c.bf16 %v337, %v337
      %v392 = vpack.c.bf16 %v338, %v338
      %v393 = vpack.c.bf16 %v339, %v339
      %v394 = vpack.c.bf16 %v340, %v340
      %v395 = vpack.c.bf16 %v341, %v341
      %v396 = vpack.c.bf16 %v342, %v342
      %v397 = vpack.c.bf16 %v343, %v343
      %v398 = vpack.c.bf16 %v344, %v344
      %v399 = vpack.c.bf16 %v345, %v345
      %v400 = vpack.c.bf16 %v346, %v346
      %v401 = vpack.c.bf16 %v347, %v347
      %v402 = vpack.c.bf16 %v348, %v348
      %v403 = vpack.c.bf16 %v349, %v349
      %v404 = vpack.c.bf16 %v350, %v350
      %v405 = vpack.c.bf16 %v351, %v351
      %v406 = vpack.c.bf16 %v352, %v352
      %v407 = vpack.c.bf16 %v353, %v353
      %v408 = vpack.c.bf16 %v354, %v354
      %v409 = vpack.c.bf16 %v355, %v355
      %v410 = vpack.c.bf16 %v356, %v356
      %v411 = vpack.c.bf16 %v357, %v357
      %v412 = vpack.c.bf16 %v358, %v358
      %v413 = vpack.c.bf16 %v359, %v359
      %v414 = vpack.c.bf16 %v360, %v360
      %v415 = vld [vmem:[%s1] sm:$0xf]
      %v416 = vld [vmem:[%s1 + $0x4] sm:$0xf]
      %v417 = vld [vmem:[%s1 + $0x8] sm:$0xf]
      %v418 = vld [vmem:[%s1 + $0xc] sm:$0xf]
      %v419 = vld [vmem:[%s1 + $0x10] sm:$0xf]
      %v420 = vld [vmem:[%s1 + $0x14] sm:$0xf]
      %v421 = vld [vmem:[%s1 + $0x18] sm:$0xf]
      %v422 = vld [vmem:[%s1 + $0x1c] sm:$0xf]
      %v423 = vld [vmem:[%s1 + $0x20] sm:$0xf]
      %v424 = vld [vmem:[%s1 + $0x24] sm:$0xf]
      %v425 = vld [vmem:[%s1 + $0x28] sm:$0xf]
      %v426 = vld [vmem:[%s1 + $0x2c] sm:$0xf]
      %v427 = vld [vmem:[%s1 + $0x30] sm:$0xf]
      %v428 = vld [vmem:[%s1 + $0x34] sm:$0xf]
      %v429 = vld [vmem:[%s1 + $0x38] sm:$0xf]
      %v430 = vld [vmem:[%s1 + $0x3c] sm:$0xf]
      %vm431 = vsmask.f32 3328
      %vm432 = vsmask.f32 7440
      %vm433 = vmor %vm431, %vm432
      %v435 = vshrl.u32 %v361, 16
      %v437 = vrot.slane %v435, 4
      %v438 = vshll.u32 %v361, 16
      %v440 = vrot.slane %v438, 5
      %v441 = vor.u32 %v437, %v440
      %v442 = vrot.slane %v441, 4
      %v444 = vshll.u32 %v362, 16
      %v446 = vrot.slane %v444, 5
      %v447 = vsel %vm433, %v442, %v446
      %v448 = vshrl.u32 %v362, 16
      %v450 = vrot.slane %v448, 4
      %v451 = vor.u32 %v450, %v446
      %v452 = vrot.slane %v451, 4
      %v454 = vshll.u32 %v363, 16
      %v456 = vrot.slane %v454, 5
      %v457 = vsel %vm433, %v452, %v456
      %v459 = vshrl.u32 %v364, 16
      %v461 = vrot.slane %v459, 4
      %v462 = vshll.u32 %v364, 16
      %v464 = vrot.slane %v462, 5
      %v465 = vor.u32 %v461, %v464
      %v466 = vrot.slane %v465, 4
      %v468 = vshll.u32 %v365, 16
      %v470 = vrot.slane %v468, 5
      %v471 = vsel %vm433, %v466, %v470
      %v472 = vshrl.u32 %v365, 16
      %v474 = vrot.slane %v472, 4
      %v475 = vor.u32 %v474, %v470
      %v476 = vrot.slane %v475, 4
      %v478 = vshll.u32 %v366, 16
      %v480 = vrot.slane %v478, 5
      %v481 = vsel %vm433, %v476, %v480
      %v483 = vshrl.u32 %v367, 16
      %v485 = vrot.slane %v483, 4
      %v486 = vshll.u32 %v367, 16
      %v488 = vrot.slane %v486, 5
      %v489 = vor.u32 %v485, %v488
      %v490 = vrot.slane %v489, 4
      %v492 = vshll.u32 %v368, 16
      %v494 = vrot.slane %v492, 5
      %v495 = vsel %vm433, %v490, %v494
      %v496 = vshrl.u32 %v368, 16
      %v498 = vrot.slane %v496, 4
      %v499 = vor.u32 %v498, %v494
      %v500 = vrot.slane %v499, 4
      %v502 = vshll.u32 %v369, 16
      %v504 = vrot.slane %v502, 5
      %v505 = vsel %vm433, %v500, %v504
      %v507 = vshrl.u32 %v370, 16
      %v509 = vrot.slane %v507, 4
      %v510 = vshll.u32 %v370, 16
      %v512 = vrot.slane %v510, 5
      %v513 = vor.u32 %v509, %v512
      %v514 = vrot.slane %v513, 4
      %v516 = vshll.u32 %v371, 16
      %v518 = vrot.slane %v516, 5
      %v519 = vsel %vm433, %v514, %v518
      %v520 = vshrl.u32 %v371, 16
      %v522 = vrot.slane %v520, 4
      %v523 = vor.u32 %v522, %v518
      %v524 = vrot.slane %v523, 4
      %v526 = vshll.u32 %v372, 16
      %v528 = vrot.slane %v526, 5
      %v529 = vsel %vm433, %v524, %v528
      %v531 = vshrl.u32 %v373, 16
      %v533 = vrot.slane %v531, 4
      %v534 = vshll.u32 %v373, 16
      %v536 = vrot.slane %v534, 5
      %v537 = vor.u32 %v533, %v536
      %v538 = vrot.slane %v537, 4
      %v540 = vshll.u32 %v374, 16
      %v542 = vrot.slane %v540, 5
      %v543 = vsel %vm433, %v538, %v542
      %v544 = vshrl.u32 %v374, 16
      %v546 = vrot.slane %v544, 4
      %v547 = vor.u32 %v546, %v542
      %v548 = vrot.slane %v547, 4
      %v550 = vshll.u32 %v375, 16
      %v552 = vrot.slane %v550, 5
      %v553 = vsel %vm433, %v548, %v552
      %v555 = vshrl.u32 %v376, 16
      %v557 = vrot.slane %v555, 4
      %v558 = vshll.u32 %v376, 16
      %v560 = vrot.slane %v558, 5
      %v561 = vor.u32 %v557, %v560
      %v562 = vrot.slane %v561, 4
      %v564 = vshll.u32 %v377, 16
      %v566 = vrot.slane %v564, 5
      %v567 = vsel %vm433, %v562, %v566
      %v568 = vshrl.u32 %v377, 16
      %v570 = vrot.slane %v568, 4
      %v571 = vor.u32 %v570, %v566
      %v572 = vrot.slane %v571, 4
      %v574 = vshll.u32 %v378, 16
      %v576 = vrot.slane %v574, 5
      %v577 = vsel %vm433, %v572, %v576
      %v579 = vshrl.u32 %v379, 16
      %v581 = vrot.slane %v579, 4
      %v582 = vshll.u32 %v379, 16
      %v584 = vrot.slane %v582, 5
      %v585 = vor.u32 %v581, %v584
      %v586 = vrot.slane %v585, 4
      %v588 = vshll.u32 %v380, 16
      %v590 = vrot.slane %v588, 5
      %v591 = vsel %vm433, %v586, %v590
      %v592 = vshrl.u32 %v380, 16
      %v594 = vrot.slane %v592, 4
      %v595 = vor.u32 %v594, %v590
      %v596 = vrot.slane %v595, 4
      %v598 = vshll.u32 %v381, 16
      %v600 = vrot.slane %v598, 5
      %v601 = vsel %vm433, %v596, %v600
      %v603 = vshrl.u32 %v382, 16
      %v605 = vrot.slane %v603, 4
      %v606 = vshll.u32 %v382, 16
      %v608 = vrot.slane %v606, 5
      %v609 = vor.u32 %v605, %v608
      %v610 = vrot.slane %v609, 4
      %v612 = vshll.u32 %v383, 16
      %v614 = vrot.slane %v612, 5
      %v615 = vsel %vm433, %v610, %v614
      %v616 = vshrl.u32 %v383, 16
      %v618 = vrot.slane %v616, 4
      %v619 = vor.u32 %v618, %v614
      %v620 = vrot.slane %v619, 4
      %v622 = vshll.u32 %v384, 16
      %v624 = vrot.slane %v622, 5
      %v625 = vsel %vm433, %v620, %v624
      %v627 = vshrl.u32 %v385, 16
      %v629 = vrot.slane %v627, 4
      %v630 = vshll.u32 %v385, 16
      %v632 = vrot.slane %v630, 5
      %v633 = vor.u32 %v629, %v632
      %v634 = vrot.slane %v633, 4
      %v636 = vshll.u32 %v386, 16
      %v638 = vrot.slane %v636, 5
      %v639 = vsel %vm433, %v634, %v638
      %v640 = vshrl.u32 %v386, 16
      %v642 = vrot.slane %v640, 4
      %v643 = vor.u32 %v642, %v638
      %v644 = vrot.slane %v643, 4
      %v646 = vshll.u32 %v387, 16
      %v648 = vrot.slane %v646, 5
      %v649 = vsel %vm433, %v644, %v648
      %v651 = vshrl.u32 %v388, 16
      %v653 = vrot.slane %v651, 4
      %v654 = vshll.u32 %v388, 16
      %v656 = vrot.slane %v654, 5
      %v657 = vor.u32 %v653, %v656
      %v658 = vrot.slane %v657, 4
      %v660 = vshll.u32 %v389, 16
      %v662 = vrot.slane %v660, 5
      %v663 = vsel %vm433, %v658, %v662
      %v664 = vshrl.u32 %v389, 16
      %v666 = vrot.slane %v664, 4
      %v667 = vor.u32 %v666, %v662
      %v668 = vrot.slane %v667, 4
      %v670 = vshll.u32 %v390, 16
      %v672 = vrot.slane %v670, 5
      %v673 = vsel %vm433, %v668, %v672
      %v675 = vshrl.u32 %v391, 16
      %v677 = vrot.slane %v675, 4
      %v678 = vshll.u32 %v391, 16
      %v680 = vrot.slane %v678, 5
      %v681 = vor.u32 %v677, %v680
      %v682 = vrot.slane %v681, 4
      %v684 = vshll.u32 %v392, 16
      %v686 = vrot.slane %v684, 5
      %v687 = vsel %vm433, %v682, %v686
      %v688 = vshrl.u32 %v392, 16
      %v690 = vrot.slane %v688, 4
      %v691 = vor.u32 %v690, %v686
      %v692 = vrot.slane %v691, 4
      %v694 = vshll.u32 %v393, 16
      %v696 = vrot.slane %v694, 5
      %v697 = vsel %vm433, %v692, %v696
      %v699 = vshrl.u32 %v394, 16
      %v701 = vrot.slane %v699, 4
      %v702 = vshll.u32 %v394, 16
      %v704 = vrot.slane %v702, 5
      %v705 = vor.u32 %v701, %v704
      %v706 = vrot.slane %v705, 4
      %v708 = vshll.u32 %v395, 16
      %v710 = vrot.slane %v708, 5
      %v711 = vsel %vm433, %v706, %v710
      %v712 = vshrl.u32 %v395, 16
      %v714 = vrot.slane %v712, 4
      %v715 = vor.u32 %v714, %v710
      %v716 = vrot.slane %v715, 4
      %v718 = vshll.u32 %v396, 16
      %v720 = vrot.slane %v718, 5
      %v721 = vsel %vm433, %v716, %v720
      %v723 = vshrl.u32 %v397, 16
      %v725 = vrot.slane %v723, 4
      %v726 = vshll.u32 %v397, 16
      %v728 = vrot.slane %v726, 5
      %v729 = vor.u32 %v725, %v728
      %v730 = vrot.slane %v729, 4
      %v732 = vshll.u32 %v398, 16
      %v734 = vrot.slane %v732, 5
      %v735 = vsel %vm433, %v730, %v734
      %v736 = vshrl.u32 %v398, 16
      %v738 = vrot.slane %v736, 4
      %v739 = vor.u32 %v738, %v734
      %v740 = vrot.slane %v739, 4
      %v742 = vshll.u32 %v399, 16
      %v744 = vrot.slane %v742, 5
      %v745 = vsel %vm433, %v740, %v744
      %v747 = vshrl.u32 %v400, 16
      %v749 = vrot.slane %v747, 4
      %v750 = vshll.u32 %v400, 16
      %v752 = vrot.slane %v750, 5
      %v753 = vor.u32 %v749, %v752
      %v754 = vrot.slane %v753, 4
      %v756 = vshll.u32 %v401, 16
      %v758 = vrot.slane %v756, 5
      %v759 = vsel %vm433, %v754, %v758
      %v760 = vshrl.u32 %v401, 16
      %v762 = vrot.slane %v760, 4
      %v763 = vor.u32 %v762, %v758
      %v764 = vrot.slane %v763, 4
      %v766 = vshll.u32 %v402, 16
      %v768 = vrot.slane %v766, 5
      %v769 = vsel %vm433, %v764, %v768
      %v771 = vshrl.u32 %v403, 16
      %v773 = vrot.slane %v771, 4
      %v774 = vshll.u32 %v403, 16
      %v776 = vrot.slane %v774, 5
      %v777 = vor.u32 %v773, %v776
      %v778 = vrot.slane %v777, 4
      %v780 = vshll.u32 %v404, 16
      %v782 = vrot.slane %v780, 5
      %v783 = vsel %vm433, %v778, %v782
      %v784 = vshrl.u32 %v404, 16
      %v786 = vrot.slane %v784, 4
      %v787 = vor.u32 %v786, %v782
      %v788 = vrot.slane %v787, 4
      %v790 = vshll.u32 %v405, 16
      %v792 = vrot.slane %v790, 5
      %v793 = vsel %vm433, %v788, %v792
      %v795 = vshrl.u32 %v406, 16
      %v797 = vrot.slane %v795, 4
      %v798 = vshll.u32 %v406, 16
      %v800 = vrot.slane %v798, 5
      %v801 = vor.u32 %v797, %v800
      %v802 = vrot.slane %v801, 4
      %v804 = vshll.u32 %v407, 16
      %v806 = vrot.slane %v804, 5
      %v807 = vsel %vm433, %v802, %v806
      %v808 = vshrl.u32 %v407, 16
      %v810 = vrot.slane %v808, 4
      %v811 = vor.u32 %v810, %v806
      %v812 = vrot.slane %v811, 4
      %v814 = vshll.u32 %v408, 16
      %v816 = vrot.slane %v814, 5
      %v817 = vsel %vm433, %v812, %v816
      %s818 = scalar_lea.vmem %s1, 64
      %v819 = vld [vmem:[%s818] sm:$0xf]
      %v820 = vld [vmem:[%s818 + $0x4] sm:$0xf]
      %v821 = vld [vmem:[%s818 + $0x8] sm:$0xf]
      %v822 = vld [vmem:[%s818 + $0xc] sm:$0xf]
      %v823 = vld [vmem:[%s818 + $0x10] sm:$0xf]
      %v824 = vld [vmem:[%s818 + $0x14] sm:$0xf]
      %v825 = vld [vmem:[%s818 + $0x18] sm:$0xf]
      %v826 = vld [vmem:[%s818 + $0x1c] sm:$0xf]
      %v827 = vld [vmem:[%s818 + $0x20] sm:$0xf]
      %v828 = vld [vmem:[%s818 + $0x24] sm:$0xf]
      %v829 = vld [vmem:[%s818 + $0x28] sm:$0xf]
      %v830 = vld [vmem:[%s818 + $0x2c] sm:$0xf]
      %v831 = vld [vmem:[%s818 + $0x30] sm:$0xf]
      %v832 = vld [vmem:[%s818 + $0x34] sm:$0xf]
      %v833 = vld [vmem:[%s818 + $0x38] sm:$0xf]
      %v834 = vld [vmem:[%s818 + $0x3c] sm:$0xf]
      %v835 = vunpack.c.l.b16 %v447
      %v836 = vunpack.c.l.b16 %v457
      %v837 = vunpack.c.l.b16 %v471
      %v838 = vunpack.c.l.b16 %v481
      %v839 = vunpack.c.l.b16 %v495
      %v840 = vunpack.c.l.b16 %v505
      %v841 = vunpack.c.l.b16 %v519
      %v842 = vunpack.c.l.b16 %v529
      %v843 = vunpack.c.l.b16 %v543
      %v844 = vunpack.c.l.b16 %v553
      %v845 = vunpack.c.l.b16 %v567
      %v846 = vunpack.c.l.b16 %v577
      %v847 = vunpack.c.l.b16 %v591
      %v848 = vunpack.c.l.b16 %v601
      %v849 = vunpack.c.l.b16 %v615
      %v850 = vunpack.c.l.b16 %v625
      %v851 = vunpack.c.l.b16 %v639
      %v852 = vunpack.c.l.b16 %v649
      %v853 = vunpack.c.l.b16 %v663
      %v854 = vunpack.c.l.b16 %v673
      %v855 = vunpack.c.l.b16 %v687
      %v856 = vunpack.c.l.b16 %v697
      %v857 = vunpack.c.l.b16 %v711
      %v858 = vunpack.c.l.b16 %v721
      %v859 = vunpack.c.l.b16 %v735
      %v860 = vunpack.c.l.b16 %v745
      %v861 = vunpack.c.l.b16 %v759
      %v862 = vunpack.c.l.b16 %v769
      %v863 = vunpack.c.l.b16 %v783
      %v864 = vunpack.c.l.b16 %v793
      %v865 = vunpack.c.l.b16 %v807
      %v866 = vunpack.c.l.b16 %v817
      %v867 = vpack.c.b16 %v836, %v835
      %v868 = vpack.c.b16 %v838, %v837
      %v869 = vpack.c.b16 %v840, %v839
      %v870 = vpack.c.b16 %v842, %v841
      %v871 = vpack.c.b16 %v844, %v843
      %v872 = vpack.c.b16 %v846, %v845
      %v873 = vpack.c.b16 %v848, %v847
      %v874 = vpack.c.b16 %v850, %v849
      %v875 = vpack.c.b16 %v852, %v851
      %v876 = vpack.c.b16 %v854, %v853
      %v877 = vpack.c.b16 %v856, %v855
      %v878 = vpack.c.b16 %v858, %v857
      %v879 = vpack.c.b16 %v860, %v859
      %v880 = vpack.c.b16 %v862, %v861
      %v881 = vpack.c.b16 %v864, %v863
      %v882 = vpack.c.b16 %v866, %v865
      %v915 = vunpack.c.l.b16 %v819
      %v916 = vunpack.c.l.b16 %v820
      %v917 = vunpack.c.l.b16 %v821
      %v918 = vunpack.c.l.b16 %v822
      %v919 = vunpack.c.l.b16 %v823
      %v920 = vunpack.c.l.b16 %v824
      %v921 = vunpack.c.l.b16 %v825
      %v922 = vunpack.c.l.b16 %v826
      %v923 = vunpack.c.l.b16 %v827
      %v924 = vunpack.c.l.b16 %v828
      %v925 = vunpack.c.l.b16 %v829
      %v926 = vunpack.c.l.b16 %v830
      %v927 = vunpack.c.l.b16 %v831
      %v928 = vunpack.c.l.b16 %v832
      %v929 = vunpack.c.l.b16 %v833
      %v930 = vunpack.c.l.b16 %v834
      %v931 = vpack.c.b16 %v916, %v915
      %v932 = vpack.c.b16 %v918, %v917
      %v933 = vpack.c.b16 %v920, %v919
      %v934 = vpack.c.b16 %v922, %v921
      %v935 = vpack.c.b16 %v924, %v923
      %v936 = vpack.c.b16 %v926, %v925
      %v937 = vpack.c.b16 %v928, %v927
      %v938 = vpack.c.b16 %v930, %v929
      %947 = vmatpush.bf16.msra.mxu0 %v938
      %948 = vmatpush.bf16.msra.mxu0 %v937
      %949 = vmatpush.bf16.msra.mxu0 %v936
      %950 = vmatpush.bf16.msra.mxu0 %v935
      %951 = vmatpush.bf16.msra.mxu0 %v934
      %952 = vmatpush.bf16.msra.mxu0 %v933
      %953 = vmatpush.bf16.msra.mxu0 %v932
      %954 = vmatpush.bf16.msra.mxu0 %v931
      %955 = vmatmul.bf16.gmra.mxu0 %v867
      %v956 = vpop.f32.mrf.mxu0
      %v957 = vadd.f32 0.0, %v956
      %v958 = vpop.f32.mrf.mxu0
      %v959 = vadd.f32 0.0, %v958
      %960 = vmatmul.bf16.gmra.mxu0 %v868
      %v961 = vpop.f32.mrf.mxu0
      %v962 = vadd.f32 0.0, %v961
      %v963 = vpop.f32.mrf.mxu0
      %v964 = vadd.f32 0.0, %v963
      %965 = vmatmul.bf16.gmra.mxu0 %v869
      %v966 = vpop.f32.mrf.mxu0
      %v967 = vadd.f32 0.0, %v966
      %v968 = vpop.f32.mrf.mxu0
      %v969 = vadd.f32 0.0, %v968
      %970 = vmatmul.bf16.gmra.mxu0 %v870
      %v971 = vpop.f32.mrf.mxu0
      %v972 = vadd.f32 0.0, %v971
      %v973 = vpop.f32.mrf.mxu0
      %v974 = vadd.f32 0.0, %v973
      %975 = vmatmul.bf16.gmra.mxu0 %v871
      %v976 = vpop.f32.mrf.mxu0
      %v977 = vadd.f32 0.0, %v976
      %v978 = vpop.f32.mrf.mxu0
      %v979 = vadd.f32 0.0, %v978
      %980 = vmatmul.bf16.gmra.mxu0 %v872
      %v981 = vpop.f32.mrf.mxu0
      %v982 = vadd.f32 0.0, %v981
      %v983 = vpop.f32.mrf.mxu0
      %v984 = vadd.f32 0.0, %v983
      %985 = vmatmul.bf16.gmra.mxu0 %v873
      %v986 = vpop.f32.mrf.mxu0
      %v987 = vadd.f32 0.0, %v986
      %v988 = vpop.f32.mrf.mxu0
      %v989 = vadd.f32 0.0, %v988
      %990 = vmatmul.bf16.gmra.mxu0 %v874
      %v991 = vpop.f32.mrf.mxu0
      %v992 = vadd.f32 0.0, %v991
      %v993 = vpop.f32.mrf.mxu0
      %v994 = vadd.f32 0.0, %v993
      %995 = vmatmul.bf16.gmra.mxu0 %v875
      %v996 = vpop.f32.mrf.mxu0
      %v997 = vadd.f32 0.0, %v996
      %v998 = vpop.f32.mrf.mxu0
      %v999 = vadd.f32 0.0, %v998
      %1000 = vmatmul.bf16.gmra.mxu0 %v876
      %v1001 = vpop.f32.mrf.mxu0
      %v1002 = vadd.f32 0.0, %v1001
      %v1003 = vpop.f32.mrf.mxu0
      %v1004 = vadd.f32 0.0, %v1003
      %1005 = vmatmul.bf16.gmra.mxu0 %v877
      %v1006 = vpop.f32.mrf.mxu0
      %v1007 = vadd.f32 0.0, %v1006
      %v1008 = vpop.f32.mrf.mxu0
      %v1009 = vadd.f32 0.0, %v1008
      %1010 = vmatmul.bf16.gmra.mxu0 %v878
      %v1011 = vpop.f32.mrf.mxu0
      %v1012 = vadd.f32 0.0, %v1011
      %v1013 = vpop.f32.mrf.mxu0
      %v1014 = vadd.f32 0.0, %v1013
      %1015 = vmatmul.bf16.gmra.mxu0 %v879
      %v1016 = vpop.f32.mrf.mxu0
      %v1017 = vadd.f32 0.0, %v1016
      %v1018 = vpop.f32.mrf.mxu0
      %v1019 = vadd.f32 0.0, %v1018
      %1020 = vmatmul.bf16.gmra.mxu0 %v880
      %v1021 = vpop.f32.mrf.mxu0
      %v1022 = vadd.f32 0.0, %v1021
      %v1023 = vpop.f32.mrf.mxu0
      %v1024 = vadd.f32 0.0, %v1023
      %1025 = vmatmul.bf16.gmra.mxu0 %v881
      %v1026 = vpop.f32.mrf.mxu0
      %v1027 = vadd.f32 0.0, %v1026
      %v1028 = vpop.f32.mrf.mxu0
      %v1029 = vadd.f32 0.0, %v1028
      %1030 = vmatmul.bf16.gmra.mxu0 %v882
      %v1031 = vpop.f32.mrf.mxu0
      %v1032 = vadd.f32 0.0, %v1031
      %v1033 = vpop.f32.mrf.mxu0
      %v1034 = vadd.f32 0.0, %v1033
      %1035 = vdwg.mxu0
      %v1068 = vunpack.c.l.b16 %v361
      %v1069 = vunpack.c.l.b16 %v362
      %v1070 = vunpack.c.l.b16 %v364
      %v1071 = vunpack.c.l.b16 %v365
      %v1072 = vunpack.c.l.b16 %v367
      %v1073 = vunpack.c.l.b16 %v368
      %v1074 = vunpack.c.l.b16 %v370
      %v1075 = vunpack.c.l.b16 %v371
      %v1076 = vunpack.c.l.b16 %v373
      %v1077 = vunpack.c.l.b16 %v374
      %v1078 = vunpack.c.l.b16 %v376
      %v1079 = vunpack.c.l.b16 %v377
      %v1080 = vunpack.c.l.b16 %v379
      %v1081 = vunpack.c.l.b16 %v380
      %v1082 = vunpack.c.l.b16 %v382
      %v1083 = vunpack.c.l.b16 %v383
      %v1084 = vunpack.c.l.b16 %v385
      %v1085 = vunpack.c.l.b16 %v386
      %v1086 = vunpack.c.l.b16 %v388
      %v1087 = vunpack.c.l.b16 %v389
      %v1088 = vunpack.c.l.b16 %v391
      %v1089 = vunpack.c.l.b16 %v392
      %v1090 = vunpack.c.l.b16 %v394
      %v1091 = vunpack.c.l.b16 %v395
      %v1092 = vunpack.c.l.b16 %v397
      %v1093 = vunpack.c.l.b16 %v398
      %v1094 = vunpack.c.l.b16 %v400
      %v1095 = vunpack.c.l.b16 %v401
      %v1096 = vunpack.c.l.b16 %v403
      %v1097 = vunpack.c.l.b16 %v404
      %v1098 = vunpack.c.l.b16 %v406
      %v1099 = vunpack.c.l.b16 %v407
      %v1100 = vpack.c.b16 %v1069, %v1068
      %v1101 = vpack.c.b16 %v1071, %v1070
      %v1102 = vpack.c.b16 %v1073, %v1072
      %v1103 = vpack.c.b16 %v1075, %v1074
      %v1104 = vpack.c.b16 %v1077, %v1076
      %v1105 = vpack.c.b16 %v1079, %v1078
      %v1106 = vpack.c.b16 %v1081, %v1080
      %v1107 = vpack.c.b16 %v1083, %v1082
      %v1108 = vpack.c.b16 %v1085, %v1084
      %v1109 = vpack.c.b16 %v1087, %v1086
      %v1110 = vpack.c.b16 %v1089, %v1088
      %v1111 = vpack.c.b16 %v1091, %v1090
      %v1112 = vpack.c.b16 %v1093, %v1092
      %v1113 = vpack.c.b16 %v1095, %v1094
      %v1114 = vpack.c.b16 %v1097, %v1096
      %v1115 = vpack.c.b16 %v1099, %v1098
      %v1148 = vunpack.c.l.b16 %v415
      %v1149 = vunpack.c.l.b16 %v416
      %v1150 = vunpack.c.l.b16 %v417
      %v1151 = vunpack.c.l.b16 %v418
      %v1152 = vunpack.c.l.b16 %v419
      %v1153 = vunpack.c.l.b16 %v420
      %v1154 = vunpack.c.l.b16 %v421
      %v1155 = vunpack.c.l.b16 %v422
      %v1156 = vunpack.c.l.b16 %v423
      %v1157 = vunpack.c.l.b16 %v424
      %v1158 = vunpack.c.l.b16 %v425
      %v1159 = vunpack.c.l.b16 %v426
      %v1160 = vunpack.c.l.b16 %v427
      %v1161 = vunpack.c.l.b16 %v428
      %v1162 = vunpack.c.l.b16 %v429
      %v1163 = vunpack.c.l.b16 %v430
      %v1164 = vpack.c.b16 %v1149, %v1148
      %v1165 = vpack.c.b16 %v1151, %v1150
      %v1166 = vpack.c.b16 %v1153, %v1152
      %v1167 = vpack.c.b16 %v1155, %v1154
      %v1168 = vpack.c.b16 %v1157, %v1156
      %v1169 = vpack.c.b16 %v1159, %v1158
      %v1170 = vpack.c.b16 %v1161, %v1160
      %v1171 = vpack.c.b16 %v1163, %v1162
      %1180 = vmatpush.bf16.msra.mxu0 %v1171
      %1181 = vmatpush.bf16.msra.mxu0 %v1170
      %1182 = vmatpush.bf16.msra.mxu0 %v1169
      %1183 = vmatpush.bf16.msra.mxu0 %v1168
      %1184 = vmatpush.bf16.msra.mxu0 %v1167
      %1185 = vmatpush.bf16.msra.mxu0 %v1166
      %1186 = vmatpush.bf16.msra.mxu0 %v1165
      %1187 = vmatpush.bf16.msra.mxu0 %v1164
      %1188 = vmatmul.bf16.gmra.mxu0 %v1100
      %v1189 = vpop.f32.mrf.mxu0
      %v1190 = vadd.f32 %v957, %v1189
      %v1191 = vpop.f32.mrf.mxu0
      %v1192 = vadd.f32 %v959, %v1191
      %1193 = vmatmul.bf16.gmra.mxu0 %v1101
      %v1194 = vpop.f32.mrf.mxu0
      %v1195 = vadd.f32 %v962, %v1194
      %v1196 = vpop.f32.mrf.mxu0
      %v1197 = vadd.f32 %v964, %v1196
      %1198 = vmatmul.bf16.gmra.mxu0 %v1102
      %v1199 = vpop.f32.mrf.mxu0
      %v1200 = vadd.f32 %v967, %v1199
      %v1201 = vpop.f32.mrf.mxu0
      %v1202 = vadd.f32 %v969, %v1201
      %1203 = vmatmul.bf16.gmra.mxu0 %v1103
      %v1204 = vpop.f32.mrf.mxu0
      %v1205 = vadd.f32 %v972, %v1204
      %v1206 = vpop.f32.mrf.mxu0
      %v1207 = vadd.f32 %v974, %v1206
      %1208 = vmatmul.bf16.gmra.mxu0 %v1104
      %v1209 = vpop.f32.mrf.mxu0
      %v1210 = vadd.f32 %v977, %v1209
      %v1211 = vpop.f32.mrf.mxu0
      %v1212 = vadd.f32 %v979, %v1211
      %1213 = vmatmul.bf16.gmra.mxu0 %v1105
      %v1214 = vpop.f32.mrf.mxu0
      %v1215 = vadd.f32 %v982, %v1214
      %v1216 = vpop.f32.mrf.mxu0
      %v1217 = vadd.f32 %v984, %v1216
      %1218 = vmatmul.bf16.gmra.mxu0 %v1106
      %v1219 = vpop.f32.mrf.mxu0
      %v1220 = vadd.f32 %v987, %v1219
      %v1221 = vpop.f32.mrf.mxu0
      %v1222 = vadd.f32 %v989, %v1221
      %1223 = vmatmul.bf16.gmra.mxu0 %v1107
      %v1224 = vpop.f32.mrf.mxu0
      %v1225 = vadd.f32 %v992, %v1224
      %v1226 = vpop.f32.mrf.mxu0
      %v1227 = vadd.f32 %v994, %v1226
      %1228 = vmatmul.bf16.gmra.mxu0 %v1108
      %v1229 = vpop.f32.mrf.mxu0
      %v1230 = vadd.f32 %v997, %v1229
      %v1231 = vpop.f32.mrf.mxu0
      %v1232 = vadd.f32 %v999, %v1231
      %1233 = vmatmul.bf16.gmra.mxu0 %v1109
      %v1234 = vpop.f32.mrf.mxu0
      %v1235 = vadd.f32 %v1002, %v1234
      %v1236 = vpop.f32.mrf.mxu0
      %v1237 = vadd.f32 %v1004, %v1236
      %1238 = vmatmul.bf16.gmra.mxu0 %v1110
      %v1239 = vpop.f32.mrf.mxu0
      %v1240 = vadd.f32 %v1007, %v1239
      %v1241 = vpop.f32.mrf.mxu0
      %v1242 = vadd.f32 %v1009, %v1241
      %1243 = vmatmul.bf16.gmra.mxu0 %v1111
      %v1244 = vpop.f32.mrf.mxu0
      %v1245 = vadd.f32 %v1012, %v1244
      %v1246 = vpop.f32.mrf.mxu0
      %v1247 = vadd.f32 %v1014, %v1246
      %1248 = vmatmul.bf16.gmra.mxu0 %v1112
      %v1249 = vpop.f32.mrf.mxu0
      %v1250 = vadd.f32 %v1017, %v1249
      %v1251 = vpop.f32.mrf.mxu0
      %v1252 = vadd.f32 %v1019, %v1251
      %1253 = vmatmul.bf16.gmra.mxu0 %v1113
      %v1254 = vpop.f32.mrf.mxu0
      %v1255 = vadd.f32 %v1022, %v1254
      %v1256 = vpop.f32.mrf.mxu0
      %v1257 = vadd.f32 %v1024, %v1256
      %1258 = vmatmul.bf16.gmra.mxu0 %v1114
      %v1259 = vpop.f32.mrf.mxu0
      %v1260 = vadd.f32 %v1027, %v1259
      %v1261 = vpop.f32.mrf.mxu0
      %v1262 = vadd.f32 %v1029, %v1261
      %1263 = vmatmul.bf16.gmra.mxu0 %v1115
      %v1264 = vpop.f32.mrf.mxu0
      %v1265 = vadd.f32 %v1032, %v1264
      %v1266 = vpop.f32.mrf.mxu0
      %v1267 = vadd.f32 %v1034, %v1266
      %1268 = vdwg.mxu0
      %vm1285 = vcmask 1042432
      %vm1286 = vcmask 1046532
      %vm1287 = vmor %vm1285, %vm1286
      %v1288 = vrot.slane %v361, 5
      %v1289 = vrot.slane %v1288, 4
      %v1290 = vrot.slane %v362, 5
      %v1291 = vsel %vm1287, %v1289, %v1290
      %v1292 = vrot.slane %v1290, 4
      %v1293 = vrot.slane %v363, 5
      %v1294 = vsel %vm1287, %v1292, %v1293
      %v1295 = vrot.slane %v364, 5
      %v1296 = vrot.slane %v1295, 4
      %v1297 = vrot.slane %v365, 5
      %v1298 = vsel %vm1287, %v1296, %v1297
      %v1299 = vrot.slane %v1297, 4
      %v1300 = vrot.slane %v366, 5
      %v1301 = vsel %vm1287, %v1299, %v1300
      %v1302 = vrot.slane %v367, 5
      %v1303 = vrot.slane %v1302, 4
      %v1304 = vrot.slane %v368, 5
      %v1305 = vsel %vm1287, %v1303, %v1304
      %v1306 = vrot.slane %v1304, 4
      %v1307 = vrot.slane %v369, 5
      %v1308 = vsel %vm1287, %v1306, %v1307
      %v1309 = vrot.slane %v370, 5
      %v1310 = vrot.slane %v1309, 4
      %v1311 = vrot.slane %v371, 5
      %v1312 = vsel %vm1287, %v1310, %v1311
      %v1313 = vrot.slane %v1311, 4
      %v1314 = vrot.slane %v372, 5
      %v1315 = vsel %vm1287, %v1313, %v1314
      %v1316 = vrot.slane %v373, 5
      %v1317 = vrot.slane %v1316, 4
      %v1318 = vrot.slane %v374, 5
      %v1319 = vsel %vm1287, %v1317, %v1318
      %v1320 = vrot.slane %v1318, 4
      %v1321 = vrot.slane %v375, 5
      %v1322 = vsel %vm1287, %v1320, %v1321
      %v1323 = vrot.slane %v376, 5
      %v1324 = vrot.slane %v1323, 4
      %v1325 = vrot.slane %v377, 5
      %v1326 = vsel %vm1287, %v1324, %v1325
      %v1327 = vrot.slane %v1325, 4
      %v1328 = vrot.slane %v378, 5
      %v1329 = vsel %vm1287, %v1327, %v1328
      %v1330 = vrot.slane %v379, 5
      %v1331 = vrot.slane %v1330, 4
      %v1332 = vrot.slane %v380, 5
      %v1333 = vsel %vm1287, %v1331, %v1332
      %v1334 = vrot.slane %v1332, 4
      %v1335 = vrot.slane %v381, 5
      %v1336 = vsel %vm1287, %v1334, %v1335
      %v1337 = vrot.slane %v382, 5
      %v1338 = vrot.slane %v1337, 4
      %v1339 = vrot.slane %v383, 5
      %v1340 = vsel %vm1287, %v1338, %v1339
      %v1341 = vrot.slane %v1339, 4
      %v1342 = vrot.slane %v384, 5
      %v1343 = vsel %vm1287, %v1341, %v1342
      %v1344 = vrot.slane %v385, 5
      %v1345 = vrot.slane %v1344, 4
      %v1346 = vrot.slane %v386, 5
      %v1347 = vsel %vm1287, %v1345, %v1346
      %v1348 = vrot.slane %v1346, 4
      %v1349 = vrot.slane %v387, 5
      %v1350 = vsel %vm1287, %v1348, %v1349
      %v1351 = vrot.slane %v388, 5
      %v1352 = vrot.slane %v1351, 4
      %v1353 = vrot.slane %v389, 5
      %v1354 = vsel %vm1287, %v1352, %v1353
      %v1355 = vrot.slane %v1353, 4
      %v1356 = vrot.slane %v390, 5
      %v1357 = vsel %vm1287, %v1355, %v1356
      %v1358 = vrot.slane %v391, 5
      %v1359 = vrot.slane %v1358, 4
      %v1360 = vrot.slane %v392, 5
      %v1361 = vsel %vm1287, %v1359, %v1360
      %v1362 = vrot.slane %v1360, 4
      %v1363 = vrot.slane %v393, 5
      %v1364 = vsel %vm1287, %v1362, %v1363
      %v1365 = vrot.slane %v394, 5
      %v1366 = vrot.slane %v1365, 4
      %v1367 = vrot.slane %v395, 5
      %v1368 = vsel %vm1287, %v1366, %v1367
      %v1369 = vrot.slane %v1367, 4
      %v1370 = vrot.slane %v396, 5
      %v1371 = vsel %vm1287, %v1369, %v1370
      %v1372 = vrot.slane %v397, 5
      %v1373 = vrot.slane %v1372, 4
      %v1374 = vrot.slane %v398, 5
      %v1375 = vsel %vm1287, %v1373, %v1374
      %v1376 = vrot.slane %v1374, 4
      %v1377 = vrot.slane %v399, 5
      %v1378 = vsel %vm1287, %v1376, %v1377
      %v1379 = vrot.slane %v400, 5
      %v1380 = vrot.slane %v1379, 4
      %v1381 = vrot.slane %v401, 5
      %v1382 = vsel %vm1287, %v1380, %v1381
      %v1383 = vrot.slane %v1381, 4
      %v1384 = vrot.slane %v402, 5
      %v1385 = vsel %vm1287, %v1383, %v1384
      %v1386 = vrot.slane %v403, 5
      %v1387 = vrot.slane %v1386, 4
      %v1388 = vrot.slane %v404, 5
      %v1389 = vsel %vm1287, %v1387, %v1388
      %v1390 = vrot.slane %v1388, 4
      %v1391 = vrot.slane %v405, 5
      %v1392 = vsel %vm1287, %v1390, %v1391
      %v1393 = vrot.slane %v406, 5
      %v1394 = vrot.slane %v1393, 4
      %v1395 = vrot.slane %v407, 5
      %v1396 = vsel %vm1287, %v1394, %v1395
      %v1397 = vrot.slane %v1395, 4
      %v1398 = vrot.slane %v408, 5
      %v1399 = vsel %vm1287, %v1397, %v1398
      %s1400 = scalar_lea.vmem %s1, 128
      %v1401 = vld [vmem:[%s1400] sm:$0xf]
      %v1402 = vld [vmem:[%s1400 + $0x4] sm:$0xf]
      %v1403 = vld [vmem:[%s1400 + $0x8] sm:$0xf]
      %v1404 = vld [vmem:[%s1400 + $0xc] sm:$0xf]
      %v1405 = vld [vmem:[%s1400 + $0x10] sm:$0xf]
      %v1406 = vld [vmem:[%s1400 + $0x14] sm:$0xf]
      %v1407 = vld [vmem:[%s1400 + $0x18] sm:$0xf]
      %v1408 = vld [vmem:[%s1400 + $0x1c] sm:$0xf]
      %v1409 = vld [vmem:[%s1400 + $0x20] sm:$0xf]
      %v1410 = vld [vmem:[%s1400 + $0x24] sm:$0xf]
      %v1411 = vld [vmem:[%s1400 + $0x28] sm:$0xf]
      %v1412 = vld [vmem:[%s1400 + $0x2c] sm:$0xf]
      %v1413 = vld [vmem:[%s1400 + $0x30] sm:$0xf]
      %v1414 = vld [vmem:[%s1400 + $0x34] sm:$0xf]
      %v1415 = vld [vmem:[%s1400 + $0x38] sm:$0xf]
      %v1416 = vld [vmem:[%s1400 + $0x3c] sm:$0xf]
      %v1417 = vunpack.c.l.b16 %v1291
      %v1418 = vunpack.c.l.b16 %v1294
      %v1419 = vunpack.c.l.b16 %v1298
      %v1420 = vunpack.c.l.b16 %v1301
      %v1421 = vunpack.c.l.b16 %v1305
      %v1422 = vunpack.c.l.b16 %v1308
      %v1423 = vunpack.c.l.b16 %v1312
      %v1424 = vunpack.c.l.b16 %v1315
      %v1425 = vunpack.c.l.b16 %v1319
      %v1426 = vunpack.c.l.b16 %v1322
      %v1427 = vunpack.c.l.b16 %v1326
      %v1428 = vunpack.c.l.b16 %v1329
      %v1429 = vunpack.c.l.b16 %v1333
      %v1430 = vunpack.c.l.b16 %v1336
      %v1431 = vunpack.c.l.b16 %v1340
      %v1432 = vunpack.c.l.b16 %v1343
      %v1433 = vunpack.c.l.b16 %v1347
      %v1434 = vunpack.c.l.b16 %v1350
      %v1435 = vunpack.c.l.b16 %v1354
      %v1436 = vunpack.c.l.b16 %v1357
      %v1437 = vunpack.c.l.b16 %v1361
      %v1438 = vunpack.c.l.b16 %v1364
      %v1439 = vunpack.c.l.b16 %v1368
      %v1440 = vunpack.c.l.b16 %v1371
      %v1441 = vunpack.c.l.b16 %v1375
      %v1442 = vunpack.c.l.b16 %v1378
      %v1443 = vunpack.c.l.b16 %v1382
      %v1444 = vunpack.c.l.b16 %v1385
      %v1445 = vunpack.c.l.b16 %v1389
      %v1446 = vunpack.c.l.b16 %v1392
      %v1447 = vunpack.c.l.b16 %v1396
      %v1448 = vunpack.c.l.b16 %v1399
      %v1449 = vpack.c.b16 %v1418, %v1417
      %v1450 = vpack.c.b16 %v1420, %v1419
      %v1451 = vpack.c.b16 %v1422, %v1421
      %v1452 = vpack.c.b16 %v1424, %v1423
      %v1453 = vpack.c.b16 %v1426, %v1425
      %v1454 = vpack.c.b16 %v1428, %v1427
      %v1455 = vpack.c.b16 %v1430, %v1429
      %v1456 = vpack.c.b16 %v1432, %v1431
      %v1457 = vpack.c.b16 %v1434, %v1433
      %v1458 = vpack.c.b16 %v1436, %v1435
      %v1459 = vpack.c.b16 %v1438, %v1437
      %v1460 = vpack.c.b16 %v1440, %v1439
      %v1461 = vpack.c.b16 %v1442, %v1441
      %v1462 = vpack.c.b16 %v1444, %v1443
      %v1463 = vpack.c.b16 %v1446, %v1445
      %v1464 = vpack.c.b16 %v1448, %v1447
      %v1497 = vunpack.c.l.b16 %v1401
      %v1498 = vunpack.c.l.b16 %v1402
      %v1499 = vunpack.c.l.b16 %v1403
      %v1500 = vunpack.c.l.b16 %v1404
      %v1501 = vunpack.c.l.b16 %v1405
      %v1502 = vunpack.c.l.b16 %v1406
      %v1503 = vunpack.c.l.b16 %v1407
      %v1504 = vunpack.c.l.b16 %v1408
      %v1505 = vunpack.c.l.b16 %v1409
      %v1506 = vunpack.c.l.b16 %v1410
      %v1507 = vunpack.c.l.b16 %v1411
      %v1508 = vunpack.c.l.b16 %v1412
      %v1509 = vunpack.c.l.b16 %v1413
      %v1510 = vunpack.c.l.b16 %v1414
      %v1511 = vunpack.c.l.b16 %v1415
      %v1512 = vunpack.c.l.b16 %v1416
      %v1513 = vpack.c.b16 %v1498, %v1497
      %v1514 = vpack.c.b16 %v1500, %v1499
      %v1515 = vpack.c.b16 %v1502, %v1501
      %v1516 = vpack.c.b16 %v1504, %v1503
      %v1517 = vpack.c.b16 %v1506, %v1505
      %v1518 = vpack.c.b16 %v1508, %v1507
      %v1519 = vpack.c.b16 %v1510, %v1509
      %v1520 = vpack.c.b16 %v1512, %v1511
      %1529 = vmatpush.bf16.msra.mxu0 %v1520
      %1530 = vmatpush.bf16.msra.mxu0 %v1519
      %1531 = vmatpush.bf16.msra.mxu0 %v1518
      %1532 = vmatpush.bf16.msra.mxu0 %v1517
      %1533 = vmatpush.bf16.msra.mxu0 %v1516
      %1534 = vmatpush.bf16.msra.mxu0 %v1515
      %1535 = vmatpush.bf16.msra.mxu0 %v1514
      %1536 = vmatpush.bf16.msra.mxu0 %v1513
      %1537 = vmatmul.bf16.gmra.mxu0 %v1449
      %v1538 = vpop.f32.mrf.mxu0
      %v1539 = vadd.f32 0.0, %v1538
      %v1540 = vpop.f32.mrf.mxu0
      %v1541 = vadd.f32 0.0, %v1540
      %1542 = vmatmul.bf16.gmra.mxu0 %v1450
      %v1543 = vpop.f32.mrf.mxu0
      %v1544 = vadd.f32 0.0, %v1543
      %v1545 = vpop.f32.mrf.mxu0
      %v1546 = vadd.f32 0.0, %v1545
      %1547 = vmatmul.bf16.gmra.mxu0 %v1451
      %v1548 = vpop.f32.mrf.mxu0
      %v1549 = vadd.f32 0.0, %v1548
      %v1550 = vpop.f32.mrf.mxu0
      %v1551 = vadd.f32 0.0, %v1550
      %1552 = vmatmul.bf16.gmra.mxu0 %v1452
      %v1553 = vpop.f32.mrf.mxu0
      %v1554 = vadd.f32 0.0, %v1553
      %v1555 = vpop.f32.mrf.mxu0
      %v1556 = vadd.f32 0.0, %v1555
      %1557 = vmatmul.bf16.gmra.mxu0 %v1453
      %v1558 = vpop.f32.mrf.mxu0
      %v1559 = vadd.f32 0.0, %v1558
      %v1560 = vpop.f32.mrf.mxu0
      %v1561 = vadd.f32 0.0, %v1560
      %1562 = vmatmul.bf16.gmra.mxu0 %v1454
      %v1563 = vpop.f32.mrf.mxu0
      %v1564 = vadd.f32 0.0, %v1563
      %v1565 = vpop.f32.mrf.mxu0
      %v1566 = vadd.f32 0.0, %v1565
      %1567 = vmatmul.bf16.gmra.mxu0 %v1455
      %v1568 = vpop.f32.mrf.mxu0
      %v1569 = vadd.f32 0.0, %v1568
      %v1570 = vpop.f32.mrf.mxu0
      %v1571 = vadd.f32 0.0, %v1570
      %1572 = vmatmul.bf16.gmra.mxu0 %v1456
      %v1573 = vpop.f32.mrf.mxu0
      %v1574 = vadd.f32 0.0, %v1573
      %v1575 = vpop.f32.mrf.mxu0
      %v1576 = vadd.f32 0.0, %v1575
      %1577 = vmatmul.bf16.gmra.mxu0 %v1457
      %v1578 = vpop.f32.mrf.mxu0
      %v1579 = vadd.f32 0.0, %v1578
      %v1580 = vpop.f32.mrf.mxu0
      %v1581 = vadd.f32 0.0, %v1580
      %1582 = vmatmul.bf16.gmra.mxu0 %v1458
      %v1583 = vpop.f32.mrf.mxu0
      %v1584 = vadd.f32 0.0, %v1583
      %v1585 = vpop.f32.mrf.mxu0
      %v1586 = vadd.f32 0.0, %v1585
      %1587 = vmatmul.bf16.gmra.mxu0 %v1459
      %v1588 = vpop.f32.mrf.mxu0
      %v1589 = vadd.f32 0.0, %v1588
      %v1590 = vpop.f32.mrf.mxu0
      %v1591 = vadd.f32 0.0, %v1590
      %1592 = vmatmul.bf16.gmra.mxu0 %v1460
      %v1593 = vpop.f32.mrf.mxu0
      %v1594 = vadd.f32 0.0, %v1593
      %v1595 = vpop.f32.mrf.mxu0
      %v1596 = vadd.f32 0.0, %v1595
      %1597 = vmatmul.bf16.gmra.mxu0 %v1461
      %v1598 = vpop.f32.mrf.mxu0
      %v1599 = vadd.f32 0.0, %v1598
      %v1600 = vpop.f32.mrf.mxu0
      %v1601 = vadd.f32 0.0, %v1600
      %1602 = vmatmul.bf16.gmra.mxu0 %v1462
      %v1603 = vpop.f32.mrf.mxu0
      %v1604 = vadd.f32 0.0, %v1603
      %v1605 = vpop.f32.mrf.mxu0
      %v1606 = vadd.f32 0.0, %v1605
      %1607 = vmatmul.bf16.gmra.mxu0 %v1463
      %v1608 = vpop.f32.mrf.mxu0
      %v1609 = vadd.f32 0.0, %v1608
      %v1610 = vpop.f32.mrf.mxu0
      %v1611 = vadd.f32 0.0, %v1610
      %1612 = vmatmul.bf16.gmra.mxu0 %v1464
      %v1613 = vpop.f32.mrf.mxu0
      %v1614 = vadd.f32 0.0, %v1613
      %v1615 = vpop.f32.mrf.mxu0
      %v1616 = vadd.f32 0.0, %v1615
      %1617 = vdwg.mxu0
      %v1618 = vadd.f32 %v1190, %v1539
      %v1619 = vadd.f32 %v1192, %v1541
      %v1620 = vadd.f32 %v1195, %v1544
      %v1621 = vadd.f32 %v1197, %v1546
      %v1622 = vadd.f32 %v1200, %v1549
      %v1623 = vadd.f32 %v1202, %v1551
      %v1624 = vadd.f32 %v1205, %v1554
      %v1625 = vadd.f32 %v1207, %v1556
      %v1626 = vadd.f32 %v1210, %v1559
      %v1627 = vadd.f32 %v1212, %v1561
      %v1628 = vadd.f32 %v1215, %v1564
      %v1629 = vadd.f32 %v1217, %v1566
      %v1630 = vadd.f32 %v1220, %v1569
      %v1631 = vadd.f32 %v1222, %v1571
      %v1632 = vadd.f32 %v1225, %v1574
      %v1633 = vadd.f32 %v1227, %v1576
      %v1634 = vadd.f32 %v1230, %v1579
      %v1635 = vadd.f32 %v1232, %v1581
      %v1636 = vadd.f32 %v1235, %v1584
      %v1637 = vadd.f32 %v1237, %v1586
      %v1638 = vadd.f32 %v1240, %v1589
      %v1639 = vadd.f32 %v1242, %v1591
      %v1640 = vadd.f32 %v1245, %v1594
      %v1641 = vadd.f32 %v1247, %v1596
      %v1642 = vadd.f32 %v1250, %v1599
      %v1643 = vadd.f32 %v1252, %v1601
      %v1644 = vadd.f32 %v1255, %v1604
      %v1645 = vadd.f32 %v1257, %v1606
      %v1646 = vadd.f32 %v1260, %v1609
      %v1647 = vadd.f32 %v1262, %v1611
      %v1648 = vadd.f32 %v1265, %v1614
      %v1649 = vadd.f32 %v1267, %v1616
      %s1650 = scalar_lea.vmem %s1, 192
      %v1651 = vld [vmem:[%s1650] sm:$0xf]
      %v1652 = vld [vmem:[%s1650 + $0x4] sm:$0xf]
      %v1653 = vld [vmem:[%s1650 + $0x8] sm:$0xf]
      %v1654 = vld [vmem:[%s1650 + $0xc] sm:$0xf]
      %v1655 = vld [vmem:[%s1650 + $0x10] sm:$0xf]
      %v1656 = vld [vmem:[%s1650 + $0x14] sm:$0xf]
      %v1657 = vld [vmem:[%s1650 + $0x18] sm:$0xf]
      %v1658 = vld [vmem:[%s1650 + $0x1c] sm:$0xf]
      %v1659 = vld [vmem:[%s1650 + $0x20] sm:$0xf]
      %v1660 = vld [vmem:[%s1650 + $0x24] sm:$0xf]
      %v1661 = vld [vmem:[%s1650 + $0x28] sm:$0xf]
      %v1662 = vld [vmem:[%s1650 + $0x2c] sm:$0xf]
      %v1663 = vld [vmem:[%s1650 + $0x30] sm:$0xf]
      %v1664 = vld [vmem:[%s1650 + $0x34] sm:$0xf]
      %v1665 = vld [vmem:[%s1650 + $0x38] sm:$0xf]
      %v1666 = vld [vmem:[%s1650 + $0x3c] sm:$0xf]
      %v1669 = vunpack.c.l.b16 %v409
      %v1670 = vunpack.c.l.b16 %v410
      %v1671 = vpack.c.b16 %v1670, %v1669
      %v1689 = vunpack.c.l.b16 %v1651
      %v1690 = vunpack.c.l.b16 %v1652
      %v1691 = vunpack.c.l.b16 %v1653
      %v1692 = vunpack.c.l.b16 %v1654
      %v1693 = vunpack.c.l.b16 %v1655
      %v1694 = vunpack.c.l.b16 %v1656
      %v1695 = vunpack.c.l.b16 %v1657
      %v1696 = vunpack.c.l.b16 %v1658
      %v1697 = vunpack.c.l.b16 %v1659
      %v1698 = vunpack.c.l.b16 %v1660
      %v1699 = vunpack.c.l.b16 %v1661
      %v1700 = vunpack.c.l.b16 %v1662
      %v1701 = vunpack.c.l.b16 %v1663
      %v1702 = vunpack.c.l.b16 %v1664
      %v1703 = vunpack.c.l.b16 %v1665
      %v1704 = vunpack.c.l.b16 %v1666
      %v1705 = vpack.c.b16 %v1690, %v1689
      %v1706 = vpack.c.b16 %v1692, %v1691
      %v1707 = vpack.c.b16 %v1694, %v1693
      %v1708 = vpack.c.b16 %v1696, %v1695
      %v1709 = vpack.c.b16 %v1698, %v1697
      %v1710 = vpack.c.b16 %v1700, %v1699
      %v1711 = vpack.c.b16 %v1702, %v1701
      %v1712 = vpack.c.b16 %v1704, %v1703
      %1721 = vmatpush.bf16.msra.mxu0 %v1712
      %1722 = vmatpush.bf16.msra.mxu0 %v1711
      %1723 = vmatpush.bf16.msra.mxu0 %v1710
      %1724 = vmatpush.bf16.msra.mxu0 %v1709
      %1725 = vmatpush.bf16.msra.mxu0 %v1708
      %1726 = vmatpush.bf16.msra.mxu0 %v1707
      %1727 = vmatpush.bf16.msra.mxu0 %v1706
      %1728 = vmatpush.bf16.msra.mxu0 %v1705
      %1729 = vmatmul.bf16.gmra.mxu0 %v1101
      %v1730 = vpop.f32.mrf.mxu0
      %v1731 = vadd.f32 0.0, %v1730
      %v1732 = vpop.f32.mrf.mxu0
      %v1733 = vadd.f32 0.0, %v1732
      %1734 = vmatmul.bf16.gmra.mxu0 %v1102
      %v1735 = vpop.f32.mrf.mxu0
      %v1736 = vadd.f32 0.0, %v1735
      %v1737 = vpop.f32.mrf.mxu0
      %v1738 = vadd.f32 0.0, %v1737
      %1739 = vmatmul.bf16.gmra.mxu0 %v1103
      %v1740 = vpop.f32.mrf.mxu0
      %v1741 = vadd.f32 0.0, %v1740
      %v1742 = vpop.f32.mrf.mxu0
      %v1743 = vadd.f32 0.0, %v1742
      %1744 = vmatmul.bf16.gmra.mxu0 %v1104
      %v1745 = vpop.f32.mrf.mxu0
      %v1746 = vadd.f32 0.0, %v1745
      %v1747 = vpop.f32.mrf.mxu0
      %v1748 = vadd.f32 0.0, %v1747
      %1749 = vmatmul.bf16.gmra.mxu0 %v1105
      %v1750 = vpop.f32.mrf.mxu0
      %v1751 = vadd.f32 0.0, %v1750
      %v1752 = vpop.f32.mrf.mxu0
      %v1753 = vadd.f32 0.0, %v1752
      %1754 = vmatmul.bf16.gmra.mxu0 %v1106
      %v1755 = vpop.f32.mrf.mxu0
      %v1756 = vadd.f32 0.0, %v1755
      %v1757 = vpop.f32.mrf.mxu0
      %v1758 = vadd.f32 0.0, %v1757
      %1759 = vmatmul.bf16.gmra.mxu0 %v1107
      %v1760 = vpop.f32.mrf.mxu0
      %v1761 = vadd.f32 0.0, %v1760
      %v1762 = vpop.f32.mrf.mxu0
      %v1763 = vadd.f32 0.0, %v1762
      %1764 = vmatmul.bf16.gmra.mxu0 %v1108
      %v1765 = vpop.f32.mrf.mxu0
      %v1766 = vadd.f32 0.0, %v1765
      %v1767 = vpop.f32.mrf.mxu0
      %v1768 = vadd.f32 0.0, %v1767
      %1769 = vmatmul.bf16.gmra.mxu0 %v1109
      %v1770 = vpop.f32.mrf.mxu0
      %v1771 = vadd.f32 0.0, %v1770
      %v1772 = vpop.f32.mrf.mxu0
      %v1773 = vadd.f32 0.0, %v1772
      %1774 = vmatmul.bf16.gmra.mxu0 %v1110
      %v1775 = vpop.f32.mrf.mxu0
      %v1776 = vadd.f32 0.0, %v1775
      %v1777 = vpop.f32.mrf.mxu0
      %v1778 = vadd.f32 0.0, %v1777
      %1779 = vmatmul.bf16.gmra.mxu0 %v1111
      %v1780 = vpop.f32.mrf.mxu0
      %v1781 = vadd.f32 0.0, %v1780
      %v1782 = vpop.f32.mrf.mxu0
      %v1783 = vadd.f32 0.0, %v1782
      %1784 = vmatmul.bf16.gmra.mxu0 %v1112
      %v1785 = vpop.f32.mrf.mxu0
      %v1786 = vadd.f32 0.0, %v1785
      %v1787 = vpop.f32.mrf.mxu0
      %v1788 = vadd.f32 0.0, %v1787
      %1789 = vmatmul.bf16.gmra.mxu0 %v1113
      %v1790 = vpop.f32.mrf.mxu0
      %v1791 = vadd.f32 0.0, %v1790
      %v1792 = vpop.f32.mrf.mxu0
      %v1793 = vadd.f32 0.0, %v1792
      %1794 = vmatmul.bf16.gmra.mxu0 %v1114
      %v1795 = vpop.f32.mrf.mxu0
      %v1796 = vadd.f32 0.0, %v1795
      %v1797 = vpop.f32.mrf.mxu0
      %v1798 = vadd.f32 0.0, %v1797
      %1799 = vmatmul.bf16.gmra.mxu0 %v1115
      %v1800 = vpop.f32.mrf.mxu0
      %v1801 = vadd.f32 0.0, %v1800
      %v1802 = vpop.f32.mrf.mxu0
      %v1803 = vadd.f32 0.0, %v1802
      %1804 = vmatmul.bf16.gmra.mxu0 %v1671
      %v1805 = vpop.f32.mrf.mxu0
      %v1806 = vadd.f32 0.0, %v1805
      %v1807 = vpop.f32.mrf.mxu0
      %v1808 = vadd.f32 0.0, %v1807
      %1809 = vdwg.mxu0
      %v1810 = vadd.f32 %v1618, %v1731
      %v1811 = vadd.f32 %v1619, %v1733
      %v1812 = vadd.f32 %v1620, %v1736
      %v1813 = vadd.f32 %v1621, %v1738
      %v1814 = vadd.f32 %v1622, %v1741
      %v1815 = vadd.f32 %v1623, %v1743
      %v1816 = vadd.f32 %v1624, %v1746
      %v1817 = vadd.f32 %v1625, %v1748
      %v1818 = vadd.f32 %v1626, %v1751
      %v1819 = vadd.f32 %v1627, %v1753
      %v1820 = vadd.f32 %v1628, %v1756
      %v1821 = vadd.f32 %v1629, %v1758
      %v1822 = vadd.f32 %v1630, %v1761
      %v1823 = vadd.f32 %v1631, %v1763
      %v1824 = vadd.f32 %v1632, %v1766
      %v1825 = vadd.f32 %v1633, %v1768
      %v1826 = vadd.f32 %v1634, %v1771
      %v1827 = vadd.f32 %v1635, %v1773
      %v1828 = vadd.f32 %v1636, %v1776
      %v1829 = vadd.f32 %v1637, %v1778
      %v1830 = vadd.f32 %v1638, %v1781
      %v1831 = vadd.f32 %v1639, %v1783
      %v1832 = vadd.f32 %v1640, %v1786
      %v1833 = vadd.f32 %v1641, %v1788
      %v1834 = vadd.f32 %v1642, %v1791
      %v1835 = vadd.f32 %v1643, %v1793
      %v1836 = vadd.f32 %v1644, %v1796
      %v1837 = vadd.f32 %v1645, %v1798
      %v1838 = vadd.f32 %v1646, %v1801
      %v1839 = vadd.f32 %v1647, %v1803
      %v1840 = vadd.f32 %v1648, %v1806
      %v1841 = vadd.f32 %v1649, %v1808
      %v1843 = vshrl.u32 %v409, 16
      %v1845 = vrot.slane %v1843, 4
      %v1846 = vshll.u32 %v409, 16
      %v1848 = vrot.slane %v1846, 5
      %v1849 = vor.u32 %v1845, %v1848
      %v1850 = vrot.slane %v1849, 4
      %v1852 = vshll.u32 %v410, 16
      %v1854 = vrot.slane %v1852, 5
      %v1855 = vsel %vm433, %v1850, %v1854
      %v1856 = vshrl.u32 %v410, 16
      %v1858 = vrot.slane %v1856, 4
      %v1859 = vor.u32 %v1858, %v1854
      %v1860 = vrot.slane %v1859, 4
      %v1862 = vshll.u32 %v411, 16
      %v1864 = vrot.slane %v1862, 5
      %v1865 = vsel %vm433, %v1860, %v1864
      %s1866 = scalar_lea.vmem %s1, 256
      %v1867 = vld [vmem:[%s1866] sm:$0xf]
      %v1868 = vld [vmem:[%s1866 + $0x4] sm:$0xf]
      %v1869 = vld [vmem:[%s1866 + $0x8] sm:$0xf]
      %v1870 = vld [vmem:[%s1866 + $0xc] sm:$0xf]
      %v1871 = vld [vmem:[%s1866 + $0x10] sm:$0xf]
      %v1872 = vld [vmem:[%s1866 + $0x14] sm:$0xf]
      %v1873 = vld [vmem:[%s1866 + $0x18] sm:$0xf]
      %v1874 = vld [vmem:[%s1866 + $0x1c] sm:$0xf]
      %v1875 = vld [vmem:[%s1866 + $0x20] sm:$0xf]
      %v1876 = vld [vmem:[%s1866 + $0x24] sm:$0xf]
      %v1877 = vld [vmem:[%s1866 + $0x28] sm:$0xf]
      %v1878 = vld [vmem:[%s1866 + $0x2c] sm:$0xf]
      %v1879 = vld [vmem:[%s1866 + $0x30] sm:$0xf]
      %v1880 = vld [vmem:[%s1866 + $0x34] sm:$0xf]
      %v1881 = vld [vmem:[%s1866 + $0x38] sm:$0xf]
      %v1882 = vld [vmem:[%s1866 + $0x3c] sm:$0xf]
      %v1883 = vunpack.c.l.b16 %v1855
      %v1884 = vunpack.c.l.b16 %v1865
      %v1885 = vpack.c.b16 %v1884, %v1883
      %v1903 = vunpack.c.l.b16 %v1867
      %v1904 = vunpack.c.l.b16 %v1868
      %v1905 = vunpack.c.l.b16 %v1869
      %v1906 = vunpack.c.l.b16 %v1870
      %v1907 = vunpack.c.l.b16 %v1871
      %v1908 = vunpack.c.l.b16 %v1872
      %v1909 = vunpack.c.l.b16 %v1873
      %v1910 = vunpack.c.l.b16 %v1874
      %v1911 = vunpack.c.l.b16 %v1875
      %v1912 = vunpack.c.l.b16 %v1876
      %v1913 = vunpack.c.l.b16 %v1877
      %v1914 = vunpack.c.l.b16 %v1878
      %v1915 = vunpack.c.l.b16 %v1879
      %v1916 = vunpack.c.l.b16 %v1880
      %v1917 = vunpack.c.l.b16 %v1881
      %v1918 = vunpack.c.l.b16 %v1882
      %v1919 = vpack.c.b16 %v1904, %v1903
      %v1920 = vpack.c.b16 %v1906, %v1905
      %v1921 = vpack.c.b16 %v1908, %v1907
      %v1922 = vpack.c.b16 %v1910, %v1909
      %v1923 = vpack.c.b16 %v1912, %v1911
      %v1924 = vpack.c.b16 %v1914, %v1913
      %v1925 = vpack.c.b16 %v1916, %v1915
      %v1926 = vpack.c.b16 %v1918, %v1917
      %1935 = vmatpush.bf16.msra.mxu0 %v1926
      %1936 = vmatpush.bf16.msra.mxu0 %v1925
      %1937 = vmatpush.bf16.msra.mxu0 %v1924
      %1938 = vmatpush.bf16.msra.mxu0 %v1923
      %1939 = vmatpush.bf16.msra.mxu0 %v1922
      %1940 = vmatpush.bf16.msra.mxu0 %v1921
      %1941 = vmatpush.bf16.msra.mxu0 %v1920
      %1942 = vmatpush.bf16.msra.mxu0 %v1919
      %1943 = vmatmul.bf16.gmra.mxu0 %v868
      %v1944 = vpop.f32.mrf.mxu0
      %v1945 = vadd.f32 0.0, %v1944
      %v1946 = vpop.f32.mrf.mxu0
      %v1947 = vadd.f32 0.0, %v1946
      %1948 = vmatmul.bf16.gmra.mxu0 %v869
      %v1949 = vpop.f32.mrf.mxu0
      %v1950 = vadd.f32 0.0, %v1949
      %v1951 = vpop.f32.mrf.mxu0
      %v1952 = vadd.f32 0.0, %v1951
      %1953 = vmatmul.bf16.gmra.mxu0 %v870
      %v1954 = vpop.f32.mrf.mxu0
      %v1955 = vadd.f32 0.0, %v1954
      %v1956 = vpop.f32.mrf.mxu0
      %v1957 = vadd.f32 0.0, %v1956
      %1958 = vmatmul.bf16.gmra.mxu0 %v871
      %v1959 = vpop.f32.mrf.mxu0
      %v1960 = vadd.f32 0.0, %v1959
      %v1961 = vpop.f32.mrf.mxu0
      %v1962 = vadd.f32 0.0, %v1961
      %1963 = vmatmul.bf16.gmra.mxu0 %v872
      %v1964 = vpop.f32.mrf.mxu0
      %v1965 = vadd.f32 0.0, %v1964
      %v1966 = vpop.f32.mrf.mxu0
      %v1967 = vadd.f32 0.0, %v1966
      %1968 = vmatmul.bf16.gmra.mxu0 %v873
      %v1969 = vpop.f32.mrf.mxu0
      %v1970 = vadd.f32 0.0, %v1969
      %v1971 = vpop.f32.mrf.mxu0
      %v1972 = vadd.f32 0.0, %v1971
      %1973 = vmatmul.bf16.gmra.mxu0 %v874
      %v1974 = vpop.f32.mrf.mxu0
      %v1975 = vadd.f32 0.0, %v1974
      %v1976 = vpop.f32.mrf.mxu0
      %v1977 = vadd.f32 0.0, %v1976
      %1978 = vmatmul.bf16.gmra.mxu0 %v875
      %v1979 = vpop.f32.mrf.mxu0
      %v1980 = vadd.f32 0.0, %v1979
      %v1981 = vpop.f32.mrf.mxu0
      %v1982 = vadd.f32 0.0, %v1981
      %1983 = vmatmul.bf16.gmra.mxu0 %v876
      %v1984 = vpop.f32.mrf.mxu0
      %v1985 = vadd.f32 0.0, %v1984
      %v1986 = vpop.f32.mrf.mxu0
      %v1987 = vadd.f32 0.0, %v1986
      %1988 = vmatmul.bf16.gmra.mxu0 %v877
      %v1989 = vpop.f32.mrf.mxu0
      %v1990 = vadd.f32 0.0, %v1989
      %v1991 = vpop.f32.mrf.mxu0
      %v1992 = vadd.f32 0.0, %v1991
      %1993 = vmatmul.bf16.gmra.mxu0 %v878
      %v1994 = vpop.f32.mrf.mxu0
      %v1995 = vadd.f32 0.0, %v1994
      %v1996 = vpop.f32.mrf.mxu0
      %v1997 = vadd.f32 0.0, %v1996
      %1998 = vmatmul.bf16.gmra.mxu0 %v879
      %v1999 = vpop.f32.mrf.mxu0
      %v2000 = vadd.f32 0.0, %v1999
      %v2001 = vpop.f32.mrf.mxu0
      %v2002 = vadd.f32 0.0, %v2001
      %2003 = vmatmul.bf16.gmra.mxu0 %v880
      %v2004 = vpop.f32.mrf.mxu0
      %v2005 = vadd.f32 0.0, %v2004
      %v2006 = vpop.f32.mrf.mxu0
      %v2007 = vadd.f32 0.0, %v2006
      %2008 = vmatmul.bf16.gmra.mxu0 %v881
      %v2009 = vpop.f32.mrf.mxu0
      %v2010 = vadd.f32 0.0, %v2009
      %v2011 = vpop.f32.mrf.mxu0
      %v2012 = vadd.f32 0.0, %v2011
      %2013 = vmatmul.bf16.gmra.mxu0 %v882
      %v2014 = vpop.f32.mrf.mxu0
      %v2015 = vadd.f32 0.0, %v2014
      %v2016 = vpop.f32.mrf.mxu0
      %v2017 = vadd.f32 0.0, %v2016
      %2018 = vmatmul.bf16.gmra.mxu0 %v1885
      %v2019 = vpop.f32.mrf.mxu0
      %v2020 = vadd.f32 0.0, %v2019
      %v2021 = vpop.f32.mrf.mxu0
      %v2022 = vadd.f32 0.0, %v2021
      %2023 = vdwg.mxu0
      %v2024 = vadd.f32 %v1810, %v1945
      %v2025 = vadd.f32 %v1811, %v1947
      %v2026 = vadd.f32 %v1812, %v1950
      %v2027 = vadd.f32 %v1813, %v1952
      %v2028 = vadd.f32 %v1814, %v1955
      %v2029 = vadd.f32 %v1815, %v1957
      %v2030 = vadd.f32 %v1816, %v1960
      %v2031 = vadd.f32 %v1817, %v1962
      %v2032 = vadd.f32 %v1818, %v1965
      %v2033 = vadd.f32 %v1819, %v1967
      %v2034 = vadd.f32 %v1820, %v1970
      %v2035 = vadd.f32 %v1821, %v1972
      %v2036 = vadd.f32 %v1822, %v1975
      %v2037 = vadd.f32 %v1823, %v1977
      %v2038 = vadd.f32 %v1824, %v1980
      %v2039 = vadd.f32 %v1825, %v1982
      %v2040 = vadd.f32 %v1826, %v1985
      %v2041 = vadd.f32 %v1827, %v1987
      %v2042 = vadd.f32 %v1828, %v1990
      %v2043 = vadd.f32 %v1829, %v1992
      %v2044 = vadd.f32 %v1830, %v1995
      %v2045 = vadd.f32 %v1831, %v1997
      %v2046 = vadd.f32 %v1832, %v2000
      %v2047 = vadd.f32 %v1833, %v2002
      %v2048 = vadd.f32 %v1834, %v2005
      %v2049 = vadd.f32 %v1835, %v2007
      %v2050 = vadd.f32 %v1836, %v2010
      %v2051 = vadd.f32 %v1837, %v2012
      %v2052 = vadd.f32 %v1838, %v2015
      %v2053 = vadd.f32 %v1839, %v2017
      %v2054 = vadd.f32 %v1840, %v2020
      %v2055 = vadd.f32 %v1841, %v2022
      %v2057 = vrot.slane %v409, 5
      %v2058 = vrot.slane %v2057, 4
      %v2059 = vrot.slane %v410, 5
      %v2060 = vsel %vm1287, %v2058, %v2059
      %v2061 = vrot.slane %v2059, 4
      %v2062 = vrot.slane %v411, 5
      %v2063 = vsel %vm1287, %v2061, %v2062
      %s2064 = scalar_lea.vmem %s1, 320
      %v2065 = vld [vmem:[%s2064] sm:$0xf]
      %v2066 = vld [vmem:[%s2064 + $0x4] sm:$0xf]
      %v2067 = vld [vmem:[%s2064 + $0x8] sm:$0xf]
      %v2068 = vld [vmem:[%s2064 + $0xc] sm:$0xf]
      %v2069 = vld [vmem:[%s2064 + $0x10] sm:$0xf]
      %v2070 = vld [vmem:[%s2064 + $0x14] sm:$0xf]
      %v2071 = vld [vmem:[%s2064 + $0x18] sm:$0xf]
      %v2072 = vld [vmem:[%s2064 + $0x1c] sm:$0xf]
      %v2073 = vld [vmem:[%s2064 + $0x20] sm:$0xf]
      %v2074 = vld [vmem:[%s2064 + $0x24] sm:$0xf]
      %v2075 = vld [vmem:[%s2064 + $0x28] sm:$0xf]
      %v2076 = vld [vmem:[%s2064 + $0x2c] sm:$0xf]
      %v2077 = vld [vmem:[%s2064 + $0x30] sm:$0xf]
      %v2078 = vld [vmem:[%s2064 + $0x34] sm:$0xf]
      %v2079 = vld [vmem:[%s2064 + $0x38] sm:$0xf]
      %v2080 = vld [vmem:[%s2064 + $0x3c] sm:$0xf]
      %v2081 = vunpack.c.l.b16 %v2060
      %v2082 = vunpack.c.l.b16 %v2063
      %v2083 = vpack.c.b16 %v2082, %v2081
      %v2101 = vunpack.c.l.b16 %v2065
      %v2102 = vunpack.c.l.b16 %v2066
      %v2103 = vunpack.c.l.b16 %v2067
      %v2104 = vunpack.c.l.b16 %v2068
      %v2105 = vunpack.c.l.b16 %v2069
      %v2106 = vunpack.c.l.b16 %v2070
      %v2107 = vunpack.c.l.b16 %v2071
      %v2108 = vunpack.c.l.b16 %v2072
      %v2109 = vunpack.c.l.b16 %v2073
      %v2110 = vunpack.c.l.b16 %v2074
      %v2111 = vunpack.c.l.b16 %v2075
      %v2112 = vunpack.c.l.b16 %v2076
      %v2113 = vunpack.c.l.b16 %v2077
      %v2114 = vunpack.c.l.b16 %v2078
      %v2115 = vunpack.c.l.b16 %v2079
      %v2116 = vunpack.c.l.b16 %v2080
      %v2117 = vpack.c.b16 %v2102, %v2101
      %v2118 = vpack.c.b16 %v2104, %v2103
      %v2119 = vpack.c.b16 %v2106, %v2105
      %v2120 = vpack.c.b16 %v2108, %v2107
      %v2121 = vpack.c.b16 %v2110, %v2109
      %v2122 = vpack.c.b16 %v2112, %v2111
      %v2123 = vpack.c.b16 %v2114, %v2113
      %v2124 = vpack.c.b16 %v2116, %v2115
      %2133 = vmatpush.bf16.msra.mxu0 %v2124
      %2134 = vmatpush.bf16.msra.mxu0 %v2123
      %2135 = vmatpush.bf16.msra.mxu0 %v2122
      %2136 = vmatpush.bf16.msra.mxu0 %v2121
      %2137 = vmatpush.bf16.msra.mxu0 %v2120
      %2138 = vmatpush.bf16.msra.mxu0 %v2119
      %2139 = vmatpush.bf16.msra.mxu0 %v2118
      %2140 = vmatpush.bf16.msra.mxu0 %v2117
      %2141 = vmatmul.bf16.gmra.mxu0 %v1450
      %v2142 = vpop.f32.mrf.mxu0
      %v2143 = vadd.f32 0.0, %v2142
      %v2144 = vpop.f32.mrf.mxu0
      %v2145 = vadd.f32 0.0, %v2144
      %2146 = vmatmul.bf16.gmra.mxu0 %v1451
      %v2147 = vpop.f32.mrf.mxu0
      %v2148 = vadd.f32 0.0, %v2147
      %v2149 = vpop.f32.mrf.mxu0
      %v2150 = vadd.f32 0.0, %v2149
      %2151 = vmatmul.bf16.gmra.mxu0 %v1452
      %v2152 = vpop.f32.mrf.mxu0
      %v2153 = vadd.f32 0.0, %v2152
      %v2154 = vpop.f32.mrf.mxu0
      %v2155 = vadd.f32 0.0, %v2154
      %2156 = vmatmul.bf16.gmra.mxu0 %v1453
      %v2157 = vpop.f32.mrf.mxu0
      %v2158 = vadd.f32 0.0, %v2157
      %v2159 = vpop.f32.mrf.mxu0
      %v2160 = vadd.f32 0.0, %v2159
      %2161 = vmatmul.bf16.gmra.mxu0 %v1454
      %v2162 = vpop.f32.mrf.mxu0
      %v2163 = vadd.f32 0.0, %v2162
      %v2164 = vpop.f32.mrf.mxu0
      %v2165 = vadd.f32 0.0, %v2164
      %2166 = vmatmul.bf16.gmra.mxu0 %v1455
      %v2167 = vpop.f32.mrf.mxu0
      %v2168 = vadd.f32 0.0, %v2167
      %v2169 = vpop.f32.mrf.mxu0
      %v2170 = vadd.f32 0.0, %v2169
      %2171 = vmatmul.bf16.gmra.mxu0 %v1456
      %v2172 = vpop.f32.mrf.mxu0
      %v2173 = vadd.f32 0.0, %v2172
      %v2174 = vpop.f32.mrf.mxu0
      %v2175 = vadd.f32 0.0, %v2174
      %2176 = vmatmul.bf16.gmra.mxu0 %v1457
      %v2177 = vpop.f32.mrf.mxu0
      %v2178 = vadd.f32 0.0, %v2177
      %v2179 = vpop.f32.mrf.mxu0
      %v2180 = vadd.f32 0.0, %v2179
      %2181 = vmatmul.bf16.gmra.mxu0 %v1458
      %v2182 = vpop.f32.mrf.mxu0
      %v2183 = vadd.f32 0.0, %v2182
      %v2184 = vpop.f32.mrf.mxu0
      %v2185 = vadd.f32 0.0, %v2184
      %2186 = vmatmul.bf16.gmra.mxu0 %v1459
      %v2187 = vpop.f32.mrf.mxu0
      %v2188 = vadd.f32 0.0, %v2187
      %v2189 = vpop.f32.mrf.mxu0
      %v2190 = vadd.f32 0.0, %v2189
      %2191 = vmatmul.bf16.gmra.mxu0 %v1460
      %v2192 = vpop.f32.mrf.mxu0
      %v2193 = vadd.f32 0.0, %v2192
      %v2194 = vpop.f32.mrf.mxu0
      %v2195 = vadd.f32 0.0, %v2194
      %2196 = vmatmul.bf16.gmra.mxu0 %v1461
      %v2197 = vpop.f32.mrf.mxu0
      %v2198 = vadd.f32 0.0, %v2197
      %v2199 = vpop.f32.mrf.mxu0
      %v2200 = vadd.f32 0.0, %v2199
      %2201 = vmatmul.bf16.gmra.mxu0 %v1462
      %v2202 = vpop.f32.mrf.mxu0
      %v2203 = vadd.f32 0.0, %v2202
      %v2204 = vpop.f32.mrf.mxu0
      %v2205 = vadd.f32 0.0, %v2204
      %2206 = vmatmul.bf16.gmra.mxu0 %v1463
      %v2207 = vpop.f32.mrf.mxu0
      %v2208 = vadd.f32 0.0, %v2207
      %v2209 = vpop.f32.mrf.mxu0
      %v2210 = vadd.f32 0.0, %v2209
      %2211 = vmatmul.bf16.gmra.mxu0 %v1464
      %v2212 = vpop.f32.mrf.mxu0
      %v2213 = vadd.f32 0.0, %v2212
      %v2214 = vpop.f32.mrf.mxu0
      %v2215 = vadd.f32 0.0, %v2214
      %2216 = vmatmul.bf16.gmra.mxu0 %v2083
      %v2217 = vpop.f32.mrf.mxu0
      %v2218 = vadd.f32 0.0, %v2217
      %v2219 = vpop.f32.mrf.mxu0
      %v2220 = vadd.f32 0.0, %v2219
      %2221 = vdwg.mxu0
      %v2222 = vadd.f32 %v2024, %v2143
      %v2223 = vadd.f32 %v2025, %v2145
      %v2224 = vadd.f32 %v2026, %v2148
      %v2225 = vadd.f32 %v2027, %v2150
      %v2226 = vadd.f32 %v2028, %v2153
      %v2227 = vadd.f32 %v2029, %v2155
      %v2228 = vadd.f32 %v2030, %v2158
      %v2229 = vadd.f32 %v2031, %v2160
      %v2230 = vadd.f32 %v2032, %v2163
      %v2231 = vadd.f32 %v2033, %v2165
      %v2232 = vadd.f32 %v2034, %v2168
      %v2233 = vadd.f32 %v2035, %v2170
      %v2234 = vadd.f32 %v2036, %v2173
      %v2235 = vadd.f32 %v2037, %v2175
      %v2236 = vadd.f32 %v2038, %v2178
      %v2237 = vadd.f32 %v2039, %v2180
      %v2238 = vadd.f32 %v2040, %v2183
      %v2239 = vadd.f32 %v2041, %v2185
      %v2240 = vadd.f32 %v2042, %v2188
      %v2241 = vadd.f32 %v2043, %v2190
      %v2242 = vadd.f32 %v2044, %v2193
      %v2243 = vadd.f32 %v2045, %v2195
      %v2244 = vadd.f32 %v2046, %v2198
      %v2245 = vadd.f32 %v2047, %v2200
      %v2246 = vadd.f32 %v2048, %v2203
      %v2247 = vadd.f32 %v2049, %v2205
      %v2248 = vadd.f32 %v2050, %v2208
      %v2249 = vadd.f32 %v2051, %v2210
      %v2250 = vadd.f32 %v2052, %v2213
      %v2251 = vadd.f32 %v2053, %v2215
      %v2252 = vadd.f32 %v2054, %v2218
      %v2253 = vadd.f32 %v2055, %v2220
      %s2254 = scalar_lea.vmem %s1, 384
      %v2255 = vld [vmem:[%s2254] sm:$0xf]
      %v2256 = vld [vmem:[%s2254 + $0x4] sm:$0xf]
      %v2257 = vld [vmem:[%s2254 + $0x8] sm:$0xf]
      %v2258 = vld [vmem:[%s2254 + $0xc] sm:$0xf]
      %v2259 = vld [vmem:[%s2254 + $0x10] sm:$0xf]
      %v2260 = vld [vmem:[%s2254 + $0x14] sm:$0xf]
      %v2261 = vld [vmem:[%s2254 + $0x18] sm:$0xf]
      %v2262 = vld [vmem:[%s2254 + $0x1c] sm:$0xf]
      %v2263 = vld [vmem:[%s2254 + $0x20] sm:$0xf]
      %v2264 = vld [vmem:[%s2254 + $0x24] sm:$0xf]
      %v2265 = vld [vmem:[%s2254 + $0x28] sm:$0xf]
      %v2266 = vld [vmem:[%s2254 + $0x2c] sm:$0xf]
      %v2267 = vld [vmem:[%s2254 + $0x30] sm:$0xf]
      %v2268 = vld [vmem:[%s2254 + $0x34] sm:$0xf]
      %v2269 = vld [vmem:[%s2254 + $0x38] sm:$0xf]
      %v2270 = vld [vmem:[%s2254 + $0x3c] sm:$0xf]
      %v2273 = vunpack.c.l.b16 %v412
      %v2274 = vunpack.c.l.b16 %v413
      %v2275 = vpack.c.b16 %v2274, %v2273
      %v2293 = vunpack.c.l.b16 %v2255
      %v2294 = vunpack.c.l.b16 %v2256
      %v2295 = vunpack.c.l.b16 %v2257
      %v2296 = vunpack.c.l.b16 %v2258
      %v2297 = vunpack.c.l.b16 %v2259
      %v2298 = vunpack.c.l.b16 %v2260
      %v2299 = vunpack.c.l.b16 %v2261
      %v2300 = vunpack.c.l.b16 %v2262
      %v2301 = vunpack.c.l.b16 %v2263
      %v2302 = vunpack.c.l.b16 %v2264
      %v2303 = vunpack.c.l.b16 %v2265
      %v2304 = vunpack.c.l.b16 %v2266
      %v2305 = vunpack.c.l.b16 %v2267
      %v2306 = vunpack.c.l.b16 %v2268
      %v2307 = vunpack.c.l.b16 %v2269
      %v2308 = vunpack.c.l.b16 %v2270
      %v2309 = vpack.c.b16 %v2294, %v2293
      %v2310 = vpack.c.b16 %v2296, %v2295
      %v2311 = vpack.c.b16 %v2298, %v2297
      %v2312 = vpack.c.b16 %v2300, %v2299
      %v2313 = vpack.c.b16 %v2302, %v2301
      %v2314 = vpack.c.b16 %v2304, %v2303
      %v2315 = vpack.c.b16 %v2306, %v2305
      %v2316 = vpack.c.b16 %v2308, %v2307
      %2325 = vmatpush.bf16.msra.mxu0 %v2316
      %2326 = vmatpush.bf16.msra.mxu0 %v2315
      %2327 = vmatpush.bf16.msra.mxu0 %v2314
      %2328 = vmatpush.bf16.msra.mxu0 %v2313
      %2329 = vmatpush.bf16.msra.mxu0 %v2312
      %2330 = vmatpush.bf16.msra.mxu0 %v2311
      %2331 = vmatpush.bf16.msra.mxu0 %v2310
      %2332 = vmatpush.bf16.msra.mxu0 %v2309
      %2333 = vmatmul.bf16.gmra.mxu0 %v1102
      %v2334 = vpop.f32.mrf.mxu0
      %v2335 = vadd.f32 0.0, %v2334
      %v2336 = vpop.f32.mrf.mxu0
      %v2337 = vadd.f32 0.0, %v2336
      %2338 = vmatmul.bf16.gmra.mxu0 %v1103
      %v2339 = vpop.f32.mrf.mxu0
      %v2340 = vadd.f32 0.0, %v2339
      %v2341 = vpop.f32.mrf.mxu0
      %v2342 = vadd.f32 0.0, %v2341
      %2343 = vmatmul.bf16.gmra.mxu0 %v1104
      %v2344 = vpop.f32.mrf.mxu0
      %v2345 = vadd.f32 0.0, %v2344
      %v2346 = vpop.f32.mrf.mxu0
      %v2347 = vadd.f32 0.0, %v2346
      %2348 = vmatmul.bf16.gmra.mxu0 %v1105
      %v2349 = vpop.f32.mrf.mxu0
      %v2350 = vadd.f32 0.0, %v2349
      %v2351 = vpop.f32.mrf.mxu0
      %v2352 = vadd.f32 0.0, %v2351
      %2353 = vmatmul.bf16.gmra.mxu0 %v1106
      %v2354 = vpop.f32.mrf.mxu0
      %v2355 = vadd.f32 0.0, %v2354
      %v2356 = vpop.f32.mrf.mxu0
      %v2357 = vadd.f32 0.0, %v2356
      %2358 = vmatmul.bf16.gmra.mxu0 %v1107
      %v2359 = vpop.f32.mrf.mxu0
      %v2360 = vadd.f32 0.0, %v2359
      %v2361 = vpop.f32.mrf.mxu0
      %v2362 = vadd.f32 0.0, %v2361
      %2363 = vmatmul.bf16.gmra.mxu0 %v1108
      %v2364 = vpop.f32.mrf.mxu0
      %v2365 = vadd.f32 0.0, %v2364
      %v2366 = vpop.f32.mrf.mxu0
      %v2367 = vadd.f32 0.0, %v2366
      %2368 = vmatmul.bf16.gmra.mxu0 %v1109
      %v2369 = vpop.f32.mrf.mxu0
      %v2370 = vadd.f32 0.0, %v2369
      %v2371 = vpop.f32.mrf.mxu0
      %v2372 = vadd.f32 0.0, %v2371
      %2373 = vmatmul.bf16.gmra.mxu0 %v1110
      %v2374 = vpop.f32.mrf.mxu0
      %v2375 = vadd.f32 0.0, %v2374
      %v2376 = vpop.f32.mrf.mxu0
      %v2377 = vadd.f32 0.0, %v2376
      %2378 = vmatmul.bf16.gmra.mxu0 %v1111
      %v2379 = vpop.f32.mrf.mxu0
      %v2380 = vadd.f32 0.0, %v2379
      %v2381 = vpop.f32.mrf.mxu0
      %v2382 = vadd.f32 0.0, %v2381
      %2383 = vmatmul.bf16.gmra.mxu0 %v1112
      %v2384 = vpop.f32.mrf.mxu0
      %v2385 = vadd.f32 0.0, %v2384
      %v2386 = vpop.f32.mrf.mxu0
      %v2387 = vadd.f32 0.0, %v2386
      %2388 = vmatmul.bf16.gmra.mxu0 %v1113
      %v2389 = vpop.f32.mrf.mxu0
      %v2390 = vadd.f32 0.0, %v2389
      %v2391 = vpop.f32.mrf.mxu0
      %v2392 = vadd.f32 0.0, %v2391
      %2393 = vmatmul.bf16.gmra.mxu0 %v1114
      %v2394 = vpop.f32.mrf.mxu0
      %v2395 = vadd.f32 0.0, %v2394
      %v2396 = vpop.f32.mrf.mxu0
      %v2397 = vadd.f32 0.0, %v2396
      %2398 = vmatmul.bf16.gmra.mxu0 %v1115
      %v2399 = vpop.f32.mrf.mxu0
      %v2400 = vadd.f32 0.0, %v2399
      %v2401 = vpop.f32.mrf.mxu0
      %v2402 = vadd.f32 0.0, %v2401
      %2403 = vmatmul.bf16.gmra.mxu0 %v1671
      %v2404 = vpop.f32.mrf.mxu0
      %v2405 = vadd.f32 0.0, %v2404
      %v2406 = vpop.f32.mrf.mxu0
      %v2407 = vadd.f32 0.0, %v2406
      %2408 = vmatmul.bf16.gmra.mxu0 %v2275
      %v2409 = vpop.f32.mrf.mxu0
      %v2410 = vadd.f32 0.0, %v2409
      %v2411 = vpop.f32.mrf.mxu0
      %v2412 = vadd.f32 0.0, %v2411
      %2413 = vdwg.mxu0
      %v2414 = vadd.f32 %v2222, %v2335
      %v2415 = vadd.f32 %v2223, %v2337
      %v2416 = vadd.f32 %v2224, %v2340
      %v2417 = vadd.f32 %v2225, %v2342
      %v2418 = vadd.f32 %v2226, %v2345
      %v2419 = vadd.f32 %v2227, %v2347
      %v2420 = vadd.f32 %v2228, %v2350
      %v2421 = vadd.f32 %v2229, %v2352
      %v2422 = vadd.f32 %v2230, %v2355
      %v2423 = vadd.f32 %v2231, %v2357
      %v2424 = vadd.f32 %v2232, %v2360
      %v2425 = vadd.f32 %v2233, %v2362
      %v2426 = vadd.f32 %v2234, %v2365
      %v2427 = vadd.f32 %v2235, %v2367
      %v2428 = vadd.f32 %v2236, %v2370
      %v2429 = vadd.f32 %v2237, %v2372
      %v2430 = vadd.f32 %v2238, %v2375
      %v2431 = vadd.f32 %v2239, %v2377
      %v2432 = vadd.f32 %v2240, %v2380
      %v2433 = vadd.f32 %v2241, %v2382
      %v2434 = vadd.f32 %v2242, %v2385
      %v2435 = vadd.f32 %v2243, %v2387
      %v2436 = vadd.f32 %v2244, %v2390
      %v2437 = vadd.f32 %v2245, %v2392
      %v2438 = vadd.f32 %v2246, %v2395
      %v2439 = vadd.f32 %v2247, %v2397
      %v2440 = vadd.f32 %v2248, %v2400
      %v2441 = vadd.f32 %v2249, %v2402
      %v2442 = vadd.f32 %v2250, %v2405
      %v2443 = vadd.f32 %v2251, %v2407
      %v2444 = vadd.f32 %v2252, %v2410
      %v2445 = vadd.f32 %v2253, %v2412
      %v2447 = vshrl.u32 %v412, 16
      %v2449 = vrot.slane %v2447, 4
      %v2450 = vshll.u32 %v412, 16
      %v2452 = vrot.slane %v2450, 5
      %v2453 = vor.u32 %v2449, %v2452
      %v2454 = vrot.slane %v2453, 4
      %v2456 = vshll.u32 %v413, 16
      %v2458 = vrot.slane %v2456, 5
      %v2459 = vsel %vm433, %v2454, %v2458
      %v2460 = vshrl.u32 %v413, 16
      %v2462 = vrot.slane %v2460, 4
      %v2463 = vor.u32 %v2462, %v2458
      %v2464 = vrot.slane %v2463, 4
      %v2466 = vshll.u32 %v414, 16
      %v2468 = vrot.slane %v2466, 5
      %v2469 = vsel %vm433, %v2464, %v2468
      %s2470 = scalar_lea.vmem %s1, 448
      %v2471 = vld [vmem:[%s2470] sm:$0xf]
      %v2472 = vld [vmem:[%s2470 + $0x4] sm:$0xf]
      %v2473 = vld [vmem:[%s2470 + $0x8] sm:$0xf]
      %v2474 = vld [vmem:[%s2470 + $0xc] sm:$0xf]
      %v2475 = vld [vmem:[%s2470 + $0x10] sm:$0xf]
      %v2476 = vld [vmem:[%s2470 + $0x14] sm:$0xf]
      %v2477 = vld [vmem:[%s2470 + $0x18] sm:$0xf]
      %v2478 = vld [vmem:[%s2470 + $0x1c] sm:$0xf]
      %v2479 = vld [vmem:[%s2470 + $0x20] sm:$0xf]
      %v2480 = vld [vmem:[%s2470 + $0x24] sm:$0xf]
      %v2481 = vld [vmem:[%s2470 + $0x28] sm:$0xf]
      %v2482 = vld [vmem:[%s2470 + $0x2c] sm:$0xf]
      %v2483 = vld [vmem:[%s2470 + $0x30] sm:$0xf]
      %v2484 = vld [vmem:[%s2470 + $0x34] sm:$0xf]
      %v2485 = vld [vmem:[%s2470 + $0x38] sm:$0xf]
      %v2486 = vld [vmem:[%s2470 + $0x3c] sm:$0xf]
      %v2487 = vunpack.c.l.b16 %v2459
      %v2488 = vunpack.c.l.b16 %v2469
      %v2489 = vpack.c.b16 %v2488, %v2487
      %v2507 = vunpack.c.l.b16 %v2471
      %v2508 = vunpack.c.l.b16 %v2472
      %v2509 = vunpack.c.l.b16 %v2473
      %v2510 = vunpack.c.l.b16 %v2474
      %v2511 = vunpack.c.l.b16 %v2475
      %v2512 = vunpack.c.l.b16 %v2476
      %v2513 = vunpack.c.l.b16 %v2477
      %v2514 = vunpack.c.l.b16 %v2478
      %v2515 = vunpack.c.l.b16 %v2479
      %v2516 = vunpack.c.l.b16 %v2480
      %v2517 = vunpack.c.l.b16 %v2481
      %v2518 = vunpack.c.l.b16 %v2482
      %v2519 = vunpack.c.l.b16 %v2483
      %v2520 = vunpack.c.l.b16 %v2484
      %v2521 = vunpack.c.l.b16 %v2485
      %v2522 = vunpack.c.l.b16 %v2486
      %v2523 = vpack.c.b16 %v2508, %v2507
      %v2524 = vpack.c.b16 %v2510, %v2509
      %v2525 = vpack.c.b16 %v2512, %v2511
      %v2526 = vpack.c.b16 %v2514, %v2513
      %v2527 = vpack.c.b16 %v2516, %v2515
      %v2528 = vpack.c.b16 %v2518, %v2517
      %v2529 = vpack.c.b16 %v2520, %v2519
      %v2530 = vpack.c.b16 %v2522, %v2521
      %2539 = vmatpush.bf16.msra.mxu0 %v2530
      %2540 = vmatpush.bf16.msra.mxu0 %v2529
      %2541 = vmatpush.bf16.msra.mxu0 %v2528
      %2542 = vmatpush.bf16.msra.mxu0 %v2527
      %2543 = vmatpush.bf16.msra.mxu0 %v2526
      %2544 = vmatpush.bf16.msra.mxu0 %v2525
      %2545 = vmatpush.bf16.msra.mxu0 %v2524
      %2546 = vmatpush.bf16.msra.mxu0 %v2523
      %2547 = vmatmul.bf16.gmra.mxu0 %v869
      %v2548 = vpop.f32.mrf.mxu0
      %v2549 = vadd.f32 0.0, %v2548
      %v2550 = vpop.f32.mrf.mxu0
      %v2551 = vadd.f32 0.0, %v2550
      %2552 = vmatmul.bf16.gmra.mxu0 %v870
      %v2553 = vpop.f32.mrf.mxu0
      %v2554 = vadd.f32 0.0, %v2553
      %v2555 = vpop.f32.mrf.mxu0
      %v2556 = vadd.f32 0.0, %v2555
      %2557 = vmatmul.bf16.gmra.mxu0 %v871
      %v2558 = vpop.f32.mrf.mxu0
      %v2559 = vadd.f32 0.0, %v2558
      %v2560 = vpop.f32.mrf.mxu0
      %v2561 = vadd.f32 0.0, %v2560
      %2562 = vmatmul.bf16.gmra.mxu0 %v872
      %v2563 = vpop.f32.mrf.mxu0
      %v2564 = vadd.f32 0.0, %v2563
      %v2565 = vpop.f32.mrf.mxu0
      %v2566 = vadd.f32 0.0, %v2565
      %2567 = vmatmul.bf16.gmra.mxu0 %v873
      %v2568 = vpop.f32.mrf.mxu0
      %v2569 = vadd.f32 0.0, %v2568
      %v2570 = vpop.f32.mrf.mxu0
      %v2571 = vadd.f32 0.0, %v2570
      %2572 = vmatmul.bf16.gmra.mxu0 %v874
      %v2573 = vpop.f32.mrf.mxu0
      %v2574 = vadd.f32 0.0, %v2573
      %v2575 = vpop.f32.mrf.mxu0
      %v2576 = vadd.f32 0.0, %v2575
      %2577 = vmatmul.bf16.gmra.mxu0 %v875
      %v2578 = vpop.f32.mrf.mxu0
      %v2579 = vadd.f32 0.0, %v2578
      %v2580 = vpop.f32.mrf.mxu0
      %v2581 = vadd.f32 0.0, %v2580
      %2582 = vmatmul.bf16.gmra.mxu0 %v876
      %v2583 = vpop.f32.mrf.mxu0
      %v2584 = vadd.f32 0.0, %v2583
      %v2585 = vpop.f32.mrf.mxu0
      %v2586 = vadd.f32 0.0, %v2585
      %2587 = vmatmul.bf16.gmra.mxu0 %v877
      %v2588 = vpop.f32.mrf.mxu0
      %v2589 = vadd.f32 0.0, %v2588
      %v2590 = vpop.f32.mrf.mxu0
      %v2591 = vadd.f32 0.0, %v2590
      %2592 = vmatmul.bf16.gmra.mxu0 %v878
      %v2593 = vpop.f32.mrf.mxu0
      %v2594 = vadd.f32 0.0, %v2593
      %v2595 = vpop.f32.mrf.mxu0
      %v2596 = vadd.f32 0.0, %v2595
      %2597 = vmatmul.bf16.gmra.mxu0 %v879
      %v2598 = vpop.f32.mrf.mxu0
      %v2599 = vadd.f32 0.0, %v2598
      %v2600 = vpop.f32.mrf.mxu0
      %v2601 = vadd.f32 0.0, %v2600
      %2602 = vmatmul.bf16.gmra.mxu0 %v880
      %v2603 = vpop.f32.mrf.mxu0
      %v2604 = vadd.f32 0.0, %v2603
      %v2605 = vpop.f32.mrf.mxu0
      %v2606 = vadd.f32 0.0, %v2605
      %2607 = vmatmul.bf16.gmra.mxu0 %v881
      %v2608 = vpop.f32.mrf.mxu0
      %v2609 = vadd.f32 0.0, %v2608
      %v2610 = vpop.f32.mrf.mxu0
      %v2611 = vadd.f32 0.0, %v2610
      %2612 = vmatmul.bf16.gmra.mxu0 %v882
      %v2613 = vpop.f32.mrf.mxu0
      %v2614 = vadd.f32 0.0, %v2613
      %v2615 = vpop.f32.mrf.mxu0
      %v2616 = vadd.f32 0.0, %v2615
      %2617 = vmatmul.bf16.gmra.mxu0 %v1885
      %v2618 = vpop.f32.mrf.mxu0
      %v2619 = vadd.f32 0.0, %v2618
      %v2620 = vpop.f32.mrf.mxu0
      %v2621 = vadd.f32 0.0, %v2620
      %2622 = vmatmul.bf16.gmra.mxu0 %v2489
      %v2623 = vpop.f32.mrf.mxu0
      %v2624 = vadd.f32 0.0, %v2623
      %v2625 = vpop.f32.mrf.mxu0
      %v2626 = vadd.f32 0.0, %v2625
      %2627 = vdwg.mxu0
      %v2628 = vadd.f32 %v2414, %v2549
      %v2629 = vadd.f32 %v2415, %v2551
      %v2630 = vadd.f32 %v2416, %v2554
      %v2631 = vadd.f32 %v2417, %v2556
      %v2632 = vadd.f32 %v2418, %v2559
      %v2633 = vadd.f32 %v2419, %v2561
      %v2634 = vadd.f32 %v2420, %v2564
      %v2635 = vadd.f32 %v2421, %v2566
      %v2636 = vadd.f32 %v2422, %v2569
      %v2637 = vadd.f32 %v2423, %v2571
      %v2638 = vadd.f32 %v2424, %v2574
      %v2639 = vadd.f32 %v2425, %v2576
      %v2640 = vadd.f32 %v2426, %v2579
      %v2641 = vadd.f32 %v2427, %v2581
      %v2642 = vadd.f32 %v2428, %v2584
      %v2643 = vadd.f32 %v2429, %v2586
      %v2644 = vadd.f32 %v2430, %v2589
      %v2645 = vadd.f32 %v2431, %v2591
      %v2646 = vadd.f32 %v2432, %v2594
      %v2647 = vadd.f32 %v2433, %v2596
      %v2648 = vadd.f32 %v2434, %v2599
      %v2649 = vadd.f32 %v2435, %v2601
      %v2650 = vadd.f32 %v2436, %v2604
      %v2651 = vadd.f32 %v2437, %v2606
      %v2652 = vadd.f32 %v2438, %v2609
      %v2653 = vadd.f32 %v2439, %v2611
      %v2654 = vadd.f32 %v2440, %v2614
      %v2655 = vadd.f32 %v2441, %v2616
      %v2656 = vadd.f32 %v2442, %v2619
      %v2657 = vadd.f32 %v2443, %v2621
      %v2658 = vadd.f32 %v2444, %v2624
      %v2659 = vadd.f32 %v2445, %v2626
      %v2661 = vrot.slane %v412, 5
      %v2662 = vrot.slane %v2661, 4
      %v2663 = vrot.slane %v413, 5
      %v2664 = vsel %vm1287, %v2662, %v2663
      %v2665 = vrot.slane %v2663, 4
      %v2666 = vrot.slane %v414, 5
      %v2667 = vsel %vm1287, %v2665, %v2666
      %s2668 = scalar_lea.vmem %s1, 512
      %v2669 = vld [vmem:[%s2668] sm:$0xf]
      %v2670 = vld [vmem:[%s2668 + $0x4] sm:$0xf]
      %v2671 = vld [vmem:[%s2668 + $0x8] sm:$0xf]
      %v2672 = vld [vmem:[%s2668 + $0xc] sm:$0xf]
      %v2673 = vld [vmem:[%s2668 + $0x10] sm:$0xf]
      %v2674 = vld [vmem:[%s2668 + $0x14] sm:$0xf]
      %v2675 = vld [vmem:[%s2668 + $0x18] sm:$0xf]
      %v2676 = vld [vmem:[%s2668 + $0x1c] sm:$0xf]
      %v2677 = vld [vmem:[%s2668 + $0x20] sm:$0xf]
      %v2678 = vld [vmem:[%s2668 + $0x24] sm:$0xf]
      %v2679 = vld [vmem:[%s2668 + $0x28] sm:$0xf]
      %v2680 = vld [vmem:[%s2668 + $0x2c] sm:$0xf]
      %v2681 = vld [vmem:[%s2668 + $0x30] sm:$0xf]
      %v2682 = vld [vmem:[%s2668 + $0x34] sm:$0xf]
      %v2683 = vld [vmem:[%s2668 + $0x38] sm:$0xf]
      %v2684 = vld [vmem:[%s2668 + $0x3c] sm:$0xf]
      %v2685 = vunpack.c.l.b16 %v2664
      %v2686 = vunpack.c.l.b16 %v2667
      %v2687 = vpack.c.b16 %v2686, %v2685
      %v2705 = vunpack.c.l.b16 %v2669
      %v2706 = vunpack.c.l.b16 %v2670
      %v2707 = vunpack.c.l.b16 %v2671
      %v2708 = vunpack.c.l.b16 %v2672
      %v2709 = vunpack.c.l.b16 %v2673
      %v2710 = vunpack.c.l.b16 %v2674
      %v2711 = vunpack.c.l.b16 %v2675
      %v2712 = vunpack.c.l.b16 %v2676
      %v2713 = vunpack.c.l.b16 %v2677
      %v2714 = vunpack.c.l.b16 %v2678
      %v2715 = vunpack.c.l.b16 %v2679
      %v2716 = vunpack.c.l.b16 %v2680
      %v2717 = vunpack.c.l.b16 %v2681
      %v2718 = vunpack.c.l.b16 %v2682
      %v2719 = vunpack.c.l.b16 %v2683
      %v2720 = vunpack.c.l.b16 %v2684
      %v2721 = vpack.c.b16 %v2706, %v2705
      %v2722 = vpack.c.b16 %v2708, %v2707
      %v2723 = vpack.c.b16 %v2710, %v2709
      %v2724 = vpack.c.b16 %v2712, %v2711
      %v2725 = vpack.c.b16 %v2714, %v2713
      %v2726 = vpack.c.b16 %v2716, %v2715
      %v2727 = vpack.c.b16 %v2718, %v2717
      %v2728 = vpack.c.b16 %v2720, %v2719
      %2737 = vmatpush.bf16.msra.mxu0 %v2728
      %2738 = vmatpush.bf16.msra.mxu0 %v2727
      %2739 = vmatpush.bf16.msra.mxu0 %v2726
      %2740 = vmatpush.bf16.msra.mxu0 %v2725
      %2741 = vmatpush.bf16.msra.mxu0 %v2724
      %2742 = vmatpush.bf16.msra.mxu0 %v2723
      %2743 = vmatpush.bf16.msra.mxu0 %v2722
      %2744 = vmatpush.bf16.msra.mxu0 %v2721
      %2745 = vmatmul.bf16.gmra.mxu0 %v1451
      %v2746 = vpop.f32.mrf.mxu0
      %v2747 = vadd.f32 0.0, %v2746
      %v2748 = vpop.f32.mrf.mxu0
      %v2749 = vadd.f32 0.0, %v2748
      %2750 = vmatmul.bf16.gmra.mxu0 %v1452
      %v2751 = vpop.f32.mrf.mxu0
      %v2752 = vadd.f32 0.0, %v2751
      %v2753 = vpop.f32.mrf.mxu0
      %v2754 = vadd.f32 0.0, %v2753
      %2755 = vmatmul.bf16.gmra.mxu0 %v1453
      %v2756 = vpop.f32.mrf.mxu0
      %v2757 = vadd.f32 0.0, %v2756
      %v2758 = vpop.f32.mrf.mxu0
      %v2759 = vadd.f32 0.0, %v2758
      %2760 = vmatmul.bf16.gmra.mxu0 %v1454
      %v2761 = vpop.f32.mrf.mxu0
      %v2762 = vadd.f32 0.0, %v2761
      %v2763 = vpop.f32.mrf.mxu0
      %v2764 = vadd.f32 0.0, %v2763
      %2765 = vmatmul.bf16.gmra.mxu0 %v1455
      %v2766 = vpop.f32.mrf.mxu0
      %v2767 = vadd.f32 0.0, %v2766
      %v2768 = vpop.f32.mrf.mxu0
      %v2769 = vadd.f32 0.0, %v2768
      %2770 = vmatmul.bf16.gmra.mxu0 %v1456
      %v2771 = vpop.f32.mrf.mxu0
      %v2772 = vadd.f32 0.0, %v2771
      %v2773 = vpop.f32.mrf.mxu0
      %v2774 = vadd.f32 0.0, %v2773
      %2775 = vmatmul.bf16.gmra.mxu0 %v1457
      %v2776 = vpop.f32.mrf.mxu0
      %v2777 = vadd.f32 0.0, %v2776
      %v2778 = vpop.f32.mrf.mxu0
      %v2779 = vadd.f32 0.0, %v2778
      %2780 = vmatmul.bf16.gmra.mxu0 %v1458
      %v2781 = vpop.f32.mrf.mxu0
      %v2782 = vadd.f32 0.0, %v2781
      %v2783 = vpop.f32.mrf.mxu0
      %v2784 = vadd.f32 0.0, %v2783
      %2785 = vmatmul.bf16.gmra.mxu0 %v1459
      %v2786 = vpop.f32.mrf.mxu0
      %v2787 = vadd.f32 0.0, %v2786
      %v2788 = vpop.f32.mrf.mxu0
      %v2789 = vadd.f32 0.0, %v2788
      %2790 = vmatmul.bf16.gmra.mxu0 %v1460
      %v2791 = vpop.f32.mrf.mxu0
      %v2792 = vadd.f32 0.0, %v2791
      %v2793 = vpop.f32.mrf.mxu0
      %v2794 = vadd.f32 0.0, %v2793
      %2795 = vmatmul.bf16.gmra.mxu0 %v1461
      %v2796 = vpop.f32.mrf.mxu0
      %v2797 = vadd.f32 0.0, %v2796
      %v2798 = vpop.f32.mrf.mxu0
      %v2799 = vadd.f32 0.0, %v2798
      %2800 = vmatmul.bf16.gmra.mxu0 %v1462
      %v2801 = vpop.f32.mrf.mxu0
      %v2802 = vadd.f32 0.0, %v2801
      %v2803 = vpop.f32.mrf.mxu0
      %v2804 = vadd.f32 0.0, %v2803
      %2805 = vmatmul.bf16.gmra.mxu0 %v1463
      %v2806 = vpop.f32.mrf.mxu0
      %v2807 = vadd.f32 0.0, %v2806
      %v2808 = vpop.f32.mrf.mxu0
      %v2809 = vadd.f32 0.0, %v2808
      %2810 = vmatmul.bf16.gmra.mxu0 %v1464
      %v2811 = vpop.f32.mrf.mxu0
      %v2812 = vadd.f32 0.0, %v2811
      %v2813 = vpop.f32.mrf.mxu0
      %v2814 = vadd.f32 0.0, %v2813
      %2815 = vmatmul.bf16.gmra.mxu0 %v2083
      %v2816 = vpop.f32.mrf.mxu0
      %v2817 = vadd.f32 0.0, %v2816
      %v2818 = vpop.f32.mrf.mxu0
      %v2819 = vadd.f32 0.0, %v2818
      %2820 = vmatmul.bf16.gmra.mxu0 %v2687
      %v2821 = vpop.f32.mrf.mxu0
      %v2822 = vadd.f32 0.0, %v2821
      %v2823 = vpop.f32.mrf.mxu0
      %v2824 = vadd.f32 0.0, %v2823
      %2825 = vdwg.mxu0
      %v2826 = vadd.f32 %v2628, %v2747
      %v2827 = vadd.f32 %v2629, %v2749
      %v2828 = vadd.f32 %v2630, %v2752
      %v2829 = vadd.f32 %v2631, %v2754
      %v2830 = vadd.f32 %v2632, %v2757
      %v2831 = vadd.f32 %v2633, %v2759
      %v2832 = vadd.f32 %v2634, %v2762
      %v2833 = vadd.f32 %v2635, %v2764
      %v2834 = vadd.f32 %v2636, %v2767
      %v2835 = vadd.f32 %v2637, %v2769
      %v2836 = vadd.f32 %v2638, %v2772
      %v2837 = vadd.f32 %v2639, %v2774
      %v2838 = vadd.f32 %v2640, %v2777
      %v2839 = vadd.f32 %v2641, %v2779
      %v2840 = vadd.f32 %v2642, %v2782
      %v2841 = vadd.f32 %v2643, %v2784
      %v2842 = vadd.f32 %v2644, %v2787
      %v2843 = vadd.f32 %v2645, %v2789
      %v2844 = vadd.f32 %v2646, %v2792
      %v2845 = vadd.f32 %v2647, %v2794
      %v2846 = vadd.f32 %v2648, %v2797
      %v2847 = vadd.f32 %v2649, %v2799
      %v2848 = vadd.f32 %v2650, %v2802
      %v2849 = vadd.f32 %v2651, %v2804
      %v2850 = vadd.f32 %v2652, %v2807
      %v2851 = vadd.f32 %v2653, %v2809
      %v2852 = vadd.f32 %v2654, %v2812
      %v2853 = vadd.f32 %v2655, %v2814
      %v2854 = vadd.f32 %v2656, %v2817
      %v2855 = vadd.f32 %v2657, %v2819
      %v2856 = vadd.f32 %v2658, %v2822
      %v2857 = vadd.f32 %v2659, %v2824
      %v2858 = vmax.f32 %v2826, 0.0
      %v2859 = vmax.f32 %v2827, 0.0
      %v2860 = vmax.f32 %v2828, 0.0
      %v2861 = vmax.f32 %v2829, 0.0
      %v2862 = vmax.f32 %v2830, 0.0
      %v2863 = vmax.f32 %v2831, 0.0
      %v2864 = vmax.f32 %v2832, 0.0
      %v2865 = vmax.f32 %v2833, 0.0
      %v2866 = vmax.f32 %v2834, 0.0
      %v2867 = vmax.f32 %v2835, 0.0
      %v2868 = vmax.f32 %v2836, 0.0
      %v2869 = vmax.f32 %v2837, 0.0
      %v2870 = vmax.f32 %v2838, 0.0
      %v2871 = vmax.f32 %v2839, 0.0
      %v2872 = vmax.f32 %v2840, 0.0
      %v2873 = vmax.f32 %v2841, 0.0
      %v2874 = vmax.f32 %v2842, 0.0
      %v2875 = vmax.f32 %v2843, 0.0
      %v2876 = vmax.f32 %v2844, 0.0
      %v2877 = vmax.f32 %v2845, 0.0
      %v2878 = vmax.f32 %v2846, 0.0
      %v2879 = vmax.f32 %v2847, 0.0
      %v2880 = vmax.f32 %v2848, 0.0
      %v2881 = vmax.f32 %v2849, 0.0
      %v2882 = vmax.f32 %v2850, 0.0
      %v2883 = vmax.f32 %v2851, 0.0
      %v2884 = vmax.f32 %v2852, 0.0
      %v2885 = vmax.f32 %v2853, 0.0
      %v2886 = vmax.f32 %v2854, 0.0
      %v2887 = vmax.f32 %v2855, 0.0
      %v2888 = vmax.f32 %v2856, 0.0
      %v2889 = vmax.f32 %v2857, 0.0
      %v2890 = vpack.c.bf16 %v2858, %v2858
      %v2891 = vpack.c.bf16 %v2859, %v2859
      %v2892 = vpack.c.bf16 %v2860, %v2860
      %v2893 = vpack.c.bf16 %v2861, %v2861
      %v2894 = vpack.c.bf16 %v2862, %v2862
      %v2895 = vpack.c.bf16 %v2863, %v2863
      %v2896 = vpack.c.bf16 %v2864, %v2864
      %v2897 = vpack.c.bf16 %v2865, %v2865
      %v2898 = vpack.c.bf16 %v2866, %v2866
      %v2899 = vpack.c.bf16 %v2867, %v2867
      %v2900 = vpack.c.bf16 %v2868, %v2868
      %v2901 = vpack.c.bf16 %v2869, %v2869
      %v2902 = vpack.c.bf16 %v2870, %v2870
      %v2903 = vpack.c.bf16 %v2871, %v2871
      %v2904 = vpack.c.bf16 %v2872, %v2872
      %v2905 = vpack.c.bf16 %v2873, %v2873
      %v2906 = vpack.c.bf16 %v2874, %v2874
      %v2907 = vpack.c.bf16 %v2875, %v2875
      %v2908 = vpack.c.bf16 %v2876, %v2876
      %v2909 = vpack.c.bf16 %v2877, %v2877
      %v2910 = vpack.c.bf16 %v2878, %v2878
      %v2911 = vpack.c.bf16 %v2879, %v2879
      %v2912 = vpack.c.bf16 %v2880, %v2880
      %v2913 = vpack.c.bf16 %v2881, %v2881
      %v2914 = vpack.c.bf16 %v2882, %v2882
      %v2915 = vpack.c.bf16 %v2883, %v2883
      %v2916 = vpack.c.bf16 %v2884, %v2884
      %v2917 = vpack.c.bf16 %v2885, %v2885
      %v2918 = vpack.c.bf16 %v2886, %v2886
      %v2919 = vpack.c.bf16 %v2887, %v2887
      %v2920 = vpack.c.bf16 %v2888, %v2888
      %v2921 = vpack.c.bf16 %v2889, %v2889
      %vm2922 = vsmask.f32 256
      %vm2923 = vsmask.f32 4368
      %vm2924 = vmor %vm2922, %vm2923
      %v2926 = vshrl.u32 %v2890, 16
      %v2928 = vrot.slane %v2926, 7
      %v2929 = vshll.u32 %v2890, 16
      %v2931 = vor.u32 %v2928, %v2929
      %v2932 = vrot.slane %v2928, 4
      %v2934 = vshrl.u32 %v2891, 16
      %v2936 = vrot.slane %v2934, 7
      %v2937 = vshll.u32 %v2891, 16
      %v2939 = vor.u32 %v2936, %v2937
      %v2940 = vsel %vm2924, %v2932, %v2939
      %v2941 = vrot.slane %v2936, 4
      %v2943 = vshrl.u32 %v2892, 16
      %v2945 = vrot.slane %v2943, 7
      %v2946 = vshll.u32 %v2892, 16
      %v2948 = vor.u32 %v2945, %v2946
      %v2949 = vrot.slane %v2945, 4
      %v2951 = vshrl.u32 %v2893, 16
      %v2953 = vrot.slane %v2951, 7
      %v2954 = vshll.u32 %v2893, 16
      %v2956 = vor.u32 %v2953, %v2954
      %v2957 = vsel %vm2924, %v2949, %v2956
      %v2958 = vrot.slane %v2953, 4
      %v2960 = vshrl.u32 %v2894, 16
      %v2962 = vrot.slane %v2960, 7
      %v2963 = vshll.u32 %v2894, 16
      %v2965 = vor.u32 %v2962, %v2963
      %v2966 = vrot.slane %v2962, 4
      %v2968 = vshrl.u32 %v2895, 16
      %v2970 = vrot.slane %v2968, 7
      %v2971 = vshll.u32 %v2895, 16
      %v2973 = vor.u32 %v2970, %v2971
      %v2974 = vsel %vm2924, %v2966, %v2973
      %v2975 = vrot.slane %v2970, 4
      %v2977 = vshrl.u32 %v2896, 16
      %v2979 = vrot.slane %v2977, 7
      %v2980 = vshll.u32 %v2896, 16
      %v2982 = vor.u32 %v2979, %v2980
      %v2983 = vrot.slane %v2979, 4
      %v2985 = vshrl.u32 %v2897, 16
      %v2987 = vrot.slane %v2985, 7
      %v2988 = vshll.u32 %v2897, 16
      %v2990 = vor.u32 %v2987, %v2988
      %v2991 = vsel %vm2924, %v2983, %v2990
      %v2992 = vrot.slane %v2987, 4
      %v2994 = vshrl.u32 %v2898, 16
      %v2996 = vrot.slane %v2994, 7
      %v2997 = vshll.u32 %v2898, 16
      %v2999 = vor.u32 %v2996, %v2997
      %v3000 = vrot.slane %v2996, 4
      %v3002 = vshrl.u32 %v2899, 16
      %v3004 = vrot.slane %v3002, 7
      %v3005 = vshll.u32 %v2899, 16
      %v3007 = vor.u32 %v3004, %v3005
      %v3008 = vsel %vm2924, %v3000, %v3007
      %v3009 = vrot.slane %v3004, 4
      %v3011 = vshrl.u32 %v2900, 16
      %v3013 = vrot.slane %v3011, 7
      %v3014 = vshll.u32 %v2900, 16
      %v3016 = vor.u32 %v3013, %v3014
      %v3017 = vrot.slane %v3013, 4
      %v3019 = vshrl.u32 %v2901, 16
      %v3021 = vrot.slane %v3019, 7
      %v3022 = vshll.u32 %v2901, 16
      %v3024 = vor.u32 %v3021, %v3022
      %v3025 = vsel %vm2924, %v3017, %v3024
      %v3026 = vrot.slane %v3021, 4
      %v3028 = vshrl.u32 %v2902, 16
      %v3030 = vrot.slane %v3028, 7
      %v3031 = vshll.u32 %v2902, 16
      %v3033 = vor.u32 %v3030, %v3031
      %v3034 = vrot.slane %v3030, 4
      %v3036 = vshrl.u32 %v2903, 16
      %v3038 = vrot.slane %v3036, 7
      %v3039 = vshll.u32 %v2903, 16
      %v3041 = vor.u32 %v3038, %v3039
      %v3042 = vsel %vm2924, %v3034, %v3041
      %v3043 = vrot.slane %v3038, 4
      %v3045 = vshrl.u32 %v2904, 16
      %v3047 = vrot.slane %v3045, 7
      %v3048 = vshll.u32 %v2904, 16
      %v3050 = vor.u32 %v3047, %v3048
      %v3051 = vrot.slane %v3047, 4
      %v3053 = vshrl.u32 %v2905, 16
      %v3055 = vrot.slane %v3053, 7
      %v3056 = vshll.u32 %v2905, 16
      %v3058 = vor.u32 %v3055, %v3056
      %v3059 = vsel %vm2924, %v3051, %v3058
      %v3060 = vrot.slane %v3055, 4
      %v3062 = vshrl.u32 %v2906, 16
      %v3064 = vrot.slane %v3062, 7
      %v3065 = vshll.u32 %v2906, 16
      %v3067 = vor.u32 %v3064, %v3065
      %v3068 = vrot.slane %v3064, 4
      %v3070 = vshrl.u32 %v2907, 16
      %v3072 = vrot.slane %v3070, 7
      %v3073 = vshll.u32 %v2907, 16
      %v3075 = vor.u32 %v3072, %v3073
      %v3076 = vsel %vm2924, %v3068, %v3075
      %v3077 = vrot.slane %v3072, 4
      %v3079 = vshrl.u32 %v2908, 16
      %v3081 = vrot.slane %v3079, 7
      %v3082 = vshll.u32 %v2908, 16
      %v3084 = vor.u32 %v3081, %v3082
      %v3085 = vrot.slane %v3081, 4
      %v3087 = vshrl.u32 %v2909, 16
      %v3089 = vrot.slane %v3087, 7
      %v3090 = vshll.u32 %v2909, 16
      %v3092 = vor.u32 %v3089, %v3090
      %v3093 = vsel %vm2924, %v3085, %v3092
      %v3094 = vrot.slane %v3089, 4
      %v3096 = vshrl.u32 %v2910, 16
      %v3098 = vrot.slane %v3096, 7
      %v3099 = vshll.u32 %v2910, 16
      %v3101 = vor.u32 %v3098, %v3099
      %v3102 = vrot.slane %v3098, 4
      %v3104 = vshrl.u32 %v2911, 16
      %v3106 = vrot.slane %v3104, 7
      %v3107 = vshll.u32 %v2911, 16
      %v3109 = vor.u32 %v3106, %v3107
      %v3110 = vsel %vm2924, %v3102, %v3109
      %v3111 = vrot.slane %v3106, 4
      %v3113 = vshrl.u32 %v2912, 16
      %v3115 = vrot.slane %v3113, 7
      %v3116 = vshll.u32 %v2912, 16
      %v3118 = vor.u32 %v3115, %v3116
      %v3119 = vrot.slane %v3115, 4
      %v3121 = vshrl.u32 %v2913, 16
      %v3123 = vrot.slane %v3121, 7
      %v3124 = vshll.u32 %v2913, 16
      %v3126 = vor.u32 %v3123, %v3124
      %v3127 = vsel %vm2924, %v3119, %v3126
      %v3128 = vrot.slane %v3123, 4
      %v3130 = vshrl.u32 %v2914, 16
      %v3132 = vrot.slane %v3130, 7
      %v3133 = vshll.u32 %v2914, 16
      %v3135 = vor.u32 %v3132, %v3133
      %v3136 = vrot.slane %v3132, 4
      %v3138 = vshrl.u32 %v2915, 16
      %v3140 = vrot.slane %v3138, 7
      %v3141 = vshll.u32 %v2915, 16
      %v3143 = vor.u32 %v3140, %v3141
      %v3144 = vsel %vm2924, %v3136, %v3143
      %v3145 = vrot.slane %v3140, 4
      %v3147 = vshrl.u32 %v2916, 16
      %v3149 = vrot.slane %v3147, 7
      %v3150 = vshll.u32 %v2916, 16
      %v3152 = vor.u32 %v3149, %v3150
      %v3153 = vrot.slane %v3149, 4
      %v3155 = vshrl.u32 %v2917, 16
      %v3157 = vrot.slane %v3155, 7
      %v3158 = vshll.u32 %v2917, 16
      %v3160 = vor.u32 %v3157, %v3158
      %v3161 = vsel %vm2924, %v3153, %v3160
      %v3162 = vrot.slane %v3157, 4
      %v3164 = vshrl.u32 %v2918, 16
      %v3166 = vrot.slane %v3164, 7
      %v3167 = vshll.u32 %v2918, 16
      %v3169 = vor.u32 %v3166, %v3167
      %v3170 = vrot.slane %v3166, 4
      %v3172 = vshrl.u32 %v2919, 16
      %v3174 = vrot.slane %v3172, 7
      %v3175 = vshll.u32 %v2919, 16
      %v3177 = vor.u32 %v3174, %v3175
      %v3178 = vsel %vm2924, %v3170, %v3177
      %v3179 = vrot.slane %v3174, 4
      %v3181 = vshrl.u32 %v2920, 16
      %v3183 = vrot.slane %v3181, 7
      %v3184 = vshll.u32 %v2920, 16
      %v3186 = vor.u32 %v3183, %v3184
      %v3187 = vrot.slane %v3183, 4
      %v3189 = vshrl.u32 %v2921, 16
      %v3191 = vrot.slane %v3189, 7
      %v3192 = vshll.u32 %v2921, 16
      %v3194 = vor.u32 %v3191, %v3192
      %v3195 = vsel %vm2924, %v3187, %v3194
      %v3196 = vrot.slane %v3191, 4
      %s3245 = scalar_lea.vmem [#allocation2], 12
      %vm3246 = vcmask 1043456
      %vm3247 = vsmask.f32 7938
      %vm3248 = vmand %vm3246, %vm3247
      %v3249 = vld [vmem:[%s3245] sm:$0xf]
      %v3250 = vsel %vm3248, %v2931, %v3249
      %3251 = vst [vmem:[%s3245] sm:$0xf] %v3250
      %3252 = vst [vmem:[%s3245 + $0x4] sm:$0xf] %v2940
      %vm3253 = vcmask 1040384
      %vm3254 = vmand %vm3253, %vm2922
      %v3255 = vld [vmem:[%s3245 + $0x8] sm:$0x1]
      %v3256 = vsel %vm3254, %v2941, %v3255
      %3257 = vst [vmem:[%s3245 + $0x8] sm:$0x1] %v3256
      %v3258 = vld [vmem:[%s3245 + $0xc] sm:$0xf]
      %v3259 = vsel %vm3248, %v2948, %v3258
      %3260 = vst [vmem:[%s3245 + $0xc] sm:$0xf] %v3259
      %3261 = vst [vmem:[%s3245 + $0x10] sm:$0xf] %v2957
      %v3262 = vld [vmem:[%s3245 + $0x14] sm:$0x1]
      %v3263 = vsel %vm3254, %v2958, %v3262
      %3264 = vst [vmem:[%s3245 + $0x14] sm:$0x1] %v3263
      %v3265 = vld [vmem:[%s3245 + $0x18] sm:$0xf]
      %v3266 = vsel %vm3248, %v2965, %v3265
      %3267 = vst [vmem:[%s3245 + $0x18] sm:$0xf] %v3266
      %3268 = vst [vmem:[%s3245 + $0x1c] sm:$0xf] %v2974
      %v3269 = vld [vmem:[%s3245 + $0x20] sm:$0x1]
      %v3270 = vsel %vm3254, %v2975, %v3269
      %3271 = vst [vmem:[%s3245 + $0x20] sm:$0x1] %v3270
      %v3272 = vld [vmem:[%s3245 + $0x24] sm:$0xf]
      %v3273 = vsel %vm3248, %v2982, %v3272
      %3274 = vst [vmem:[%s3245 + $0x24] sm:$0xf] %v3273
      %3275 = vst [vmem:[%s3245 + $0x28] sm:$0xf] %v2991
      %v3276 = vld [vmem:[%s3245 + $0x2c] sm:$0x1]
      %v3277 = vsel %vm3254, %v2992, %v3276
      %3278 = vst [vmem:[%s3245 + $0x2c] sm:$0x1] %v3277
      %v3279 = vld [vmem:[%s3245 + $0x30] sm:$0xf]
      %v3280 = vsel %vm3248, %v2999, %v3279
      %3281 = vst [vmem:[%s3245 + $0x30] sm:$0xf] %v3280
      %3282 = vst [vmem:[%s3245 + $0x34] sm:$0xf] %v3008
      %v3283 = vld [vmem:[%s3245 + $0x38] sm:$0x1]
      %v3284 = vsel %vm3254, %v3009, %v3283
      %3285 = vst [vmem:[%s3245 + $0x38] sm:$0x1] %v3284
      %v3286 = vld [vmem:[%s3245 + $0x3c] sm:$0xf]
      %v3287 = vsel %vm3248, %v3016, %v3286
      %3288 = vst [vmem:[%s3245 + $0x3c] sm:$0xf] %v3287
      %3289 = vst [vmem:[%s3245 + $0x40] sm:$0xf] %v3025
      %v3290 = vld [vmem:[%s3245 + $0x44] sm:$0x1]
      %v3291 = vsel %vm3254, %v3026, %v3290
      %3292 = vst [vmem:[%s3245 + $0x44] sm:$0x1] %v3291
      %v3293 = vld [vmem:[%s3245 + $0x48] sm:$0xf]
      %v3294 = vsel %vm3248, %v3033, %v3293
      %3295 = vst [vmem:[%s3245 + $0x48] sm:$0xf] %v3294
      %3296 = vst [vmem:[%s3245 + $0x4c] sm:$0xf] %v3042
      %v3297 = vld [vmem:[%s3245 + $0x50] sm:$0x1]
      %v3298 = vsel %vm3254, %v3043, %v3297
      %3299 = vst [vmem:[%s3245 + $0x50] sm:$0x1] %v3298
      %v3300 = vld [vmem:[%s3245 + $0x54] sm:$0xf]
      %v3301 = vsel %vm3248, %v3050, %v3300
      %3302 = vst [vmem:[%s3245 + $0x54] sm:$0xf] %v3301
      %3303 = vst [vmem:[%s3245 + $0x58] sm:$0xf] %v3059
      %v3304 = vld [vmem:[%s3245 + $0x5c] sm:$0x1]
      %v3305 = vsel %vm3254, %v3060, %v3304
      %3306 = vst [vmem:[%s3245 + $0x5c] sm:$0x1] %v3305
      %v3307 = vld [vmem:[%s3245 + $0x60] sm:$0xf]
      %v3308 = vsel %vm3248, %v3067, %v3307
      %3309 = vst [vmem:[%s3245 + $0x60] sm:$0xf] %v3308
      %3310 = vst [vmem:[%s3245 + $0x64] sm:$0xf] %v3076
      %v3311 = vld [vmem:[%s3245 + $0x68] sm:$0x1]
      %v3312 = vsel %vm3254, %v3077, %v3311
      %3313 = vst [vmem:[%s3245 + $0x68] sm:$0x1] %v3312
      %v3314 = vld [vmem:[%s3245 + $0x6c] sm:$0xf]
      %v3315 = vsel %vm3248, %v3084, %v3314
      %3316 = vst [vmem:[%s3245 + $0x6c] sm:$0xf] %v3315
      %3317 = vst [vmem:[%s3245 + $0x70] sm:$0xf] %v3093
      %v3318 = vld [vmem:[%s3245 + $0x74] sm:$0x1]
      %v3319 = vsel %vm3254, %v3094, %v3318
      %3320 = vst [vmem:[%s3245 + $0x74] sm:$0x1] %v3319
      %v3321 = vld [vmem:[%s3245 + $0x78] sm:$0xf]
      %v3322 = vsel %vm3248, %v3101, %v3321
      %3323 = vst [vmem:[%s3245 + $0x78] sm:$0xf] %v3322
      %3324 = vst [vmem:[%s3245 + $0x7c] sm:$0xf] %v3110
      %v3325 = vld [vmem:[%s3245 + $0x80] sm:$0x1]
      %v3326 = vsel %vm3254, %v3111, %v3325
      %3327 = vst [vmem:[%s3245 + $0x80] sm:$0x1] %v3326
      %v3328 = vld [vmem:[%s3245 + $0x84] sm:$0xf]
      %v3329 = vsel %vm3248, %v3118, %v3328
      %3330 = vst [vmem:[%s3245 + $0x84] sm:$0xf] %v3329
      %3331 = vst [vmem:[%s3245 + $0x88] sm:$0xf] %v3127
      %v3332 = vld [vmem:[%s3245 + $0x8c] sm:$0x1]
      %v3333 = vsel %vm3254, %v3128, %v3332
      %3334 = vst [vmem:[%s3245 + $0x8c] sm:$0x1] %v3333
      %v3335 = vld [vmem:[%s3245 + $0x90] sm:$0xf]
      %v3336 = vsel %vm3248, %v3135, %v3335
      %3337 = vst [vmem:[%s3245 + $0x90] sm:$0xf] %v3336
      %3338 = vst [vmem:[%s3245 + $0x94] sm:$0xf] %v3144
      %v3339 = vld [vmem:[%s3245 + $0x98] sm:$0x1]
      %v3340 = vsel %vm3254, %v3145, %v3339
      %3341 = vst [vmem:[%s3245 + $0x98] sm:$0x1] %v3340
      %v3342 = vld [vmem:[%s3245 + $0x9c] sm:$0xf]
      %v3343 = vsel %vm3248, %v3152, %v3342
      %3344 = vst [vmem:[%s3245 + $0x9c] sm:$0xf] %v3343
      %3345 = vst [vmem:[%s3245 + $0xa0] sm:$0xf] %v3161
      %v3346 = vld [vmem:[%s3245 + $0xa4] sm:$0x1]
      %v3347 = vsel %vm3254, %v3162, %v3346
      %3348 = vst [vmem:[%s3245 + $0xa4] sm:$0x1] %v3347
      %v3349 = vld [vmem:[%s3245 + $0xa8] sm:$0xf]
      %v3350 = vsel %vm3248, %v3169, %v3349
      %3351 = vst [vmem:[%s3245 + $0xa8] sm:$0xf] %v3350
      %3352 = vst [vmem:[%s3245 + $0xac] sm:$0xf] %v3178
      %v3353 = vld [vmem:[%s3245 + $0xb0] sm:$0x1]
      %v3354 = vsel %vm3254, %v3179, %v3353
      %3355 = vst [vmem:[%s3245 + $0xb0] sm:$0x1] %v3354
      %v3356 = vld [vmem:[%s3245 + $0xb4] sm:$0xf]
      %v3357 = vsel %vm3248, %v3186, %v3356
      %3358 = vst [vmem:[%s3245 + $0xb4] sm:$0xf] %v3357
      %3359 = vst [vmem:[%s3245 + $0xb8] sm:$0xf] %v3195
      %v3360 = vld [vmem:[%s3245 + $0xbc] sm:$0x1]
      %v3361 = vsel %vm3254, %v3196, %v3360
      %3362 = vst [vmem:[%s3245 + $0xbc] sm:$0x1] %v3361
      %v3363 = vld [vmem:[#allocation2] sm:$0xf]
      %v3364 = vld [vmem:[#allocation2 + $0x4] sm:$0xf]
      %v3365 = vld [vmem:[#allocation2 + $0x8] sm:$0x1]
      %v3366 = vld [vmem:[#allocation2 + $0xc] sm:$0xf]
      %v3367 = vld [vmem:[#allocation2 + $0x10] sm:$0xf]
      %v3368 = vld [vmem:[#allocation2 + $0x14] sm:$0x1]
      %v3369 = vld [vmem:[#allocation2 + $0x18] sm:$0xf]
      %v3370 = vld [vmem:[#allocation2 + $0x1c] sm:$0xf]
      %v3371 = vld [vmem:[#allocation2 + $0x20] sm:$0x1]
      %v3372 = vld [vmem:[#allocation2 + $0x24] sm:$0xf]
      %v3373 = vld [vmem:[#allocation2 + $0x28] sm:$0xf]
      %v3374 = vld [vmem:[#allocation2 + $0x2c] sm:$0x1]
      %v3375 = vld [vmem:[#allocation2 + $0x30] sm:$0xf]
      %v3376 = vld [vmem:[#allocation2 + $0x34] sm:$0xf]
      %v3377 = vld [vmem:[#allocation2 + $0x38] sm:$0x1]
      %v3378 = vld [vmem:[#allocation2 + $0x3c] sm:$0xf]
      %v3379 = vld [vmem:[#allocation2 + $0x40] sm:$0xf]
      %v3380 = vld [vmem:[#allocation2 + $0x44] sm:$0x1]
      %v3381 = vld [vmem:[#allocation2 + $0x48] sm:$0xf]
      %v3382 = vld [vmem:[#allocation2 + $0x4c] sm:$0xf]
      %v3383 = vld [vmem:[#allocation2 + $0x50] sm:$0x1]
      %v3384 = vld [vmem:[#allocation2 + $0x54] sm:$0xf]
      %v3385 = vld [vmem:[#allocation2 + $0x58] sm:$0xf]
      %v3386 = vld [vmem:[#allocation2 + $0x5c] sm:$0x1]
      %v3387 = vld [vmem:[#allocation2 + $0x60] sm:$0xf]
      %v3388 = vld [vmem:[#allocation2 + $0x64] sm:$0xf]
      %v3389 = vld [vmem:[#allocation2 + $0x68] sm:$0x1]
      %v3390 = vld [vmem:[#allocation2 + $0x6c] sm:$0xf]
      %v3391 = vld [vmem:[#allocation2 + $0x70] sm:$0xf]
      %v3392 = vld [vmem:[#allocation2 + $0x74] sm:$0x1]
      %v3393 = vld [vmem:[#allocation2 + $0x78] sm:$0xf]
      %v3394 = vld [vmem:[#allocation2 + $0x7c] sm:$0xf]
      %v3395 = vld [vmem:[#allocation2 + $0x80] sm:$0x1]
      %v3396 = vld [vmem:[#allocation2 + $0x84] sm:$0xf]
      %v3397 = vld [vmem:[#allocation2 + $0x88] sm:$0xf]
      %v3398 = vld [vmem:[#allocation2 + $0x8c] sm:$0x1]
      %v3399 = vld [vmem:[#allocation2 + $0x90] sm:$0xf]
      %v3400 = vld [vmem:[#allocation2 + $0x94] sm:$0xf]
      %v3401 = vld [vmem:[#allocation2 + $0x98] sm:$0x1]
      %v3402 = vld [vmem:[#allocation2 + $0x9c] sm:$0xf]
      %v3403 = vld [vmem:[#allocation2 + $0xa0] sm:$0xf]
      %v3404 = vld [vmem:[#allocation2 + $0xa4] sm:$0x1]
      %v3405 = vld [vmem:[#allocation2 + $0xa8] sm:$0xf]
      %v3406 = vld [vmem:[#allocation2 + $0xac] sm:$0xf]
      %v3407 = vld [vmem:[#allocation2 + $0xb0] sm:$0x1]
      %v3408 = vld [vmem:[#allocation2 + $0xb4] sm:$0xf]
      %v3409 = vld [vmem:[#allocation2 + $0xb8] sm:$0xf]
      %v3410 = vld [vmem:[#allocation2 + $0xbc] sm:$0x1]
      %v3411 = vld [vmem:[#allocation2 + $0xc0] sm:$0xf]
      %v3412 = vld [vmem:[#allocation2 + $0xc4] sm:$0xf]
      %v3413 = vld [vmem:[#allocation2 + $0xc8] sm:$0x1]
      %v3414 = vld [vmem:[#allocation2 + $0xcc] sm:$0xf]
      %v3415 = vld [vmem:[#allocation2 + $0xd0] sm:$0xf]
      %v3416 = vld [vmem:[#allocation2 + $0xd4] sm:$0x1]
      %v3417 = vld [vmem:[%s2] sm:$0xf]
      %v3418 = vld [vmem:[%s2 + $0x4] sm:$0xf]
      %v3419 = vld [vmem:[%s2 + $0x8] sm:$0xf]
      %v3420 = vld [vmem:[%s2 + $0xc] sm:$0xf]
      %v3421 = vld [vmem:[%s2 + $0x10] sm:$0xf]
      %v3422 = vld [vmem:[%s2 + $0x14] sm:$0xf]
      %v3423 = vld [vmem:[%s2 + $0x18] sm:$0xf]
      %v3424 = vld [vmem:[%s2 + $0x1c] sm:$0xf]
      %v3425 = vld [vmem:[%s2 + $0x20] sm:$0xf]
      %v3426 = vld [vmem:[%s2 + $0x24] sm:$0xf]
      %v3427 = vld [vmem:[%s2 + $0x28] sm:$0xf]
      %v3428 = vld [vmem:[%s2 + $0x2c] sm:$0xf]
      %v3429 = vld [vmem:[%s2 + $0x30] sm:$0xf]
      %v3430 = vld [vmem:[%s2 + $0x34] sm:$0xf]
      %v3431 = vld [vmem:[%s2 + $0x38] sm:$0xf]
      %v3432 = vld [vmem:[%s2 + $0x3c] sm:$0xf]
      %v3434 = vshrl.u32 %v3363, 16
      %v3436 = vrot.slane %v3434, 4
      %v3437 = vshll.u32 %v3363, 16
      %v3439 = vrot.slane %v3437, 5
      %v3440 = vor.u32 %v3436, %v3439
      %v3441 = vrot.slane %v3440, 4
      %v3443 = vshll.u32 %v3364, 16
      %v3445 = vrot.slane %v3443, 5
      %v3446 = vsel %vm433, %v3441, %v3445
      %v3447 = vshrl.u32 %v3364, 16
      %v3449 = vrot.slane %v3447, 4
      %v3450 = vor.u32 %v3449, %v3445
      %v3451 = vrot.slane %v3450, 4
      %v3453 = vshll.u32 %v3365, 16
      %v3455 = vrot.slane %v3453, 5
      %v3456 = vsel %vm433, %v3451, %v3455
      %v3458 = vshrl.u32 %v3366, 16
      %v3460 = vrot.slane %v3458, 4
      %v3461 = vshll.u32 %v3366, 16
      %v3463 = vrot.slane %v3461, 5
      %v3464 = vor.u32 %v3460, %v3463
      %v3465 = vrot.slane %v3464, 4
      %v3467 = vshll.u32 %v3367, 16
      %v3469 = vrot.slane %v3467, 5
      %v3470 = vsel %vm433, %v3465, %v3469
      %v3471 = vshrl.u32 %v3367, 16
      %v3473 = vrot.slane %v3471, 4
      %v3474 = vor.u32 %v3473, %v3469
      %v3475 = vrot.slane %v3474, 4
      %v3477 = vshll.u32 %v3368, 16
      %v3479 = vrot.slane %v3477, 5
      %v3480 = vsel %vm433, %v3475, %v3479
      %v3482 = vshrl.u32 %v3369, 16
      %v3484 = vrot.slane %v3482, 4
      %v3485 = vshll.u32 %v3369, 16
      %v3487 = vrot.slane %v3485, 5
      %v3488 = vor.u32 %v3484, %v3487
      %v3489 = vrot.slane %v3488, 4
      %v3491 = vshll.u32 %v3370, 16
      %v3493 = vrot.slane %v3491, 5
      %v3494 = vsel %vm433, %v3489, %v3493
      %v3495 = vshrl.u32 %v3370, 16
      %v3497 = vrot.slane %v3495, 4
      %v3498 = vor.u32 %v3497, %v3493
      %v3499 = vrot.slane %v3498, 4
      %v3501 = vshll.u32 %v3371, 16
      %v3503 = vrot.slane %v3501, 5
      %v3504 = vsel %vm433, %v3499, %v3503
      %v3506 = vshrl.u32 %v3372, 16
      %v3508 = vrot.slane %v3506, 4
      %v3509 = vshll.u32 %v3372, 16
      %v3511 = vrot.slane %v3509, 5
      %v3512 = vor.u32 %v3508, %v3511
      %v3513 = vrot.slane %v3512, 4
      %v3515 = vshll.u32 %v3373, 16
      %v3517 = vrot.slane %v3515, 5
      %v3518 = vsel %vm433, %v3513, %v3517
      %v3519 = vshrl.u32 %v3373, 16
      %v3521 = vrot.slane %v3519, 4
      %v3522 = vor.u32 %v3521, %v3517
      %v3523 = vrot.slane %v3522, 4
      %v3525 = vshll.u32 %v3374, 16
      %v3527 = vrot.slane %v3525, 5
      %v3528 = vsel %vm433, %v3523, %v3527
      %v3530 = vshrl.u32 %v3375, 16
      %v3532 = vrot.slane %v3530, 4
      %v3533 = vshll.u32 %v3375, 16
      %v3535 = vrot.slane %v3533, 5
      %v3536 = vor.u32 %v3532, %v3535
      %v3537 = vrot.slane %v3536, 4
      %v3539 = vshll.u32 %v3376, 16
      %v3541 = vrot.slane %v3539, 5
      %v3542 = vsel %vm433, %v3537, %v3541
      %v3543 = vshrl.u32 %v3376, 16
      %v3545 = vrot.slane %v3543, 4
      %v3546 = vor.u32 %v3545, %v3541
      %v3547 = vrot.slane %v3546, 4
      %v3549 = vshll.u32 %v3377, 16
      %v3551 = vrot.slane %v3549, 5
      %v3552 = vsel %vm433, %v3547, %v3551
      %v3554 = vshrl.u32 %v3378, 16
      %v3556 = vrot.slane %v3554, 4
      %v3557 = vshll.u32 %v3378, 16
      %v3559 = vrot.slane %v3557, 5
      %v3560 = vor.u32 %v3556, %v3559
      %v3561 = vrot.slane %v3560, 4
      %v3563 = vshll.u32 %v3379, 16
      %v3565 = vrot.slane %v3563, 5
      %v3566 = vsel %vm433, %v3561, %v3565
      %v3567 = vshrl.u32 %v3379, 16
      %v3569 = vrot.slane %v3567, 4
      %v3570 = vor.u32 %v3569, %v3565
      %v3571 = vrot.slane %v3570, 4
      %v3573 = vshll.u32 %v3380, 16
      %v3575 = vrot.slane %v3573, 5
      %v3576 = vsel %vm433, %v3571, %v3575
      %v3578 = vshrl.u32 %v3381, 16
      %v3580 = vrot.slane %v3578, 4
      %v3581 = vshll.u32 %v3381, 16
      %v3583 = vrot.slane %v3581, 5
      %v3584 = vor.u32 %v3580, %v3583
      %v3585 = vrot.slane %v3584, 4
      %v3587 = vshll.u32 %v3382, 16
      %v3589 = vrot.slane %v3587, 5
      %v3590 = vsel %vm433, %v3585, %v3589
      %v3591 = vshrl.u32 %v3382, 16
      %v3593 = vrot.slane %v3591, 4
      %v3594 = vor.u32 %v3593, %v3589
      %v3595 = vrot.slane %v3594, 4
      %v3597 = vshll.u32 %v3383, 16
      %v3599 = vrot.slane %v3597, 5
      %v3600 = vsel %vm433, %v3595, %v3599
      %v3602 = vshrl.u32 %v3384, 16
      %v3604 = vrot.slane %v3602, 4
      %v3605 = vshll.u32 %v3384, 16
      %v3607 = vrot.slane %v3605, 5
      %v3608 = vor.u32 %v3604, %v3607
      %v3609 = vrot.slane %v3608, 4
      %v3611 = vshll.u32 %v3385, 16
      %v3613 = vrot.slane %v3611, 5
      %v3614 = vsel %vm433, %v3609, %v3613
      %v3615 = vshrl.u32 %v3385, 16
      %v3617 = vrot.slane %v3615, 4
      %v3618 = vor.u32 %v3617, %v3613
      %v3619 = vrot.slane %v3618, 4
      %v3621 = vshll.u32 %v3386, 16
      %v3623 = vrot.slane %v3621, 5
      %v3624 = vsel %vm433, %v3619, %v3623
      %v3626 = vshrl.u32 %v3387, 16
      %v3628 = vrot.slane %v3626, 4
      %v3629 = vshll.u32 %v3387, 16
      %v3631 = vrot.slane %v3629, 5
      %v3632 = vor.u32 %v3628, %v3631
      %v3633 = vrot.slane %v3632, 4
      %v3635 = vshll.u32 %v3388, 16
      %v3637 = vrot.slane %v3635, 5
      %v3638 = vsel %vm433, %v3633, %v3637
      %v3639 = vshrl.u32 %v3388, 16
      %v3641 = vrot.slane %v3639, 4
      %v3642 = vor.u32 %v3641, %v3637
      %v3643 = vrot.slane %v3642, 4
      %v3645 = vshll.u32 %v3389, 16
      %v3647 = vrot.slane %v3645, 5
      %v3648 = vsel %vm433, %v3643, %v3647
      %v3650 = vshrl.u32 %v3390, 16
      %v3652 = vrot.slane %v3650, 4
      %v3653 = vshll.u32 %v3390, 16
      %v3655 = vrot.slane %v3653, 5
      %v3656 = vor.u32 %v3652, %v3655
      %v3657 = vrot.slane %v3656, 4
      %v3659 = vshll.u32 %v3391, 16
      %v3661 = vrot.slane %v3659, 5
      %v3662 = vsel %vm433, %v3657, %v3661
      %v3663 = vshrl.u32 %v3391, 16
      %v3665 = vrot.slane %v3663, 4
      %v3666 = vor.u32 %v3665, %v3661
      %v3667 = vrot.slane %v3666, 4
      %v3669 = vshll.u32 %v3392, 16
      %v3671 = vrot.slane %v3669, 5
      %v3672 = vsel %vm433, %v3667, %v3671
      %v3674 = vshrl.u32 %v3393, 16
      %v3676 = vrot.slane %v3674, 4
      %v3677 = vshll.u32 %v3393, 16
      %v3679 = vrot.slane %v3677, 5
      %v3680 = vor.u32 %v3676, %v3679
      %v3681 = vrot.slane %v3680, 4
      %v3683 = vshll.u32 %v3394, 16
      %v3685 = vrot.slane %v3683, 5
      %v3686 = vsel %vm433, %v3681, %v3685
      %v3687 = vshrl.u32 %v3394, 16
      %v3689 = vrot.slane %v3687, 4
      %v3690 = vor.u32 %v3689, %v3685
      %v3691 = vrot.slane %v3690, 4
      %v3693 = vshll.u32 %v3395, 16
      %v3695 = vrot.slane %v3693, 5
      %v3696 = vsel %vm433, %v3691, %v3695
      %v3698 = vshrl.u32 %v3396, 16
      %v3700 = vrot.slane %v3698, 4
      %v3701 = vshll.u32 %v3396, 16
      %v3703 = vrot.slane %v3701, 5
      %v3704 = vor.u32 %v3700, %v3703
      %v3705 = vrot.slane %v3704, 4
      %v3707 = vshll.u32 %v3397, 16
      %v3709 = vrot.slane %v3707, 5
      %v3710 = vsel %vm433, %v3705, %v3709
      %v3711 = vshrl.u32 %v3397, 16
      %v3713 = vrot.slane %v3711, 4
      %v3714 = vor.u32 %v3713, %v3709
      %v3715 = vrot.slane %v3714, 4
      %v3717 = vshll.u32 %v3398, 16
      %v3719 = vrot.slane %v3717, 5
      %v3720 = vsel %vm433, %v3715, %v3719
      %v3722 = vshrl.u32 %v3399, 16
      %v3724 = vrot.slane %v3722, 4
      %v3725 = vshll.u32 %v3399, 16
      %v3727 = vrot.slane %v3725, 5
      %v3728 = vor.u32 %v3724, %v3727
      %v3729 = vrot.slane %v3728, 4
      %v3731 = vshll.u32 %v3400, 16
      %v3733 = vrot.slane %v3731, 5
      %v3734 = vsel %vm433, %v3729, %v3733
      %v3735 = vshrl.u32 %v3400, 16
      %v3737 = vrot.slane %v3735, 4
      %v3738 = vor.u32 %v3737, %v3733
      %v3739 = vrot.slane %v3738, 4
      %v3741 = vshll.u32 %v3401, 16
      %v3743 = vrot.slane %v3741, 5
      %v3744 = vsel %vm433, %v3739, %v3743
      %v3746 = vshrl.u32 %v3402, 16
      %v3748 = vrot.slane %v3746, 4
      %v3749 = vshll.u32 %v3402, 16
      %v3751 = vrot.slane %v3749, 5
      %v3752 = vor.u32 %v3748, %v3751
      %v3753 = vrot.slane %v3752, 4
      %v3755 = vshll.u32 %v3403, 16
      %v3757 = vrot.slane %v3755, 5
      %v3758 = vsel %vm433, %v3753, %v3757
      %v3759 = vshrl.u32 %v3403, 16
      %v3761 = vrot.slane %v3759, 4
      %v3762 = vor.u32 %v3761, %v3757
      %v3763 = vrot.slane %v3762, 4
      %v3765 = vshll.u32 %v3404, 16
      %v3767 = vrot.slane %v3765, 5
      %v3768 = vsel %vm433, %v3763, %v3767
      %v3770 = vshrl.u32 %v3405, 16
      %v3772 = vrot.slane %v3770, 4
      %v3773 = vshll.u32 %v3405, 16
      %v3775 = vrot.slane %v3773, 5
      %v3776 = vor.u32 %v3772, %v3775
      %v3777 = vrot.slane %v3776, 4
      %v3779 = vshll.u32 %v3406, 16
      %v3781 = vrot.slane %v3779, 5
      %v3782 = vsel %vm433, %v3777, %v3781
      %v3783 = vshrl.u32 %v3406, 16
      %v3785 = vrot.slane %v3783, 4
      %v3786 = vor.u32 %v3785, %v3781
      %v3787 = vrot.slane %v3786, 4
      %v3789 = vshll.u32 %v3407, 16
      %v3791 = vrot.slane %v3789, 5
      %v3792 = vsel %vm433, %v3787, %v3791
      %v3794 = vshrl.u32 %v3408, 16
      %v3796 = vrot.slane %v3794, 4
      %v3797 = vshll.u32 %v3408, 16
      %v3799 = vrot.slane %v3797, 5
      %v3800 = vor.u32 %v3796, %v3799
      %v3801 = vrot.slane %v3800, 4
      %v3803 = vshll.u32 %v3409, 16
      %v3805 = vrot.slane %v3803, 5
      %v3806 = vsel %vm433, %v3801, %v3805
      %v3807 = vshrl.u32 %v3409, 16
      %v3809 = vrot.slane %v3807, 4
      %v3810 = vor.u32 %v3809, %v3805
      %v3811 = vrot.slane %v3810, 4
      %v3813 = vshll.u32 %v3410, 16
      %v3815 = vrot.slane %v3813, 5
      %v3816 = vsel %vm433, %v3811, %v3815
      %s3817 = scalar_lea.vmem %s2, 64
      %v3818 = vld [vmem:[%s3817] sm:$0xf]
      %v3819 = vld [vmem:[%s3817 + $0x4] sm:$0xf]
      %v3820 = vld [vmem:[%s3817 + $0x8] sm:$0xf]
      %v3821 = vld [vmem:[%s3817 + $0xc] sm:$0xf]
      %v3822 = vld [vmem:[%s3817 + $0x10] sm:$0xf]
      %v3823 = vld [vmem:[%s3817 + $0x14] sm:$0xf]
      %v3824 = vld [vmem:[%s3817 + $0x18] sm:$0xf]
      %v3825 = vld [vmem:[%s3817 + $0x1c] sm:$0xf]
      %v3826 = vld [vmem:[%s3817 + $0x20] sm:$0xf]
      %v3827 = vld [vmem:[%s3817 + $0x24] sm:$0xf]
      %v3828 = vld [vmem:[%s3817 + $0x28] sm:$0xf]
      %v3829 = vld [vmem:[%s3817 + $0x2c] sm:$0xf]
      %v3830 = vld [vmem:[%s3817 + $0x30] sm:$0xf]
      %v3831 = vld [vmem:[%s3817 + $0x34] sm:$0xf]
      %v3832 = vld [vmem:[%s3817 + $0x38] sm:$0xf]
      %v3833 = vld [vmem:[%s3817 + $0x3c] sm:$0xf]
      %v3834 = vunpack.c.l.b16 %v3446
      %v3835 = vunpack.c.l.b16 %v3456
      %v3836 = vunpack.c.l.b16 %v3470
      %v3837 = vunpack.c.l.b16 %v3480
      %v3838 = vunpack.c.l.b16 %v3494
      %v3839 = vunpack.c.l.b16 %v3504
      %v3840 = vunpack.c.l.b16 %v3518
      %v3841 = vunpack.c.l.b16 %v3528
      %v3842 = vunpack.c.l.b16 %v3542
      %v3843 = vunpack.c.l.b16 %v3552
      %v3844 = vunpack.c.l.b16 %v3566
      %v3845 = vunpack.c.l.b16 %v3576
      %v3846 = vunpack.c.l.b16 %v3590
      %v3847 = vunpack.c.l.b16 %v3600
      %v3848 = vunpack.c.l.b16 %v3614
      %v3849 = vunpack.c.l.b16 %v3624
      %v3850 = vunpack.c.l.b16 %v3638
      %v3851 = vunpack.c.l.b16 %v3648
      %v3852 = vunpack.c.l.b16 %v3662
      %v3853 = vunpack.c.l.b16 %v3672
      %v3854 = vunpack.c.l.b16 %v3686
      %v3855 = vunpack.c.l.b16 %v3696
      %v3856 = vunpack.c.l.b16 %v3710
      %v3857 = vunpack.c.l.b16 %v3720
      %v3858 = vunpack.c.l.b16 %v3734
      %v3859 = vunpack.c.l.b16 %v3744
      %v3860 = vunpack.c.l.b16 %v3758
      %v3861 = vunpack.c.l.b16 %v3768
      %v3862 = vunpack.c.l.b16 %v3782
      %v3863 = vunpack.c.l.b16 %v3792
      %v3864 = vunpack.c.l.b16 %v3806
      %v3865 = vunpack.c.l.b16 %v3816
      %v3866 = vpack.c.b16 %v3835, %v3834
      %v3867 = vpack.c.b16 %v3837, %v3836
      %v3868 = vpack.c.b16 %v3839, %v3838
      %v3869 = vpack.c.b16 %v3841, %v3840
      %v3870 = vpack.c.b16 %v3843, %v3842
      %v3871 = vpack.c.b16 %v3845, %v3844
      %v3872 = vpack.c.b16 %v3847, %v3846
      %v3873 = vpack.c.b16 %v3849, %v3848
      %v3874 = vpack.c.b16 %v3851, %v3850
      %v3875 = vpack.c.b16 %v3853, %v3852
      %v3876 = vpack.c.b16 %v3855, %v3854
      %v3877 = vpack.c.b16 %v3857, %v3856
      %v3878 = vpack.c.b16 %v3859, %v3858
      %v3879 = vpack.c.b16 %v3861, %v3860
      %v3880 = vpack.c.b16 %v3863, %v3862
      %v3881 = vpack.c.b16 %v3865, %v3864
      %v3914 = vunpack.c.l.b16 %v3818
      %v3915 = vunpack.c.l.b16 %v3819
      %v3916 = vunpack.c.l.b16 %v3820
      %v3917 = vunpack.c.l.b16 %v3821
      %v3918 = vunpack.c.l.b16 %v3822
      %v3919 = vunpack.c.l.b16 %v3823
      %v3920 = vunpack.c.l.b16 %v3824
      %v3921 = vunpack.c.l.b16 %v3825
      %v3922 = vunpack.c.l.b16 %v3826
      %v3923 = vunpack.c.l.b16 %v3827
      %v3924 = vunpack.c.l.b16 %v3828
      %v3925 = vunpack.c.l.b16 %v3829
      %v3926 = vunpack.c.l.b16 %v3830
      %v3927 = vunpack.c.l.b16 %v3831
      %v3928 = vunpack.c.l.b16 %v3832
      %v3929 = vunpack.c.l.b16 %v3833
      %v3930 = vpack.c.b16 %v3915, %v3914
      %v3931 = vpack.c.b16 %v3917, %v3916
      %v3932 = vpack.c.b16 %v3919, %v3918
      %v3933 = vpack.c.b16 %v3921, %v3920
      %v3934 = vpack.c.b16 %v3923, %v3922
      %v3935 = vpack.c.b16 %v3925, %v3924
      %v3936 = vpack.c.b16 %v3927, %v3926
      %v3937 = vpack.c.b16 %v3929, %v3928
      %3946 = vmatpush.bf16.msra.mxu0 %v3937
      %3947 = vmatpush.bf16.msra.mxu0 %v3936
      %3948 = vmatpush.bf16.msra.mxu0 %v3935
      %3949 = vmatpush.bf16.msra.mxu0 %v3934
      %3950 = vmatpush.bf16.msra.mxu0 %v3933
      %3951 = vmatpush.bf16.msra.mxu0 %v3932
      %3952 = vmatpush.bf16.msra.mxu0 %v3931
      %3953 = vmatpush.bf16.msra.mxu0 %v3930
      %3954 = vmatmul.bf16.gmra.mxu0 %v3866
      %v3955 = vpop.f32.mrf.mxu0
      %v3956 = vadd.f32 0.0, %v3955
      %v3957 = vpop.f32.mrf.mxu0
      %v3958 = vadd.f32 0.0, %v3957
      %3959 = vmatmul.bf16.gmra.mxu0 %v3867
      %v3960 = vpop.f32.mrf.mxu0
      %v3961 = vadd.f32 0.0, %v3960
      %v3962 = vpop.f32.mrf.mxu0
      %v3963 = vadd.f32 0.0, %v3962
      %3964 = vmatmul.bf16.gmra.mxu0 %v3868
      %v3965 = vpop.f32.mrf.mxu0
      %v3966 = vadd.f32 0.0, %v3965
      %v3967 = vpop.f32.mrf.mxu0
      %v3968 = vadd.f32 0.0, %v3967
      %3969 = vmatmul.bf16.gmra.mxu0 %v3869
      %v3970 = vpop.f32.mrf.mxu0
      %v3971 = vadd.f32 0.0, %v3970
      %v3972 = vpop.f32.mrf.mxu0
      %v3973 = vadd.f32 0.0, %v3972
      %3974 = vmatmul.bf16.gmra.mxu0 %v3870
      %v3975 = vpop.f32.mrf.mxu0
      %v3976 = vadd.f32 0.0, %v3975
      %v3977 = vpop.f32.mrf.mxu0
      %v3978 = vadd.f32 0.0, %v3977
      %3979 = vmatmul.bf16.gmra.mxu0 %v3871
      %v3980 = vpop.f32.mrf.mxu0
      %v3981 = vadd.f32 0.0, %v3980
      %v3982 = vpop.f32.mrf.mxu0
      %v3983 = vadd.f32 0.0, %v3982
      %3984 = vmatmul.bf16.gmra.mxu0 %v3872
      %v3985 = vpop.f32.mrf.mxu0
      %v3986 = vadd.f32 0.0, %v3985
      %v3987 = vpop.f32.mrf.mxu0
      %v3988 = vadd.f32 0.0, %v3987
      %3989 = vmatmul.bf16.gmra.mxu0 %v3873
      %v3990 = vpop.f32.mrf.mxu0
      %v3991 = vadd.f32 0.0, %v3990
      %v3992 = vpop.f32.mrf.mxu0
      %v3993 = vadd.f32 0.0, %v3992
      %3994 = vmatmul.bf16.gmra.mxu0 %v3874
      %v3995 = vpop.f32.mrf.mxu0
      %v3996 = vadd.f32 0.0, %v3995
      %v3997 = vpop.f32.mrf.mxu0
      %v3998 = vadd.f32 0.0, %v3997
      %3999 = vmatmul.bf16.gmra.mxu0 %v3875
      %v4000 = vpop.f32.mrf.mxu0
      %v4001 = vadd.f32 0.0, %v4000
      %v4002 = vpop.f32.mrf.mxu0
      %v4003 = vadd.f32 0.0, %v4002
      %4004 = vmatmul.bf16.gmra.mxu0 %v3876
      %v4005 = vpop.f32.mrf.mxu0
      %v4006 = vadd.f32 0.0, %v4005
      %v4007 = vpop.f32.mrf.mxu0
      %v4008 = vadd.f32 0.0, %v4007
      %4009 = vmatmul.bf16.gmra.mxu0 %v3877
      %v4010 = vpop.f32.mrf.mxu0
      %v4011 = vadd.f32 0.0, %v4010
      %v4012 = vpop.f32.mrf.mxu0
      %v4013 = vadd.f32 0.0, %v4012
      %4014 = vmatmul.bf16.gmra.mxu0 %v3878
      %v4015 = vpop.f32.mrf.mxu0
      %v4016 = vadd.f32 0.0, %v4015
      %v4017 = vpop.f32.mrf.mxu0
      %v4018 = vadd.f32 0.0, %v4017
      %4019 = vmatmul.bf16.gmra.mxu0 %v3879
      %v4020 = vpop.f32.mrf.mxu0
      %v4021 = vadd.f32 0.0, %v4020
      %v4022 = vpop.f32.mrf.mxu0
      %v4023 = vadd.f32 0.0, %v4022
      %4024 = vmatmul.bf16.gmra.mxu0 %v3880
      %v4025 = vpop.f32.mrf.mxu0
      %v4026 = vadd.f32 0.0, %v4025
      %v4027 = vpop.f32.mrf.mxu0
      %v4028 = vadd.f32 0.0, %v4027
      %4029 = vmatmul.bf16.gmra.mxu0 %v3881
      %v4030 = vpop.f32.mrf.mxu0
      %v4031 = vadd.f32 0.0, %v4030
      %v4032 = vpop.f32.mrf.mxu0
      %v4033 = vadd.f32 0.0, %v4032
      %4034 = vdwg.mxu0
      %v4067 = vunpack.c.l.b16 %v3363
      %v4068 = vunpack.c.l.b16 %v3364
      %v4069 = vunpack.c.l.b16 %v3366
      %v4070 = vunpack.c.l.b16 %v3367
      %v4071 = vunpack.c.l.b16 %v3369
      %v4072 = vunpack.c.l.b16 %v3370
      %v4073 = vunpack.c.l.b16 %v3372
      %v4074 = vunpack.c.l.b16 %v3373
      %v4075 = vunpack.c.l.b16 %v3375
      %v4076 = vunpack.c.l.b16 %v3376
      %v4077 = vunpack.c.l.b16 %v3378
      %v4078 = vunpack.c.l.b16 %v3379
      %v4079 = vunpack.c.l.b16 %v3381
      %v4080 = vunpack.c.l.b16 %v3382
      %v4081 = vunpack.c.l.b16 %v3384
      %v4082 = vunpack.c.l.b16 %v3385
      %v4083 = vunpack.c.l.b16 %v3387
      %v4084 = vunpack.c.l.b16 %v3388
      %v4085 = vunpack.c.l.b16 %v3390
      %v4086 = vunpack.c.l.b16 %v3391
      %v4087 = vunpack.c.l.b16 %v3393
      %v4088 = vunpack.c.l.b16 %v3394
      %v4089 = vunpack.c.l.b16 %v3396
      %v4090 = vunpack.c.l.b16 %v3397
      %v4091 = vunpack.c.l.b16 %v3399
      %v4092 = vunpack.c.l.b16 %v3400
      %v4093 = vunpack.c.l.b16 %v3402
      %v4094 = vunpack.c.l.b16 %v3403
      %v4095 = vunpack.c.l.b16 %v3405
      %v4096 = vunpack.c.l.b16 %v3406
      %v4097 = vunpack.c.l.b16 %v3408
      %v4098 = vunpack.c.l.b16 %v3409
      %v4099 = vpack.c.b16 %v4068, %v4067
      %v4100 = vpack.c.b16 %v4070, %v4069
      %v4101 = vpack.c.b16 %v4072, %v4071
      %v4102 = vpack.c.b16 %v4074, %v4073
      %v4103 = vpack.c.b16 %v4076, %v4075
      %v4104 = vpack.c.b16 %v4078, %v4077
      %v4105 = vpack.c.b16 %v4080, %v4079
      %v4106 = vpack.c.b16 %v4082, %v4081
      %v4107 = vpack.c.b16 %v4084, %v4083
      %v4108 = vpack.c.b16 %v4086, %v4085
      %v4109 = vpack.c.b16 %v4088, %v4087
      %v4110 = vpack.c.b16 %v4090, %v4089
      %v4111 = vpack.c.b16 %v4092, %v4091
      %v4112 = vpack.c.b16 %v4094, %v4093
      %v4113 = vpack.c.b16 %v4096, %v4095
      %v4114 = vpack.c.b16 %v4098, %v4097
      %v4147 = vunpack.c.l.b16 %v3417
      %v4148 = vunpack.c.l.b16 %v3418
      %v4149 = vunpack.c.l.b16 %v3419
      %v4150 = vunpack.c.l.b16 %v3420
      %v4151 = vunpack.c.l.b16 %v3421
      %v4152 = vunpack.c.l.b16 %v3422
      %v4153 = vunpack.c.l.b16 %v3423
      %v4154 = vunpack.c.l.b16 %v3424
      %v4155 = vunpack.c.l.b16 %v3425
      %v4156 = vunpack.c.l.b16 %v3426
      %v4157 = vunpack.c.l.b16 %v3427
      %v4158 = vunpack.c.l.b16 %v3428
      %v4159 = vunpack.c.l.b16 %v3429
      %v4160 = vunpack.c.l.b16 %v3430
      %v4161 = vunpack.c.l.b16 %v3431
      %v4162 = vunpack.c.l.b16 %v3432
      %v4163 = vpack.c.b16 %v4148, %v4147
      %v4164 = vpack.c.b16 %v4150, %v4149
      %v4165 = vpack.c.b16 %v4152, %v4151
      %v4166 = vpack.c.b16 %v4154, %v4153
      %v4167 = vpack.c.b16 %v4156, %v4155
      %v4168 = vpack.c.b16 %v4158, %v4157
      %v4169 = vpack.c.b16 %v4160, %v4159
      %v4170 = vpack.c.b16 %v4162, %v4161
      %4179 = vmatpush.bf16.msra.mxu0 %v4170
      %4180 = vmatpush.bf16.msra.mxu0 %v4169
      %4181 = vmatpush.bf16.msra.mxu0 %v4168
      %4182 = vmatpush.bf16.msra.mxu0 %v4167
      %4183 = vmatpush.bf16.msra.mxu0 %v4166
      %4184 = vmatpush.bf16.msra.mxu0 %v4165
      %4185 = vmatpush.bf16.msra.mxu0 %v4164
      %4186 = vmatpush.bf16.msra.mxu0 %v4163
      %4187 = vmatmul.bf16.gmra.mxu0 %v4099
      %v4188 = vpop.f32.mrf.mxu0
      %v4189 = vadd.f32 %v3956, %v4188
      %v4190 = vpop.f32.mrf.mxu0
      %v4191 = vadd.f32 %v3958, %v4190
      %4192 = vmatmul.bf16.gmra.mxu0 %v4100
      %v4193 = vpop.f32.mrf.mxu0
      %v4194 = vadd.f32 %v3961, %v4193
      %v4195 = vpop.f32.mrf.mxu0
      %v4196 = vadd.f32 %v3963, %v4195
      %4197 = vmatmul.bf16.gmra.mxu0 %v4101
      %v4198 = vpop.f32.mrf.mxu0
      %v4199 = vadd.f32 %v3966, %v4198
      %v4200 = vpop.f32.mrf.mxu0
      %v4201 = vadd.f32 %v3968, %v4200
      %4202 = vmatmul.bf16.gmra.mxu0 %v4102
      %v4203 = vpop.f32.mrf.mxu0
      %v4204 = vadd.f32 %v3971, %v4203
      %v4205 = vpop.f32.mrf.mxu0
      %v4206 = vadd.f32 %v3973, %v4205
      %4207 = vmatmul.bf16.gmra.mxu0 %v4103
      %v4208 = vpop.f32.mrf.mxu0
      %v4209 = vadd.f32 %v3976, %v4208
      %v4210 = vpop.f32.mrf.mxu0
      %v4211 = vadd.f32 %v3978, %v4210
      %4212 = vmatmul.bf16.gmra.mxu0 %v4104
      %v4213 = vpop.f32.mrf.mxu0
      %v4214 = vadd.f32 %v3981, %v4213
      %v4215 = vpop.f32.mrf.mxu0
      %v4216 = vadd.f32 %v3983, %v4215
      %4217 = vmatmul.bf16.gmra.mxu0 %v4105
      %v4218 = vpop.f32.mrf.mxu0
      %v4219 = vadd.f32 %v3986, %v4218
      %v4220 = vpop.f32.mrf.mxu0
      %v4221 = vadd.f32 %v3988, %v4220
      %4222 = vmatmul.bf16.gmra.mxu0 %v4106
      %v4223 = vpop.f32.mrf.mxu0
      %v4224 = vadd.f32 %v3991, %v4223
      %v4225 = vpop.f32.mrf.mxu0
      %v4226 = vadd.f32 %v3993, %v4225
      %4227 = vmatmul.bf16.gmra.mxu0 %v4107
      %v4228 = vpop.f32.mrf.mxu0
      %v4229 = vadd.f32 %v3996, %v4228
      %v4230 = vpop.f32.mrf.mxu0
      %v4231 = vadd.f32 %v3998, %v4230
      %4232 = vmatmul.bf16.gmra.mxu0 %v4108
      %v4233 = vpop.f32.mrf.mxu0
      %v4234 = vadd.f32 %v4001, %v4233
      %v4235 = vpop.f32.mrf.mxu0
      %v4236 = vadd.f32 %v4003, %v4235
      %4237 = vmatmul.bf16.gmra.mxu0 %v4109
      %v4238 = vpop.f32.mrf.mxu0
      %v4239 = vadd.f32 %v4006, %v4238
      %v4240 = vpop.f32.mrf.mxu0
      %v4241 = vadd.f32 %v4008, %v4240
      %4242 = vmatmul.bf16.gmra.mxu0 %v4110
      %v4243 = vpop.f32.mrf.mxu0
      %v4244 = vadd.f32 %v4011, %v4243
      %v4245 = vpop.f32.mrf.mxu0
      %v4246 = vadd.f32 %v4013, %v4245
      %4247 = vmatmul.bf16.gmra.mxu0 %v4111
      %v4248 = vpop.f32.mrf.mxu0
      %v4249 = vadd.f32 %v4016, %v4248
      %v4250 = vpop.f32.mrf.mxu0
      %v4251 = vadd.f32 %v4018, %v4250
      %4252 = vmatmul.bf16.gmra.mxu0 %v4112
      %v4253 = vpop.f32.mrf.mxu0
      %v4254 = vadd.f32 %v4021, %v4253
      %v4255 = vpop.f32.mrf.mxu0
      %v4256 = vadd.f32 %v4023, %v4255
      %4257 = vmatmul.bf16.gmra.mxu0 %v4113
      %v4258 = vpop.f32.mrf.mxu0
      %v4259 = vadd.f32 %v4026, %v4258
      %v4260 = vpop.f32.mrf.mxu0
      %v4261 = vadd.f32 %v4028, %v4260
      %4262 = vmatmul.bf16.gmra.mxu0 %v4114
      %v4263 = vpop.f32.mrf.mxu0
      %v4264 = vadd.f32 %v4031, %v4263
      %v4265 = vpop.f32.mrf.mxu0
      %v4266 = vadd.f32 %v4033, %v4265
      %4267 = vdwg.mxu0
      %v4284 = vrot.slane %v3363, 5
      %v4285 = vrot.slane %v4284, 4
      %v4286 = vrot.slane %v3364, 5
      %v4287 = vsel %vm1287, %v4285, %v4286
      %v4288 = vrot.slane %v4286, 4
      %v4289 = vrot.slane %v3365, 5
      %v4290 = vsel %vm1287, %v4288, %v4289
      %v4291 = vrot.slane %v3366, 5
      %v4292 = vrot.slane %v4291, 4
      %v4293 = vrot.slane %v3367, 5
      %v4294 = vsel %vm1287, %v4292, %v4293
      %v4295 = vrot.slane %v4293, 4
      %v4296 = vrot.slane %v3368, 5
      %v4297 = vsel %vm1287, %v4295, %v4296
      %v4298 = vrot.slane %v3369, 5
      %v4299 = vrot.slane %v4298, 4
      %v4300 = vrot.slane %v3370, 5
      %v4301 = vsel %vm1287, %v4299, %v4300
      %v4302 = vrot.slane %v4300, 4
      %v4303 = vrot.slane %v3371, 5
      %v4304 = vsel %vm1287, %v4302, %v4303
      %v4305 = vrot.slane %v3372, 5
      %v4306 = vrot.slane %v4305, 4
      %v4307 = vrot.slane %v3373, 5
      %v4308 = vsel %vm1287, %v4306, %v4307
      %v4309 = vrot.slane %v4307, 4
      %v4310 = vrot.slane %v3374, 5
      %v4311 = vsel %vm1287, %v4309, %v4310
      %v4312 = vrot.slane %v3375, 5
      %v4313 = vrot.slane %v4312, 4
      %v4314 = vrot.slane %v3376, 5
      %v4315 = vsel %vm1287, %v4313, %v4314
      %v4316 = vrot.slane %v4314, 4
      %v4317 = vrot.slane %v3377, 5
      %v4318 = vsel %vm1287, %v4316, %v4317
      %v4319 = vrot.slane %v3378, 5
      %v4320 = vrot.slane %v4319, 4
      %v4321 = vrot.slane %v3379, 5
      %v4322 = vsel %vm1287, %v4320, %v4321
      %v4323 = vrot.slane %v4321, 4
      %v4324 = vrot.slane %v3380, 5
      %v4325 = vsel %vm1287, %v4323, %v4324
      %v4326 = vrot.slane %v3381, 5
      %v4327 = vrot.slane %v4326, 4
      %v4328 = vrot.slane %v3382, 5
      %v4329 = vsel %vm1287, %v4327, %v4328
      %v4330 = vrot.slane %v4328, 4
      %v4331 = vrot.slane %v3383, 5
      %v4332 = vsel %vm1287, %v4330, %v4331
      %v4333 = vrot.slane %v3384, 5
      %v4334 = vrot.slane %v4333, 4
      %v4335 = vrot.slane %v3385, 5
      %v4336 = vsel %vm1287, %v4334, %v4335
      %v4337 = vrot.slane %v4335, 4
      %v4338 = vrot.slane %v3386, 5
      %v4339 = vsel %vm1287, %v4337, %v4338
      %v4340 = vrot.slane %v3387, 5
      %v4341 = vrot.slane %v4340, 4
      %v4342 = vrot.slane %v3388, 5
      %v4343 = vsel %vm1287, %v4341, %v4342
      %v4344 = vrot.slane %v4342, 4
      %v4345 = vrot.slane %v3389, 5
      %v4346 = vsel %vm1287, %v4344, %v4345
      %v4347 = vrot.slane %v3390, 5
      %v4348 = vrot.slane %v4347, 4
      %v4349 = vrot.slane %v3391, 5
      %v4350 = vsel %vm1287, %v4348, %v4349
      %v4351 = vrot.slane %v4349, 4
      %v4352 = vrot.slane %v3392, 5
      %v4353 = vsel %vm1287, %v4351, %v4352
      %v4354 = vrot.slane %v3393, 5
      %v4355 = vrot.slane %v4354, 4
      %v4356 = vrot.slane %v3394, 5
      %v4357 = vsel %vm1287, %v4355, %v4356
      %v4358 = vrot.slane %v4356, 4
      %v4359 = vrot.slane %v3395, 5
      %v4360 = vsel %vm1287, %v4358, %v4359
      %v4361 = vrot.slane %v3396, 5
      %v4362 = vrot.slane %v4361, 4
      %v4363 = vrot.slane %v3397, 5
      %v4364 = vsel %vm1287, %v4362, %v4363
      %v4365 = vrot.slane %v4363, 4
      %v4366 = vrot.slane %v3398, 5
      %v4367 = vsel %vm1287, %v4365, %v4366
      %v4368 = vrot.slane %v3399, 5
      %v4369 = vrot.slane %v4368, 4
      %v4370 = vrot.slane %v3400, 5
      %v4371 = vsel %vm1287, %v4369, %v4370
      %v4372 = vrot.slane %v4370, 4
      %v4373 = vrot.slane %v3401, 5
      %v4374 = vsel %vm1287, %v4372, %v4373
      %v4375 = vrot.slane %v3402, 5
      %v4376 = vrot.slane %v4375, 4
      %v4377 = vrot.slane %v3403, 5
      %v4378 = vsel %vm1287, %v4376, %v4377
      %v4379 = vrot.slane %v4377, 4
      %v4380 = vrot.slane %v3404, 5
      %v4381 = vsel %vm1287, %v4379, %v4380
      %v4382 = vrot.slane %v3405, 5
      %v4383 = vrot.slane %v4382, 4
      %v4384 = vrot.slane %v3406, 5
      %v4385 = vsel %vm1287, %v4383, %v4384
      %v4386 = vrot.slane %v4384, 4
      %v4387 = vrot.slane %v3407, 5
      %v4388 = vsel %vm1287, %v4386, %v4387
      %v4389 = vrot.slane %v3408, 5
      %v4390 = vrot.slane %v4389, 4
      %v4391 = vrot.slane %v3409, 5
      %v4392 = vsel %vm1287, %v4390, %v4391
      %v4393 = vrot.slane %v4391, 4
      %v4394 = vrot.slane %v3410, 5
      %v4395 = vsel %vm1287, %v4393, %v4394
      %s4396 = scalar_lea.vmem %s2, 128
      %v4397 = vld [vmem:[%s4396] sm:$0xf]
      %v4398 = vld [vmem:[%s4396 + $0x4] sm:$0xf]
      %v4399 = vld [vmem:[%s4396 + $0x8] sm:$0xf]
      %v4400 = vld [vmem:[%s4396 + $0xc] sm:$0xf]
      %v4401 = vld [vmem:[%s4396 + $0x10] sm:$0xf]
      %v4402 = vld [vmem:[%s4396 + $0x14] sm:$0xf]
      %v4403 = vld [vmem:[%s4396 + $0x18] sm:$0xf]
      %v4404 = vld [vmem:[%s4396 + $0x1c] sm:$0xf]
      %v4405 = vld [vmem:[%s4396 + $0x20] sm:$0xf]
      %v4406 = vld [vmem:[%s4396 + $0x24] sm:$0xf]
      %v4407 = vld [vmem:[%s4396 + $0x28] sm:$0xf]
      %v4408 = vld [vmem:[%s4396 + $0x2c] sm:$0xf]
      %v4409 = vld [vmem:[%s4396 + $0x30] sm:$0xf]
      %v4410 = vld [vmem:[%s4396 + $0x34] sm:$0xf]
      %v4411 = vld [vmem:[%s4396 + $0x38] sm:$0xf]
      %v4412 = vld [vmem:[%s4396 + $0x3c] sm:$0xf]
      %v4413 = vunpack.c.l.b16 %v4287
      %v4414 = vunpack.c.l.b16 %v4290
      %v4415 = vunpack.c.l.b16 %v4294
      %v4416 = vunpack.c.l.b16 %v4297
      %v4417 = vunpack.c.l.b16 %v4301
      %v4418 = vunpack.c.l.b16 %v4304
      %v4419 = vunpack.c.l.b16 %v4308
      %v4420 = vunpack.c.l.b16 %v4311
      %v4421 = vunpack.c.l.b16 %v4315
      %v4422 = vunpack.c.l.b16 %v4318
      %v4423 = vunpack.c.l.b16 %v4322
      %v4424 = vunpack.c.l.b16 %v4325
      %v4425 = vunpack.c.l.b16 %v4329
      %v4426 = vunpack.c.l.b16 %v4332
      %v4427 = vunpack.c.l.b16 %v4336
      %v4428 = vunpack.c.l.b16 %v4339
      %v4429 = vunpack.c.l.b16 %v4343
      %v4430 = vunpack.c.l.b16 %v4346
      %v4431 = vunpack.c.l.b16 %v4350
      %v4432 = vunpack.c.l.b16 %v4353
      %v4433 = vunpack.c.l.b16 %v4357
      %v4434 = vunpack.c.l.b16 %v4360
      %v4435 = vunpack.c.l.b16 %v4364
      %v4436 = vunpack.c.l.b16 %v4367
      %v4437 = vunpack.c.l.b16 %v4371
      %v4438 = vunpack.c.l.b16 %v4374
      %v4439 = vunpack.c.l.b16 %v4378
      %v4440 = vunpack.c.l.b16 %v4381
      %v4441 = vunpack.c.l.b16 %v4385
      %v4442 = vunpack.c.l.b16 %v4388
      %v4443 = vunpack.c.l.b16 %v4392
      %v4444 = vunpack.c.l.b16 %v4395
      %v4445 = vpack.c.b16 %v4414, %v4413
      %v4446 = vpack.c.b16 %v4416, %v4415
      %v4447 = vpack.c.b16 %v4418, %v4417
      %v4448 = vpack.c.b16 %v4420, %v4419
      %v4449 = vpack.c.b16 %v4422, %v4421
      %v4450 = vpack.c.b16 %v4424, %v4423
      %v4451 = vpack.c.b16 %v4426, %v4425
      %v4452 = vpack.c.b16 %v4428, %v4427
      %v4453 = vpack.c.b16 %v4430, %v4429
      %v4454 = vpack.c.b16 %v4432, %v4431
      %v4455 = vpack.c.b16 %v4434, %v4433
      %v4456 = vpack.c.b16 %v4436, %v4435
      %v4457 = vpack.c.b16 %v4438, %v4437
      %v4458 = vpack.c.b16 %v4440, %v4439
      %v4459 = vpack.c.b16 %v4442, %v4441
      %v4460 = vpack.c.b16 %v4444, %v4443
      %v4493 = vunpack.c.l.b16 %v4397
      %v4494 = vunpack.c.l.b16 %v4398
      %v4495 = vunpack.c.l.b16 %v4399
      %v4496 = vunpack.c.l.b16 %v4400
      %v4497 = vunpack.c.l.b16 %v4401
      %v4498 = vunpack.c.l.b16 %v4402
      %v4499 = vunpack.c.l.b16 %v4403
      %v4500 = vunpack.c.l.b16 %v4404
      %v4501 = vunpack.c.l.b16 %v4405
      %v4502 = vunpack.c.l.b16 %v4406
      %v4503 = vunpack.c.l.b16 %v4407
      %v4504 = vunpack.c.l.b16 %v4408
      %v4505 = vunpack.c.l.b16 %v4409
      %v4506 = vunpack.c.l.b16 %v4410
      %v4507 = vunpack.c.l.b16 %v4411
      %v4508 = vunpack.c.l.b16 %v4412
      %v4509 = vpack.c.b16 %v4494, %v4493
      %v4510 = vpack.c.b16 %v4496, %v4495
      %v4511 = vpack.c.b16 %v4498, %v4497
      %v4512 = vpack.c.b16 %v4500, %v4499
      %v4513 = vpack.c.b16 %v4502, %v4501
      %v4514 = vpack.c.b16 %v4504, %v4503
      %v4515 = vpack.c.b16 %v4506, %v4505
      %v4516 = vpack.c.b16 %v4508, %v4507
      %4525 = vmatpush.bf16.msra.mxu0 %v4516
      %4526 = vmatpush.bf16.msra.mxu0 %v4515
      %4527 = vmatpush.bf16.msra.mxu0 %v4514
      %4528 = vmatpush.bf16.msra.mxu0 %v4513
      %4529 = vmatpush.bf16.msra.mxu0 %v4512
      %4530 = vmatpush.bf16.msra.mxu0 %v4511
      %4531 = vmatpush.bf16.msra.mxu0 %v4510
      %4532 = vmatpush.bf16.msra.mxu0 %v4509
      %4533 = vmatmul.bf16.gmra.mxu0 %v4445
      %v4534 = vpop.f32.mrf.mxu0
      %v4535 = vadd.f32 0.0, %v4534
      %v4536 = vpop.f32.mrf.mxu0
      %v4537 = vadd.f32 0.0, %v4536
      %4538 = vmatmul.bf16.gmra.mxu0 %v4446
      %v4539 = vpop.f32.mrf.mxu0
      %v4540 = vadd.f32 0.0, %v4539
      %v4541 = vpop.f32.mrf.mxu0
      %v4542 = vadd.f32 0.0, %v4541
      %4543 = vmatmul.bf16.gmra.mxu0 %v4447
      %v4544 = vpop.f32.mrf.mxu0
      %v4545 = vadd.f32 0.0, %v4544
      %v4546 = vpop.f32.mrf.mxu0
      %v4547 = vadd.f32 0.0, %v4546
      %4548 = vmatmul.bf16.gmra.mxu0 %v4448
      %v4549 = vpop.f32.mrf.mxu0
      %v4550 = vadd.f32 0.0, %v4549
      %v4551 = vpop.f32.mrf.mxu0
      %v4552 = vadd.f32 0.0, %v4551
      %4553 = vmatmul.bf16.gmra.mxu0 %v4449
      %v4554 = vpop.f32.mrf.mxu0
      %v4555 = vadd.f32 0.0, %v4554
      %v4556 = vpop.f32.mrf.mxu0
      %v4557 = vadd.f32 0.0, %v4556
      %4558 = vmatmul.bf16.gmra.mxu0 %v4450
      %v4559 = vpop.f32.mrf.mxu0
      %v4560 = vadd.f32 0.0, %v4559
      %v4561 = vpop.f32.mrf.mxu0
      %v4562 = vadd.f32 0.0, %v4561
      %4563 = vmatmul.bf16.gmra.mxu0 %v4451
      %v4564 = vpop.f32.mrf.mxu0
      %v4565 = vadd.f32 0.0, %v4564
      %v4566 = vpop.f32.mrf.mxu0
      %v4567 = vadd.f32 0.0, %v4566
      %4568 = vmatmul.bf16.gmra.mxu0 %v4452
      %v4569 = vpop.f32.mrf.mxu0
      %v4570 = vadd.f32 0.0, %v4569
      %v4571 = vpop.f32.mrf.mxu0
      %v4572 = vadd.f32 0.0, %v4571
      %4573 = vmatmul.bf16.gmra.mxu0 %v4453
      %v4574 = vpop.f32.mrf.mxu0
      %v4575 = vadd.f32 0.0, %v4574
      %v4576 = vpop.f32.mrf.mxu0
      %v4577 = vadd.f32 0.0, %v4576
      %4578 = vmatmul.bf16.gmra.mxu0 %v4454
      %v4579 = vpop.f32.mrf.mxu0
      %v4580 = vadd.f32 0.0, %v4579
      %v4581 = vpop.f32.mrf.mxu0
      %v4582 = vadd.f32 0.0, %v4581
      %4583 = vmatmul.bf16.gmra.mxu0 %v4455
      %v4584 = vpop.f32.mrf.mxu0
      %v4585 = vadd.f32 0.0, %v4584
      %v4586 = vpop.f32.mrf.mxu0
      %v4587 = vadd.f32 0.0, %v4586
      %4588 = vmatmul.bf16.gmra.mxu0 %v4456
      %v4589 = vpop.f32.mrf.mxu0
      %v4590 = vadd.f32 0.0, %v4589
      %v4591 = vpop.f32.mrf.mxu0
      %v4592 = vadd.f32 0.0, %v4591
      %4593 = vmatmul.bf16.gmra.mxu0 %v4457
      %v4594 = vpop.f32.mrf.mxu0
      %v4595 = vadd.f32 0.0, %v4594
      %v4596 = vpop.f32.mrf.mxu0
      %v4597 = vadd.f32 0.0, %v4596
      %4598 = vmatmul.bf16.gmra.mxu0 %v4458
      %v4599 = vpop.f32.mrf.mxu0
      %v4600 = vadd.f32 0.0, %v4599
      %v4601 = vpop.f32.mrf.mxu0
      %v4602 = vadd.f32 0.0, %v4601
      %4603 = vmatmul.bf16.gmra.mxu0 %v4459
      %v4604 = vpop.f32.mrf.mxu0
      %v4605 = vadd.f32 0.0, %v4604
      %v4606 = vpop.f32.mrf.mxu0
      %v4607 = vadd.f32 0.0, %v4606
      %4608 = vmatmul.bf16.gmra.mxu0 %v4460
      %v4609 = vpop.f32.mrf.mxu0
      %v4610 = vadd.f32 0.0, %v4609
      %v4611 = vpop.f32.mrf.mxu0
      %v4612 = vadd.f32 0.0, %v4611
      %4613 = vdwg.mxu0
      %v4614 = vadd.f32 %v4189, %v4535
      %v4615 = vadd.f32 %v4191, %v4537
      %v4616 = vadd.f32 %v4194, %v4540
      %v4617 = vadd.f32 %v4196, %v4542
      %v4618 = vadd.f32 %v4199, %v4545
      %v4619 = vadd.f32 %v4201, %v4547
      %v4620 = vadd.f32 %v4204, %v4550
      %v4621 = vadd.f32 %v4206, %v4552
      %v4622 = vadd.f32 %v4209, %v4555
      %v4623 = vadd.f32 %v4211, %v4557
      %v4624 = vadd.f32 %v4214, %v4560
      %v4625 = vadd.f32 %v4216, %v4562
      %v4626 = vadd.f32 %v4219, %v4565
      %v4627 = vadd.f32 %v4221, %v4567
      %v4628 = vadd.f32 %v4224, %v4570
      %v4629 = vadd.f32 %v4226, %v4572
      %v4630 = vadd.f32 %v4229, %v4575
      %v4631 = vadd.f32 %v4231, %v4577
      %v4632 = vadd.f32 %v4234, %v4580
      %v4633 = vadd.f32 %v4236, %v4582
      %v4634 = vadd.f32 %v4239, %v4585
      %v4635 = vadd.f32 %v4241, %v4587
      %v4636 = vadd.f32 %v4244, %v4590
      %v4637 = vadd.f32 %v4246, %v4592
      %v4638 = vadd.f32 %v4249, %v4595
      %v4639 = vadd.f32 %v4251, %v4597
      %v4640 = vadd.f32 %v4254, %v4600
      %v4641 = vadd.f32 %v4256, %v4602
      %v4642 = vadd.f32 %v4259, %v4605
      %v4643 = vadd.f32 %v4261, %v4607
      %v4644 = vadd.f32 %v4264, %v4610
      %v4645 = vadd.f32 %v4266, %v4612
      %s4646 = scalar_lea.vmem %s2, 192
      %v4647 = vld [vmem:[%s4646] sm:$0xf]
      %v4648 = vld [vmem:[%s4646 + $0x4] sm:$0xf]
      %v4649 = vld [vmem:[%s4646 + $0x8] sm:$0xf]
      %v4650 = vld [vmem:[%s4646 + $0xc] sm:$0xf]
      %v4651 = vld [vmem:[%s4646 + $0x10] sm:$0xf]
      %v4652 = vld [vmem:[%s4646 + $0x14] sm:$0xf]
      %v4653 = vld [vmem:[%s4646 + $0x18] sm:$0xf]
      %v4654 = vld [vmem:[%s4646 + $0x1c] sm:$0xf]
      %v4655 = vld [vmem:[%s4646 + $0x20] sm:$0xf]
      %v4656 = vld [vmem:[%s4646 + $0x24] sm:$0xf]
      %v4657 = vld [vmem:[%s4646 + $0x28] sm:$0xf]
      %v4658 = vld [vmem:[%s4646 + $0x2c] sm:$0xf]
      %v4659 = vld [vmem:[%s4646 + $0x30] sm:$0xf]
      %v4660 = vld [vmem:[%s4646 + $0x34] sm:$0xf]
      %v4661 = vld [vmem:[%s4646 + $0x38] sm:$0xf]
      %v4662 = vld [vmem:[%s4646 + $0x3c] sm:$0xf]
      %v4665 = vunpack.c.l.b16 %v3411
      %v4666 = vunpack.c.l.b16 %v3412
      %v4667 = vpack.c.b16 %v4666, %v4665
      %v4685 = vunpack.c.l.b16 %v4647
      %v4686 = vunpack.c.l.b16 %v4648
      %v4687 = vunpack.c.l.b16 %v4649
      %v4688 = vunpack.c.l.b16 %v4650
      %v4689 = vunpack.c.l.b16 %v4651
      %v4690 = vunpack.c.l.b16 %v4652
      %v4691 = vunpack.c.l.b16 %v4653
      %v4692 = vunpack.c.l.b16 %v4654
      %v4693 = vunpack.c.l.b16 %v4655
      %v4694 = vunpack.c.l.b16 %v4656
      %v4695 = vunpack.c.l.b16 %v4657
      %v4696 = vunpack.c.l.b16 %v4658
      %v4697 = vunpack.c.l.b16 %v4659
      %v4698 = vunpack.c.l.b16 %v4660
      %v4699 = vunpack.c.l.b16 %v4661
      %v4700 = vunpack.c.l.b16 %v4662
      %v4701 = vpack.c.b16 %v4686, %v4685
      %v4702 = vpack.c.b16 %v4688, %v4687
      %v4703 = vpack.c.b16 %v4690, %v4689
      %v4704 = vpack.c.b16 %v4692, %v4691
      %v4705 = vpack.c.b16 %v4694, %v4693
      %v4706 = vpack.c.b16 %v4696, %v4695
      %v4707 = vpack.c.b16 %v4698, %v4697
      %v4708 = vpack.c.b16 %v4700, %v4699
      %4717 = vmatpush.bf16.msra.mxu0 %v4708
      %4718 = vmatpush.bf16.msra.mxu0 %v4707
      %4719 = vmatpush.bf16.msra.mxu0 %v4706
      %4720 = vmatpush.bf16.msra.mxu0 %v4705
      %4721 = vmatpush.bf16.msra.mxu0 %v4704
      %4722 = vmatpush.bf16.msra.mxu0 %v4703
      %4723 = vmatpush.bf16.msra.mxu0 %v4702
      %4724 = vmatpush.bf16.msra.mxu0 %v4701
      %4725 = vmatmul.bf16.gmra.mxu0 %v4100
      %v4726 = vpop.f32.mrf.mxu0
      %v4727 = vadd.f32 0.0, %v4726
      %v4728 = vpop.f32.mrf.mxu0
      %v4729 = vadd.f32 0.0, %v4728
      %4730 = vmatmul.bf16.gmra.mxu0 %v4101
      %v4731 = vpop.f32.mrf.mxu0
      %v4732 = vadd.f32 0.0, %v4731
      %v4733 = vpop.f32.mrf.mxu0
      %v4734 = vadd.f32 0.0, %v4733
      %4735 = vmatmul.bf16.gmra.mxu0 %v4102
      %v4736 = vpop.f32.mrf.mxu0
      %v4737 = vadd.f32 0.0, %v4736
      %v4738 = vpop.f32.mrf.mxu0
      %v4739 = vadd.f32 0.0, %v4738
      %4740 = vmatmul.bf16.gmra.mxu0 %v4103
      %v4741 = vpop.f32.mrf.mxu0
      %v4742 = vadd.f32 0.0, %v4741
      %v4743 = vpop.f32.mrf.mxu0
      %v4744 = vadd.f32 0.0, %v4743
      %4745 = vmatmul.bf16.gmra.mxu0 %v4104
      %v4746 = vpop.f32.mrf.mxu0
      %v4747 = vadd.f32 0.0, %v4746
      %v4748 = vpop.f32.mrf.mxu0
      %v4749 = vadd.f32 0.0, %v4748
      %4750 = vmatmul.bf16.gmra.mxu0 %v4105
      %v4751 = vpop.f32.mrf.mxu0
      %v4752 = vadd.f32 0.0, %v4751
      %v4753 = vpop.f32.mrf.mxu0
      %v4754 = vadd.f32 0.0, %v4753
      %4755 = vmatmul.bf16.gmra.mxu0 %v4106
      %v4756 = vpop.f32.mrf.mxu0
      %v4757 = vadd.f32 0.0, %v4756
      %v4758 = vpop.f32.mrf.mxu0
      %v4759 = vadd.f32 0.0, %v4758
      %4760 = vmatmul.bf16.gmra.mxu0 %v4107
      %v4761 = vpop.f32.mrf.mxu0
      %v4762 = vadd.f32 0.0, %v4761
      %v4763 = vpop.f32.mrf.mxu0
      %v4764 = vadd.f32 0.0, %v4763
      %4765 = vmatmul.bf16.gmra.mxu0 %v4108
      %v4766 = vpop.f32.mrf.mxu0
      %v4767 = vadd.f32 0.0, %v4766
      %v4768 = vpop.f32.mrf.mxu0
      %v4769 = vadd.f32 0.0, %v4768
      %4770 = vmatmul.bf16.gmra.mxu0 %v4109
      %v4771 = vpop.f32.mrf.mxu0
      %v4772 = vadd.f32 0.0, %v4771
      %v4773 = vpop.f32.mrf.mxu0
      %v4774 = vadd.f32 0.0, %v4773
      %4775 = vmatmul.bf16.gmra.mxu0 %v4110
      %v4776 = vpop.f32.mrf.mxu0
      %v4777 = vadd.f32 0.0, %v4776
      %v4778 = vpop.f32.mrf.mxu0
      %v4779 = vadd.f32 0.0, %v4778
      %4780 = vmatmul.bf16.gmra.mxu0 %v4111
      %v4781 = vpop.f32.mrf.mxu0
      %v4782 = vadd.f32 0.0, %v4781
      %v4783 = vpop.f32.mrf.mxu0
      %v4784 = vadd.f32 0.0, %v4783
      %4785 = vmatmul.bf16.gmra.mxu0 %v4112
      %v4786 = vpop.f32.mrf.mxu0
      %v4787 = vadd.f32 0.0, %v4786
      %v4788 = vpop.f32.mrf.mxu0
      %v4789 = vadd.f32 0.0, %v4788
      %4790 = vmatmul.bf16.gmra.mxu0 %v4113
      %v4791 = vpop.f32.mrf.mxu0
      %v4792 = vadd.f32 0.0, %v4791
      %v4793 = vpop.f32.mrf.mxu0
      %v4794 = vadd.f32 0.0, %v4793
      %4795 = vmatmul.bf16.gmra.mxu0 %v4114
      %v4796 = vpop.f32.mrf.mxu0
      %v4797 = vadd.f32 0.0, %v4796
      %v4798 = vpop.f32.mrf.mxu0
      %v4799 = vadd.f32 0.0, %v4798
      %4800 = vmatmul.bf16.gmra.mxu0 %v4667
      %v4801 = vpop.f32.mrf.mxu0
      %v4802 = vadd.f32 0.0, %v4801
      %v4803 = vpop.f32.mrf.mxu0
      %v4804 = vadd.f32 0.0, %v4803
      %4805 = vdwg.mxu0
      %v4806 = vadd.f32 %v4614, %v4727
      %v4807 = vadd.f32 %v4615, %v4729
      %v4808 = vadd.f32 %v4616, %v4732
      %v4809 = vadd.f32 %v4617, %v4734
      %v4810 = vadd.f32 %v4618, %v4737
      %v4811 = vadd.f32 %v4619, %v4739
      %v4812 = vadd.f32 %v4620, %v4742
      %v4813 = vadd.f32 %v4621, %v4744
      %v4814 = vadd.f32 %v4622, %v4747
      %v4815 = vadd.f32 %v4623, %v4749
      %v4816 = vadd.f32 %v4624, %v4752
      %v4817 = vadd.f32 %v4625, %v4754
      %v4818 = vadd.f32 %v4626, %v4757
      %v4819 = vadd.f32 %v4627, %v4759
      %v4820 = vadd.f32 %v4628, %v4762
      %v4821 = vadd.f32 %v4629, %v4764
      %v4822 = vadd.f32 %v4630, %v4767
      %v4823 = vadd.f32 %v4631, %v4769
      %v4824 = vadd.f32 %v4632, %v4772
      %v4825 = vadd.f32 %v4633, %v4774
      %v4826 = vadd.f32 %v4634, %v4777
      %v4827 = vadd.f32 %v4635, %v4779
      %v4828 = vadd.f32 %v4636, %v4782
      %v4829 = vadd.f32 %v4637, %v4784
      %v4830 = vadd.f32 %v4638, %v4787
      %v4831 = vadd.f32 %v4639, %v4789
      %v4832 = vadd.f32 %v4640, %v4792
      %v4833 = vadd.f32 %v4641, %v4794
      %v4834 = vadd.f32 %v4642, %v4797
      %v4835 = vadd.f32 %v4643, %v4799
      %v4836 = vadd.f32 %v4644, %v4802
      %v4837 = vadd.f32 %v4645, %v4804
      %v4839 = vshrl.u32 %v3411, 16
      %v4841 = vrot.slane %v4839, 4
      %v4842 = vshll.u32 %v3411, 16
      %v4844 = vrot.slane %v4842, 5
      %v4845 = vor.u32 %v4841, %v4844
      %v4846 = vrot.slane %v4845, 4
      %v4848 = vshll.u32 %v3412, 16
      %v4850 = vrot.slane %v4848, 5
      %v4851 = vsel %vm433, %v4846, %v4850
      %v4852 = vshrl.u32 %v3412, 16
      %v4854 = vrot.slane %v4852, 4
      %v4855 = vor.u32 %v4854, %v4850
      %v4856 = vrot.slane %v4855, 4
      %v4858 = vshll.u32 %v3413, 16
      %v4860 = vrot.slane %v4858, 5
      %v4861 = vsel %vm433, %v4856, %v4860
      %s4862 = scalar_lea.vmem %s2, 256
      %v4863 = vld [vmem:[%s4862] sm:$0xf]
      %v4864 = vld [vmem:[%s4862 + $0x4] sm:$0xf]
      %v4865 = vld [vmem:[%s4862 + $0x8] sm:$0xf]
      %v4866 = vld [vmem:[%s4862 + $0xc] sm:$0xf]
      %v4867 = vld [vmem:[%s4862 + $0x10] sm:$0xf]
      %v4868 = vld [vmem:[%s4862 + $0x14] sm:$0xf]
      %v4869 = vld [vmem:[%s4862 + $0x18] sm:$0xf]
      %v4870 = vld [vmem:[%s4862 + $0x1c] sm:$0xf]
      %v4871 = vld [vmem:[%s4862 + $0x20] sm:$0xf]
      %v4872 = vld [vmem:[%s4862 + $0x24] sm:$0xf]
      %v4873 = vld [vmem:[%s4862 + $0x28] sm:$0xf]
      %v4874 = vld [vmem:[%s4862 + $0x2c] sm:$0xf]
      %v4875 = vld [vmem:[%s4862 + $0x30] sm:$0xf]
      %v4876 = vld [vmem:[%s4862 + $0x34] sm:$0xf]
      %v4877 = vld [vmem:[%s4862 + $0x38] sm:$0xf]
      %v4878 = vld [vmem:[%s4862 + $0x3c] sm:$0xf]
      %v4879 = vunpack.c.l.b16 %v4851
      %v4880 = vunpack.c.l.b16 %v4861
      %v4881 = vpack.c.b16 %v4880, %v4879
      %v4899 = vunpack.c.l.b16 %v4863
      %v4900 = vunpack.c.l.b16 %v4864
      %v4901 = vunpack.c.l.b16 %v4865
      %v4902 = vunpack.c.l.b16 %v4866
      %v4903 = vunpack.c.l.b16 %v4867
      %v4904 = vunpack.c.l.b16 %v4868
      %v4905 = vunpack.c.l.b16 %v4869
      %v4906 = vunpack.c.l.b16 %v4870
      %v4907 = vunpack.c.l.b16 %v4871
      %v4908 = vunpack.c.l.b16 %v4872
      %v4909 = vunpack.c.l.b16 %v4873
      %v4910 = vunpack.c.l.b16 %v4874
      %v4911 = vunpack.c.l.b16 %v4875
      %v4912 = vunpack.c.l.b16 %v4876
      %v4913 = vunpack.c.l.b16 %v4877
      %v4914 = vunpack.c.l.b16 %v4878
      %v4915 = vpack.c.b16 %v4900, %v4899
      %v4916 = vpack.c.b16 %v4902, %v4901
      %v4917 = vpack.c.b16 %v4904, %v4903
      %v4918 = vpack.c.b16 %v4906, %v4905
      %v4919 = vpack.c.b16 %v4908, %v4907
      %v4920 = vpack.c.b16 %v4910, %v4909
      %v4921 = vpack.c.b16 %v4912, %v4911
      %v4922 = vpack.c.b16 %v4914, %v4913
      %4931 = vmatpush.bf16.msra.mxu0 %v4922
      %4932 = vmatpush.bf16.msra.mxu0 %v4921
      %4933 = vmatpush.bf16.msra.mxu0 %v4920
      %4934 = vmatpush.bf16.msra.mxu0 %v4919
      %4935 = vmatpush.bf16.msra.mxu0 %v4918
      %4936 = vmatpush.bf16.msra.mxu0 %v4917
      %4937 = vmatpush.bf16.msra.mxu0 %v4916
      %4938 = vmatpush.bf16.msra.mxu0 %v4915
      %4939 = vmatmul.bf16.gmra.mxu0 %v3867
      %v4940 = vpop.f32.mrf.mxu0
      %v4941 = vadd.f32 0.0, %v4940
      %v4942 = vpop.f32.mrf.mxu0
      %v4943 = vadd.f32 0.0, %v4942
      %4944 = vmatmul.bf16.gmra.mxu0 %v3868
      %v4945 = vpop.f32.mrf.mxu0
      %v4946 = vadd.f32 0.0, %v4945
      %v4947 = vpop.f32.mrf.mxu0
      %v4948 = vadd.f32 0.0, %v4947
      %4949 = vmatmul.bf16.gmra.mxu0 %v3869
      %v4950 = vpop.f32.mrf.mxu0
      %v4951 = vadd.f32 0.0, %v4950
      %v4952 = vpop.f32.mrf.mxu0
      %v4953 = vadd.f32 0.0, %v4952
      %4954 = vmatmul.bf16.gmra.mxu0 %v3870
      %v4955 = vpop.f32.mrf.mxu0
      %v4956 = vadd.f32 0.0, %v4955
      %v4957 = vpop.f32.mrf.mxu0
      %v4958 = vadd.f32 0.0, %v4957
      %4959 = vmatmul.bf16.gmra.mxu0 %v3871
      %v4960 = vpop.f32.mrf.mxu0
      %v4961 = vadd.f32 0.0, %v4960
      %v4962 = vpop.f32.mrf.mxu0
      %v4963 = vadd.f32 0.0, %v4962
      %4964 = vmatmul.bf16.gmra.mxu0 %v3872
      %v4965 = vpop.f32.mrf.mxu0
      %v4966 = vadd.f32 0.0, %v4965
      %v4967 = vpop.f32.mrf.mxu0
      %v4968 = vadd.f32 0.0, %v4967
      %4969 = vmatmul.bf16.gmra.mxu0 %v3873
      %v4970 = vpop.f32.mrf.mxu0
      %v4971 = vadd.f32 0.0, %v4970
      %v4972 = vpop.f32.mrf.mxu0
      %v4973 = vadd.f32 0.0, %v4972
      %4974 = vmatmul.bf16.gmra.mxu0 %v3874
      %v4975 = vpop.f32.mrf.mxu0
      %v4976 = vadd.f32 0.0, %v4975
      %v4977 = vpop.f32.mrf.mxu0
      %v4978 = vadd.f32 0.0, %v4977
      %4979 = vmatmul.bf16.gmra.mxu0 %v3875
      %v4980 = vpop.f32.mrf.mxu0
      %v4981 = vadd.f32 0.0, %v4980
      %v4982 = vpop.f32.mrf.mxu0
      %v4983 = vadd.f32 0.0, %v4982
      %4984 = vmatmul.bf16.gmra.mxu0 %v3876
      %v4985 = vpop.f32.mrf.mxu0
      %v4986 = vadd.f32 0.0, %v4985
      %v4987 = vpop.f32.mrf.mxu0
      %v4988 = vadd.f32 0.0, %v4987
      %4989 = vmatmul.bf16.gmra.mxu0 %v3877
      %v4990 = vpop.f32.mrf.mxu0
      %v4991 = vadd.f32 0.0, %v4990
      %v4992 = vpop.f32.mrf.mxu0
      %v4993 = vadd.f32 0.0, %v4992
      %4994 = vmatmul.bf16.gmra.mxu0 %v3878
      %v4995 = vpop.f32.mrf.mxu0
      %v4996 = vadd.f32 0.0, %v4995
      %v4997 = vpop.f32.mrf.mxu0
      %v4998 = vadd.f32 0.0, %v4997
      %4999 = vmatmul.bf16.gmra.mxu0 %v3879
      %v5000 = vpop.f32.mrf.mxu0
      %v5001 = vadd.f32 0.0, %v5000
      %v5002 = vpop.f32.mrf.mxu0
      %v5003 = vadd.f32 0.0, %v5002
      %5004 = vmatmul.bf16.gmra.mxu0 %v3880
      %v5005 = vpop.f32.mrf.mxu0
      %v5006 = vadd.f32 0.0, %v5005
      %v5007 = vpop.f32.mrf.mxu0
      %v5008 = vadd.f32 0.0, %v5007
      %5009 = vmatmul.bf16.gmra.mxu0 %v3881
      %v5010 = vpop.f32.mrf.mxu0
      %v5011 = vadd.f32 0.0, %v5010
      %v5012 = vpop.f32.mrf.mxu0
      %v5013 = vadd.f32 0.0, %v5012
      %5014 = vmatmul.bf16.gmra.mxu0 %v4881
      %v5015 = vpop.f32.mrf.mxu0
      %v5016 = vadd.f32 0.0, %v5015
      %v5017 = vpop.f32.mrf.mxu0
      %v5018 = vadd.f32 0.0, %v5017
      %5019 = vdwg.mxu0
      %v5020 = vadd.f32 %v4806, %v4941
      %v5021 = vadd.f32 %v4807, %v4943
      %v5022 = vadd.f32 %v4808, %v4946
      %v5023 = vadd.f32 %v4809, %v4948
      %v5024 = vadd.f32 %v4810, %v4951
      %v5025 = vadd.f32 %v4811, %v4953
      %v5026 = vadd.f32 %v4812, %v4956
      %v5027 = vadd.f32 %v4813, %v4958
      %v5028 = vadd.f32 %v4814, %v4961
      %v5029 = vadd.f32 %v4815, %v4963
      %v5030 = vadd.f32 %v4816, %v4966
      %v5031 = vadd.f32 %v4817, %v4968
      %v5032 = vadd.f32 %v4818, %v4971
      %v5033 = vadd.f32 %v4819, %v4973
      %v5034 = vadd.f32 %v4820, %v4976
      %v5035 = vadd.f32 %v4821, %v4978
      %v5036 = vadd.f32 %v4822, %v4981
      %v5037 = vadd.f32 %v4823, %v4983
      %v5038 = vadd.f32 %v4824, %v4986
      %v5039 = vadd.f32 %v4825, %v4988
      %v5040 = vadd.f32 %v4826, %v4991
      %v5041 = vadd.f32 %v4827, %v4993
      %v5042 = vadd.f32 %v4828, %v4996
      %v5043 = vadd.f32 %v4829, %v4998
      %v5044 = vadd.f32 %v4830, %v5001
      %v5045 = vadd.f32 %v4831, %v5003
      %v5046 = vadd.f32 %v4832, %v5006
      %v5047 = vadd.f32 %v4833, %v5008
      %v5048 = vadd.f32 %v4834, %v5011
      %v5049 = vadd.f32 %v4835, %v5013
      %v5050 = vadd.f32 %v4836, %v5016
      %v5051 = vadd.f32 %v4837, %v5018
      %v5053 = vrot.slane %v3411, 5
      %v5054 = vrot.slane %v5053, 4
      %v5055 = vrot.slane %v3412, 5
      %v5056 = vsel %vm1287, %v5054, %v5055
      %v5057 = vrot.slane %v5055, 4
      %v5058 = vrot.slane %v3413, 5
      %v5059 = vsel %vm1287, %v5057, %v5058
      %s5060 = scalar_lea.vmem %s2, 320
      %v5061 = vld [vmem:[%s5060] sm:$0xf]
      %v5062 = vld [vmem:[%s5060 + $0x4] sm:$0xf]
      %v5063 = vld [vmem:[%s5060 + $0x8] sm:$0xf]
      %v5064 = vld [vmem:[%s5060 + $0xc] sm:$0xf]
      %v5065 = vld [vmem:[%s5060 + $0x10] sm:$0xf]
      %v5066 = vld [vmem:[%s5060 + $0x14] sm:$0xf]
      %v5067 = vld [vmem:[%s5060 + $0x18] sm:$0xf]
      %v5068 = vld [vmem:[%s5060 + $0x1c] sm:$0xf]
      %v5069 = vld [vmem:[%s5060 + $0x20] sm:$0xf]
      %v5070 = vld [vmem:[%s5060 + $0x24] sm:$0xf]
      %v5071 = vld [vmem:[%s5060 + $0x28] sm:$0xf]
      %v5072 = vld [vmem:[%s5060 + $0x2c] sm:$0xf]
      %v5073 = vld [vmem:[%s5060 + $0x30] sm:$0xf]
      %v5074 = vld [vmem:[%s5060 + $0x34] sm:$0xf]
      %v5075 = vld [vmem:[%s5060 + $0x38] sm:$0xf]
      %v5076 = vld [vmem:[%s5060 + $0x3c] sm:$0xf]
      %v5077 = vunpack.c.l.b16 %v5056
      %v5078 = vunpack.c.l.b16 %v5059
      %v5079 = vpack.c.b16 %v5078, %v5077
      %v5097 = vunpack.c.l.b16 %v5061
      %v5098 = vunpack.c.l.b16 %v5062
      %v5099 = vunpack.c.l.b16 %v5063
      %v5100 = vunpack.c.l.b16 %v5064
      %v5101 = vunpack.c.l.b16 %v5065
      %v5102 = vunpack.c.l.b16 %v5066
      %v5103 = vunpack.c.l.b16 %v5067
      %v5104 = vunpack.c.l.b16 %v5068
      %v5105 = vunpack.c.l.b16 %v5069
      %v5106 = vunpack.c.l.b16 %v5070
      %v5107 = vunpack.c.l.b16 %v5071
      %v5108 = vunpack.c.l.b16 %v5072
      %v5109 = vunpack.c.l.b16 %v5073
      %v5110 = vunpack.c.l.b16 %v5074
      %v5111 = vunpack.c.l.b16 %v5075
      %v5112 = vunpack.c.l.b16 %v5076
      %v5113 = vpack.c.b16 %v5098, %v5097
      %v5114 = vpack.c.b16 %v5100, %v5099
      %v5115 = vpack.c.b16 %v5102, %v5101
      %v5116 = vpack.c.b16 %v5104, %v5103
      %v5117 = vpack.c.b16 %v5106, %v5105
      %v5118 = vpack.c.b16 %v5108, %v5107
      %v5119 = vpack.c.b16 %v5110, %v5109
      %v5120 = vpack.c.b16 %v5112, %v5111
      %5129 = vmatpush.bf16.msra.mxu0 %v5120
      %5130 = vmatpush.bf16.msra.mxu0 %v5119
      %5131 = vmatpush.bf16.msra.mxu0 %v5118
      %5132 = vmatpush.bf16.msra.mxu0 %v5117
      %5133 = vmatpush.bf16.msra.mxu0 %v5116
      %5134 = vmatpush.bf16.msra.mxu0 %v5115
      %5135 = vmatpush.bf16.msra.mxu0 %v5114
      %5136 = vmatpush.bf16.msra.mxu0 %v5113
      %5137 = vmatmul.bf16.gmra.mxu0 %v4446
      %v5138 = vpop.f32.mrf.mxu0
      %v5139 = vadd.f32 0.0, %v5138
      %v5140 = vpop.f32.mrf.mxu0
      %v5141 = vadd.f32 0.0, %v5140
      %5142 = vmatmul.bf16.gmra.mxu0 %v4447
      %v5143 = vpop.f32.mrf.mxu0
      %v5144 = vadd.f32 0.0, %v5143
      %v5145 = vpop.f32.mrf.mxu0
      %v5146 = vadd.f32 0.0, %v5145
      %5147 = vmatmul.bf16.gmra.mxu0 %v4448
      %v5148 = vpop.f32.mrf.mxu0
      %v5149 = vadd.f32 0.0, %v5148
      %v5150 = vpop.f32.mrf.mxu0
      %v5151 = vadd.f32 0.0, %v5150
      %5152 = vmatmul.bf16.gmra.mxu0 %v4449
      %v5153 = vpop.f32.mrf.mxu0
      %v5154 = vadd.f32 0.0, %v5153
      %v5155 = vpop.f32.mrf.mxu0
      %v5156 = vadd.f32 0.0, %v5155
      %5157 = vmatmul.bf16.gmra.mxu0 %v4450
      %v5158 = vpop.f32.mrf.mxu0
      %v5159 = vadd.f32 0.0, %v5158
      %v5160 = vpop.f32.mrf.mxu0
      %v5161 = vadd.f32 0.0, %v5160
      %5162 = vmatmul.bf16.gmra.mxu0 %v4451
      %v5163 = vpop.f32.mrf.mxu0
      %v5164 = vadd.f32 0.0, %v5163
      %v5165 = vpop.f32.mrf.mxu0
      %v5166 = vadd.f32 0.0, %v5165
      %5167 = vmatmul.bf16.gmra.mxu0 %v4452
      %v5168 = vpop.f32.mrf.mxu0
      %v5169 = vadd.f32 0.0, %v5168
      %v5170 = vpop.f32.mrf.mxu0
      %v5171 = vadd.f32 0.0, %v5170
      %5172 = vmatmul.bf16.gmra.mxu0 %v4453
      %v5173 = vpop.f32.mrf.mxu0
      %v5174 = vadd.f32 0.0, %v5173
      %v5175 = vpop.f32.mrf.mxu0
      %v5176 = vadd.f32 0.0, %v5175
      %5177 = vmatmul.bf16.gmra.mxu0 %v4454
      %v5178 = vpop.f32.mrf.mxu0
      %v5179 = vadd.f32 0.0, %v5178
      %v5180 = vpop.f32.mrf.mxu0
      %v5181 = vadd.f32 0.0, %v5180
      %5182 = vmatmul.bf16.gmra.mxu0 %v4455
      %v5183 = vpop.f32.mrf.mxu0
      %v5184 = vadd.f32 0.0, %v5183
      %v5185 = vpop.f32.mrf.mxu0
      %v5186 = vadd.f32 0.0, %v5185
      %5187 = vmatmul.bf16.gmra.mxu0 %v4456
      %v5188 = vpop.f32.mrf.mxu0
      %v5189 = vadd.f32 0.0, %v5188
      %v5190 = vpop.f32.mrf.mxu0
      %v5191 = vadd.f32 0.0, %v5190
      %5192 = vmatmul.bf16.gmra.mxu0 %v4457
      %v5193 = vpop.f32.mrf.mxu0
      %v5194 = vadd.f32 0.0, %v5193
      %v5195 = vpop.f32.mrf.mxu0
      %v5196 = vadd.f32 0.0, %v5195
      %5197 = vmatmul.bf16.gmra.mxu0 %v4458
      %v5198 = vpop.f32.mrf.mxu0
      %v5199 = vadd.f32 0.0, %v5198
      %v5200 = vpop.f32.mrf.mxu0
      %v5201 = vadd.f32 0.0, %v5200
      %5202 = vmatmul.bf16.gmra.mxu0 %v4459
      %v5203 = vpop.f32.mrf.mxu0
      %v5204 = vadd.f32 0.0, %v5203
      %v5205 = vpop.f32.mrf.mxu0
      %v5206 = vadd.f32 0.0, %v5205
      %5207 = vmatmul.bf16.gmra.mxu0 %v4460
      %v5208 = vpop.f32.mrf.mxu0
      %v5209 = vadd.f32 0.0, %v5208
      %v5210 = vpop.f32.mrf.mxu0
      %v5211 = vadd.f32 0.0, %v5210
      %5212 = vmatmul.bf16.gmra.mxu0 %v5079
      %v5213 = vpop.f32.mrf.mxu0
      %v5214 = vadd.f32 0.0, %v5213
      %v5215 = vpop.f32.mrf.mxu0
      %v5216 = vadd.f32 0.0, %v5215
      %5217 = vdwg.mxu0
      %v5218 = vadd.f32 %v5020, %v5139
      %v5219 = vadd.f32 %v5021, %v5141
      %v5220 = vadd.f32 %v5022, %v5144
      %v5221 = vadd.f32 %v5023, %v5146
      %v5222 = vadd.f32 %v5024, %v5149
      %v5223 = vadd.f32 %v5025, %v5151
      %v5224 = vadd.f32 %v5026, %v5154
      %v5225 = vadd.f32 %v5027, %v5156
      %v5226 = vadd.f32 %v5028, %v5159
      %v5227 = vadd.f32 %v5029, %v5161
      %v5228 = vadd.f32 %v5030, %v5164
      %v5229 = vadd.f32 %v5031, %v5166
      %v5230 = vadd.f32 %v5032, %v5169
      %v5231 = vadd.f32 %v5033, %v5171
      %v5232 = vadd.f32 %v5034, %v5174
      %v5233 = vadd.f32 %v5035, %v5176
      %v5234 = vadd.f32 %v5036, %v5179
      %v5235 = vadd.f32 %v5037, %v5181
      %v5236 = vadd.f32 %v5038, %v5184
      %v5237 = vadd.f32 %v5039, %v5186
      %v5238 = vadd.f32 %v5040, %v5189
      %v5239 = vadd.f32 %v5041, %v5191
      %v5240 = vadd.f32 %v5042, %v5194
      %v5241 = vadd.f32 %v5043, %v5196
      %v5242 = vadd.f32 %v5044, %v5199
      %v5243 = vadd.f32 %v5045, %v5201
      %v5244 = vadd.f32 %v5046, %v5204
      %v5245 = vadd.f32 %v5047, %v5206
      %v5246 = vadd.f32 %v5048, %v5209
      %v5247 = vadd.f32 %v5049, %v5211
      %v5248 = vadd.f32 %v5050, %v5214
      %v5249 = vadd.f32 %v5051, %v5216
      %s5250 = scalar_lea.vmem %s2, 384
      %v5251 = vld [vmem:[%s5250] sm:$0xf]
      %v5252 = vld [vmem:[%s5250 + $0x4] sm:$0xf]
      %v5253 = vld [vmem:[%s5250 + $0x8] sm:$0xf]
      %v5254 = vld [vmem:[%s5250 + $0xc] sm:$0xf]
      %v5255 = vld [vmem:[%s5250 + $0x10] sm:$0xf]
      %v5256 = vld [vmem:[%s5250 + $0x14] sm:$0xf]
      %v5257 = vld [vmem:[%s5250 + $0x18] sm:$0xf]
      %v5258 = vld [vmem:[%s5250 + $0x1c] sm:$0xf]
      %v5259 = vld [vmem:[%s5250 + $0x20] sm:$0xf]
      %v5260 = vld [vmem:[%s5250 + $0x24] sm:$0xf]
      %v5261 = vld [vmem:[%s5250 + $0x28] sm:$0xf]
      %v5262 = vld [vmem:[%s5250 + $0x2c] sm:$0xf]
      %v5263 = vld [vmem:[%s5250 + $0x30] sm:$0xf]
      %v5264 = vld [vmem:[%s5250 + $0x34] sm:$0xf]
      %v5265 = vld [vmem:[%s5250 + $0x38] sm:$0xf]
      %v5266 = vld [vmem:[%s5250 + $0x3c] sm:$0xf]
      %v5269 = vunpack.c.l.b16 %v3414
      %v5270 = vunpack.c.l.b16 %v3415
      %v5271 = vpack.c.b16 %v5270, %v5269
      %v5289 = vunpack.c.l.b16 %v5251
      %v5290 = vunpack.c.l.b16 %v5252
      %v5291 = vunpack.c.l.b16 %v5253
      %v5292 = vunpack.c.l.b16 %v5254
      %v5293 = vunpack.c.l.b16 %v5255
      %v5294 = vunpack.c.l.b16 %v5256
      %v5295 = vunpack.c.l.b16 %v5257
      %v5296 = vunpack.c.l.b16 %v5258
      %v5297 = vunpack.c.l.b16 %v5259
      %v5298 = vunpack.c.l.b16 %v5260
      %v5299 = vunpack.c.l.b16 %v5261
      %v5300 = vunpack.c.l.b16 %v5262
      %v5301 = vunpack.c.l.b16 %v5263
      %v5302 = vunpack.c.l.b16 %v5264
      %v5303 = vunpack.c.l.b16 %v5265
      %v5304 = vunpack.c.l.b16 %v5266
      %v5305 = vpack.c.b16 %v5290, %v5289
      %v5306 = vpack.c.b16 %v5292, %v5291
      %v5307 = vpack.c.b16 %v5294, %v5293
      %v5308 = vpack.c.b16 %v5296, %v5295
      %v5309 = vpack.c.b16 %v5298, %v5297
      %v5310 = vpack.c.b16 %v5300, %v5299
      %v5311 = vpack.c.b16 %v5302, %v5301
      %v5312 = vpack.c.b16 %v5304, %v5303
      %5321 = vmatpush.bf16.msra.mxu0 %v5312
      %5322 = vmatpush.bf16.msra.mxu0 %v5311
      %5323 = vmatpush.bf16.msra.mxu0 %v5310
      %5324 = vmatpush.bf16.msra.mxu0 %v5309
      %5325 = vmatpush.bf16.msra.mxu0 %v5308
      %5326 = vmatpush.bf16.msra.mxu0 %v5307
      %5327 = vmatpush.bf16.msra.mxu0 %v5306
      %5328 = vmatpush.bf16.msra.mxu0 %v5305
      %5329 = vmatmul.bf16.gmra.mxu0 %v4101
      %v5330 = vpop.f32.mrf.mxu0
      %v5331 = vadd.f32 0.0, %v5330
      %v5332 = vpop.f32.mrf.mxu0
      %v5333 = vadd.f32 0.0, %v5332
      %5334 = vmatmul.bf16.gmra.mxu0 %v4102
      %v5335 = vpop.f32.mrf.mxu0
      %v5336 = vadd.f32 0.0, %v5335
      %v5337 = vpop.f32.mrf.mxu0
      %v5338 = vadd.f32 0.0, %v5337
      %5339 = vmatmul.bf16.gmra.mxu0 %v4103
      %v5340 = vpop.f32.mrf.mxu0
      %v5341 = vadd.f32 0.0, %v5340
      %v5342 = vpop.f32.mrf.mxu0
      %v5343 = vadd.f32 0.0, %v5342
      %5344 = vmatmul.bf16.gmra.mxu0 %v4104
      %v5345 = vpop.f32.mrf.mxu0
      %v5346 = vadd.f32 0.0, %v5345
      %v5347 = vpop.f32.mrf.mxu0
      %v5348 = vadd.f32 0.0, %v5347
      %5349 = vmatmul.bf16.gmra.mxu0 %v4105
      %v5350 = vpop.f32.mrf.mxu0
      %v5351 = vadd.f32 0.0, %v5350
      %v5352 = vpop.f32.mrf.mxu0
      %v5353 = vadd.f32 0.0, %v5352
      %5354 = vmatmul.bf16.gmra.mxu0 %v4106
      %v5355 = vpop.f32.mrf.mxu0
      %v5356 = vadd.f32 0.0, %v5355
      %v5357 = vpop.f32.mrf.mxu0
      %v5358 = vadd.f32 0.0, %v5357
      %5359 = vmatmul.bf16.gmra.mxu0 %v4107
      %v5360 = vpop.f32.mrf.mxu0
      %v5361 = vadd.f32 0.0, %v5360
      %v5362 = vpop.f32.mrf.mxu0
      %v5363 = vadd.f32 0.0, %v5362
      %5364 = vmatmul.bf16.gmra.mxu0 %v4108
      %v5365 = vpop.f32.mrf.mxu0
      %v5366 = vadd.f32 0.0, %v5365
      %v5367 = vpop.f32.mrf.mxu0
      %v5368 = vadd.f32 0.0, %v5367
      %5369 = vmatmul.bf16.gmra.mxu0 %v4109
      %v5370 = vpop.f32.mrf.mxu0
      %v5371 = vadd.f32 0.0, %v5370
      %v5372 = vpop.f32.mrf.mxu0
      %v5373 = vadd.f32 0.0, %v5372
      %5374 = vmatmul.bf16.gmra.mxu0 %v4110
      %v5375 = vpop.f32.mrf.mxu0
      %v5376 = vadd.f32 0.0, %v5375
      %v5377 = vpop.f32.mrf.mxu0
      %v5378 = vadd.f32 0.0, %v5377
      %5379 = vmatmul.bf16.gmra.mxu0 %v4111
      %v5380 = vpop.f32.mrf.mxu0
      %v5381 = vadd.f32 0.0, %v5380
      %v5382 = vpop.f32.mrf.mxu0
      %v5383 = vadd.f32 0.0, %v5382
      %5384 = vmatmul.bf16.gmra.mxu0 %v4112
      %v5385 = vpop.f32.mrf.mxu0
      %v5386 = vadd.f32 0.0, %v5385
      %v5387 = vpop.f32.mrf.mxu0
      %v5388 = vadd.f32 0.0, %v5387
      %5389 = vmatmul.bf16.gmra.mxu0 %v4113
      %v5390 = vpop.f32.mrf.mxu0
      %v5391 = vadd.f32 0.0, %v5390
      %v5392 = vpop.f32.mrf.mxu0
      %v5393 = vadd.f32 0.0, %v5392
      %5394 = vmatmul.bf16.gmra.mxu0 %v4114
      %v5395 = vpop.f32.mrf.mxu0
      %v5396 = vadd.f32 0.0, %v5395
      %v5397 = vpop.f32.mrf.mxu0
      %v5398 = vadd.f32 0.0, %v5397
      %5399 = vmatmul.bf16.gmra.mxu0 %v4667
      %v5400 = vpop.f32.mrf.mxu0
      %v5401 = vadd.f32 0.0, %v5400
      %v5402 = vpop.f32.mrf.mxu0
      %v5403 = vadd.f32 0.0, %v5402
      %5404 = vmatmul.bf16.gmra.mxu0 %v5271
      %v5405 = vpop.f32.mrf.mxu0
      %v5406 = vadd.f32 0.0, %v5405
      %v5407 = vpop.f32.mrf.mxu0
      %v5408 = vadd.f32 0.0, %v5407
      %5409 = vdwg.mxu0
      %v5410 = vadd.f32 %v5218, %v5331
      %v5411 = vadd.f32 %v5219, %v5333
      %v5412 = vadd.f32 %v5220, %v5336
      %v5413 = vadd.f32 %v5221, %v5338
      %v5414 = vadd.f32 %v5222, %v5341
      %v5415 = vadd.f32 %v5223, %v5343
      %v5416 = vadd.f32 %v5224, %v5346
      %v5417 = vadd.f32 %v5225, %v5348
      %v5418 = vadd.f32 %v5226, %v5351
      %v5419 = vadd.f32 %v5227, %v5353
      %v5420 = vadd.f32 %v5228, %v5356
      %v5421 = vadd.f32 %v5229, %v5358
      %v5422 = vadd.f32 %v5230, %v5361
      %v5423 = vadd.f32 %v5231, %v5363
      %v5424 = vadd.f32 %v5232, %v5366
      %v5425 = vadd.f32 %v5233, %v5368
      %v5426 = vadd.f32 %v5234, %v5371
      %v5427 = vadd.f32 %v5235, %v5373
      %v5428 = vadd.f32 %v5236, %v5376
      %v5429 = vadd.f32 %v5237, %v5378
      %v5430 = vadd.f32 %v5238, %v5381
      %v5431 = vadd.f32 %v5239, %v5383
      %v5432 = vadd.f32 %v5240, %v5386
      %v5433 = vadd.f32 %v5241, %v5388
      %v5434 = vadd.f32 %v5242, %v5391
      %v5435 = vadd.f32 %v5243, %v5393
      %v5436 = vadd.f32 %v5244, %v5396
      %v5437 = vadd.f32 %v5245, %v5398
      %v5438 = vadd.f32 %v5246, %v5401
      %v5439 = vadd.f32 %v5247, %v5403
      %v5440 = vadd.f32 %v5248, %v5406
      %v5441 = vadd.f32 %v5249, %v5408
      %v5443 = vshrl.u32 %v3414, 16
      %v5445 = vrot.slane %v5443, 4
      %v5446 = vshll.u32 %v3414, 16
      %v5448 = vrot.slane %v5446, 5
      %v5449 = vor.u32 %v5445, %v5448
      %v5450 = vrot.slane %v5449, 4
      %v5452 = vshll.u32 %v3415, 16
      %v5454 = vrot.slane %v5452, 5
      %v5455 = vsel %vm433, %v5450, %v5454
      %v5456 = vshrl.u32 %v3415, 16
      %v5458 = vrot.slane %v5456, 4
      %v5459 = vor.u32 %v5458, %v5454
      %v5460 = vrot.slane %v5459, 4
      %v5462 = vshll.u32 %v3416, 16
      %v5464 = vrot.slane %v5462, 5
      %v5465 = vsel %vm433, %v5460, %v5464
      %s5466 = scalar_lea.vmem %s2, 448
      %v5467 = vld [vmem:[%s5466] sm:$0xf]
      %v5468 = vld [vmem:[%s5466 + $0x4] sm:$0xf]
      %v5469 = vld [vmem:[%s5466 + $0x8] sm:$0xf]
      %v5470 = vld [vmem:[%s5466 + $0xc] sm:$0xf]
      %v5471 = vld [vmem:[%s5466 + $0x10] sm:$0xf]
      %v5472 = vld [vmem:[%s5466 + $0x14] sm:$0xf]
      %v5473 = vld [vmem:[%s5466 + $0x18] sm:$0xf]
      %v5474 = vld [vmem:[%s5466 + $0x1c] sm:$0xf]
      %v5475 = vld [vmem:[%s5466 + $0x20] sm:$0xf]
      %v5476 = vld [vmem:[%s5466 + $0x24] sm:$0xf]
      %v5477 = vld [vmem:[%s5466 + $0x28] sm:$0xf]
      %v5478 = vld [vmem:[%s5466 + $0x2c] sm:$0xf]
      %v5479 = vld [vmem:[%s5466 + $0x30] sm:$0xf]
      %v5480 = vld [vmem:[%s5466 + $0x34] sm:$0xf]
      %v5481 = vld [vmem:[%s5466 + $0x38] sm:$0xf]
      %v5482 = vld [vmem:[%s5466 + $0x3c] sm:$0xf]
      %v5483 = vunpack.c.l.b16 %v5455
      %v5484 = vunpack.c.l.b16 %v5465
      %v5485 = vpack.c.b16 %v5484, %v5483
      %v5503 = vunpack.c.l.b16 %v5467
      %v5504 = vunpack.c.l.b16 %v5468
      %v5505 = vunpack.c.l.b16 %v5469
      %v5506 = vunpack.c.l.b16 %v5470
      %v5507 = vunpack.c.l.b16 %v5471
      %v5508 = vunpack.c.l.b16 %v5472
      %v5509 = vunpack.c.l.b16 %v5473
      %v5510 = vunpack.c.l.b16 %v5474
      %v5511 = vunpack.c.l.b16 %v5475
      %v5512 = vunpack.c.l.b16 %v5476
      %v5513 = vunpack.c.l.b16 %v5477
      %v5514 = vunpack.c.l.b16 %v5478
      %v5515 = vunpack.c.l.b16 %v5479
      %v5516 = vunpack.c.l.b16 %v5480
      %v5517 = vunpack.c.l.b16 %v5481
      %v5518 = vunpack.c.l.b16 %v5482
      %v5519 = vpack.c.b16 %v5504, %v5503
      %v5520 = vpack.c.b16 %v5506, %v5505
      %v5521 = vpack.c.b16 %v5508, %v5507
      %v5522 = vpack.c.b16 %v5510, %v5509
      %v5523 = vpack.c.b16 %v5512, %v5511
      %v5524 = vpack.c.b16 %v5514, %v5513
      %v5525 = vpack.c.b16 %v5516, %v5515
      %v5526 = vpack.c.b16 %v5518, %v5517
      %5535 = vmatpush.bf16.msra.mxu0 %v5526
      %5536 = vmatpush.bf16.msra.mxu0 %v5525
      %5537 = vmatpush.bf16.msra.mxu0 %v5524
      %5538 = vmatpush.bf16.msra.mxu0 %v5523
      %5539 = vmatpush.bf16.msra.mxu0 %v5522
      %5540 = vmatpush.bf16.msra.mxu0 %v5521
      %5541 = vmatpush.bf16.msra.mxu0 %v5520
      %5542 = vmatpush.bf16.msra.mxu0 %v5519
      %5543 = vmatmul.bf16.gmra.mxu0 %v3868
      %v5544 = vpop.f32.mrf.mxu0
      %v5545 = vadd.f32 0.0, %v5544
      %v5546 = vpop.f32.mrf.mxu0
      %v5547 = vadd.f32 0.0, %v5546
      %5548 = vmatmul.bf16.gmra.mxu0 %v3869
      %v5549 = vpop.f32.mrf.mxu0
      %v5550 = vadd.f32 0.0, %v5549
      %v5551 = vpop.f32.mrf.mxu0
      %v5552 = vadd.f32 0.0, %v5551
      %5553 = vmatmul.bf16.gmra.mxu0 %v3870
      %v5554 = vpop.f32.mrf.mxu0
      %v5555 = vadd.f32 0.0, %v5554
      %v5556 = vpop.f32.mrf.mxu0
      %v5557 = vadd.f32 0.0, %v5556
      %5558 = vmatmul.bf16.gmra.mxu0 %v3871
      %v5559 = vpop.f32.mrf.mxu0
      %v5560 = vadd.f32 0.0, %v5559
      %v5561 = vpop.f32.mrf.mxu0
      %v5562 = vadd.f32 0.0, %v5561
      %5563 = vmatmul.bf16.gmra.mxu0 %v3872
      %v5564 = vpop.f32.mrf.mxu0
      %v5565 = vadd.f32 0.0, %v5564
      %v5566 = vpop.f32.mrf.mxu0
      %v5567 = vadd.f32 0.0, %v5566
      %5568 = vmatmul.bf16.gmra.mxu0 %v3873
      %v5569 = vpop.f32.mrf.mxu0
      %v5570 = vadd.f32 0.0, %v5569
      %v5571 = vpop.f32.mrf.mxu0
      %v5572 = vadd.f32 0.0, %v5571
      %5573 = vmatmul.bf16.gmra.mxu0 %v3874
      %v5574 = vpop.f32.mrf.mxu0
      %v5575 = vadd.f32 0.0, %v5574
      %v5576 = vpop.f32.mrf.mxu0
      %v5577 = vadd.f32 0.0, %v5576
      %5578 = vmatmul.bf16.gmra.mxu0 %v3875
      %v5579 = vpop.f32.mrf.mxu0
      %v5580 = vadd.f32 0.0, %v5579
      %v5581 = vpop.f32.mrf.mxu0
      %v5582 = vadd.f32 0.0, %v5581
      %5583 = vmatmul.bf16.gmra.mxu0 %v3876
      %v5584 = vpop.f32.mrf.mxu0
      %v5585 = vadd.f32 0.0, %v5584
      %v5586 = vpop.f32.mrf.mxu0
      %v5587 = vadd.f32 0.0, %v5586
      %5588 = vmatmul.bf16.gmra.mxu0 %v3877
      %v5589 = vpop.f32.mrf.mxu0
      %v5590 = vadd.f32 0.0, %v5589
      %v5591 = vpop.f32.mrf.mxu0
      %v5592 = vadd.f32 0.0, %v5591
      %5593 = vmatmul.bf16.gmra.mxu0 %v3878
      %v5594 = vpop.f32.mrf.mxu0
      %v5595 = vadd.f32 0.0, %v5594
      %v5596 = vpop.f32.mrf.mxu0
      %v5597 = vadd.f32 0.0, %v5596
      %5598 = vmatmul.bf16.gmra.mxu0 %v3879
      %v5599 = vpop.f32.mrf.mxu0
      %v5600 = vadd.f32 0.0, %v5599
      %v5601 = vpop.f32.mrf.mxu0
      %v5602 = vadd.f32 0.0, %v5601
      %5603 = vmatmul.bf16.gmra.mxu0 %v3880
      %v5604 = vpop.f32.mrf.mxu0
      %v5605 = vadd.f32 0.0, %v5604
      %v5606 = vpop.f32.mrf.mxu0
      %v5607 = vadd.f32 0.0, %v5606
      %5608 = vmatmul.bf16.gmra.mxu0 %v3881
      %v5609 = vpop.f32.mrf.mxu0
      %v5610 = vadd.f32 0.0, %v5609
      %v5611 = vpop.f32.mrf.mxu0
      %v5612 = vadd.f32 0.0, %v5611
      %5613 = vmatmul.bf16.gmra.mxu0 %v4881
      %v5614 = vpop.f32.mrf.mxu0
      %v5615 = vadd.f32 0.0, %v5614
      %v5616 = vpop.f32.mrf.mxu0
      %v5617 = vadd.f32 0.0, %v5616
      %5618 = vmatmul.bf16.gmra.mxu0 %v5485
      %v5619 = vpop.f32.mrf.mxu0
      %v5620 = vadd.f32 0.0, %v5619
      %v5621 = vpop.f32.mrf.mxu0
      %v5622 = vadd.f32 0.0, %v5621
      %5623 = vdwg.mxu0
      %v5624 = vadd.f32 %v5410, %v5545
      %v5625 = vadd.f32 %v5411, %v5547
      %v5626 = vadd.f32 %v5412, %v5550
      %v5627 = vadd.f32 %v5413, %v5552
      %v5628 = vadd.f32 %v5414, %v5555
      %v5629 = vadd.f32 %v5415, %v5557
      %v5630 = vadd.f32 %v5416, %v5560
      %v5631 = vadd.f32 %v5417, %v5562
      %v5632 = vadd.f32 %v5418, %v5565
      %v5633 = vadd.f32 %v5419, %v5567
      %v5634 = vadd.f32 %v5420, %v5570
      %v5635 = vadd.f32 %v5421, %v5572
      %v5636 = vadd.f32 %v5422, %v5575
      %v5637 = vadd.f32 %v5423, %v5577
      %v5638 = vadd.f32 %v5424, %v5580
      %v5639 = vadd.f32 %v5425, %v5582
      %v5640 = vadd.f32 %v5426, %v5585
      %v5641 = vadd.f32 %v5427, %v5587
      %v5642 = vadd.f32 %v5428, %v5590
      %v5643 = vadd.f32 %v5429, %v5592
      %v5644 = vadd.f32 %v5430, %v5595
      %v5645 = vadd.f32 %v5431, %v5597
      %v5646 = vadd.f32 %v5432, %v5600
      %v5647 = vadd.f32 %v5433, %v5602
      %v5648 = vadd.f32 %v5434, %v5605
      %v5649 = vadd.f32 %v5435, %v5607
      %v5650 = vadd.f32 %v5436, %v5610
      %v5651 = vadd.f32 %v5437, %v5612
      %v5652 = vadd.f32 %v5438, %v5615
      %v5653 = vadd.f32 %v5439, %v5617
      %v5654 = vadd.f32 %v5440, %v5620
      %v5655 = vadd.f32 %v5441, %v5622
      %v5657 = vrot.slane %v3414, 5
      %v5658 = vrot.slane %v5657, 4
      %v5659 = vrot.slane %v3415, 5
      %v5660 = vsel %vm1287, %v5658, %v5659
      %v5661 = vrot.slane %v5659, 4
      %v5662 = vrot.slane %v3416, 5
      %v5663 = vsel %vm1287, %v5661, %v5662
      %s5664 = scalar_lea.vmem %s2, 512
      %v5665 = vld [vmem:[%s5664] sm:$0xf]
      %v5666 = vld [vmem:[%s5664 + $0x4] sm:$0xf]
      %v5667 = vld [vmem:[%s5664 + $0x8] sm:$0xf]
      %v5668 = vld [vmem:[%s5664 + $0xc] sm:$0xf]
      %v5669 = vld [vmem:[%s5664 + $0x10] sm:$0xf]
      %v5670 = vld [vmem:[%s5664 + $0x14] sm:$0xf]
      %v5671 = vld [vmem:[%s5664 + $0x18] sm:$0xf]
      %v5672 = vld [vmem:[%s5664 + $0x1c] sm:$0xf]
      %v5673 = vld [vmem:[%s5664 + $0x20] sm:$0xf]
      %v5674 = vld [vmem:[%s5664 + $0x24] sm:$0xf]
      %v5675 = vld [vmem:[%s5664 + $0x28] sm:$0xf]
      %v5676 = vld [vmem:[%s5664 + $0x2c] sm:$0xf]
      %v5677 = vld [vmem:[%s5664 + $0x30] sm:$0xf]
      %v5678 = vld [vmem:[%s5664 + $0x34] sm:$0xf]
      %v5679 = vld [vmem:[%s5664 + $0x38] sm:$0xf]
      %v5680 = vld [vmem:[%s5664 + $0x3c] sm:$0xf]
      %v5681 = vunpack.c.l.b16 %v5660
      %v5682 = vunpack.c.l.b16 %v5663
      %v5683 = vpack.c.b16 %v5682, %v5681
      %v5701 = vunpack.c.l.b16 %v5665
      %v5702 = vunpack.c.l.b16 %v5666
      %v5703 = vunpack.c.l.b16 %v5667
      %v5704 = vunpack.c.l.b16 %v5668
      %v5705 = vunpack.c.l.b16 %v5669
      %v5706 = vunpack.c.l.b16 %v5670
      %v5707 = vunpack.c.l.b16 %v5671
      %v5708 = vunpack.c.l.b16 %v5672
      %v5709 = vunpack.c.l.b16 %v5673
      %v5710 = vunpack.c.l.b16 %v5674
      %v5711 = vunpack.c.l.b16 %v5675
      %v5712 = vunpack.c.l.b16 %v5676
      %v5713 = vunpack.c.l.b16 %v5677
      %v5714 = vunpack.c.l.b16 %v5678
      %v5715 = vunpack.c.l.b16 %v5679
      %v5716 = vunpack.c.l.b16 %v5680
      %v5717 = vpack.c.b16 %v5702, %v5701
      %v5718 = vpack.c.b16 %v5704, %v5703
      %v5719 = vpack.c.b16 %v5706, %v5705
      %v5720 = vpack.c.b16 %v5708, %v5707
      %v5721 = vpack.c.b16 %v5710, %v5709
      %v5722 = vpack.c.b16 %v5712, %v5711
      %v5723 = vpack.c.b16 %v5714, %v5713
      %v5724 = vpack.c.b16 %v5716, %v5715
      %5733 = vmatpush.bf16.msra.mxu0 %v5724
      %5734 = vmatpush.bf16.msra.mxu0 %v5723
      %5735 = vmatpush.bf16.msra.mxu0 %v5722
      %5736 = vmatpush.bf16.msra.mxu0 %v5721
      %5737 = vmatpush.bf16.msra.mxu0 %v5720
      %5738 = vmatpush.bf16.msra.mxu0 %v5719
      %5739 = vmatpush.bf16.msra.mxu0 %v5718
      %5740 = vmatpush.bf16.msra.mxu0 %v5717
      %5741 = vmatmul.bf16.gmra.mxu0 %v4447
      %v5742 = vpop.f32.mrf.mxu0
      %v5743 = vadd.f32 0.0, %v5742
      %v5744 = vpop.f32.mrf.mxu0
      %v5745 = vadd.f32 0.0, %v5744
      %5746 = vmatmul.bf16.gmra.mxu0 %v4448
      %v5747 = vpop.f32.mrf.mxu0
      %v5748 = vadd.f32 0.0, %v5747
      %v5749 = vpop.f32.mrf.mxu0
      %v5750 = vadd.f32 0.0, %v5749
      %5751 = vmatmul.bf16.gmra.mxu0 %v4449
      %v5752 = vpop.f32.mrf.mxu0
      %v5753 = vadd.f32 0.0, %v5752
      %v5754 = vpop.f32.mrf.mxu0
      %v5755 = vadd.f32 0.0, %v5754
      %5756 = vmatmul.bf16.gmra.mxu0 %v4450
      %v5757 = vpop.f32.mrf.mxu0
      %v5758 = vadd.f32 0.0, %v5757
      %v5759 = vpop.f32.mrf.mxu0
      %v5760 = vadd.f32 0.0, %v5759
      %5761 = vmatmul.bf16.gmra.mxu0 %v4451
      %v5762 = vpop.f32.mrf.mxu0
      %v5763 = vadd.f32 0.0, %v5762
      %v5764 = vpop.f32.mrf.mxu0
      %v5765 = vadd.f32 0.0, %v5764
      %5766 = vmatmul.bf16.gmra.mxu0 %v4452
      %v5767 = vpop.f32.mrf.mxu0
      %v5768 = vadd.f32 0.0, %v5767
      %v5769 = vpop.f32.mrf.mxu0
      %v5770 = vadd.f32 0.0, %v5769
      %5771 = vmatmul.bf16.gmra.mxu0 %v4453
      %v5772 = vpop.f32.mrf.mxu0
      %v5773 = vadd.f32 0.0, %v5772
      %v5774 = vpop.f32.mrf.mxu0
      %v5775 = vadd.f32 0.0, %v5774
      %5776 = vmatmul.bf16.gmra.mxu0 %v4454
      %v5777 = vpop.f32.mrf.mxu0
      %v5778 = vadd.f32 0.0, %v5777
      %v5779 = vpop.f32.mrf.mxu0
      %v5780 = vadd.f32 0.0, %v5779
      %5781 = vmatmul.bf16.gmra.mxu0 %v4455
      %v5782 = vpop.f32.mrf.mxu0
      %v5783 = vadd.f32 0.0, %v5782
      %v5784 = vpop.f32.mrf.mxu0
      %v5785 = vadd.f32 0.0, %v5784
      %5786 = vmatmul.bf16.gmra.mxu0 %v4456
      %v5787 = vpop.f32.mrf.mxu0
      %v5788 = vadd.f32 0.0, %v5787
      %v5789 = vpop.f32.mrf.mxu0
      %v5790 = vadd.f32 0.0, %v5789
      %5791 = vmatmul.bf16.gmra.mxu0 %v4457
      %v5792 = vpop.f32.mrf.mxu0
      %v5793 = vadd.f32 0.0, %v5792
      %v5794 = vpop.f32.mrf.mxu0
      %v5795 = vadd.f32 0.0, %v5794
      %5796 = vmatmul.bf16.gmra.mxu0 %v4458
      %v5797 = vpop.f32.mrf.mxu0
      %v5798 = vadd.f32 0.0, %v5797
      %v5799 = vpop.f32.mrf.mxu0
      %v5800 = vadd.f32 0.0, %v5799
      %5801 = vmatmul.bf16.gmra.mxu0 %v4459
      %v5802 = vpop.f32.mrf.mxu0
      %v5803 = vadd.f32 0.0, %v5802
      %v5804 = vpop.f32.mrf.mxu0
      %v5805 = vadd.f32 0.0, %v5804
      %5806 = vmatmul.bf16.gmra.mxu0 %v4460
      %v5807 = vpop.f32.mrf.mxu0
      %v5808 = vadd.f32 0.0, %v5807
      %v5809 = vpop.f32.mrf.mxu0
      %v5810 = vadd.f32 0.0, %v5809
      %5811 = vmatmul.bf16.gmra.mxu0 %v5079
      %v5812 = vpop.f32.mrf.mxu0
      %v5813 = vadd.f32 0.0, %v5812
      %v5814 = vpop.f32.mrf.mxu0
      %v5815 = vadd.f32 0.0, %v5814
      %5816 = vmatmul.bf16.gmra.mxu0 %v5683
      %v5817 = vpop.f32.mrf.mxu0
      %v5818 = vadd.f32 0.0, %v5817
      %v5819 = vpop.f32.mrf.mxu0
      %v5820 = vadd.f32 0.0, %v5819
      %5821 = vdwg.mxu0
      %v5822 = vadd.f32 %v5624, %v5743
      %v5823 = vadd.f32 %v5625, %v5745
      %v5824 = vadd.f32 %v5626, %v5748
      %v5825 = vadd.f32 %v5627, %v5750
      %v5826 = vadd.f32 %v5628, %v5753
      %v5827 = vadd.f32 %v5629, %v5755
      %v5828 = vadd.f32 %v5630, %v5758
      %v5829 = vadd.f32 %v5631, %v5760
      %v5830 = vadd.f32 %v5632, %v5763
      %v5831 = vadd.f32 %v5633, %v5765
      %v5832 = vadd.f32 %v5634, %v5768
      %v5833 = vadd.f32 %v5635, %v5770
      %v5834 = vadd.f32 %v5636, %v5773
      %v5835 = vadd.f32 %v5637, %v5775
      %v5836 = vadd.f32 %v5638, %v5778
      %v5837 = vadd.f32 %v5639, %v5780
      %v5838 = vadd.f32 %v5640, %v5783
      %v5839 = vadd.f32 %v5641, %v5785
      %v5840 = vadd.f32 %v5642, %v5788
      %v5841 = vadd.f32 %v5643, %v5790
      %v5842 = vadd.f32 %v5644, %v5793
      %v5843 = vadd.f32 %v5645, %v5795
      %v5844 = vadd.f32 %v5646, %v5798
      %v5845 = vadd.f32 %v5647, %v5800
      %v5846 = vadd.f32 %v5648, %v5803
      %v5847 = vadd.f32 %v5649, %v5805
      %v5848 = vadd.f32 %v5650, %v5808
      %v5849 = vadd.f32 %v5651, %v5810
      %v5850 = vadd.f32 %v5652, %v5813
      %v5851 = vadd.f32 %v5653, %v5815
      %v5852 = vadd.f32 %v5654, %v5818
      %v5853 = vadd.f32 %v5655, %v5820
      %v5854 = vmax.f32 %v5822, 0.0
      %v5855 = vmax.f32 %v5823, 0.0
      %v5856 = vmax.f32 %v5824, 0.0
      %v5857 = vmax.f32 %v5825, 0.0
      %v5858 = vmax.f32 %v5826, 0.0
      %v5859 = vmax.f32 %v5827, 0.0
      %v5860 = vmax.f32 %v5828, 0.0
      %v5861 = vmax.f32 %v5829, 0.0
      %v5862 = vmax.f32 %v5830, 0.0
      %v5863 = vmax.f32 %v5831, 0.0
      %v5864 = vmax.f32 %v5832, 0.0
      %v5865 = vmax.f32 %v5833, 0.0
      %v5866 = vmax.f32 %v5834, 0.0
      %v5867 = vmax.f32 %v5835, 0.0
      %v5868 = vmax.f32 %v5836, 0.0
      %v5869 = vmax.f32 %v5837, 0.0
      %v5870 = vmax.f32 %v5838, 0.0
      %v5871 = vmax.f32 %v5839, 0.0
      %v5872 = vmax.f32 %v5840, 0.0
      %v5873 = vmax.f32 %v5841, 0.0
      %v5874 = vmax.f32 %v5842, 0.0
      %v5875 = vmax.f32 %v5843, 0.0
      %v5876 = vmax.f32 %v5844, 0.0
      %v5877 = vmax.f32 %v5845, 0.0
      %v5878 = vmax.f32 %v5846, 0.0
      %v5879 = vmax.f32 %v5847, 0.0
      %v5880 = vmax.f32 %v5848, 0.0
      %v5881 = vmax.f32 %v5849, 0.0
      %v5882 = vmax.f32 %v5850, 0.0
      %v5883 = vmax.f32 %v5851, 0.0
      %v5884 = vmax.f32 %v5852, 0.0
      %v5885 = vmax.f32 %v5853, 0.0
      %v5886 = vpack.c.bf16 %v5854, %v5854
      %v5887 = vpack.c.bf16 %v5855, %v5855
      %v5888 = vpack.c.bf16 %v5856, %v5856
      %v5889 = vpack.c.bf16 %v5857, %v5857
      %v5890 = vpack.c.bf16 %v5858, %v5858
      %v5891 = vpack.c.bf16 %v5859, %v5859
      %v5892 = vpack.c.bf16 %v5860, %v5860
      %v5893 = vpack.c.bf16 %v5861, %v5861
      %v5894 = vpack.c.bf16 %v5862, %v5862
      %v5895 = vpack.c.bf16 %v5863, %v5863
      %v5896 = vpack.c.bf16 %v5864, %v5864
      %v5897 = vpack.c.bf16 %v5865, %v5865
      %v5898 = vpack.c.bf16 %v5866, %v5866
      %v5899 = vpack.c.bf16 %v5867, %v5867
      %v5900 = vpack.c.bf16 %v5868, %v5868
      %v5901 = vpack.c.bf16 %v5869, %v5869
      %v5902 = vpack.c.bf16 %v5870, %v5870
      %v5903 = vpack.c.bf16 %v5871, %v5871
      %v5904 = vpack.c.bf16 %v5872, %v5872
      %v5905 = vpack.c.bf16 %v5873, %v5873
      %v5906 = vpack.c.bf16 %v5874, %v5874
      %v5907 = vpack.c.bf16 %v5875, %v5875
      %v5908 = vpack.c.bf16 %v5876, %v5876
      %v5909 = vpack.c.bf16 %v5877, %v5877
      %v5910 = vpack.c.bf16 %v5878, %v5878
      %v5911 = vpack.c.bf16 %v5879, %v5879
      %v5912 = vpack.c.bf16 %v5880, %v5880
      %v5913 = vpack.c.bf16 %v5881, %v5881
      %v5914 = vpack.c.bf16 %v5882, %v5882
      %v5915 = vpack.c.bf16 %v5883, %v5883
      %v5916 = vpack.c.bf16 %v5884, %v5884
      %v5917 = vpack.c.bf16 %v5885, %v5885
      %v5919 = vshrl.u32 %v5886, 16
      %v5921 = vrot.slane %v5919, 7
      %v5922 = vshll.u32 %v5886, 16
      %v5924 = vor.u32 %v5921, %v5922
      %v5925 = vrot.slane %v5921, 4
      %v5927 = vshrl.u32 %v5887, 16
      %v5929 = vrot.slane %v5927, 7
      %v5930 = vshll.u32 %v5887, 16
      %v5932 = vor.u32 %v5929, %v5930
      %v5933 = vsel %vm2924, %v5925, %v5932
      %v5934 = vrot.slane %v5929, 4
      %v5936 = vshrl.u32 %v5888, 16
      %v5938 = vrot.slane %v5936, 7
      %v5939 = vshll.u32 %v5888, 16
      %v5941 = vor.u32 %v5938, %v5939
      %v5942 = vrot.slane %v5938, 4
      %v5944 = vshrl.u32 %v5889, 16
      %v5946 = vrot.slane %v5944, 7
      %v5947 = vshll.u32 %v5889, 16
      %v5949 = vor.u32 %v5946, %v5947
      %v5950 = vsel %vm2924, %v5942, %v5949
      %v5951 = vrot.slane %v5946, 4
      %v5953 = vshrl.u32 %v5890, 16
      %v5955 = vrot.slane %v5953, 7
      %v5956 = vshll.u32 %v5890, 16
      %v5958 = vor.u32 %v5955, %v5956
      %v5959 = vrot.slane %v5955, 4
      %v5961 = vshrl.u32 %v5891, 16
      %v5963 = vrot.slane %v5961, 7
      %v5964 = vshll.u32 %v5891, 16
      %v5966 = vor.u32 %v5963, %v5964
      %v5967 = vsel %vm2924, %v5959, %v5966
      %v5968 = vrot.slane %v5963, 4
      %v5970 = vshrl.u32 %v5892, 16
      %v5972 = vrot.slane %v5970, 7
      %v5973 = vshll.u32 %v5892, 16
      %v5975 = vor.u32 %v5972, %v5973
      %v5976 = vrot.slane %v5972, 4
      %v5978 = vshrl.u32 %v5893, 16
      %v5980 = vrot.slane %v5978, 7
      %v5981 = vshll.u32 %v5893, 16
      %v5983 = vor.u32 %v5980, %v5981
      %v5984 = vsel %vm2924, %v5976, %v5983
      %v5985 = vrot.slane %v5980, 4
      %v5987 = vshrl.u32 %v5894, 16
      %v5989 = vrot.slane %v5987, 7
      %v5990 = vshll.u32 %v5894, 16
      %v5992 = vor.u32 %v5989, %v5990
      %v5993 = vrot.slane %v5989, 4
      %v5995 = vshrl.u32 %v5895, 16
      %v5997 = vrot.slane %v5995, 7
      %v5998 = vshll.u32 %v5895, 16
      %v6000 = vor.u32 %v5997, %v5998
      %v6001 = vsel %vm2924, %v5993, %v6000
      %v6002 = vrot.slane %v5997, 4
      %v6004 = vshrl.u32 %v5896, 16
      %v6006 = vrot.slane %v6004, 7
      %v6007 = vshll.u32 %v5896, 16
      %v6009 = vor.u32 %v6006, %v6007
      %v6010 = vrot.slane %v6006, 4
      %v6012 = vshrl.u32 %v5897, 16
      %v6014 = vrot.slane %v6012, 7
      %v6015 = vshll.u32 %v5897, 16
      %v6017 = vor.u32 %v6014, %v6015
      %v6018 = vsel %vm2924, %v6010, %v6017
      %v6019 = vrot.slane %v6014, 4
      %v6021 = vshrl.u32 %v5898, 16
      %v6023 = vrot.slane %v6021, 7
      %v6024 = vshll.u32 %v5898, 16
      %v6026 = vor.u32 %v6023, %v6024
      %v6027 = vrot.slane %v6023, 4
      %v6029 = vshrl.u32 %v5899, 16
      %v6031 = vrot.slane %v6029, 7
      %v6032 = vshll.u32 %v5899, 16
      %v6034 = vor.u32 %v6031, %v6032
      %v6035 = vsel %vm2924, %v6027, %v6034
      %v6036 = vrot.slane %v6031, 4
      %v6038 = vshrl.u32 %v5900, 16
      %v6040 = vrot.slane %v6038, 7
      %v6041 = vshll.u32 %v5900, 16
      %v6043 = vor.u32 %v6040, %v6041
      %v6044 = vrot.slane %v6040, 4
      %v6046 = vshrl.u32 %v5901, 16
      %v6048 = vrot.slane %v6046, 7
      %v6049 = vshll.u32 %v5901, 16
      %v6051 = vor.u32 %v6048, %v6049
      %v6052 = vsel %vm2924, %v6044, %v6051
      %v6053 = vrot.slane %v6048, 4
      %v6055 = vshrl.u32 %v5902, 16
      %v6057 = vrot.slane %v6055, 7
      %v6058 = vshll.u32 %v5902, 16
      %v6060 = vor.u32 %v6057, %v6058
      %v6061 = vrot.slane %v6057, 4
      %v6063 = vshrl.u32 %v5903, 16
      %v6065 = vrot.slane %v6063, 7
      %v6066 = vshll.u32 %v5903, 16
      %v6068 = vor.u32 %v6065, %v6066
      %v6069 = vsel %vm2924, %v6061, %v6068
      %v6070 = vrot.slane %v6065, 4
      %v6072 = vshrl.u32 %v5904, 16
      %v6074 = vrot.slane %v6072, 7
      %v6075 = vshll.u32 %v5904, 16
      %v6077 = vor.u32 %v6074, %v6075
      %v6078 = vrot.slane %v6074, 4
      %v6080 = vshrl.u32 %v5905, 16
      %v6082 = vrot.slane %v6080, 7
      %v6083 = vshll.u32 %v5905, 16
      %v6085 = vor.u32 %v6082, %v6083
      %v6086 = vsel %vm2924, %v6078, %v6085
      %v6087 = vrot.slane %v6082, 4
      %v6089 = vshrl.u32 %v5906, 16
      %v6091 = vrot.slane %v6089, 7
      %v6092 = vshll.u32 %v5906, 16
      %v6094 = vor.u32 %v6091, %v6092
      %v6095 = vrot.slane %v6091, 4
      %v6097 = vshrl.u32 %v5907, 16
      %v6099 = vrot.slane %v6097, 7
      %v6100 = vshll.u32 %v5907, 16
      %v6102 = vor.u32 %v6099, %v6100
      %v6103 = vsel %vm2924, %v6095, %v6102
      %v6104 = vrot.slane %v6099, 4
      %v6106 = vshrl.u32 %v5908, 16
      %v6108 = vrot.slane %v6106, 7
      %v6109 = vshll.u32 %v5908, 16
      %v6111 = vor.u32 %v6108, %v6109
      %v6112 = vrot.slane %v6108, 4
      %v6114 = vshrl.u32 %v5909, 16
      %v6116 = vrot.slane %v6114, 7
      %v6117 = vshll.u32 %v5909, 16
      %v6119 = vor.u32 %v6116, %v6117
      %v6120 = vsel %vm2924, %v6112, %v6119
      %v6121 = vrot.slane %v6116, 4
      %v6123 = vshrl.u32 %v5910, 16
      %v6125 = vrot.slane %v6123, 7
      %v6126 = vshll.u32 %v5910, 16
      %v6128 = vor.u32 %v6125, %v6126
      %v6129 = vrot.slane %v6125, 4
      %v6131 = vshrl.u32 %v5911, 16
      %v6133 = vrot.slane %v6131, 7
      %v6134 = vshll.u32 %v5911, 16
      %v6136 = vor.u32 %v6133, %v6134
      %v6137 = vsel %vm2924, %v6129, %v6136
      %v6138 = vrot.slane %v6133, 4
      %v6140 = vshrl.u32 %v5912, 16
      %v6142 = vrot.slane %v6140, 7
      %v6143 = vshll.u32 %v5912, 16
      %v6145 = vor.u32 %v6142, %v6143
      %v6146 = vrot.slane %v6142, 4
      %v6148 = vshrl.u32 %v5913, 16
      %v6150 = vrot.slane %v6148, 7
      %v6151 = vshll.u32 %v5913, 16
      %v6153 = vor.u32 %v6150, %v6151
      %v6154 = vsel %vm2924, %v6146, %v6153
      %v6155 = vrot.slane %v6150, 4
      %v6157 = vshrl.u32 %v5914, 16
      %v6159 = vrot.slane %v6157, 7
      %v6160 = vshll.u32 %v5914, 16
      %v6162 = vor.u32 %v6159, %v6160
      %v6163 = vrot.slane %v6159, 4
      %v6165 = vshrl.u32 %v5915, 16
      %v6167 = vrot.slane %v6165, 7
      %v6168 = vshll.u32 %v5915, 16
      %v6170 = vor.u32 %v6167, %v6168
      %v6171 = vsel %vm2924, %v6163, %v6170
      %v6172 = vrot.slane %v6167, 4
      %v6174 = vshrl.u32 %v5916, 16
      %v6176 = vrot.slane %v6174, 7
      %v6177 = vshll.u32 %v5916, 16
      %v6179 = vor.u32 %v6176, %v6177
      %v6180 = vrot.slane %v6176, 4
      %v6182 = vshrl.u32 %v5917, 16
      %v6184 = vrot.slane %v6182, 7
      %v6185 = vshll.u32 %v5917, 16
      %v6187 = vor.u32 %v6184, %v6185
      %v6188 = vsel %vm2924, %v6180, %v6187
      %v6189 = vrot.slane %v6184, 4
      %s6238 = scalar_lea.vmem [#allocation3], 12
      %v6239 = vld [vmem:[%s6238] sm:$0xf]
      %v6240 = vsel %vm3248, %v5924, %v6239
      %6241 = vst [vmem:[%s6238] sm:$0xf] %v6240
      %6242 = vst [vmem:[%s6238 + $0x4] sm:$0xf] %v5933
      %v6243 = vld [vmem:[%s6238 + $0x8] sm:$0x1]
      %v6244 = vsel %vm3254, %v5934, %v6243
      %6245 = vst [vmem:[%s6238 + $0x8] sm:$0x1] %v6244
      %v6246 = vld [vmem:[%s6238 + $0xc] sm:$0xf]
      %v6247 = vsel %vm3248, %v5941, %v6246
      %6248 = vst [vmem:[%s6238 + $0xc] sm:$0xf] %v6247
      %6249 = vst [vmem:[%s6238 + $0x10] sm:$0xf] %v5950
      %v6250 = vld [vmem:[%s6238 + $0x14] sm:$0x1]
      %v6251 = vsel %vm3254, %v5951, %v6250
      %6252 = vst [vmem:[%s6238 + $0x14] sm:$0x1] %v6251
      %v6253 = vld [vmem:[%s6238 + $0x18] sm:$0xf]
      %v6254 = vsel %vm3248, %v5958, %v6253
      %6255 = vst [vmem:[%s6238 + $0x18] sm:$0xf] %v6254
      %6256 = vst [vmem:[%s6238 + $0x1c] sm:$0xf] %v5967
      %v6257 = vld [vmem:[%s6238 + $0x20] sm:$0x1]
      %v6258 = vsel %vm3254, %v5968, %v6257
      %6259 = vst [vmem:[%s6238 + $0x20] sm:$0x1] %v6258
      %v6260 = vld [vmem:[%s6238 + $0x24] sm:$0xf]
      %v6261 = vsel %vm3248, %v5975, %v6260
      %6262 = vst [vmem:[%s6238 + $0x24] sm:$0xf] %v6261
      %6263 = vst [vmem:[%s6238 + $0x28] sm:$0xf] %v5984
      %v6264 = vld [vmem:[%s6238 + $0x2c] sm:$0x1]
      %v6265 = vsel %vm3254, %v5985, %v6264
      %6266 = vst [vmem:[%s6238 + $0x2c] sm:$0x1] %v6265
      %v6267 = vld [vmem:[%s6238 + $0x30] sm:$0xf]
      %v6268 = vsel %vm3248, %v5992, %v6267
      %6269 = vst [vmem:[%s6238 + $0x30] sm:$0xf] %v6268
      %6270 = vst [vmem:[%s6238 + $0x34] sm:$0xf] %v6001
      %v6271 = vld [vmem:[%s6238 + $0x38] sm:$0x1]
      %v6272 = vsel %vm3254, %v6002, %v6271
      %6273 = vst [vmem:[%s6238 + $0x38] sm:$0x1] %v6272
      %v6274 = vld [vmem:[%s6238 + $0x3c] sm:$0xf]
      %v6275 = vsel %vm3248, %v6009, %v6274
      %6276 = vst [vmem:[%s6238 + $0x3c] sm:$0xf] %v6275
      %6277 = vst [vmem:[%s6238 + $0x40] sm:$0xf] %v6018
      %v6278 = vld [vmem:[%s6238 + $0x44] sm:$0x1]
      %v6279 = vsel %vm3254, %v6019, %v6278
      %6280 = vst [vmem:[%s6238 + $0x44] sm:$0x1] %v6279
      %v6281 = vld [vmem:[%s6238 + $0x48] sm:$0xf]
      %v6282 = vsel %vm3248, %v6026, %v6281
      %6283 = vst [vmem:[%s6238 + $0x48] sm:$0xf] %v6282
      %6284 = vst [vmem:[%s6238 + $0x4c] sm:$0xf] %v6035
      %v6285 = vld [vmem:[%s6238 + $0x50] sm:$0x1]
      %v6286 = vsel %vm3254, %v6036, %v6285
      %6287 = vst [vmem:[%s6238 + $0x50] sm:$0x1] %v6286
      %v6288 = vld [vmem:[%s6238 + $0x54] sm:$0xf]
      %v6289 = vsel %vm3248, %v6043, %v6288
      %6290 = vst [vmem:[%s6238 + $0x54] sm:$0xf] %v6289
      %6291 = vst [vmem:[%s6238 + $0x58] sm:$0xf] %v6052
      %v6292 = vld [vmem:[%s6238 + $0x5c] sm:$0x1]
      %v6293 = vsel %vm3254, %v6053, %v6292
      %6294 = vst [vmem:[%s6238 + $0x5c] sm:$0x1] %v6293
      %v6295 = vld [vmem:[%s6238 + $0x60] sm:$0xf]
      %v6296 = vsel %vm3248, %v6060, %v6295
      %6297 = vst [vmem:[%s6238 + $0x60] sm:$0xf] %v6296
      %6298 = vst [vmem:[%s6238 + $0x64] sm:$0xf] %v6069
      %v6299 = vld [vmem:[%s6238 + $0x68] sm:$0x1]
      %v6300 = vsel %vm3254, %v6070, %v6299
      %6301 = vst [vmem:[%s6238 + $0x68] sm:$0x1] %v6300
      %v6302 = vld [vmem:[%s6238 + $0x6c] sm:$0xf]
      %v6303 = vsel %vm3248, %v6077, %v6302
      %6304 = vst [vmem:[%s6238 + $0x6c] sm:$0xf] %v6303
      %6305 = vst [vmem:[%s6238 + $0x70] sm:$0xf] %v6086
      %v6306 = vld [vmem:[%s6238 + $0x74] sm:$0x1]
      %v6307 = vsel %vm3254, %v6087, %v6306
      %6308 = vst [vmem:[%s6238 + $0x74] sm:$0x1] %v6307
      %v6309 = vld [vmem:[%s6238 + $0x78] sm:$0xf]
      %v6310 = vsel %vm3248, %v6094, %v6309
      %6311 = vst [vmem:[%s6238 + $0x78] sm:$0xf] %v6310
      %6312 = vst [vmem:[%s6238 + $0x7c] sm:$0xf] %v6103
      %v6313 = vld [vmem:[%s6238 + $0x80] sm:$0x1]
      %v6314 = vsel %vm3254, %v6104, %v6313
      %6315 = vst [vmem:[%s6238 + $0x80] sm:$0x1] %v6314
      %v6316 = vld [vmem:[%s6238 + $0x84] sm:$0xf]
      %v6317 = vsel %vm3248, %v6111, %v6316
      %6318 = vst [vmem:[%s6238 + $0x84] sm:$0xf] %v6317
      %6319 = vst [vmem:[%s6238 + $0x88] sm:$0xf] %v6120
      %v6320 = vld [vmem:[%s6238 + $0x8c] sm:$0x1]
      %v6321 = vsel %vm3254, %v6121, %v6320
      %6322 = vst [vmem:[%s6238 + $0x8c] sm:$0x1] %v6321
      %v6323 = vld [vmem:[%s6238 + $0x90] sm:$0xf]
      %v6324 = vsel %vm3248, %v6128, %v6323
      %6325 = vst [vmem:[%s6238 + $0x90] sm:$0xf] %v6324
      %6326 = vst [vmem:[%s6238 + $0x94] sm:$0xf] %v6137
      %v6327 = vld [vmem:[%s6238 + $0x98] sm:$0x1]
      %v6328 = vsel %vm3254, %v6138, %v6327
      %6329 = vst [vmem:[%s6238 + $0x98] sm:$0x1] %v6328
      %v6330 = vld [vmem:[%s6238 + $0x9c] sm:$0xf]
      %v6331 = vsel %vm3248, %v6145, %v6330
      %6332 = vst [vmem:[%s6238 + $0x9c] sm:$0xf] %v6331
      %6333 = vst [vmem:[%s6238 + $0xa0] sm:$0xf] %v6154
      %v6334 = vld [vmem:[%s6238 + $0xa4] sm:$0x1]
      %v6335 = vsel %vm3254, %v6155, %v6334
      %6336 = vst [vmem:[%s6238 + $0xa4] sm:$0x1] %v6335
      %v6337 = vld [vmem:[%s6238 + $0xa8] sm:$0xf]
      %v6338 = vsel %vm3248, %v6162, %v6337
      %6339 = vst [vmem:[%s6238 + $0xa8] sm:$0xf] %v6338
      %6340 = vst [vmem:[%s6238 + $0xac] sm:$0xf] %v6171
      %v6341 = vld [vmem:[%s6238 + $0xb0] sm:$0x1]
      %v6342 = vsel %vm3254, %v6172, %v6341
      %6343 = vst [vmem:[%s6238 + $0xb0] sm:$0x1] %v6342
      %v6344 = vld [vmem:[%s6238 + $0xb4] sm:$0xf]
      %v6345 = vsel %vm3248, %v6179, %v6344
      %6346 = vst [vmem:[%s6238 + $0xb4] sm:$0xf] %v6345
      %6347 = vst [vmem:[%s6238 + $0xb8] sm:$0xf] %v6188
      %v6348 = vld [vmem:[%s6238 + $0xbc] sm:$0x1]
      %v6349 = vsel %vm3254, %v6189, %v6348
      %6350 = vst [vmem:[%s6238 + $0xbc] sm:$0x1] %v6349
      %v6351 = vld [vmem:[#allocation3] sm:$0xf]
      %v6352 = vld [vmem:[#allocation3 + $0x4] sm:$0xf]
      %v6353 = vld [vmem:[#allocation3 + $0x8] sm:$0x1]
      %v6354 = vld [vmem:[#allocation3 + $0xc] sm:$0xf]
      %v6355 = vld [vmem:[#allocation3 + $0x10] sm:$0xf]
      %v6356 = vld [vmem:[#allocation3 + $0x14] sm:$0x1]
      %v6357 = vld [vmem:[#allocation3 + $0x18] sm:$0xf]
      %v6358 = vld [vmem:[#allocation3 + $0x1c] sm:$0xf]
      %v6359 = vld [vmem:[#allocation3 + $0x20] sm:$0x1]
      %v6360 = vld [vmem:[#allocation3 + $0x24] sm:$0xf]
      %v6361 = vld [vmem:[#allocation3 + $0x28] sm:$0xf]
      %v6362 = vld [vmem:[#allocation3 + $0x2c] sm:$0x1]
      %v6363 = vld [vmem:[#allocation3 + $0x30] sm:$0xf]
      %v6364 = vld [vmem:[#allocation3 + $0x34] sm:$0xf]
      %v6365 = vld [vmem:[#allocation3 + $0x38] sm:$0x1]
      %v6366 = vld [vmem:[#allocation3 + $0x3c] sm:$0xf]
      %v6367 = vld [vmem:[#allocation3 + $0x40] sm:$0xf]
      %v6368 = vld [vmem:[#allocation3 + $0x44] sm:$0x1]
      %v6369 = vld [vmem:[#allocation3 + $0x48] sm:$0xf]
      %v6370 = vld [vmem:[#allocation3 + $0x4c] sm:$0xf]
      %v6371 = vld [vmem:[#allocation3 + $0x50] sm:$0x1]
      %v6372 = vld [vmem:[#allocation3 + $0x54] sm:$0xf]
      %v6373 = vld [vmem:[#allocation3 + $0x58] sm:$0xf]
      %v6374 = vld [vmem:[#allocation3 + $0x5c] sm:$0x1]
      %v6375 = vld [vmem:[#allocation3 + $0x60] sm:$0xf]
      %v6376 = vld [vmem:[#allocation3 + $0x64] sm:$0xf]
      %v6377 = vld [vmem:[#allocation3 + $0x68] sm:$0x1]
      %v6378 = vld [vmem:[#allocation3 + $0x6c] sm:$0xf]
      %v6379 = vld [vmem:[#allocation3 + $0x70] sm:$0xf]
      %v6380 = vld [vmem:[#allocation3 + $0x74] sm:$0x1]
      %v6381 = vld [vmem:[#allocation3 + $0x78] sm:$0xf]
      %v6382 = vld [vmem:[#allocation3 + $0x7c] sm:$0xf]
      %v6383 = vld [vmem:[#allocation3 + $0x80] sm:$0x1]
      %v6384 = vld [vmem:[#allocation3 + $0x84] sm:$0xf]
      %v6385 = vld [vmem:[#allocation3 + $0x88] sm:$0xf]
      %v6386 = vld [vmem:[#allocation3 + $0x8c] sm:$0x1]
      %v6387 = vld [vmem:[#allocation3 + $0x90] sm:$0xf]
      %v6388 = vld [vmem:[#allocation3 + $0x94] sm:$0xf]
      %v6389 = vld [vmem:[#allocation3 + $0x98] sm:$0x1]
      %v6390 = vld [vmem:[#allocation3 + $0x9c] sm:$0xf]
      %v6391 = vld [vmem:[#allocation3 + $0xa0] sm:$0xf]
      %v6392 = vld [vmem:[#allocation3 + $0xa4] sm:$0x1]
      %v6393 = vld [vmem:[#allocation3 + $0xa8] sm:$0xf]
      %v6394 = vld [vmem:[#allocation3 + $0xac] sm:$0xf]
      %v6395 = vld [vmem:[#allocation3 + $0xb0] sm:$0x1]
      %v6396 = vld [vmem:[#allocation3 + $0xb4] sm:$0xf]
      %v6397 = vld [vmem:[#allocation3 + $0xb8] sm:$0xf]
      %v6398 = vld [vmem:[#allocation3 + $0xbc] sm:$0x1]
      %v6399 = vld [vmem:[#allocation3 + $0xc0] sm:$0xf]
      %v6400 = vld [vmem:[#allocation3 + $0xc4] sm:$0xf]
      %v6401 = vld [vmem:[#allocation3 + $0xc8] sm:$0x1]
      %v6402 = vld [vmem:[#allocation3 + $0xcc] sm:$0xf]
      %v6403 = vld [vmem:[#allocation3 + $0xd0] sm:$0xf]
      %v6404 = vld [vmem:[#allocation3 + $0xd4] sm:$0x1]
      %v6405 = vld [vmem:[%s3] sm:$0xf]
      %v6406 = vld [vmem:[%s3 + $0x4] sm:$0xf]
      %v6407 = vld [vmem:[%s3 + $0x8] sm:$0xf]
      %v6408 = vld [vmem:[%s3 + $0xc] sm:$0xf]
      %v6409 = vld [vmem:[%s3 + $0x10] sm:$0xf]
      %v6410 = vld [vmem:[%s3 + $0x14] sm:$0xf]
      %v6411 = vld [vmem:[%s3 + $0x18] sm:$0xf]
      %v6412 = vld [vmem:[%s3 + $0x1c] sm:$0xf]
      %v6413 = vld [vmem:[%s3 + $0x20] sm:$0xf]
      %v6414 = vld [vmem:[%s3 + $0x24] sm:$0xf]
      %v6415 = vld [vmem:[%s3 + $0x28] sm:$0xf]
      %v6416 = vld [vmem:[%s3 + $0x2c] sm:$0xf]
      %v6417 = vld [vmem:[%s3 + $0x30] sm:$0xf]
      %v6418 = vld [vmem:[%s3 + $0x34] sm:$0xf]
      %v6419 = vld [vmem:[%s3 + $0x38] sm:$0xf]
      %v6420 = vld [vmem:[%s3 + $0x3c] sm:$0xf]
      %v6422 = vshrl.u32 %v6351, 16
      %v6424 = vrot.slane %v6422, 4
      %v6425 = vshll.u32 %v6351, 16
      %v6427 = vrot.slane %v6425, 5
      %v6428 = vor.u32 %v6424, %v6427
      %v6429 = vrot.slane %v6428, 4
      %v6431 = vshll.u32 %v6352, 16
      %v6433 = vrot.slane %v6431, 5
      %v6434 = vsel %vm433, %v6429, %v6433
      %v6435 = vshrl.u32 %v6352, 16
      %v6437 = vrot.slane %v6435, 4
      %v6438 = vor.u32 %v6437, %v6433
      %v6439 = vrot.slane %v6438, 4
      %v6441 = vshll.u32 %v6353, 16
      %v6443 = vrot.slane %v6441, 5
      %v6444 = vsel %vm433, %v6439, %v6443
      %v6446 = vshrl.u32 %v6354, 16
      %v6448 = vrot.slane %v6446, 4
      %v6449 = vshll.u32 %v6354, 16
      %v6451 = vrot.slane %v6449, 5
      %v6452 = vor.u32 %v6448, %v6451
      %v6453 = vrot.slane %v6452, 4
      %v6455 = vshll.u32 %v6355, 16
      %v6457 = vrot.slane %v6455, 5
      %v6458 = vsel %vm433, %v6453, %v6457
      %v6459 = vshrl.u32 %v6355, 16
      %v6461 = vrot.slane %v6459, 4
      %v6462 = vor.u32 %v6461, %v6457
      %v6463 = vrot.slane %v6462, 4
      %v6465 = vshll.u32 %v6356, 16
      %v6467 = vrot.slane %v6465, 5
      %v6468 = vsel %vm433, %v6463, %v6467
      %v6470 = vshrl.u32 %v6357, 16
      %v6472 = vrot.slane %v6470, 4
      %v6473 = vshll.u32 %v6357, 16
      %v6475 = vrot.slane %v6473, 5
      %v6476 = vor.u32 %v6472, %v6475
      %v6477 = vrot.slane %v6476, 4
      %v6479 = vshll.u32 %v6358, 16
      %v6481 = vrot.slane %v6479, 5
      %v6482 = vsel %vm433, %v6477, %v6481
      %v6483 = vshrl.u32 %v6358, 16
      %v6485 = vrot.slane %v6483, 4
      %v6486 = vor.u32 %v6485, %v6481
      %v6487 = vrot.slane %v6486, 4
      %v6489 = vshll.u32 %v6359, 16
      %v6491 = vrot.slane %v6489, 5
      %v6492 = vsel %vm433, %v6487, %v6491
      %v6494 = vshrl.u32 %v6360, 16
      %v6496 = vrot.slane %v6494, 4
      %v6497 = vshll.u32 %v6360, 16
      %v6499 = vrot.slane %v6497, 5
      %v6500 = vor.u32 %v6496, %v6499
      %v6501 = vrot.slane %v6500, 4
      %v6503 = vshll.u32 %v6361, 16
      %v6505 = vrot.slane %v6503, 5
      %v6506 = vsel %vm433, %v6501, %v6505
      %v6507 = vshrl.u32 %v6361, 16
      %v6509 = vrot.slane %v6507, 4
      %v6510 = vor.u32 %v6509, %v6505
      %v6511 = vrot.slane %v6510, 4
      %v6513 = vshll.u32 %v6362, 16
      %v6515 = vrot.slane %v6513, 5
      %v6516 = vsel %vm433, %v6511, %v6515
      %v6518 = vshrl.u32 %v6363, 16
      %v6520 = vrot.slane %v6518, 4
      %v6521 = vshll.u32 %v6363, 16
      %v6523 = vrot.slane %v6521, 5
      %v6524 = vor.u32 %v6520, %v6523
      %v6525 = vrot.slane %v6524, 4
      %v6527 = vshll.u32 %v6364, 16
      %v6529 = vrot.slane %v6527, 5
      %v6530 = vsel %vm433, %v6525, %v6529
      %v6531 = vshrl.u32 %v6364, 16
      %v6533 = vrot.slane %v6531, 4
      %v6534 = vor.u32 %v6533, %v6529
      %v6535 = vrot.slane %v6534, 4
      %v6537 = vshll.u32 %v6365, 16
      %v6539 = vrot.slane %v6537, 5
      %v6540 = vsel %vm433, %v6535, %v6539
      %v6542 = vshrl.u32 %v6366, 16
      %v6544 = vrot.slane %v6542, 4
      %v6545 = vshll.u32 %v6366, 16
      %v6547 = vrot.slane %v6545, 5
      %v6548 = vor.u32 %v6544, %v6547
      %v6549 = vrot.slane %v6548, 4
      %v6551 = vshll.u32 %v6367, 16
      %v6553 = vrot.slane %v6551, 5
      %v6554 = vsel %vm433, %v6549, %v6553
      %v6555 = vshrl.u32 %v6367, 16
      %v6557 = vrot.slane %v6555, 4
      %v6558 = vor.u32 %v6557, %v6553
      %v6559 = vrot.slane %v6558, 4
      %v6561 = vshll.u32 %v6368, 16
      %v6563 = vrot.slane %v6561, 5
      %v6564 = vsel %vm433, %v6559, %v6563
      %v6566 = vshrl.u32 %v6369, 16
      %v6568 = vrot.slane %v6566, 4
      %v6569 = vshll.u32 %v6369, 16
      %v6571 = vrot.slane %v6569, 5
      %v6572 = vor.u32 %v6568, %v6571
      %v6573 = vrot.slane %v6572, 4
      %v6575 = vshll.u32 %v6370, 16
      %v6577 = vrot.slane %v6575, 5
      %v6578 = vsel %vm433, %v6573, %v6577
      %v6579 = vshrl.u32 %v6370, 16
      %v6581 = vrot.slane %v6579, 4
      %v6582 = vor.u32 %v6581, %v6577
      %v6583 = vrot.slane %v6582, 4
      %v6585 = vshll.u32 %v6371, 16
      %v6587 = vrot.slane %v6585, 5
      %v6588 = vsel %vm433, %v6583, %v6587
      %v6590 = vshrl.u32 %v6372, 16
      %v6592 = vrot.slane %v6590, 4
      %v6593 = vshll.u32 %v6372, 16
      %v6595 = vrot.slane %v6593, 5
      %v6596 = vor.u32 %v6592, %v6595
      %v6597 = vrot.slane %v6596, 4
      %v6599 = vshll.u32 %v6373, 16
      %v6601 = vrot.slane %v6599, 5
      %v6602 = vsel %vm433, %v6597, %v6601
      %v6603 = vshrl.u32 %v6373, 16
      %v6605 = vrot.slane %v6603, 4
      %v6606 = vor.u32 %v6605, %v6601
      %v6607 = vrot.slane %v6606, 4
      %v6609 = vshll.u32 %v6374, 16
      %v6611 = vrot.slane %v6609, 5
      %v6612 = vsel %vm433, %v6607, %v6611
      %v6614 = vshrl.u32 %v6375, 16
      %v6616 = vrot.slane %v6614, 4
      %v6617 = vshll.u32 %v6375, 16
      %v6619 = vrot.slane %v6617, 5
      %v6620 = vor.u32 %v6616, %v6619
      %v6621 = vrot.slane %v6620, 4
      %v6623 = vshll.u32 %v6376, 16
      %v6625 = vrot.slane %v6623, 5
      %v6626 = vsel %vm433, %v6621, %v6625
      %v6627 = vshrl.u32 %v6376, 16
      %v6629 = vrot.slane %v6627, 4
      %v6630 = vor.u32 %v6629, %v6625
      %v6631 = vrot.slane %v6630, 4
      %v6633 = vshll.u32 %v6377, 16
      %v6635 = vrot.slane %v6633, 5
      %v6636 = vsel %vm433, %v6631, %v6635
      %v6638 = vshrl.u32 %v6378, 16
      %v6640 = vrot.slane %v6638, 4
      %v6641 = vshll.u32 %v6378, 16
      %v6643 = vrot.slane %v6641, 5
      %v6644 = vor.u32 %v6640, %v6643
      %v6645 = vrot.slane %v6644, 4
      %v6647 = vshll.u32 %v6379, 16
      %v6649 = vrot.slane %v6647, 5
      %v6650 = vsel %vm433, %v6645, %v6649
      %v6651 = vshrl.u32 %v6379, 16
      %v6653 = vrot.slane %v6651, 4
      %v6654 = vor.u32 %v6653, %v6649
      %v6655 = vrot.slane %v6654, 4
      %v6657 = vshll.u32 %v6380, 16
      %v6659 = vrot.slane %v6657, 5
      %v6660 = vsel %vm433, %v6655, %v6659
      %v6662 = vshrl.u32 %v6381, 16
      %v6664 = vrot.slane %v6662, 4
      %v6665 = vshll.u32 %v6381, 16
      %v6667 = vrot.slane %v6665, 5
      %v6668 = vor.u32 %v6664, %v6667
      %v6669 = vrot.slane %v6668, 4
      %v6671 = vshll.u32 %v6382, 16
      %v6673 = vrot.slane %v6671, 5
      %v6674 = vsel %vm433, %v6669, %v6673
      %v6675 = vshrl.u32 %v6382, 16
      %v6677 = vrot.slane %v6675, 4
      %v6678 = vor.u32 %v6677, %v6673
      %v6679 = vrot.slane %v6678, 4
      %v6681 = vshll.u32 %v6383, 16
      %v6683 = vrot.slane %v6681, 5
      %v6684 = vsel %vm433, %v6679, %v6683
      %v6686 = vshrl.u32 %v6384, 16
      %v6688 = vrot.slane %v6686, 4
      %v6689 = vshll.u32 %v6384, 16
      %v6691 = vrot.slane %v6689, 5
      %v6692 = vor.u32 %v6688, %v6691
      %v6693 = vrot.slane %v6692, 4
      %v6695 = vshll.u32 %v6385, 16
      %v6697 = vrot.slane %v6695, 5
      %v6698 = vsel %vm433, %v6693, %v6697
      %v6699 = vshrl.u32 %v6385, 16
      %v6701 = vrot.slane %v6699, 4
      %v6702 = vor.u32 %v6701, %v6697
      %v6703 = vrot.slane %v6702, 4
      %v6705 = vshll.u32 %v6386, 16
      %v6707 = vrot.slane %v6705, 5
      %v6708 = vsel %vm433, %v6703, %v6707
      %v6710 = vshrl.u32 %v6387, 16
      %v6712 = vrot.slane %v6710, 4
      %v6713 = vshll.u32 %v6387, 16
      %v6715 = vrot.slane %v6713, 5
      %v6716 = vor.u32 %v6712, %v6715
      %v6717 = vrot.slane %v6716, 4
      %v6719 = vshll.u32 %v6388, 16
      %v6721 = vrot.slane %v6719, 5
      %v6722 = vsel %vm433, %v6717, %v6721
      %v6723 = vshrl.u32 %v6388, 16
      %v6725 = vrot.slane %v6723, 4
      %v6726 = vor.u32 %v6725, %v6721
      %v6727 = vrot.slane %v6726, 4
      %v6729 = vshll.u32 %v6389, 16
      %v6731 = vrot.slane %v6729, 5
      %v6732 = vsel %vm433, %v6727, %v6731
      %v6734 = vshrl.u32 %v6390, 16
      %v6736 = vrot.slane %v6734, 4
      %v6737 = vshll.u32 %v6390, 16
      %v6739 = vrot.slane %v6737, 5
      %v6740 = vor.u32 %v6736, %v6739
      %v6741 = vrot.slane %v6740, 4
      %v6743 = vshll.u32 %v6391, 16
      %v6745 = vrot.slane %v6743, 5
      %v6746 = vsel %vm433, %v6741, %v6745
      %v6747 = vshrl.u32 %v6391, 16
      %v6749 = vrot.slane %v6747, 4
      %v6750 = vor.u32 %v6749, %v6745
      %v6751 = vrot.slane %v6750, 4
      %v6753 = vshll.u32 %v6392, 16
      %v6755 = vrot.slane %v6753, 5
      %v6756 = vsel %vm433, %v6751, %v6755
      %v6758 = vshrl.u32 %v6393, 16
      %v6760 = vrot.slane %v6758, 4
      %v6761 = vshll.u32 %v6393, 16
      %v6763 = vrot.slane %v6761, 5
      %v6764 = vor.u32 %v6760, %v6763
      %v6765 = vrot.slane %v6764, 4
      %v6767 = vshll.u32 %v6394, 16
      %v6769 = vrot.slane %v6767, 5
      %v6770 = vsel %vm433, %v6765, %v6769
      %v6771 = vshrl.u32 %v6394, 16
      %v6773 = vrot.slane %v6771, 4
      %v6774 = vor.u32 %v6773, %v6769
      %v6775 = vrot.slane %v6774, 4
      %v6777 = vshll.u32 %v6395, 16
      %v6779 = vrot.slane %v6777, 5
      %v6780 = vsel %vm433, %v6775, %v6779
      %v6782 = vshrl.u32 %v6396, 16
      %v6784 = vrot.slane %v6782, 4
      %v6785 = vshll.u32 %v6396, 16
      %v6787 = vrot.slane %v6785, 5
      %v6788 = vor.u32 %v6784, %v6787
      %v6789 = vrot.slane %v6788, 4
      %v6791 = vshll.u32 %v6397, 16
      %v6793 = vrot.slane %v6791, 5
      %v6794 = vsel %vm433, %v6789, %v6793
      %v6795 = vshrl.u32 %v6397, 16
      %v6797 = vrot.slane %v6795, 4
      %v6798 = vor.u32 %v6797, %v6793
      %v6799 = vrot.slane %v6798, 4
      %v6801 = vshll.u32 %v6398, 16
      %v6803 = vrot.slane %v6801, 5
      %v6804 = vsel %vm433, %v6799, %v6803
      %s6805 = scalar_lea.vmem %s3, 64
      %v6806 = vld [vmem:[%s6805] sm:$0xf]
      %v6807 = vld [vmem:[%s6805 + $0x4] sm:$0xf]
      %v6808 = vld [vmem:[%s6805 + $0x8] sm:$0xf]
      %v6809 = vld [vmem:[%s6805 + $0xc] sm:$0xf]
      %v6810 = vld [vmem:[%s6805 + $0x10] sm:$0xf]
      %v6811 = vld [vmem:[%s6805 + $0x14] sm:$0xf]
      %v6812 = vld [vmem:[%s6805 + $0x18] sm:$0xf]
      %v6813 = vld [vmem:[%s6805 + $0x1c] sm:$0xf]
      %v6814 = vld [vmem:[%s6805 + $0x20] sm:$0xf]
      %v6815 = vld [vmem:[%s6805 + $0x24] sm:$0xf]
      %v6816 = vld [vmem:[%s6805 + $0x28] sm:$0xf]
      %v6817 = vld [vmem:[%s6805 + $0x2c] sm:$0xf]
      %v6818 = vld [vmem:[%s6805 + $0x30] sm:$0xf]
      %v6819 = vld [vmem:[%s6805 + $0x34] sm:$0xf]
      %v6820 = vld [vmem:[%s6805 + $0x38] sm:$0xf]
      %v6821 = vld [vmem:[%s6805 + $0x3c] sm:$0xf]
      %v6822 = vunpack.c.l.b16 %v6434
      %v6823 = vunpack.c.l.b16 %v6444
      %v6824 = vunpack.c.l.b16 %v6458
      %v6825 = vunpack.c.l.b16 %v6468
      %v6826 = vunpack.c.l.b16 %v6482
      %v6827 = vunpack.c.l.b16 %v6492
      %v6828 = vunpack.c.l.b16 %v6506
      %v6829 = vunpack.c.l.b16 %v6516
      %v6830 = vunpack.c.l.b16 %v6530
      %v6831 = vunpack.c.l.b16 %v6540
      %v6832 = vunpack.c.l.b16 %v6554
      %v6833 = vunpack.c.l.b16 %v6564
      %v6834 = vunpack.c.l.b16 %v6578
      %v6835 = vunpack.c.l.b16 %v6588
      %v6836 = vunpack.c.l.b16 %v6602
      %v6837 = vunpack.c.l.b16 %v6612
      %v6838 = vunpack.c.l.b16 %v6626
      %v6839 = vunpack.c.l.b16 %v6636
      %v6840 = vunpack.c.l.b16 %v6650
      %v6841 = vunpack.c.l.b16 %v6660
      %v6842 = vunpack.c.l.b16 %v6674
      %v6843 = vunpack.c.l.b16 %v6684
      %v6844 = vunpack.c.l.b16 %v6698
      %v6845 = vunpack.c.l.b16 %v6708
      %v6846 = vunpack.c.l.b16 %v6722
      %v6847 = vunpack.c.l.b16 %v6732
      %v6848 = vunpack.c.l.b16 %v6746
      %v6849 = vunpack.c.l.b16 %v6756
      %v6850 = vunpack.c.l.b16 %v6770
      %v6851 = vunpack.c.l.b16 %v6780
      %v6852 = vunpack.c.l.b16 %v6794
      %v6853 = vunpack.c.l.b16 %v6804
      %v6854 = vpack.c.b16 %v6823, %v6822
      %v6855 = vpack.c.b16 %v6825, %v6824
      %v6856 = vpack.c.b16 %v6827, %v6826
      %v6857 = vpack.c.b16 %v6829, %v6828
      %v6858 = vpack.c.b16 %v6831, %v6830
      %v6859 = vpack.c.b16 %v6833, %v6832
      %v6860 = vpack.c.b16 %v6835, %v6834
      %v6861 = vpack.c.b16 %v6837, %v6836
      %v6862 = vpack.c.b16 %v6839, %v6838
      %v6863 = vpack.c.b16 %v6841, %v6840
      %v6864 = vpack.c.b16 %v6843, %v6842
      %v6865 = vpack.c.b16 %v6845, %v6844
      %v6866 = vpack.c.b16 %v6847, %v6846
      %v6867 = vpack.c.b16 %v6849, %v6848
      %v6868 = vpack.c.b16 %v6851, %v6850
      %v6869 = vpack.c.b16 %v6853, %v6852
      %v6902 = vunpack.c.l.b16 %v6806
      %v6903 = vunpack.c.l.b16 %v6807
      %v6904 = vunpack.c.l.b16 %v6808
      %v6905 = vunpack.c.l.b16 %v6809
      %v6906 = vunpack.c.l.b16 %v6810
      %v6907 = vunpack.c.l.b16 %v6811
      %v6908 = vunpack.c.l.b16 %v6812
      %v6909 = vunpack.c.l.b16 %v6813
      %v6910 = vunpack.c.l.b16 %v6814
      %v6911 = vunpack.c.l.b16 %v6815
      %v6912 = vunpack.c.l.b16 %v6816
      %v6913 = vunpack.c.l.b16 %v6817
      %v6914 = vunpack.c.l.b16 %v6818
      %v6915 = vunpack.c.l.b16 %v6819
      %v6916 = vunpack.c.l.b16 %v6820
      %v6917 = vunpack.c.l.b16 %v6821
      %v6918 = vpack.c.b16 %v6903, %v6902
      %v6919 = vpack.c.b16 %v6905, %v6904
      %v6920 = vpack.c.b16 %v6907, %v6906
      %v6921 = vpack.c.b16 %v6909, %v6908
      %v6922 = vpack.c.b16 %v6911, %v6910
      %v6923 = vpack.c.b16 %v6913, %v6912
      %v6924 = vpack.c.b16 %v6915, %v6914
      %v6925 = vpack.c.b16 %v6917, %v6916
      %6934 = vmatpush.bf16.msra.mxu0 %v6925
      %6935 = vmatpush.bf16.msra.mxu0 %v6924
      %6936 = vmatpush.bf16.msra.mxu0 %v6923
      %6937 = vmatpush.bf16.msra.mxu0 %v6922
      %6938 = vmatpush.bf16.msra.mxu0 %v6921
      %6939 = vmatpush.bf16.msra.mxu0 %v6920
      %6940 = vmatpush.bf16.msra.mxu0 %v6919
      %6941 = vmatpush.bf16.msra.mxu0 %v6918
      %6942 = vmatmul.bf16.gmra.mxu0 %v6854
      %v6943 = vpop.f32.mrf.mxu0
      %v6944 = vadd.f32 0.0, %v6943
      %v6945 = vpop.f32.mrf.mxu0
      %v6946 = vadd.f32 0.0, %v6945
      %6947 = vmatmul.bf16.gmra.mxu0 %v6855
      %v6948 = vpop.f32.mrf.mxu0
      %v6949 = vadd.f32 0.0, %v6948
      %v6950 = vpop.f32.mrf.mxu0
      %v6951 = vadd.f32 0.0, %v6950
      %6952 = vmatmul.bf16.gmra.mxu0 %v6856
      %v6953 = vpop.f32.mrf.mxu0
      %v6954 = vadd.f32 0.0, %v6953
      %v6955 = vpop.f32.mrf.mxu0
      %v6956 = vadd.f32 0.0, %v6955
      %6957 = vmatmul.bf16.gmra.mxu0 %v6857
      %v6958 = vpop.f32.mrf.mxu0
      %v6959 = vadd.f32 0.0, %v6958
      %v6960 = vpop.f32.mrf.mxu0
      %v6961 = vadd.f32 0.0, %v6960
      %6962 = vmatmul.bf16.gmra.mxu0 %v6858
      %v6963 = vpop.f32.mrf.mxu0
      %v6964 = vadd.f32 0.0, %v6963
      %v6965 = vpop.f32.mrf.mxu0
      %v6966 = vadd.f32 0.0, %v6965
      %6967 = vmatmul.bf16.gmra.mxu0 %v6859
      %v6968 = vpop.f32.mrf.mxu0
      %v6969 = vadd.f32 0.0, %v6968
      %v6970 = vpop.f32.mrf.mxu0
      %v6971 = vadd.f32 0.0, %v6970
      %6972 = vmatmul.bf16.gmra.mxu0 %v6860
      %v6973 = vpop.f32.mrf.mxu0
      %v6974 = vadd.f32 0.0, %v6973
      %v6975 = vpop.f32.mrf.mxu0
      %v6976 = vadd.f32 0.0, %v6975
      %6977 = vmatmul.bf16.gmra.mxu0 %v6861
      %v6978 = vpop.f32.mrf.mxu0
      %v6979 = vadd.f32 0.0, %v6978
      %v6980 = vpop.f32.mrf.mxu0
      %v6981 = vadd.f32 0.0, %v6980
      %6982 = vmatmul.bf16.gmra.mxu0 %v6862
      %v6983 = vpop.f32.mrf.mxu0
      %v6984 = vadd.f32 0.0, %v6983
      %v6985 = vpop.f32.mrf.mxu0
      %v6986 = vadd.f32 0.0, %v6985
      %6987 = vmatmul.bf16.gmra.mxu0 %v6863
      %v6988 = vpop.f32.mrf.mxu0
      %v6989 = vadd.f32 0.0, %v6988
      %v6990 = vpop.f32.mrf.mxu0
      %v6991 = vadd.f32 0.0, %v6990
      %6992 = vmatmul.bf16.gmra.mxu0 %v6864
      %v6993 = vpop.f32.mrf.mxu0
      %v6994 = vadd.f32 0.0, %v6993
      %v6995 = vpop.f32.mrf.mxu0
      %v6996 = vadd.f32 0.0, %v6995
      %6997 = vmatmul.bf16.gmra.mxu0 %v6865
      %v6998 = vpop.f32.mrf.mxu0
      %v6999 = vadd.f32 0.0, %v6998
      %v7000 = vpop.f32.mrf.mxu0
      %v7001 = vadd.f32 0.0, %v7000
      %7002 = vmatmul.bf16.gmra.mxu0 %v6866
      %v7003 = vpop.f32.mrf.mxu0
      %v7004 = vadd.f32 0.0, %v7003
      %v7005 = vpop.f32.mrf.mxu0
      %v7006 = vadd.f32 0.0, %v7005
      %7007 = vmatmul.bf16.gmra.mxu0 %v6867
      %v7008 = vpop.f32.mrf.mxu0
      %v7009 = vadd.f32 0.0, %v7008
      %v7010 = vpop.f32.mrf.mxu0
      %v7011 = vadd.f32 0.0, %v7010
      %7012 = vmatmul.bf16.gmra.mxu0 %v6868
      %v7013 = vpop.f32.mrf.mxu0
      %v7014 = vadd.f32 0.0, %v7013
      %v7015 = vpop.f32.mrf.mxu0
      %v7016 = vadd.f32 0.0, %v7015
      %7017 = vmatmul.bf16.gmra.mxu0 %v6869
      %v7018 = vpop.f32.mrf.mxu0
      %v7019 = vadd.f32 0.0, %v7018
      %v7020 = vpop.f32.mrf.mxu0
      %v7021 = vadd.f32 0.0, %v7020
      %7022 = vdwg.mxu0
      %v7055 = vunpack.c.l.b16 %v6351
      %v7056 = vunpack.c.l.b16 %v6352
      %v7057 = vunpack.c.l.b16 %v6354
      %v7058 = vunpack.c.l.b16 %v6355
      %v7059 = vunpack.c.l.b16 %v6357
      %v7060 = vunpack.c.l.b16 %v6358
      %v7061 = vunpack.c.l.b16 %v6360
      %v7062 = vunpack.c.l.b16 %v6361
      %v7063 = vunpack.c.l.b16 %v6363
      %v7064 = vunpack.c.l.b16 %v6364
      %v7065 = vunpack.c.l.b16 %v6366
      %v7066 = vunpack.c.l.b16 %v6367
      %v7067 = vunpack.c.l.b16 %v6369
      %v7068 = vunpack.c.l.b16 %v6370
      %v7069 = vunpack.c.l.b16 %v6372
      %v7070 = vunpack.c.l.b16 %v6373
      %v7071 = vunpack.c.l.b16 %v6375
      %v7072 = vunpack.c.l.b16 %v6376
      %v7073 = vunpack.c.l.b16 %v6378
      %v7074 = vunpack.c.l.b16 %v6379
      %v7075 = vunpack.c.l.b16 %v6381
      %v7076 = vunpack.c.l.b16 %v6382
      %v7077 = vunpack.c.l.b16 %v6384
      %v7078 = vunpack.c.l.b16 %v6385
      %v7079 = vunpack.c.l.b16 %v6387
      %v7080 = vunpack.c.l.b16 %v6388
      %v7081 = vunpack.c.l.b16 %v6390
      %v7082 = vunpack.c.l.b16 %v6391
      %v7083 = vunpack.c.l.b16 %v6393
      %v7084 = vunpack.c.l.b16 %v6394
      %v7085 = vunpack.c.l.b16 %v6396
      %v7086 = vunpack.c.l.b16 %v6397
      %v7087 = vpack.c.b16 %v7056, %v7055
      %v7088 = vpack.c.b16 %v7058, %v7057
      %v7089 = vpack.c.b16 %v7060, %v7059
      %v7090 = vpack.c.b16 %v7062, %v7061
      %v7091 = vpack.c.b16 %v7064, %v7063
      %v7092 = vpack.c.b16 %v7066, %v7065
      %v7093 = vpack.c.b16 %v7068, %v7067
      %v7094 = vpack.c.b16 %v7070, %v7069
      %v7095 = vpack.c.b16 %v7072, %v7071
      %v7096 = vpack.c.b16 %v7074, %v7073
      %v7097 = vpack.c.b16 %v7076, %v7075
      %v7098 = vpack.c.b16 %v7078, %v7077
      %v7099 = vpack.c.b16 %v7080, %v7079
      %v7100 = vpack.c.b16 %v7082, %v7081
      %v7101 = vpack.c.b16 %v7084, %v7083
      %v7102 = vpack.c.b16 %v7086, %v7085
      %v7135 = vunpack.c.l.b16 %v6405
      %v7136 = vunpack.c.l.b16 %v6406
      %v7137 = vunpack.c.l.b16 %v6407
      %v7138 = vunpack.c.l.b16 %v6408
      %v7139 = vunpack.c.l.b16 %v6409
      %v7140 = vunpack.c.l.b16 %v6410
      %v7141 = vunpack.c.l.b16 %v6411
      %v7142 = vunpack.c.l.b16 %v6412
      %v7143 = vunpack.c.l.b16 %v6413
      %v7144 = vunpack.c.l.b16 %v6414
      %v7145 = vunpack.c.l.b16 %v6415
      %v7146 = vunpack.c.l.b16 %v6416
      %v7147 = vunpack.c.l.b16 %v6417
      %v7148 = vunpack.c.l.b16 %v6418
      %v7149 = vunpack.c.l.b16 %v6419
      %v7150 = vunpack.c.l.b16 %v6420
      %v7151 = vpack.c.b16 %v7136, %v7135
      %v7152 = vpack.c.b16 %v7138, %v7137
      %v7153 = vpack.c.b16 %v7140, %v7139
      %v7154 = vpack.c.b16 %v7142, %v7141
      %v7155 = vpack.c.b16 %v7144, %v7143
      %v7156 = vpack.c.b16 %v7146, %v7145
      %v7157 = vpack.c.b16 %v7148, %v7147
      %v7158 = vpack.c.b16 %v7150, %v7149
      %7167 = vmatpush.bf16.msra.mxu0 %v7158
      %7168 = vmatpush.bf16.msra.mxu0 %v7157
      %7169 = vmatpush.bf16.msra.mxu0 %v7156
      %7170 = vmatpush.bf16.msra.mxu0 %v7155
      %7171 = vmatpush.bf16.msra.mxu0 %v7154
      %7172 = vmatpush.bf16.msra.mxu0 %v7153
      %7173 = vmatpush.bf16.msra.mxu0 %v7152
      %7174 = vmatpush.bf16.msra.mxu0 %v7151
      %7175 = vmatmul.bf16.gmra.mxu0 %v7087
      %v7176 = vpop.f32.mrf.mxu0
      %v7177 = vadd.f32 %v6944, %v7176
      %v7178 = vpop.f32.mrf.mxu0
      %v7179 = vadd.f32 %v6946, %v7178
      %7180 = vmatmul.bf16.gmra.mxu0 %v7088
      %v7181 = vpop.f32.mrf.mxu0
      %v7182 = vadd.f32 %v6949, %v7181
      %v7183 = vpop.f32.mrf.mxu0
      %v7184 = vadd.f32 %v6951, %v7183
      %7185 = vmatmul.bf16.gmra.mxu0 %v7089
      %v7186 = vpop.f32.mrf.mxu0
      %v7187 = vadd.f32 %v6954, %v7186
      %v7188 = vpop.f32.mrf.mxu0
      %v7189 = vadd.f32 %v6956, %v7188
      %7190 = vmatmul.bf16.gmra.mxu0 %v7090
      %v7191 = vpop.f32.mrf.mxu0
      %v7192 = vadd.f32 %v6959, %v7191
      %v7193 = vpop.f32.mrf.mxu0
      %v7194 = vadd.f32 %v6961, %v7193
      %7195 = vmatmul.bf16.gmra.mxu0 %v7091
      %v7196 = vpop.f32.mrf.mxu0
      %v7197 = vadd.f32 %v6964, %v7196
      %v7198 = vpop.f32.mrf.mxu0
      %v7199 = vadd.f32 %v6966, %v7198
      %7200 = vmatmul.bf16.gmra.mxu0 %v7092
      %v7201 = vpop.f32.mrf.mxu0
      %v7202 = vadd.f32 %v6969, %v7201
      %v7203 = vpop.f32.mrf.mxu0
      %v7204 = vadd.f32 %v6971, %v7203
      %7205 = vmatmul.bf16.gmra.mxu0 %v7093
      %v7206 = vpop.f32.mrf.mxu0
      %v7207 = vadd.f32 %v6974, %v7206
      %v7208 = vpop.f32.mrf.mxu0
      %v7209 = vadd.f32 %v6976, %v7208
      %7210 = vmatmul.bf16.gmra.mxu0 %v7094
      %v7211 = vpop.f32.mrf.mxu0
      %v7212 = vadd.f32 %v6979, %v7211
      %v7213 = vpop.f32.mrf.mxu0
      %v7214 = vadd.f32 %v6981, %v7213
      %7215 = vmatmul.bf16.gmra.mxu0 %v7095
      %v7216 = vpop.f32.mrf.mxu0
      %v7217 = vadd.f32 %v6984, %v7216
      %v7218 = vpop.f32.mrf.mxu0
      %v7219 = vadd.f32 %v6986, %v7218
      %7220 = vmatmul.bf16.gmra.mxu0 %v7096
      %v7221 = vpop.f32.mrf.mxu0
      %v7222 = vadd.f32 %v6989, %v7221
      %v7223 = vpop.f32.mrf.mxu0
      %v7224 = vadd.f32 %v6991, %v7223
      %7225 = vmatmul.bf16.gmra.mxu0 %v7097
      %v7226 = vpop.f32.mrf.mxu0
      %v7227 = vadd.f32 %v6994, %v7226
      %v7228 = vpop.f32.mrf.mxu0
      %v7229 = vadd.f32 %v6996, %v7228
      %7230 = vmatmul.bf16.gmra.mxu0 %v7098
      %v7231 = vpop.f32.mrf.mxu0
      %v7232 = vadd.f32 %v6999, %v7231
      %v7233 = vpop.f32.mrf.mxu0
      %v7234 = vadd.f32 %v7001, %v7233
      %7235 = vmatmul.bf16.gmra.mxu0 %v7099
      %v7236 = vpop.f32.mrf.mxu0
      %v7237 = vadd.f32 %v7004, %v7236
      %v7238 = vpop.f32.mrf.mxu0
      %v7239 = vadd.f32 %v7006, %v7238
      %7240 = vmatmul.bf16.gmra.mxu0 %v7100
      %v7241 = vpop.f32.mrf.mxu0
      %v7242 = vadd.f32 %v7009, %v7241
      %v7243 = vpop.f32.mrf.mxu0
      %v7244 = vadd.f32 %v7011, %v7243
      %7245 = vmatmul.bf16.gmra.mxu0 %v7101
      %v7246 = vpop.f32.mrf.mxu0
      %v7247 = vadd.f32 %v7014, %v7246
      %v7248 = vpop.f32.mrf.mxu0
      %v7249 = vadd.f32 %v7016, %v7248
      %7250 = vmatmul.bf16.gmra.mxu0 %v7102
      %v7251 = vpop.f32.mrf.mxu0
      %v7252 = vadd.f32 %v7019, %v7251
      %v7253 = vpop.f32.mrf.mxu0
      %v7254 = vadd.f32 %v7021, %v7253
      %7255 = vdwg.mxu0
      %v7272 = vrot.slane %v6351, 5
      %v7273 = vrot.slane %v7272, 4
      %v7274 = vrot.slane %v6352, 5
      %v7275 = vsel %vm1287, %v7273, %v7274
      %v7276 = vrot.slane %v7274, 4
      %v7277 = vrot.slane %v6353, 5
      %v7278 = vsel %vm1287, %v7276, %v7277
      %v7279 = vrot.slane %v6354, 5
      %v7280 = vrot.slane %v7279, 4
      %v7281 = vrot.slane %v6355, 5
      %v7282 = vsel %vm1287, %v7280, %v7281
      %v7283 = vrot.slane %v7281, 4
      %v7284 = vrot.slane %v6356, 5
      %v7285 = vsel %vm1287, %v7283, %v7284
      %v7286 = vrot.slane %v6357, 5
      %v7287 = vrot.slane %v7286, 4
      %v7288 = vrot.slane %v6358, 5
      %v7289 = vsel %vm1287, %v7287, %v7288
      %v7290 = vrot.slane %v7288, 4
      %v7291 = vrot.slane %v6359, 5
      %v7292 = vsel %vm1287, %v7290, %v7291
      %v7293 = vrot.slane %v6360, 5
      %v7294 = vrot.slane %v7293, 4
      %v7295 = vrot.slane %v6361, 5
      %v7296 = vsel %vm1287, %v7294, %v7295
      %v7297 = vrot.slane %v7295, 4
      %v7298 = vrot.slane %v6362, 5
      %v7299 = vsel %vm1287, %v7297, %v7298
      %v7300 = vrot.slane %v6363, 5
      %v7301 = vrot.slane %v7300, 4
      %v7302 = vrot.slane %v6364, 5
      %v7303 = vsel %vm1287, %v7301, %v7302
      %v7304 = vrot.slane %v7302, 4
      %v7305 = vrot.slane %v6365, 5
      %v7306 = vsel %vm1287, %v7304, %v7305
      %v7307 = vrot.slane %v6366, 5
      %v7308 = vrot.slane %v7307, 4
      %v7309 = vrot.slane %v6367, 5
      %v7310 = vsel %vm1287, %v7308, %v7309
      %v7311 = vrot.slane %v7309, 4
      %v7312 = vrot.slane %v6368, 5
      %v7313 = vsel %vm1287, %v7311, %v7312
      %v7314 = vrot.slane %v6369, 5
      %v7315 = vrot.slane %v7314, 4
      %v7316 = vrot.slane %v6370, 5
      %v7317 = vsel %vm1287, %v7315, %v7316
      %v7318 = vrot.slane %v7316, 4
      %v7319 = vrot.slane %v6371, 5
      %v7320 = vsel %vm1287, %v7318, %v7319
      %v7321 = vrot.slane %v6372, 5
      %v7322 = vrot.slane %v7321, 4
      %v7323 = vrot.slane %v6373, 5
      %v7324 = vsel %vm1287, %v7322, %v7323
      %v7325 = vrot.slane %v7323, 4
      %v7326 = vrot.slane %v6374, 5
      %v7327 = vsel %vm1287, %v7325, %v7326
      %v7328 = vrot.slane %v6375, 5
      %v7329 = vrot.slane %v7328, 4
      %v7330 = vrot.slane %v6376, 5
      %v7331 = vsel %vm1287, %v7329, %v7330
      %v7332 = vrot.slane %v7330, 4
      %v7333 = vrot.slane %v6377, 5
      %v7334 = vsel %vm1287, %v7332, %v7333
      %v7335 = vrot.slane %v6378, 5
      %v7336 = vrot.slane %v7335, 4
      %v7337 = vrot.slane %v6379, 5
      %v7338 = vsel %vm1287, %v7336, %v7337
      %v7339 = vrot.slane %v7337, 4
      %v7340 = vrot.slane %v6380, 5
      %v7341 = vsel %vm1287, %v7339, %v7340
      %v7342 = vrot.slane %v6381, 5
      %v7343 = vrot.slane %v7342, 4
      %v7344 = vrot.slane %v6382, 5
      %v7345 = vsel %vm1287, %v7343, %v7344
      %v7346 = vrot.slane %v7344, 4
      %v7347 = vrot.slane %v6383, 5
      %v7348 = vsel %vm1287, %v7346, %v7347
      %v7349 = vrot.slane %v6384, 5
      %v7350 = vrot.slane %v7349, 4
      %v7351 = vrot.slane %v6385, 5
      %v7352 = vsel %vm1287, %v7350, %v7351
      %v7353 = vrot.slane %v7351, 4
      %v7354 = vrot.slane %v6386, 5
      %v7355 = vsel %vm1287, %v7353, %v7354
      %v7356 = vrot.slane %v6387, 5
      %v7357 = vrot.slane %v7356, 4
      %v7358 = vrot.slane %v6388, 5
      %v7359 = vsel %vm1287, %v7357, %v7358
      %v7360 = vrot.slane %v7358, 4
      %v7361 = vrot.slane %v6389, 5
      %v7362 = vsel %vm1287, %v7360, %v7361
      %v7363 = vrot.slane %v6390, 5
      %v7364 = vrot.slane %v7363, 4
      %v7365 = vrot.slane %v6391, 5
      %v7366 = vsel %vm1287, %v7364, %v7365
      %v7367 = vrot.slane %v7365, 4
      %v7368 = vrot.slane %v6392, 5
      %v7369 = vsel %vm1287, %v7367, %v7368
      %v7370 = vrot.slane %v6393, 5
      %v7371 = vrot.slane %v7370, 4
      %v7372 = vrot.slane %v6394, 5
      %v7373 = vsel %vm1287, %v7371, %v7372
      %v7374 = vrot.slane %v7372, 4
      %v7375 = vrot.slane %v6395, 5
      %v7376 = vsel %vm1287, %v7374, %v7375
      %v7377 = vrot.slane %v6396, 5
      %v7378 = vrot.slane %v7377, 4
      %v7379 = vrot.slane %v6397, 5
      %v7380 = vsel %vm1287, %v7378, %v7379
      %v7381 = vrot.slane %v7379, 4
      %v7382 = vrot.slane %v6398, 5
      %v7383 = vsel %vm1287, %v7381, %v7382
      %s7384 = scalar_lea.vmem %s3, 128
      %v7385 = vld [vmem:[%s7384] sm:$0xf]
      %v7386 = vld [vmem:[%s7384 + $0x4] sm:$0xf]
      %v7387 = vld [vmem:[%s7384 + $0x8] sm:$0xf]
      %v7388 = vld [vmem:[%s7384 + $0xc] sm:$0xf]
      %v7389 = vld [vmem:[%s7384 + $0x10] sm:$0xf]
      %v7390 = vld [vmem:[%s7384 + $0x14] sm:$0xf]
      %v7391 = vld [vmem:[%s7384 + $0x18] sm:$0xf]
      %v7392 = vld [vmem:[%s7384 + $0x1c] sm:$0xf]
      %v7393 = vld [vmem:[%s7384 + $0x20] sm:$0xf]
      %v7394 = vld [vmem:[%s7384 + $0x24] sm:$0xf]
      %v7395 = vld [vmem:[%s7384 + $0x28] sm:$0xf]
      %v7396 = vld [vmem:[%s7384 + $0x2c] sm:$0xf]
      %v7397 = vld [vmem:[%s7384 + $0x30] sm:$0xf]
      %v7398 = vld [vmem:[%s7384 + $0x34] sm:$0xf]
      %v7399 = vld [vmem:[%s7384 + $0x38] sm:$0xf]
      %v7400 = vld [vmem:[%s7384 + $0x3c] sm:$0xf]
      %v7401 = vunpack.c.l.b16 %v7275
      %v7402 = vunpack.c.l.b16 %v7278
      %v7403 = vunpack.c.l.b16 %v7282
      %v7404 = vunpack.c.l.b16 %v7285
      %v7405 = vunpack.c.l.b16 %v7289
      %v7406 = vunpack.c.l.b16 %v7292
      %v7407 = vunpack.c.l.b16 %v7296
      %v7408 = vunpack.c.l.b16 %v7299
      %v7409 = vunpack.c.l.b16 %v7303
      %v7410 = vunpack.c.l.b16 %v7306
      %v7411 = vunpack.c.l.b16 %v7310
      %v7412 = vunpack.c.l.b16 %v7313
      %v7413 = vunpack.c.l.b16 %v7317
      %v7414 = vunpack.c.l.b16 %v7320
      %v7415 = vunpack.c.l.b16 %v7324
      %v7416 = vunpack.c.l.b16 %v7327
      %v7417 = vunpack.c.l.b16 %v7331
      %v7418 = vunpack.c.l.b16 %v7334
      %v7419 = vunpack.c.l.b16 %v7338
      %v7420 = vunpack.c.l.b16 %v7341
      %v7421 = vunpack.c.l.b16 %v7345
      %v7422 = vunpack.c.l.b16 %v7348
      %v7423 = vunpack.c.l.b16 %v7352
      %v7424 = vunpack.c.l.b16 %v7355
      %v7425 = vunpack.c.l.b16 %v7359
      %v7426 = vunpack.c.l.b16 %v7362
      %v7427 = vunpack.c.l.b16 %v7366
      %v7428 = vunpack.c.l.b16 %v7369
      %v7429 = vunpack.c.l.b16 %v7373
      %v7430 = vunpack.c.l.b16 %v7376
      %v7431 = vunpack.c.l.b16 %v7380
      %v7432 = vunpack.c.l.b16 %v7383
      %v7433 = vpack.c.b16 %v7402, %v7401
      %v7434 = vpack.c.b16 %v7404, %v7403
      %v7435 = vpack.c.b16 %v7406, %v7405
      %v7436 = vpack.c.b16 %v7408, %v7407
      %v7437 = vpack.c.b16 %v7410, %v7409
      %v7438 = vpack.c.b16 %v7412, %v7411
      %v7439 = vpack.c.b16 %v7414, %v7413
      %v7440 = vpack.c.b16 %v7416, %v7415
      %v7441 = vpack.c.b16 %v7418, %v7417
      %v7442 = vpack.c.b16 %v7420, %v7419
      %v7443 = vpack.c.b16 %v7422, %v7421
      %v7444 = vpack.c.b16 %v7424, %v7423
      %v7445 = vpack.c.b16 %v7426, %v7425
      %v7446 = vpack.c.b16 %v7428, %v7427
      %v7447 = vpack.c.b16 %v7430, %v7429
      %v7448 = vpack.c.b16 %v7432, %v7431
      %v7481 = vunpack.c.l.b16 %v7385
      %v7482 = vunpack.c.l.b16 %v7386
      %v7483 = vunpack.c.l.b16 %v7387
      %v7484 = vunpack.c.l.b16 %v7388
      %v7485 = vunpack.c.l.b16 %v7389
      %v7486 = vunpack.c.l.b16 %v7390
      %v7487 = vunpack.c.l.b16 %v7391
      %v7488 = vunpack.c.l.b16 %v7392
      %v7489 = vunpack.c.l.b16 %v7393
      %v7490 = vunpack.c.l.b16 %v7394
      %v7491 = vunpack.c.l.b16 %v7395
      %v7492 = vunpack.c.l.b16 %v7396
      %v7493 = vunpack.c.l.b16 %v7397
      %v7494 = vunpack.c.l.b16 %v7398
      %v7495 = vunpack.c.l.b16 %v7399
      %v7496 = vunpack.c.l.b16 %v7400
      %v7497 = vpack.c.b16 %v7482, %v7481
      %v7498 = vpack.c.b16 %v7484, %v7483
      %v7499 = vpack.c.b16 %v7486, %v7485
      %v7500 = vpack.c.b16 %v7488, %v7487
      %v7501 = vpack.c.b16 %v7490, %v7489
      %v7502 = vpack.c.b16 %v7492, %v7491
      %v7503 = vpack.c.b16 %v7494, %v7493
      %v7504 = vpack.c.b16 %v7496, %v7495
      %7513 = vmatpush.bf16.msra.mxu0 %v7504
      %7514 = vmatpush.bf16.msra.mxu0 %v7503
      %7515 = vmatpush.bf16.msra.mxu0 %v7502
      %7516 = vmatpush.bf16.msra.mxu0 %v7501
      %7517 = vmatpush.bf16.msra.mxu0 %v7500
      %7518 = vmatpush.bf16.msra.mxu0 %v7499
      %7519 = vmatpush.bf16.msra.mxu0 %v7498
      %7520 = vmatpush.bf16.msra.mxu0 %v7497
      %7521 = vmatmul.bf16.gmra.mxu0 %v7433
      %v7522 = vpop.f32.mrf.mxu0
      %v7523 = vadd.f32 0.0, %v7522
      %v7524 = vpop.f32.mrf.mxu0
      %v7525 = vadd.f32 0.0, %v7524
      %7526 = vmatmul.bf16.gmra.mxu0 %v7434
      %v7527 = vpop.f32.mrf.mxu0
      %v7528 = vadd.f32 0.0, %v7527
      %v7529 = vpop.f32.mrf.mxu0
      %v7530 = vadd.f32 0.0, %v7529
      %7531 = vmatmul.bf16.gmra.mxu0 %v7435
      %v7532 = vpop.f32.mrf.mxu0
      %v7533 = vadd.f32 0.0, %v7532
      %v7534 = vpop.f32.mrf.mxu0
      %v7535 = vadd.f32 0.0, %v7534
      %7536 = vmatmul.bf16.gmra.mxu0 %v7436
      %v7537 = vpop.f32.mrf.mxu0
      %v7538 = vadd.f32 0.0, %v7537
      %v7539 = vpop.f32.mrf.mxu0
      %v7540 = vadd.f32 0.0, %v7539
      %7541 = vmatmul.bf16.gmra.mxu0 %v7437
      %v7542 = vpop.f32.mrf.mxu0
      %v7543 = vadd.f32 0.0, %v7542
      %v7544 = vpop.f32.mrf.mxu0
      %v7545 = vadd.f32 0.0, %v7544
      %7546 = vmatmul.bf16.gmra.mxu0 %v7438
      %v7547 = vpop.f32.mrf.mxu0
      %v7548 = vadd.f32 0.0, %v7547
      %v7549 = vpop.f32.mrf.mxu0
      %v7550 = vadd.f32 0.0, %v7549
      %7551 = vmatmul.bf16.gmra.mxu0 %v7439
      %v7552 = vpop.f32.mrf.mxu0
      %v7553 = vadd.f32 0.0, %v7552
      %v7554 = vpop.f32.mrf.mxu0
      %v7555 = vadd.f32 0.0, %v7554
      %7556 = vmatmul.bf16.gmra.mxu0 %v7440
      %v7557 = vpop.f32.mrf.mxu0
      %v7558 = vadd.f32 0.0, %v7557
      %v7559 = vpop.f32.mrf.mxu0
      %v7560 = vadd.f32 0.0, %v7559
      %7561 = vmatmul.bf16.gmra.mxu0 %v7441
      %v7562 = vpop.f32.mrf.mxu0
      %v7563 = vadd.f32 0.0, %v7562
      %v7564 = vpop.f32.mrf.mxu0
      %v7565 = vadd.f32 0.0, %v7564
      %7566 = vmatmul.bf16.gmra.mxu0 %v7442
      %v7567 = vpop.f32.mrf.mxu0
      %v7568 = vadd.f32 0.0, %v7567
      %v7569 = vpop.f32.mrf.mxu0
      %v7570 = vadd.f32 0.0, %v7569
      %7571 = vmatmul.bf16.gmra.mxu0 %v7443
      %v7572 = vpop.f32.mrf.mxu0
      %v7573 = vadd.f32 0.0, %v7572
      %v7574 = vpop.f32.mrf.mxu0
      %v7575 = vadd.f32 0.0, %v7574
      %7576 = vmatmul.bf16.gmra.mxu0 %v7444
      %v7577 = vpop.f32.mrf.mxu0
      %v7578 = vadd.f32 0.0, %v7577
      %v7579 = vpop.f32.mrf.mxu0
      %v7580 = vadd.f32 0.0, %v7579
      %7581 = vmatmul.bf16.gmra.mxu0 %v7445
      %v7582 = vpop.f32.mrf.mxu0
      %v7583 = vadd.f32 0.0, %v7582
      %v7584 = vpop.f32.mrf.mxu0
      %v7585 = vadd.f32 0.0, %v7584
      %7586 = vmatmul.bf16.gmra.mxu0 %v7446
      %v7587 = vpop.f32.mrf.mxu0
      %v7588 = vadd.f32 0.0, %v7587
      %v7589 = vpop.f32.mrf.mxu0
      %v7590 = vadd.f32 0.0, %v7589
      %7591 = vmatmul.bf16.gmra.mxu0 %v7447
      %v7592 = vpop.f32.mrf.mxu0
      %v7593 = vadd.f32 0.0, %v7592
      %v7594 = vpop.f32.mrf.mxu0
      %v7595 = vadd.f32 0.0, %v7594
      %7596 = vmatmul.bf16.gmra.mxu0 %v7448
      %v7597 = vpop.f32.mrf.mxu0
      %v7598 = vadd.f32 0.0, %v7597
      %v7599 = vpop.f32.mrf.mxu0
      %v7600 = vadd.f32 0.0, %v7599
      %7601 = vdwg.mxu0
      %v7602 = vadd.f32 %v7177, %v7523
      %v7603 = vadd.f32 %v7179, %v7525
      %v7604 = vadd.f32 %v7182, %v7528
      %v7605 = vadd.f32 %v7184, %v7530
      %v7606 = vadd.f32 %v7187, %v7533
      %v7607 = vadd.f32 %v7189, %v7535
      %v7608 = vadd.f32 %v7192, %v7538
      %v7609 = vadd.f32 %v7194, %v7540
      %v7610 = vadd.f32 %v7197, %v7543
      %v7611 = vadd.f32 %v7199, %v7545
      %v7612 = vadd.f32 %v7202, %v7548
      %v7613 = vadd.f32 %v7204, %v7550
      %v7614 = vadd.f32 %v7207, %v7553
      %v7615 = vadd.f32 %v7209, %v7555
      %v7616 = vadd.f32 %v7212, %v7558
      %v7617 = vadd.f32 %v7214, %v7560
      %v7618 = vadd.f32 %v7217, %v7563
      %v7619 = vadd.f32 %v7219, %v7565
      %v7620 = vadd.f32 %v7222, %v7568
      %v7621 = vadd.f32 %v7224, %v7570
      %v7622 = vadd.f32 %v7227, %v7573
      %v7623 = vadd.f32 %v7229, %v7575
      %v7624 = vadd.f32 %v7232, %v7578
      %v7625 = vadd.f32 %v7234, %v7580
      %v7626 = vadd.f32 %v7237, %v7583
      %v7627 = vadd.f32 %v7239, %v7585
      %v7628 = vadd.f32 %v7242, %v7588
      %v7629 = vadd.f32 %v7244, %v7590
      %v7630 = vadd.f32 %v7247, %v7593
      %v7631 = vadd.f32 %v7249, %v7595
      %v7632 = vadd.f32 %v7252, %v7598
      %v7633 = vadd.f32 %v7254, %v7600
      %s7634 = scalar_lea.vmem %s3, 192
      %v7635 = vld [vmem:[%s7634] sm:$0xf]
      %v7636 = vld [vmem:[%s7634 + $0x4] sm:$0xf]
      %v7637 = vld [vmem:[%s7634 + $0x8] sm:$0xf]
      %v7638 = vld [vmem:[%s7634 + $0xc] sm:$0xf]
      %v7639 = vld [vmem:[%s7634 + $0x10] sm:$0xf]
      %v7640 = vld [vmem:[%s7634 + $0x14] sm:$0xf]
      %v7641 = vld [vmem:[%s7634 + $0x18] sm:$0xf]
      %v7642 = vld [vmem:[%s7634 + $0x1c] sm:$0xf]
      %v7643 = vld [vmem:[%s7634 + $0x20] sm:$0xf]
      %v7644 = vld [vmem:[%s7634 + $0x24] sm:$0xf]
      %v7645 = vld [vmem:[%s7634 + $0x28] sm:$0xf]
      %v7646 = vld [vmem:[%s7634 + $0x2c] sm:$0xf]
      %v7647 = vld [vmem:[%s7634 + $0x30] sm:$0xf]
      %v7648 = vld [vmem:[%s7634 + $0x34] sm:$0xf]
      %v7649 = vld [vmem:[%s7634 + $0x38] sm:$0xf]
      %v7650 = vld [vmem:[%s7634 + $0x3c] sm:$0xf]
      %v7653 = vunpack.c.l.b16 %v6399
      %v7654 = vunpack.c.l.b16 %v6400
      %v7655 = vpack.c.b16 %v7654, %v7653
      %v7673 = vunpack.c.l.b16 %v7635
      %v7674 = vunpack.c.l.b16 %v7636
      %v7675 = vunpack.c.l.b16 %v7637
      %v7676 = vunpack.c.l.b16 %v7638
      %v7677 = vunpack.c.l.b16 %v7639
      %v7678 = vunpack.c.l.b16 %v7640
      %v7679 = vunpack.c.l.b16 %v7641
      %v7680 = vunpack.c.l.b16 %v7642
      %v7681 = vunpack.c.l.b16 %v7643
      %v7682 = vunpack.c.l.b16 %v7644
      %v7683 = vunpack.c.l.b16 %v7645
      %v7684 = vunpack.c.l.b16 %v7646
      %v7685 = vunpack.c.l.b16 %v7647
      %v7686 = vunpack.c.l.b16 %v7648
      %v7687 = vunpack.c.l.b16 %v7649
      %v7688 = vunpack.c.l.b16 %v7650
      %v7689 = vpack.c.b16 %v7674, %v7673
      %v7690 = vpack.c.b16 %v7676, %v7675
      %v7691 = vpack.c.b16 %v7678, %v7677
      %v7692 = vpack.c.b16 %v7680, %v7679
      %v7693 = vpack.c.b16 %v7682, %v7681
      %v7694 = vpack.c.b16 %v7684, %v7683
      %v7695 = vpack.c.b16 %v7686, %v7685
      %v7696 = vpack.c.b16 %v7688, %v7687
      %7705 = vmatpush.bf16.msra.mxu0 %v7696
      %7706 = vmatpush.bf16.msra.mxu0 %v7695
      %7707 = vmatpush.bf16.msra.mxu0 %v7694
      %7708 = vmatpush.bf16.msra.mxu0 %v7693
      %7709 = vmatpush.bf16.msra.mxu0 %v7692
      %7710 = vmatpush.bf16.msra.mxu0 %v7691
      %7711 = vmatpush.bf16.msra.mxu0 %v7690
      %7712 = vmatpush.bf16.msra.mxu0 %v7689
      %7713 = vmatmul.bf16.gmra.mxu0 %v7088
      %v7714 = vpop.f32.mrf.mxu0
      %v7715 = vadd.f32 0.0, %v7714
      %v7716 = vpop.f32.mrf.mxu0
      %v7717 = vadd.f32 0.0, %v7716
      %7718 = vmatmul.bf16.gmra.mxu0 %v7089
      %v7719 = vpop.f32.mrf.mxu0
      %v7720 = vadd.f32 0.0, %v7719
      %v7721 = vpop.f32.mrf.mxu0
      %v7722 = vadd.f32 0.0, %v7721
      %7723 = vmatmul.bf16.gmra.mxu0 %v7090
      %v7724 = vpop.f32.mrf.mxu0
      %v7725 = vadd.f32 0.0, %v7724
      %v7726 = vpop.f32.mrf.mxu0
      %v7727 = vadd.f32 0.0, %v7726
      %7728 = vmatmul.bf16.gmra.mxu0 %v7091
      %v7729 = vpop.f32.mrf.mxu0
      %v7730 = vadd.f32 0.0, %v7729
      %v7731 = vpop.f32.mrf.mxu0
      %v7732 = vadd.f32 0.0, %v7731
      %7733 = vmatmul.bf16.gmra.mxu0 %v7092
      %v7734 = vpop.f32.mrf.mxu0
      %v7735 = vadd.f32 0.0, %v7734
      %v7736 = vpop.f32.mrf.mxu0
      %v7737 = vadd.f32 0.0, %v7736
      %7738 = vmatmul.bf16.gmra.mxu0 %v7093
      %v7739 = vpop.f32.mrf.mxu0
      %v7740 = vadd.f32 0.0, %v7739
      %v7741 = vpop.f32.mrf.mxu0
      %v7742 = vadd.f32 0.0, %v7741
      %7743 = vmatmul.bf16.gmra.mxu0 %v7094
      %v7744 = vpop.f32.mrf.mxu0
      %v7745 = vadd.f32 0.0, %v7744
      %v7746 = vpop.f32.mrf.mxu0
      %v7747 = vadd.f32 0.0, %v7746
      %7748 = vmatmul.bf16.gmra.mxu0 %v7095
      %v7749 = vpop.f32.mrf.mxu0
      %v7750 = vadd.f32 0.0, %v7749
      %v7751 = vpop.f32.mrf.mxu0
      %v7752 = vadd.f32 0.0, %v7751
      %7753 = vmatmul.bf16.gmra.mxu0 %v7096
      %v7754 = vpop.f32.mrf.mxu0
      %v7755 = vadd.f32 0.0, %v7754
      %v7756 = vpop.f32.mrf.mxu0
      %v7757 = vadd.f32 0.0, %v7756
      %7758 = vmatmul.bf16.gmra.mxu0 %v7097
      %v7759 = vpop.f32.mrf.mxu0
      %v7760 = vadd.f32 0.0, %v7759
      %v7761 = vpop.f32.mrf.mxu0
      %v7762 = vadd.f32 0.0, %v7761
      %7763 = vmatmul.bf16.gmra.mxu0 %v7098
      %v7764 = vpop.f32.mrf.mxu0
      %v7765 = vadd.f32 0.0, %v7764
      %v7766 = vpop.f32.mrf.mxu0
      %v7767 = vadd.f32 0.0, %v7766
      %7768 = vmatmul.bf16.gmra.mxu0 %v7099
      %v7769 = vpop.f32.mrf.mxu0
      %v7770 = vadd.f32 0.0, %v7769
      %v7771 = vpop.f32.mrf.mxu0
      %v7772 = vadd.f32 0.0, %v7771
      %7773 = vmatmul.bf16.gmra.mxu0 %v7100
      %v7774 = vpop.f32.mrf.mxu0
      %v7775 = vadd.f32 0.0, %v7774
      %v7776 = vpop.f32.mrf.mxu0
      %v7777 = vadd.f32 0.0, %v7776
      %7778 = vmatmul.bf16.gmra.mxu0 %v7101
      %v7779 = vpop.f32.mrf.mxu0
      %v7780 = vadd.f32 0.0, %v7779
      %v7781 = vpop.f32.mrf.mxu0
      %v7782 = vadd.f32 0.0, %v7781
      %7783 = vmatmul.bf16.gmra.mxu0 %v7102
      %v7784 = vpop.f32.mrf.mxu0
      %v7785 = vadd.f32 0.0, %v7784
      %v7786 = vpop.f32.mrf.mxu0
      %v7787 = vadd.f32 0.0, %v7786
      %7788 = vmatmul.bf16.gmra.mxu0 %v7655
      %v7789 = vpop.f32.mrf.mxu0
      %v7790 = vadd.f32 0.0, %v7789
      %v7791 = vpop.f32.mrf.mxu0
      %v7792 = vadd.f32 0.0, %v7791
      %7793 = vdwg.mxu0
      %v7794 = vadd.f32 %v7602, %v7715
      %v7795 = vadd.f32 %v7603, %v7717
      %v7796 = vadd.f32 %v7604, %v7720
      %v7797 = vadd.f32 %v7605, %v7722
      %v7798 = vadd.f32 %v7606, %v7725
      %v7799 = vadd.f32 %v7607, %v7727
      %v7800 = vadd.f32 %v7608, %v7730
      %v7801 = vadd.f32 %v7609, %v7732
      %v7802 = vadd.f32 %v7610, %v7735
      %v7803 = vadd.f32 %v7611, %v7737
      %v7804 = vadd.f32 %v7612, %v7740
      %v7805 = vadd.f32 %v7613, %v7742
      %v7806 = vadd.f32 %v7614, %v7745
      %v7807 = vadd.f32 %v7615, %v7747
      %v7808 = vadd.f32 %v7616, %v7750
      %v7809 = vadd.f32 %v7617, %v7752
      %v7810 = vadd.f32 %v7618, %v7755
      %v7811 = vadd.f32 %v7619, %v7757
      %v7812 = vadd.f32 %v7620, %v7760
      %v7813 = vadd.f32 %v7621, %v7762
      %v7814 = vadd.f32 %v7622, %v7765
      %v7815 = vadd.f32 %v7623, %v7767
      %v7816 = vadd.f32 %v7624, %v7770
      %v7817 = vadd.f32 %v7625, %v7772
      %v7818 = vadd.f32 %v7626, %v7775
      %v7819 = vadd.f32 %v7627, %v7777
      %v7820 = vadd.f32 %v7628, %v7780
      %v7821 = vadd.f32 %v7629, %v7782
      %v7822 = vadd.f32 %v7630, %v7785
      %v7823 = vadd.f32 %v7631, %v7787
      %v7824 = vadd.f32 %v7632, %v7790
      %v7825 = vadd.f32 %v7633, %v7792
      %v7827 = vshrl.u32 %v6399, 16
      %v7829 = vrot.slane %v7827, 4
      %v7830 = vshll.u32 %v6399, 16
      %v7832 = vrot.slane %v7830, 5
      %v7833 = vor.u32 %v7829, %v7832
      %v7834 = vrot.slane %v7833, 4
      %v7836 = vshll.u32 %v6400, 16
      %v7838 = vrot.slane %v7836, 5
      %v7839 = vsel %vm433, %v7834, %v7838
      %v7840 = vshrl.u32 %v6400, 16
      %v7842 = vrot.slane %v7840, 4
      %v7843 = vor.u32 %v7842, %v7838
      %v7844 = vrot.slane %v7843, 4
      %v7846 = vshll.u32 %v6401, 16
      %v7848 = vrot.slane %v7846, 5
      %v7849 = vsel %vm433, %v7844, %v7848
      %s7850 = scalar_lea.vmem %s3, 256
      %v7851 = vld [vmem:[%s7850] sm:$0xf]
      %v7852 = vld [vmem:[%s7850 + $0x4] sm:$0xf]
      %v7853 = vld [vmem:[%s7850 + $0x8] sm:$0xf]
      %v7854 = vld [vmem:[%s7850 + $0xc] sm:$0xf]
      %v7855 = vld [vmem:[%s7850 + $0x10] sm:$0xf]
      %v7856 = vld [vmem:[%s7850 + $0x14] sm:$0xf]
      %v7857 = vld [vmem:[%s7850 + $0x18] sm:$0xf]
      %v7858 = vld [vmem:[%s7850 + $0x1c] sm:$0xf]
      %v7859 = vld [vmem:[%s7850 + $0x20] sm:$0xf]
      %v7860 = vld [vmem:[%s7850 + $0x24] sm:$0xf]
      %v7861 = vld [vmem:[%s7850 + $0x28] sm:$0xf]
      %v7862 = vld [vmem:[%s7850 + $0x2c] sm:$0xf]
      %v7863 = vld [vmem:[%s7850 + $0x30] sm:$0xf]
      %v7864 = vld [vmem:[%s7850 + $0x34] sm:$0xf]
      %v7865 = vld [vmem:[%s7850 + $0x38] sm:$0xf]
      %v7866 = vld [vmem:[%s7850 + $0x3c] sm:$0xf]
      %v7867 = vunpack.c.l.b16 %v7839
      %v7868 = vunpack.c.l.b16 %v7849
      %v7869 = vpack.c.b16 %v7868, %v7867
      %v7887 = vunpack.c.l.b16 %v7851
      %v7888 = vunpack.c.l.b16 %v7852
      %v7889 = vunpack.c.l.b16 %v7853
      %v7890 = vunpack.c.l.b16 %v7854
      %v7891 = vunpack.c.l.b16 %v7855
      %v7892 = vunpack.c.l.b16 %v7856
      %v7893 = vunpack.c.l.b16 %v7857
      %v7894 = vunpack.c.l.b16 %v7858
      %v7895 = vunpack.c.l.b16 %v7859
      %v7896 = vunpack.c.l.b16 %v7860
      %v7897 = vunpack.c.l.b16 %v7861
      %v7898 = vunpack.c.l.b16 %v7862
      %v7899 = vunpack.c.l.b16 %v7863
      %v7900 = vunpack.c.l.b16 %v7864
      %v7901 = vunpack.c.l.b16 %v7865
      %v7902 = vunpack.c.l.b16 %v7866
      %v7903 = vpack.c.b16 %v7888, %v7887
      %v7904 = vpack.c.b16 %v7890, %v7889
      %v7905 = vpack.c.b16 %v7892, %v7891
      %v7906 = vpack.c.b16 %v7894, %v7893
      %v7907 = vpack.c.b16 %v7896, %v7895
      %v7908 = vpack.c.b16 %v7898, %v7897
      %v7909 = vpack.c.b16 %v7900, %v7899
      %v7910 = vpack.c.b16 %v7902, %v7901
      %7919 = vmatpush.bf16.msra.mxu0 %v7910
      %7920 = vmatpush.bf16.msra.mxu0 %v7909
      %7921 = vmatpush.bf16.msra.mxu0 %v7908
      %7922 = vmatpush.bf16.msra.mxu0 %v7907
      %7923 = vmatpush.bf16.msra.mxu0 %v7906
      %7924 = vmatpush.bf16.msra.mxu0 %v7905
      %7925 = vmatpush.bf16.msra.mxu0 %v7904
      %7926 = vmatpush.bf16.msra.mxu0 %v7903
      %7927 = vmatmul.bf16.gmra.mxu0 %v6855
      %v7928 = vpop.f32.mrf.mxu0
      %v7929 = vadd.f32 0.0, %v7928
      %v7930 = vpop.f32.mrf.mxu0
      %v7931 = vadd.f32 0.0, %v7930
      %7932 = vmatmul.bf16.gmra.mxu0 %v6856
      %v7933 = vpop.f32.mrf.mxu0
      %v7934 = vadd.f32 0.0, %v7933
      %v7935 = vpop.f32.mrf.mxu0
      %v7936 = vadd.f32 0.0, %v7935
      %7937 = vmatmul.bf16.gmra.mxu0 %v6857
      %v7938 = vpop.f32.mrf.mxu0
      %v7939 = vadd.f32 0.0, %v7938
      %v7940 = vpop.f32.mrf.mxu0
      %v7941 = vadd.f32 0.0, %v7940
      %7942 = vmatmul.bf16.gmra.mxu0 %v6858
      %v7943 = vpop.f32.mrf.mxu0
      %v7944 = vadd.f32 0.0, %v7943
      %v7945 = vpop.f32.mrf.mxu0
      %v7946 = vadd.f32 0.0, %v7945
      %7947 = vmatmul.bf16.gmra.mxu0 %v6859
      %v7948 = vpop.f32.mrf.mxu0
      %v7949 = vadd.f32 0.0, %v7948
      %v7950 = vpop.f32.mrf.mxu0
      %v7951 = vadd.f32 0.0, %v7950
      %7952 = vmatmul.bf16.gmra.mxu0 %v6860
      %v7953 = vpop.f32.mrf.mxu0
      %v7954 = vadd.f32 0.0, %v7953
      %v7955 = vpop.f32.mrf.mxu0
      %v7956 = vadd.f32 0.0, %v7955
      %7957 = vmatmul.bf16.gmra.mxu0 %v6861
      %v7958 = vpop.f32.mrf.mxu0
      %v7959 = vadd.f32 0.0, %v7958
      %v7960 = vpop.f32.mrf.mxu0
      %v7961 = vadd.f32 0.0, %v7960
      %7962 = vmatmul.bf16.gmra.mxu0 %v6862
      %v7963 = vpop.f32.mrf.mxu0
      %v7964 = vadd.f32 0.0, %v7963
      %v7965 = vpop.f32.mrf.mxu0
      %v7966 = vadd.f32 0.0, %v7965
      %7967 = vmatmul.bf16.gmra.mxu0 %v6863
      %v7968 = vpop.f32.mrf.mxu0
      %v7969 = vadd.f32 0.0, %v7968
      %v7970 = vpop.f32.mrf.mxu0
      %v7971 = vadd.f32 0.0, %v7970
      %7972 = vmatmul.bf16.gmra.mxu0 %v6864
      %v7973 = vpop.f32.mrf.mxu0
      %v7974 = vadd.f32 0.0, %v7973
      %v7975 = vpop.f32.mrf.mxu0
      %v7976 = vadd.f32 0.0, %v7975
      %7977 = vmatmul.bf16.gmra.mxu0 %v6865
      %v7978 = vpop.f32.mrf.mxu0
      %v7979 = vadd.f32 0.0, %v7978
      %v7980 = vpop.f32.mrf.mxu0
      %v7981 = vadd.f32 0.0, %v7980
      %7982 = vmatmul.bf16.gmra.mxu0 %v6866
      %v7983 = vpop.f32.mrf.mxu0
      %v7984 = vadd.f32 0.0, %v7983
      %v7985 = vpop.f32.mrf.mxu0
      %v7986 = vadd.f32 0.0, %v7985
      %7987 = vmatmul.bf16.gmra.mxu0 %v6867
      %v7988 = vpop.f32.mrf.mxu0
      %v7989 = vadd.f32 0.0, %v7988
      %v7990 = vpop.f32.mrf.mxu0
      %v7991 = vadd.f32 0.0, %v7990
      %7992 = vmatmul.bf16.gmra.mxu0 %v6868
      %v7993 = vpop.f32.mrf.mxu0
      %v7994 = vadd.f32 0.0, %v7993
      %v7995 = vpop.f32.mrf.mxu0
      %v7996 = vadd.f32 0.0, %v7995
      %7997 = vmatmul.bf16.gmra.mxu0 %v6869
      %v7998 = vpop.f32.mrf.mxu0
      %v7999 = vadd.f32 0.0, %v7998
      %v8000 = vpop.f32.mrf.mxu0
      %v8001 = vadd.f32 0.0, %v8000
      %8002 = vmatmul.bf16.gmra.mxu0 %v7869
      %v8003 = vpop.f32.mrf.mxu0
      %v8004 = vadd.f32 0.0, %v8003
      %v8005 = vpop.f32.mrf.mxu0
      %v8006 = vadd.f32 0.0, %v8005
      %8007 = vdwg.mxu0
      %v8008 = vadd.f32 %v7794, %v7929
      %v8009 = vadd.f32 %v7795, %v7931
      %v8010 = vadd.f32 %v7796, %v7934
      %v8011 = vadd.f32 %v7797, %v7936
      %v8012 = vadd.f32 %v7798, %v7939
      %v8013 = vadd.f32 %v7799, %v7941
      %v8014 = vadd.f32 %v7800, %v7944
      %v8015 = vadd.f32 %v7801, %v7946
      %v8016 = vadd.f32 %v7802, %v7949
      %v8017 = vadd.f32 %v7803, %v7951
      %v8018 = vadd.f32 %v7804, %v7954
      %v8019 = vadd.f32 %v7805, %v7956
      %v8020 = vadd.f32 %v7806, %v7959
      %v8021 = vadd.f32 %v7807, %v7961
      %v8022 = vadd.f32 %v7808, %v7964
      %v8023 = vadd.f32 %v7809, %v7966
      %v8024 = vadd.f32 %v7810, %v7969
      %v8025 = vadd.f32 %v7811, %v7971
      %v8026 = vadd.f32 %v7812, %v7974
      %v8027 = vadd.f32 %v7813, %v7976
      %v8028 = vadd.f32 %v7814, %v7979
      %v8029 = vadd.f32 %v7815, %v7981
      %v8030 = vadd.f32 %v7816, %v7984
      %v8031 = vadd.f32 %v7817, %v7986
      %v8032 = vadd.f32 %v7818, %v7989
      %v8033 = vadd.f32 %v7819, %v7991
      %v8034 = vadd.f32 %v7820, %v7994
      %v8035 = vadd.f32 %v7821, %v7996
      %v8036 = vadd.f32 %v7822, %v7999
      %v8037 = vadd.f32 %v7823, %v8001
      %v8038 = vadd.f32 %v7824, %v8004
      %v8039 = vadd.f32 %v7825, %v8006
      %v8041 = vrot.slane %v6399, 5
      %v8042 = vrot.slane %v8041, 4
      %v8043 = vrot.slane %v6400, 5
      %v8044 = vsel %vm1287, %v8042, %v8043
      %v8045 = vrot.slane %v8043, 4
      %v8046 = vrot.slane %v6401, 5
      %v8047 = vsel %vm1287, %v8045, %v8046
      %s8048 = scalar_lea.vmem %s3, 320
      %v8049 = vld [vmem:[%s8048] sm:$0xf]
      %v8050 = vld [vmem:[%s8048 + $0x4] sm:$0xf]
      %v8051 = vld [vmem:[%s8048 + $0x8] sm:$0xf]
      %v8052 = vld [vmem:[%s8048 + $0xc] sm:$0xf]
      %v8053 = vld [vmem:[%s8048 + $0x10] sm:$0xf]
      %v8054 = vld [vmem:[%s8048 + $0x14] sm:$0xf]
      %v8055 = vld [vmem:[%s8048 + $0x18] sm:$0xf]
      %v8056 = vld [vmem:[%s8048 + $0x1c] sm:$0xf]
      %v8057 = vld [vmem:[%s8048 + $0x20] sm:$0xf]
      %v8058 = vld [vmem:[%s8048 + $0x24] sm:$0xf]
      %v8059 = vld [vmem:[%s8048 + $0x28] sm:$0xf]
      %v8060 = vld [vmem:[%s8048 + $0x2c] sm:$0xf]
      %v8061 = vld [vmem:[%s8048 + $0x30] sm:$0xf]
      %v8062 = vld [vmem:[%s8048 + $0x34] sm:$0xf]
      %v8063 = vld [vmem:[%s8048 + $0x38] sm:$0xf]
      %v8064 = vld [vmem:[%s8048 + $0x3c] sm:$0xf]
      %v8065 = vunpack.c.l.b16 %v8044
      %v8066 = vunpack.c.l.b16 %v8047
      %v8067 = vpack.c.b16 %v8066, %v8065
      %v8085 = vunpack.c.l.b16 %v8049
      %v8086 = vunpack.c.l.b16 %v8050
      %v8087 = vunpack.c.l.b16 %v8051
      %v8088 = vunpack.c.l.b16 %v8052
      %v8089 = vunpack.c.l.b16 %v8053
      %v8090 = vunpack.c.l.b16 %v8054
      %v8091 = vunpack.c.l.b16 %v8055
      %v8092 = vunpack.c.l.b16 %v8056
      %v8093 = vunpack.c.l.b16 %v8057
      %v8094 = vunpack.c.l.b16 %v8058
      %v8095 = vunpack.c.l.b16 %v8059
      %v8096 = vunpack.c.l.b16 %v8060
      %v8097 = vunpack.c.l.b16 %v8061
      %v8098 = vunpack.c.l.b16 %v8062
      %v8099 = vunpack.c.l.b16 %v8063
      %v8100 = vunpack.c.l.b16 %v8064
      %v8101 = vpack.c.b16 %v8086, %v8085
      %v8102 = vpack.c.b16 %v8088, %v8087
      %v8103 = vpack.c.b16 %v8090, %v8089
      %v8104 = vpack.c.b16 %v8092, %v8091
      %v8105 = vpack.c.b16 %v8094, %v8093
      %v8106 = vpack.c.b16 %v8096, %v8095
      %v8107 = vpack.c.b16 %v8098, %v8097
      %v8108 = vpack.c.b16 %v8100, %v8099
      %8117 = vmatpush.bf16.msra.mxu0 %v8108
      %8118 = vmatpush.bf16.msra.mxu0 %v8107
      %8119 = vmatpush.bf16.msra.mxu0 %v8106
      %8120 = vmatpush.bf16.msra.mxu0 %v8105
      %8121 = vmatpush.bf16.msra.mxu0 %v8104
      %8122 = vmatpush.bf16.msra.mxu0 %v8103
      %8123 = vmatpush.bf16.msra.mxu0 %v8102
      %8124 = vmatpush.bf16.msra.mxu0 %v8101
      %8125 = vmatmul.bf16.gmra.mxu0 %v7434
      %v8126 = vpop.f32.mrf.mxu0
      %v8127 = vadd.f32 0.0, %v8126
      %v8128 = vpop.f32.mrf.mxu0
      %v8129 = vadd.f32 0.0, %v8128
      %8130 = vmatmul.bf16.gmra.mxu0 %v7435
      %v8131 = vpop.f32.mrf.mxu0
      %v8132 = vadd.f32 0.0, %v8131
      %v8133 = vpop.f32.mrf.mxu0
      %v8134 = vadd.f32 0.0, %v8133
      %8135 = vmatmul.bf16.gmra.mxu0 %v7436
      %v8136 = vpop.f32.mrf.mxu0
      %v8137 = vadd.f32 0.0, %v8136
      %v8138 = vpop.f32.mrf.mxu0
      %v8139 = vadd.f32 0.0, %v8138
      %8140 = vmatmul.bf16.gmra.mxu0 %v7437
      %v8141 = vpop.f32.mrf.mxu0
      %v8142 = vadd.f32 0.0, %v8141
      %v8143 = vpop.f32.mrf.mxu0
      %v8144 = vadd.f32 0.0, %v8143
      %8145 = vmatmul.bf16.gmra.mxu0 %v7438
      %v8146 = vpop.f32.mrf.mxu0
      %v8147 = vadd.f32 0.0, %v8146
      %v8148 = vpop.f32.mrf.mxu0
      %v8149 = vadd.f32 0.0, %v8148
      %8150 = vmatmul.bf16.gmra.mxu0 %v7439
      %v8151 = vpop.f32.mrf.mxu0
      %v8152 = vadd.f32 0.0, %v8151
      %v8153 = vpop.f32.mrf.mxu0
      %v8154 = vadd.f32 0.0, %v8153
      %8155 = vmatmul.bf16.gmra.mxu0 %v7440
      %v8156 = vpop.f32.mrf.mxu0
      %v8157 = vadd.f32 0.0, %v8156
      %v8158 = vpop.f32.mrf.mxu0
      %v8159 = vadd.f32 0.0, %v8158
      %8160 = vmatmul.bf16.gmra.mxu0 %v7441
      %v8161 = vpop.f32.mrf.mxu0
      %v8162 = vadd.f32 0.0, %v8161
      %v8163 = vpop.f32.mrf.mxu0
      %v8164 = vadd.f32 0.0, %v8163
      %8165 = vmatmul.bf16.gmra.mxu0 %v7442
      %v8166 = vpop.f32.mrf.mxu0
      %v8167 = vadd.f32 0.0, %v8166
      %v8168 = vpop.f32.mrf.mxu0
      %v8169 = vadd.f32 0.0, %v8168
      %8170 = vmatmul.bf16.gmra.mxu0 %v7443
      %v8171 = vpop.f32.mrf.mxu0
      %v8172 = vadd.f32 0.0, %v8171
      %v8173 = vpop.f32.mrf.mxu0
      %v8174 = vadd.f32 0.0, %v8173
      %8175 = vmatmul.bf16.gmra.mxu0 %v7444
      %v8176 = vpop.f32.mrf.mxu0
      %v8177 = vadd.f32 0.0, %v8176
      %v8178 = vpop.f32.mrf.mxu0
      %v8179 = vadd.f32 0.0, %v8178
      %8180 = vmatmul.bf16.gmra.mxu0 %v7445
      %v8181 = vpop.f32.mrf.mxu0
      %v8182 = vadd.f32 0.0, %v8181
      %v8183 = vpop.f32.mrf.mxu0
      %v8184 = vadd.f32 0.0, %v8183
      %8185 = vmatmul.bf16.gmra.mxu0 %v7446
      %v8186 = vpop.f32.mrf.mxu0
      %v8187 = vadd.f32 0.0, %v8186
      %v8188 = vpop.f32.mrf.mxu0
      %v8189 = vadd.f32 0.0, %v8188
      %8190 = vmatmul.bf16.gmra.mxu0 %v7447
      %v8191 = vpop.f32.mrf.mxu0
      %v8192 = vadd.f32 0.0, %v8191
      %v8193 = vpop.f32.mrf.mxu0
      %v8194 = vadd.f32 0.0, %v8193
      %8195 = vmatmul.bf16.gmra.mxu0 %v7448
      %v8196 = vpop.f32.mrf.mxu0
      %v8197 = vadd.f32 0.0, %v8196
      %v8198 = vpop.f32.mrf.mxu0
      %v8199 = vadd.f32 0.0, %v8198
      %8200 = vmatmul.bf16.gmra.mxu0 %v8067
      %v8201 = vpop.f32.mrf.mxu0
      %v8202 = vadd.f32 0.0, %v8201
      %v8203 = vpop.f32.mrf.mxu0
      %v8204 = vadd.f32 0.0, %v8203
      %8205 = vdwg.mxu0
      %v8206 = vadd.f32 %v8008, %v8127
      %v8207 = vadd.f32 %v8009, %v8129
      %v8208 = vadd.f32 %v8010, %v8132
      %v8209 = vadd.f32 %v8011, %v8134
      %v8210 = vadd.f32 %v8012, %v8137
      %v8211 = vadd.f32 %v8013, %v8139
      %v8212 = vadd.f32 %v8014, %v8142
      %v8213 = vadd.f32 %v8015, %v8144
      %v8214 = vadd.f32 %v8016, %v8147
      %v8215 = vadd.f32 %v8017, %v8149
      %v8216 = vadd.f32 %v8018, %v8152
      %v8217 = vadd.f32 %v8019, %v8154
      %v8218 = vadd.f32 %v8020, %v8157
      %v8219 = vadd.f32 %v8021, %v8159
      %v8220 = vadd.f32 %v8022, %v8162
      %v8221 = vadd.f32 %v8023, %v8164
      %v8222 = vadd.f32 %v8024, %v8167
      %v8223 = vadd.f32 %v8025, %v8169
      %v8224 = vadd.f32 %v8026, %v8172
      %v8225 = vadd.f32 %v8027, %v8174
      %v8226 = vadd.f32 %v8028, %v8177
      %v8227 = vadd.f32 %v8029, %v8179
      %v8228 = vadd.f32 %v8030, %v8182
      %v8229 = vadd.f32 %v8031, %v8184
      %v8230 = vadd.f32 %v8032, %v8187
      %v8231 = vadd.f32 %v8033, %v8189
      %v8232 = vadd.f32 %v8034, %v8192
      %v8233 = vadd.f32 %v8035, %v8194
      %v8234 = vadd.f32 %v8036, %v8197
      %v8235 = vadd.f32 %v8037, %v8199
      %v8236 = vadd.f32 %v8038, %v8202
      %v8237 = vadd.f32 %v8039, %v8204
      %s8238 = scalar_lea.vmem %s3, 384
      %v8239 = vld [vmem:[%s8238] sm:$0xf]
      %v8240 = vld [vmem:[%s8238 + $0x4] sm:$0xf]
      %v8241 = vld [vmem:[%s8238 + $0x8] sm:$0xf]
      %v8242 = vld [vmem:[%s8238 + $0xc] sm:$0xf]
      %v8243 = vld [vmem:[%s8238 + $0x10] sm:$0xf]
      %v8244 = vld [vmem:[%s8238 + $0x14] sm:$0xf]
      %v8245 = vld [vmem:[%s8238 + $0x18] sm:$0xf]
      %v8246 = vld [vmem:[%s8238 + $0x1c] sm:$0xf]
      %v8247 = vld [vmem:[%s8238 + $0x20] sm:$0xf]
      %v8248 = vld [vmem:[%s8238 + $0x24] sm:$0xf]
      %v8249 = vld [vmem:[%s8238 + $0x28] sm:$0xf]
      %v8250 = vld [vmem:[%s8238 + $0x2c] sm:$0xf]
      %v8251 = vld [vmem:[%s8238 + $0x30] sm:$0xf]
      %v8252 = vld [vmem:[%s8238 + $0x34] sm:$0xf]
      %v8253 = vld [vmem:[%s8238 + $0x38] sm:$0xf]
      %v8254 = vld [vmem:[%s8238 + $0x3c] sm:$0xf]
      %v8257 = vunpack.c.l.b16 %v6402
      %v8258 = vunpack.c.l.b16 %v6403
      %v8259 = vpack.c.b16 %v8258, %v8257
      %v8277 = vunpack.c.l.b16 %v8239
      %v8278 = vunpack.c.l.b16 %v8240
      %v8279 = vunpack.c.l.b16 %v8241
      %v8280 = vunpack.c.l.b16 %v8242
      %v8281 = vunpack.c.l.b16 %v8243
      %v8282 = vunpack.c.l.b16 %v8244
      %v8283 = vunpack.c.l.b16 %v8245
      %v8284 = vunpack.c.l.b16 %v8246
      %v8285 = vunpack.c.l.b16 %v8247
      %v8286 = vunpack.c.l.b16 %v8248
      %v8287 = vunpack.c.l.b16 %v8249
      %v8288 = vunpack.c.l.b16 %v8250
      %v8289 = vunpack.c.l.b16 %v8251
      %v8290 = vunpack.c.l.b16 %v8252
      %v8291 = vunpack.c.l.b16 %v8253
      %v8292 = vunpack.c.l.b16 %v8254
      %v8293 = vpack.c.b16 %v8278, %v8277
      %v8294 = vpack.c.b16 %v8280, %v8279
      %v8295 = vpack.c.b16 %v8282, %v8281
      %v8296 = vpack.c.b16 %v8284, %v8283
      %v8297 = vpack.c.b16 %v8286, %v8285
      %v8298 = vpack.c.b16 %v8288, %v8287
      %v8299 = vpack.c.b16 %v8290, %v8289
      %v8300 = vpack.c.b16 %v8292, %v8291
      %8309 = vmatpush.bf16.msra.mxu0 %v8300
      %8310 = vmatpush.bf16.msra.mxu0 %v8299
      %8311 = vmatpush.bf16.msra.mxu0 %v8298
      %8312 = vmatpush.bf16.msra.mxu0 %v8297
      %8313 = vmatpush.bf16.msra.mxu0 %v8296
      %8314 = vmatpush.bf16.msra.mxu0 %v8295
      %8315 = vmatpush.bf16.msra.mxu0 %v8294
      %8316 = vmatpush.bf16.msra.mxu0 %v8293
      %8317 = vmatmul.bf16.gmra.mxu0 %v7089
      %v8318 = vpop.f32.mrf.mxu0
      %v8319 = vadd.f32 0.0, %v8318
      %v8320 = vpop.f32.mrf.mxu0
      %v8321 = vadd.f32 0.0, %v8320
      %8322 = vmatmul.bf16.gmra.mxu0 %v7090
      %v8323 = vpop.f32.mrf.mxu0
      %v8324 = vadd.f32 0.0, %v8323
      %v8325 = vpop.f32.mrf.mxu0
      %v8326 = vadd.f32 0.0, %v8325
      %8327 = vmatmul.bf16.gmra.mxu0 %v7091
      %v8328 = vpop.f32.mrf.mxu0
      %v8329 = vadd.f32 0.0, %v8328
      %v8330 = vpop.f32.mrf.mxu0
      %v8331 = vadd.f32 0.0, %v8330
      %8332 = vmatmul.bf16.gmra.mxu0 %v7092
      %v8333 = vpop.f32.mrf.mxu0
      %v8334 = vadd.f32 0.0, %v8333
      %v8335 = vpop.f32.mrf.mxu0
      %v8336 = vadd.f32 0.0, %v8335
      %8337 = vmatmul.bf16.gmra.mxu0 %v7093
      %v8338 = vpop.f32.mrf.mxu0
      %v8339 = vadd.f32 0.0, %v8338
      %v8340 = vpop.f32.mrf.mxu0
      %v8341 = vadd.f32 0.0, %v8340
      %8342 = vmatmul.bf16.gmra.mxu0 %v7094
      %v8343 = vpop.f32.mrf.mxu0
      %v8344 = vadd.f32 0.0, %v8343
      %v8345 = vpop.f32.mrf.mxu0
      %v8346 = vadd.f32 0.0, %v8345
      %8347 = vmatmul.bf16.gmra.mxu0 %v7095
      %v8348 = vpop.f32.mrf.mxu0
      %v8349 = vadd.f32 0.0, %v8348
      %v8350 = vpop.f32.mrf.mxu0
      %v8351 = vadd.f32 0.0, %v8350
      %8352 = vmatmul.bf16.gmra.mxu0 %v7096
      %v8353 = vpop.f32.mrf.mxu0
      %v8354 = vadd.f32 0.0, %v8353
      %v8355 = vpop.f32.mrf.mxu0
      %v8356 = vadd.f32 0.0, %v8355
      %8357 = vmatmul.bf16.gmra.mxu0 %v7097
      %v8358 = vpop.f32.mrf.mxu0
      %v8359 = vadd.f32 0.0, %v8358
      %v8360 = vpop.f32.mrf.mxu0
      %v8361 = vadd.f32 0.0, %v8360
      %8362 = vmatmul.bf16.gmra.mxu0 %v7098
      %v8363 = vpop.f32.mrf.mxu0
      %v8364 = vadd.f32 0.0, %v8363
      %v8365 = vpop.f32.mrf.mxu0
      %v8366 = vadd.f32 0.0, %v8365
      %8367 = vmatmul.bf16.gmra.mxu0 %v7099
      %v8368 = vpop.f32.mrf.mxu0
      %v8369 = vadd.f32 0.0, %v8368
      %v8370 = vpop.f32.mrf.mxu0
      %v8371 = vadd.f32 0.0, %v8370
      %8372 = vmatmul.bf16.gmra.mxu0 %v7100
      %v8373 = vpop.f32.mrf.mxu0
      %v8374 = vadd.f32 0.0, %v8373
      %v8375 = vpop.f32.mrf.mxu0
      %v8376 = vadd.f32 0.0, %v8375
      %8377 = vmatmul.bf16.gmra.mxu0 %v7101
      %v8378 = vpop.f32.mrf.mxu0
      %v8379 = vadd.f32 0.0, %v8378
      %v8380 = vpop.f32.mrf.mxu0
      %v8381 = vadd.f32 0.0, %v8380
      %8382 = vmatmul.bf16.gmra.mxu0 %v7102
      %v8383 = vpop.f32.mrf.mxu0
      %v8384 = vadd.f32 0.0, %v8383
      %v8385 = vpop.f32.mrf.mxu0
      %v8386 = vadd.f32 0.0, %v8385
      %8387 = vmatmul.bf16.gmra.mxu0 %v7655
      %v8388 = vpop.f32.mrf.mxu0
      %v8389 = vadd.f32 0.0, %v8388
      %v8390 = vpop.f32.mrf.mxu0
      %v8391 = vadd.f32 0.0, %v8390
      %8392 = vmatmul.bf16.gmra.mxu0 %v8259
      %v8393 = vpop.f32.mrf.mxu0
      %v8394 = vadd.f32 0.0, %v8393
      %v8395 = vpop.f32.mrf.mxu0
      %v8396 = vadd.f32 0.0, %v8395
      %8397 = vdwg.mxu0
      %v8398 = vadd.f32 %v8206, %v8319
      %v8399 = vadd.f32 %v8207, %v8321
      %v8400 = vadd.f32 %v8208, %v8324
      %v8401 = vadd.f32 %v8209, %v8326
      %v8402 = vadd.f32 %v8210, %v8329
      %v8403 = vadd.f32 %v8211, %v8331
      %v8404 = vadd.f32 %v8212, %v8334
      %v8405 = vadd.f32 %v8213, %v8336
      %v8406 = vadd.f32 %v8214, %v8339
      %v8407 = vadd.f32 %v8215, %v8341
      %v8408 = vadd.f32 %v8216, %v8344
      %v8409 = vadd.f32 %v8217, %v8346
      %v8410 = vadd.f32 %v8218, %v8349
      %v8411 = vadd.f32 %v8219, %v8351
      %v8412 = vadd.f32 %v8220, %v8354
      %v8413 = vadd.f32 %v8221, %v8356
      %v8414 = vadd.f32 %v8222, %v8359
      %v8415 = vadd.f32 %v8223, %v8361
      %v8416 = vadd.f32 %v8224, %v8364
      %v8417 = vadd.f32 %v8225, %v8366
      %v8418 = vadd.f32 %v8226, %v8369
      %v8419 = vadd.f32 %v8227, %v8371
      %v8420 = vadd.f32 %v8228, %v8374
      %v8421 = vadd.f32 %v8229, %v8376
      %v8422 = vadd.f32 %v8230, %v8379
      %v8423 = vadd.f32 %v8231, %v8381
      %v8424 = vadd.f32 %v8232, %v8384
      %v8425 = vadd.f32 %v8233, %v8386
      %v8426 = vadd.f32 %v8234, %v8389
      %v8427 = vadd.f32 %v8235, %v8391
      %v8428 = vadd.f32 %v8236, %v8394
      %v8429 = vadd.f32 %v8237, %v8396
      %v8431 = vshrl.u32 %v6402, 16
      %v8433 = vrot.slane %v8431, 4
      %v8434 = vshll.u32 %v6402, 16
      %v8436 = vrot.slane %v8434, 5
      %v8437 = vor.u32 %v8433, %v8436
      %v8438 = vrot.slane %v8437, 4
      %v8440 = vshll.u32 %v6403, 16
      %v8442 = vrot.slane %v8440, 5
      %v8443 = vsel %vm433, %v8438, %v8442
      %v8444 = vshrl.u32 %v6403, 16
      %v8446 = vrot.slane %v8444, 4
      %v8447 = vor.u32 %v8446, %v8442
      %v8448 = vrot.slane %v8447, 4
      %v8450 = vshll.u32 %v6404, 16
      %v8452 = vrot.slane %v8450, 5
      %v8453 = vsel %vm433, %v8448, %v8452
      %s8454 = scalar_lea.vmem %s3, 448
      %v8455 = vld [vmem:[%s8454] sm:$0xf]
      %v8456 = vld [vmem:[%s8454 + $0x4] sm:$0xf]
      %v8457 = vld [vmem:[%s8454 + $0x8] sm:$0xf]
      %v8458 = vld [vmem:[%s8454 + $0xc] sm:$0xf]
      %v8459 = vld [vmem:[%s8454 + $0x10] sm:$0xf]
      %v8460 = vld [vmem:[%s8454 + $0x14] sm:$0xf]
      %v8461 = vld [vmem:[%s8454 + $0x18] sm:$0xf]
      %v8462 = vld [vmem:[%s8454 + $0x1c] sm:$0xf]
      %v8463 = vld [vmem:[%s8454 + $0x20] sm:$0xf]
      %v8464 = vld [vmem:[%s8454 + $0x24] sm:$0xf]
      %v8465 = vld [vmem:[%s8454 + $0x28] sm:$0xf]
      %v8466 = vld [vmem:[%s8454 + $0x2c] sm:$0xf]
      %v8467 = vld [vmem:[%s8454 + $0x30] sm:$0xf]
      %v8468 = vld [vmem:[%s8454 + $0x34] sm:$0xf]
      %v8469 = vld [vmem:[%s8454 + $0x38] sm:$0xf]
      %v8470 = vld [vmem:[%s8454 + $0x3c] sm:$0xf]
      %v8471 = vunpack.c.l.b16 %v8443
      %v8472 = vunpack.c.l.b16 %v8453
      %v8473 = vpack.c.b16 %v8472, %v8471
      %v8491 = vunpack.c.l.b16 %v8455
      %v8492 = vunpack.c.l.b16 %v8456
      %v8493 = vunpack.c.l.b16 %v8457
      %v8494 = vunpack.c.l.b16 %v8458
      %v8495 = vunpack.c.l.b16 %v8459
      %v8496 = vunpack.c.l.b16 %v8460
      %v8497 = vunpack.c.l.b16 %v8461
      %v8498 = vunpack.c.l.b16 %v8462
      %v8499 = vunpack.c.l.b16 %v8463
      %v8500 = vunpack.c.l.b16 %v8464
      %v8501 = vunpack.c.l.b16 %v8465
      %v8502 = vunpack.c.l.b16 %v8466
      %v8503 = vunpack.c.l.b16 %v8467
      %v8504 = vunpack.c.l.b16 %v8468
      %v8505 = vunpack.c.l.b16 %v8469
      %v8506 = vunpack.c.l.b16 %v8470
      %v8507 = vpack.c.b16 %v8492, %v8491
      %v8508 = vpack.c.b16 %v8494, %v8493
      %v8509 = vpack.c.b16 %v8496, %v8495
      %v8510 = vpack.c.b16 %v8498, %v8497
      %v8511 = vpack.c.b16 %v8500, %v8499
      %v8512 = vpack.c.b16 %v8502, %v8501
      %v8513 = vpack.c.b16 %v8504, %v8503
      %v8514 = vpack.c.b16 %v8506, %v8505
      %8523 = vmatpush.bf16.msra.mxu0 %v8514
      %8524 = vmatpush.bf16.msra.mxu0 %v8513
      %8525 = vmatpush.bf16.msra.mxu0 %v8512
      %8526 = vmatpush.bf16.msra.mxu0 %v8511
      %8527 = vmatpush.bf16.msra.mxu0 %v8510
      %8528 = vmatpush.bf16.msra.mxu0 %v8509
      %8529 = vmatpush.bf16.msra.mxu0 %v8508
      %8530 = vmatpush.bf16.msra.mxu0 %v8507
      %8531 = vmatmul.bf16.gmra.mxu0 %v6856
      %v8532 = vpop.f32.mrf.mxu0
      %v8533 = vadd.f32 0.0, %v8532
      %v8534 = vpop.f32.mrf.mxu0
      %v8535 = vadd.f32 0.0, %v8534
      %8536 = vmatmul.bf16.gmra.mxu0 %v6857
      %v8537 = vpop.f32.mrf.mxu0
      %v8538 = vadd.f32 0.0, %v8537
      %v8539 = vpop.f32.mrf.mxu0
      %v8540 = vadd.f32 0.0, %v8539
      %8541 = vmatmul.bf16.gmra.mxu0 %v6858
      %v8542 = vpop.f32.mrf.mxu0
      %v8543 = vadd.f32 0.0, %v8542
      %v8544 = vpop.f32.mrf.mxu0
      %v8545 = vadd.f32 0.0, %v8544
      %8546 = vmatmul.bf16.gmra.mxu0 %v6859
      %v8547 = vpop.f32.mrf.mxu0
      %v8548 = vadd.f32 0.0, %v8547
      %v8549 = vpop.f32.mrf.mxu0
      %v8550 = vadd.f32 0.0, %v8549
      %8551 = vmatmul.bf16.gmra.mxu0 %v6860
      %v8552 = vpop.f32.mrf.mxu0
      %v8553 = vadd.f32 0.0, %v8552
      %v8554 = vpop.f32.mrf.mxu0
      %v8555 = vadd.f32 0.0, %v8554
      %8556 = vmatmul.bf16.gmra.mxu0 %v6861
      %v8557 = vpop.f32.mrf.mxu0
      %v8558 = vadd.f32 0.0, %v8557
      %v8559 = vpop.f32.mrf.mxu0
      %v8560 = vadd.f32 0.0, %v8559
      %8561 = vmatmul.bf16.gmra.mxu0 %v6862
      %v8562 = vpop.f32.mrf.mxu0
      %v8563 = vadd.f32 0.0, %v8562
      %v8564 = vpop.f32.mrf.mxu0
      %v8565 = vadd.f32 0.0, %v8564
      %8566 = vmatmul.bf16.gmra.mxu0 %v6863
      %v8567 = vpop.f32.mrf.mxu0
      %v8568 = vadd.f32 0.0, %v8567
      %v8569 = vpop.f32.mrf.mxu0
      %v8570 = vadd.f32 0.0, %v8569
      %8571 = vmatmul.bf16.gmra.mxu0 %v6864
      %v8572 = vpop.f32.mrf.mxu0
      %v8573 = vadd.f32 0.0, %v8572
      %v8574 = vpop.f32.mrf.mxu0
      %v8575 = vadd.f32 0.0, %v8574
      %8576 = vmatmul.bf16.gmra.mxu0 %v6865
      %v8577 = vpop.f32.mrf.mxu0
      %v8578 = vadd.f32 0.0, %v8577
      %v8579 = vpop.f32.mrf.mxu0
      %v8580 = vadd.f32 0.0, %v8579
      %8581 = vmatmul.bf16.gmra.mxu0 %v6866
      %v8582 = vpop.f32.mrf.mxu0
      %v8583 = vadd.f32 0.0, %v8582
      %v8584 = vpop.f32.mrf.mxu0
      %v8585 = vadd.f32 0.0, %v8584
      %8586 = vmatmul.bf16.gmra.mxu0 %v6867
      %v8587 = vpop.f32.mrf.mxu0
      %v8588 = vadd.f32 0.0, %v8587
      %v8589 = vpop.f32.mrf.mxu0
      %v8590 = vadd.f32 0.0, %v8589
      %8591 = vmatmul.bf16.gmra.mxu0 %v6868
      %v8592 = vpop.f32.mrf.mxu0
      %v8593 = vadd.f32 0.0, %v8592
      %v8594 = vpop.f32.mrf.mxu0
      %v8595 = vadd.f32 0.0, %v8594
      %8596 = vmatmul.bf16.gmra.mxu0 %v6869
      %v8597 = vpop.f32.mrf.mxu0
      %v8598 = vadd.f32 0.0, %v8597
      %v8599 = vpop.f32.mrf.mxu0
      %v8600 = vadd.f32 0.0, %v8599
      %8601 = vmatmul.bf16.gmra.mxu0 %v7869
      %v8602 = vpop.f32.mrf.mxu0
      %v8603 = vadd.f32 0.0, %v8602
      %v8604 = vpop.f32.mrf.mxu0
      %v8605 = vadd.f32 0.0, %v8604
      %8606 = vmatmul.bf16.gmra.mxu0 %v8473
      %v8607 = vpop.f32.mrf.mxu0
      %v8608 = vadd.f32 0.0, %v8607
      %v8609 = vpop.f32.mrf.mxu0
      %v8610 = vadd.f32 0.0, %v8609
      %8611 = vdwg.mxu0
      %v8612 = vadd.f32 %v8398, %v8533
      %v8613 = vadd.f32 %v8399, %v8535
      %v8614 = vadd.f32 %v8400, %v8538
      %v8615 = vadd.f32 %v8401, %v8540
      %v8616 = vadd.f32 %v8402, %v8543
      %v8617 = vadd.f32 %v8403, %v8545
      %v8618 = vadd.f32 %v8404, %v8548
      %v8619 = vadd.f32 %v8405, %v8550
      %v8620 = vadd.f32 %v8406, %v8553
      %v8621 = vadd.f32 %v8407, %v8555
      %v8622 = vadd.f32 %v8408, %v8558
      %v8623 = vadd.f32 %v8409, %v8560
      %v8624 = vadd.f32 %v8410, %v8563
      %v8625 = vadd.f32 %v8411, %v8565
      %v8626 = vadd.f32 %v8412, %v8568
      %v8627 = vadd.f32 %v8413, %v8570
      %v8628 = vadd.f32 %v8414, %v8573
      %v8629 = vadd.f32 %v8415, %v8575
      %v8630 = vadd.f32 %v8416, %v8578
      %v8631 = vadd.f32 %v8417, %v8580
      %v8632 = vadd.f32 %v8418, %v8583
      %v8633 = vadd.f32 %v8419, %v8585
      %v8634 = vadd.f32 %v8420, %v8588
      %v8635 = vadd.f32 %v8421, %v8590
      %v8636 = vadd.f32 %v8422, %v8593
      %v8637 = vadd.f32 %v8423, %v8595
      %v8638 = vadd.f32 %v8424, %v8598
      %v8639 = vadd.f32 %v8425, %v8600
      %v8640 = vadd.f32 %v8426, %v8603
      %v8641 = vadd.f32 %v8427, %v8605
      %v8642 = vadd.f32 %v8428, %v8608
      %v8643 = vadd.f32 %v8429, %v8610
      %v8645 = vrot.slane %v6402, 5
      %v8646 = vrot.slane %v8645, 4
      %v8647 = vrot.slane %v6403, 5
      %v8648 = vsel %vm1287, %v8646, %v8647
      %v8649 = vrot.slane %v8647, 4
      %v8650 = vrot.slane %v6404, 5
      %v8651 = vsel %vm1287, %v8649, %v8650
      %s8652 = scalar_lea.vmem %s3, 512
      %v8653 = vld [vmem:[%s8652] sm:$0xf]
      %v8654 = vld [vmem:[%s8652 + $0x4] sm:$0xf]
      %v8655 = vld [vmem:[%s8652 + $0x8] sm:$0xf]
      %v8656 = vld [vmem:[%s8652 + $0xc] sm:$0xf]
      %v8657 = vld [vmem:[%s8652 + $0x10] sm:$0xf]
      %v8658 = vld [vmem:[%s8652 + $0x14] sm:$0xf]
      %v8659 = vld [vmem:[%s8652 + $0x18] sm:$0xf]
      %v8660 = vld [vmem:[%s8652 + $0x1c] sm:$0xf]
      %v8661 = vld [vmem:[%s8652 + $0x20] sm:$0xf]
      %v8662 = vld [vmem:[%s8652 + $0x24] sm:$0xf]
      %v8663 = vld [vmem:[%s8652 + $0x28] sm:$0xf]
      %v8664 = vld [vmem:[%s8652 + $0x2c] sm:$0xf]
      %v8665 = vld [vmem:[%s8652 + $0x30] sm:$0xf]
      %v8666 = vld [vmem:[%s8652 + $0x34] sm:$0xf]
      %v8667 = vld [vmem:[%s8652 + $0x38] sm:$0xf]
      %v8668 = vld [vmem:[%s8652 + $0x3c] sm:$0xf]
      %v8669 = vunpack.c.l.b16 %v8648
      %v8670 = vunpack.c.l.b16 %v8651
      %v8671 = vpack.c.b16 %v8670, %v8669
      %v8689 = vunpack.c.l.b16 %v8653
      %v8690 = vunpack.c.l.b16 %v8654
      %v8691 = vunpack.c.l.b16 %v8655
      %v8692 = vunpack.c.l.b16 %v8656
      %v8693 = vunpack.c.l.b16 %v8657
      %v8694 = vunpack.c.l.b16 %v8658
      %v8695 = vunpack.c.l.b16 %v8659
      %v8696 = vunpack.c.l.b16 %v8660
      %v8697 = vunpack.c.l.b16 %v8661
      %v8698 = vunpack.c.l.b16 %v8662
      %v8699 = vunpack.c.l.b16 %v8663
      %v8700 = vunpack.c.l.b16 %v8664
      %v8701 = vunpack.c.l.b16 %v8665
      %v8702 = vunpack.c.l.b16 %v8666
      %v8703 = vunpack.c.l.b16 %v8667
      %v8704 = vunpack.c.l.b16 %v8668
      %v8705 = vpack.c.b16 %v8690, %v8689
      %v8706 = vpack.c.b16 %v8692, %v8691
      %v8707 = vpack.c.b16 %v8694, %v8693
      %v8708 = vpack.c.b16 %v8696, %v8695
      %v8709 = vpack.c.b16 %v8698, %v8697
      %v8710 = vpack.c.b16 %v8700, %v8699
      %v8711 = vpack.c.b16 %v8702, %v8701
      %v8712 = vpack.c.b16 %v8704, %v8703
      %8721 = vmatpush.bf16.msra.mxu0 %v8712
      %8722 = vmatpush.bf16.msra.mxu0 %v8711
      %8723 = vmatpush.bf16.msra.mxu0 %v8710
      %8724 = vmatpush.bf16.msra.mxu0 %v8709
      %8725 = vmatpush.bf16.msra.mxu0 %v8708
      %8726 = vmatpush.bf16.msra.mxu0 %v8707
      %8727 = vmatpush.bf16.msra.mxu0 %v8706
      %8728 = vmatpush.bf16.msra.mxu0 %v8705
      %8729 = vmatmul.bf16.gmra.mxu0 %v7435
      %v8730 = vpop.f32.mrf.mxu0
      %v8731 = vadd.f32 0.0, %v8730
      %v8732 = vpop.f32.mrf.mxu0
      %v8733 = vadd.f32 0.0, %v8732
      %8734 = vmatmul.bf16.gmra.mxu0 %v7436
      %v8735 = vpop.f32.mrf.mxu0
      %v8736 = vadd.f32 0.0, %v8735
      %v8737 = vpop.f32.mrf.mxu0
      %v8738 = vadd.f32 0.0, %v8737
      %8739 = vmatmul.bf16.gmra.mxu0 %v7437
      %v8740 = vpop.f32.mrf.mxu0
      %v8741 = vadd.f32 0.0, %v8740
      %v8742 = vpop.f32.mrf.mxu0
      %v8743 = vadd.f32 0.0, %v8742
      %8744 = vmatmul.bf16.gmra.mxu0 %v7438
      %v8745 = vpop.f32.mrf.mxu0
      %v8746 = vadd.f32 0.0, %v8745
      %v8747 = vpop.f32.mrf.mxu0
      %v8748 = vadd.f32 0.0, %v8747
      %8749 = vmatmul.bf16.gmra.mxu0 %v7439
      %v8750 = vpop.f32.mrf.mxu0
      %v8751 = vadd.f32 0.0, %v8750
      %v8752 = vpop.f32.mrf.mxu0
      %v8753 = vadd.f32 0.0, %v8752
      %8754 = vmatmul.bf16.gmra.mxu0 %v7440
      %v8755 = vpop.f32.mrf.mxu0
      %v8756 = vadd.f32 0.0, %v8755
      %v8757 = vpop.f32.mrf.mxu0
      %v8758 = vadd.f32 0.0, %v8757
      %8759 = vmatmul.bf16.gmra.mxu0 %v7441
      %v8760 = vpop.f32.mrf.mxu0
      %v8761 = vadd.f32 0.0, %v8760
      %v8762 = vpop.f32.mrf.mxu0
      %v8763 = vadd.f32 0.0, %v8762
      %8764 = vmatmul.bf16.gmra.mxu0 %v7442
      %v8765 = vpop.f32.mrf.mxu0
      %v8766 = vadd.f32 0.0, %v8765
      %v8767 = vpop.f32.mrf.mxu0
      %v8768 = vadd.f32 0.0, %v8767
      %8769 = vmatmul.bf16.gmra.mxu0 %v7443
      %v8770 = vpop.f32.mrf.mxu0
      %v8771 = vadd.f32 0.0, %v8770
      %v8772 = vpop.f32.mrf.mxu0
      %v8773 = vadd.f32 0.0, %v8772
      %8774 = vmatmul.bf16.gmra.mxu0 %v7444
      %v8775 = vpop.f32.mrf.mxu0
      %v8776 = vadd.f32 0.0, %v8775
      %v8777 = vpop.f32.mrf.mxu0
      %v8778 = vadd.f32 0.0, %v8777
      %8779 = vmatmul.bf16.gmra.mxu0 %v7445
      %v8780 = vpop.f32.mrf.mxu0
      %v8781 = vadd.f32 0.0, %v8780
      %v8782 = vpop.f32.mrf.mxu0
      %v8783 = vadd.f32 0.0, %v8782
      %8784 = vmatmul.bf16.gmra.mxu0 %v7446
      %v8785 = vpop.f32.mrf.mxu0
      %v8786 = vadd.f32 0.0, %v8785
      %v8787 = vpop.f32.mrf.mxu0
      %v8788 = vadd.f32 0.0, %v8787
      %8789 = vmatmul.bf16.gmra.mxu0 %v7447
      %v8790 = vpop.f32.mrf.mxu0
      %v8791 = vadd.f32 0.0, %v8790
      %v8792 = vpop.f32.mrf.mxu0
      %v8793 = vadd.f32 0.0, %v8792
      %8794 = vmatmul.bf16.gmra.mxu0 %v7448
      %v8795 = vpop.f32.mrf.mxu0
      %v8796 = vadd.f32 0.0, %v8795
      %v8797 = vpop.f32.mrf.mxu0
      %v8798 = vadd.f32 0.0, %v8797
      %8799 = vmatmul.bf16.gmra.mxu0 %v8067
      %v8800 = vpop.f32.mrf.mxu0
      %v8801 = vadd.f32 0.0, %v8800
      %v8802 = vpop.f32.mrf.mxu0
      %v8803 = vadd.f32 0.0, %v8802
      %8804 = vmatmul.bf16.gmra.mxu0 %v8671
      %v8805 = vpop.f32.mrf.mxu0
      %v8806 = vadd.f32 0.0, %v8805
      %v8807 = vpop.f32.mrf.mxu0
      %v8808 = vadd.f32 0.0, %v8807
      %8809 = vdwg.mxu0
      %v8810 = vadd.f32 %v8612, %v8731
      %v8811 = vadd.f32 %v8613, %v8733
      %v8812 = vadd.f32 %v8614, %v8736
      %v8813 = vadd.f32 %v8615, %v8738
      %v8814 = vadd.f32 %v8616, %v8741
      %v8815 = vadd.f32 %v8617, %v8743
      %v8816 = vadd.f32 %v8618, %v8746
      %v8817 = vadd.f32 %v8619, %v8748
      %v8818 = vadd.f32 %v8620, %v8751
      %v8819 = vadd.f32 %v8621, %v8753
      %v8820 = vadd.f32 %v8622, %v8756
      %v8821 = vadd.f32 %v8623, %v8758
      %v8822 = vadd.f32 %v8624, %v8761
      %v8823 = vadd.f32 %v8625, %v8763
      %v8824 = vadd.f32 %v8626, %v8766
      %v8825 = vadd.f32 %v8627, %v8768
      %v8826 = vadd.f32 %v8628, %v8771
      %v8827 = vadd.f32 %v8629, %v8773
      %v8828 = vadd.f32 %v8630, %v8776
      %v8829 = vadd.f32 %v8631, %v8778
      %v8830 = vadd.f32 %v8632, %v8781
      %v8831 = vadd.f32 %v8633, %v8783
      %v8832 = vadd.f32 %v8634, %v8786
      %v8833 = vadd.f32 %v8635, %v8788
      %v8834 = vadd.f32 %v8636, %v8791
      %v8835 = vadd.f32 %v8637, %v8793
      %v8836 = vadd.f32 %v8638, %v8796
      %v8837 = vadd.f32 %v8639, %v8798
      %v8838 = vadd.f32 %v8640, %v8801
      %v8839 = vadd.f32 %v8641, %v8803
      %v8840 = vadd.f32 %v8642, %v8806
      %v8841 = vadd.f32 %v8643, %v8808
      %v8842 = vmax.f32 %v8810, 0.0
      %v8843 = vmax.f32 %v8811, 0.0
      %v8844 = vmax.f32 %v8812, 0.0
      %v8845 = vmax.f32 %v8813, 0.0
      %v8846 = vmax.f32 %v8814, 0.0
      %v8847 = vmax.f32 %v8815, 0.0
      %v8848 = vmax.f32 %v8816, 0.0
      %v8849 = vmax.f32 %v8817, 0.0
      %v8850 = vmax.f32 %v8818, 0.0
      %v8851 = vmax.f32 %v8819, 0.0
      %v8852 = vmax.f32 %v8820, 0.0
      %v8853 = vmax.f32 %v8821, 0.0
      %v8854 = vmax.f32 %v8822, 0.0
      %v8855 = vmax.f32 %v8823, 0.0
      %v8856 = vmax.f32 %v8824, 0.0
      %v8857 = vmax.f32 %v8825, 0.0
      %v8858 = vmax.f32 %v8826, 0.0
      %v8859 = vmax.f32 %v8827, 0.0
      %v8860 = vmax.f32 %v8828, 0.0
      %v8861 = vmax.f32 %v8829, 0.0
      %v8862 = vmax.f32 %v8830, 0.0
      %v8863 = vmax.f32 %v8831, 0.0
      %v8864 = vmax.f32 %v8832, 0.0
      %v8865 = vmax.f32 %v8833, 0.0
      %v8866 = vmax.f32 %v8834, 0.0
      %v8867 = vmax.f32 %v8835, 0.0
      %v8868 = vmax.f32 %v8836, 0.0
      %v8869 = vmax.f32 %v8837, 0.0
      %v8870 = vmax.f32 %v8838, 0.0
      %v8871 = vmax.f32 %v8839, 0.0
      %v8872 = vmax.f32 %v8840, 0.0
      %v8873 = vmax.f32 %v8841, 0.0
      %s8874 = scalar_lea.vmem %s192, 24
      %v8875 = vld [vmem:[%s8874 + $0x1] sm:$0xff]
      %v8876 = vld [vmem:[%s8874 + $0x9] sm:$0xff]
      %v8877 = vld [vmem:[%s8874 + $0x19] sm:$0xff]
      %v8878 = vld [vmem:[%s8874 + $0x21] sm:$0xff]
      %v8879 = vld [vmem:[%s8874 + $0x31] sm:$0xff]
      %v8880 = vld [vmem:[%s8874 + $0x39] sm:$0xff]
      %v8881 = vld [vmem:[%s8874 + $0x49] sm:$0xff]
      %v8882 = vld [vmem:[%s8874 + $0x51] sm:$0xff]
      %v8883 = vld [vmem:[%s8874 + $0x61] sm:$0xff]
      %v8884 = vld [vmem:[%s8874 + $0x69] sm:$0xff]
      %v8885 = vld [vmem:[%s8874 + $0x79] sm:$0xff]
      %v8886 = vld [vmem:[%s8874 + $0x81] sm:$0xff]
      %v8887 = vld [vmem:[%s8874 + $0x91] sm:$0xff]
      %v8888 = vld [vmem:[%s8874 + $0x99] sm:$0xff]
      %v8889 = vld [vmem:[%s8874 + $0xa9] sm:$0xff]
      %v8890 = vld [vmem:[%s8874 + $0xb1] sm:$0xff]
      %v8891 = vld [vmem:[%s8874 + $0xc1] sm:$0xff]
      %v8892 = vld [vmem:[%s8874 + $0xc9] sm:$0xff]
      %v8893 = vld [vmem:[%s8874 + $0xd9] sm:$0xff]
      %v8894 = vld [vmem:[%s8874 + $0xe1] sm:$0xff]
      %v8895 = vld [vmem:[%s8874 + $0xf1] sm:$0xff]
      %v8896 = vld [vmem:[%s8874 + $0xf9] sm:$0xff]
      %v8897 = vld [vmem:[%s8874 + $0x109] sm:$0xff]
      %v8898 = vld [vmem:[%s8874 + $0x111] sm:$0xff]
      %v8899 = vld [vmem:[%s8874 + $0x121] sm:$0xff]
      %v8900 = vld [vmem:[%s8874 + $0x129] sm:$0xff]
      %v8901 = vld [vmem:[%s8874 + $0x139] sm:$0xff]
      %v8902 = vld [vmem:[%s8874 + $0x141] sm:$0xff]
      %v8903 = vld [vmem:[%s8874 + $0x151] sm:$0xff]
      %v8904 = vld [vmem:[%s8874 + $0x159] sm:$0xff]
      %v8905 = vld [vmem:[%s8874 + $0x169] sm:$0xff]
      %v8906 = vld [vmem:[%s8874 + $0x171] sm:$0xff]
      %v8907 = vadd.f32 %v8842, %v8875
      %v8908 = vadd.f32 %v8843, %v8876
      %v8909 = vadd.f32 %v8844, %v8877
      %v8910 = vadd.f32 %v8845, %v8878
      %v8911 = vadd.f32 %v8846, %v8879
      %v8912 = vadd.f32 %v8847, %v8880
      %v8913 = vadd.f32 %v8848, %v8881
      %v8914 = vadd.f32 %v8849, %v8882
      %v8915 = vadd.f32 %v8850, %v8883
      %v8916 = vadd.f32 %v8851, %v8884
      %v8917 = vadd.f32 %v8852, %v8885
      %v8918 = vadd.f32 %v8853, %v8886
      %v8919 = vadd.f32 %v8854, %v8887
      %v8920 = vadd.f32 %v8855, %v8888
      %v8921 = vadd.f32 %v8856, %v8889
      %v8922 = vadd.f32 %v8857, %v8890
      %v8923 = vadd.f32 %v8858, %v8891
      %v8924 = vadd.f32 %v8859, %v8892
      %v8925 = vadd.f32 %v8860, %v8893
      %v8926 = vadd.f32 %v8861, %v8894
      %v8927 = vadd.f32 %v8862, %v8895
      %v8928 = vadd.f32 %v8863, %v8896
      %v8929 = vadd.f32 %v8864, %v8897
      %v8930 = vadd.f32 %v8865, %v8898
      %v8931 = vadd.f32 %v8866, %v8899
      %v8932 = vadd.f32 %v8867, %v8900
      %v8933 = vadd.f32 %v8868, %v8901
      %v8934 = vadd.f32 %v8869, %v8902
      %v8935 = vadd.f32 %v8870, %v8903
      %v8936 = vadd.f32 %v8871, %v8904
      %v8937 = vadd.f32 %v8872, %v8905
      %v8938 = vadd.f32 %v8873, %v8906
      %8939 = vst [vmem:[%s197] sm:$0xff] %v8907
      %8940 = vst [vmem:[%s197 + $0x8] sm:$0xff] %v8908
      %8941 = vst [vmem:[%s197 + $0x10] sm:$0xff] %v8909
      %8942 = vst [vmem:[%s197 + $0x18] sm:$0xff] %v8910
      %8943 = vst [vmem:[%s197 + $0x20] sm:$0xff] %v8911
      %8944 = vst [vmem:[%s197 + $0x28] sm:$0xff] %v8912
      %8945 = vst [vmem:[%s197 + $0x30] sm:$0xff] %v8913
      %8946 = vst [vmem:[%s197 + $0x38] sm:$0xff] %v8914
      %8947 = vst [vmem:[%s197 + $0x40] sm:$0xff] %v8915
      %8948 = vst [vmem:[%s197 + $0x48] sm:$0xff] %v8916
      %8949 = vst [vmem:[%s197 + $0x50] sm:$0xff] %v8917
      %8950 = vst [vmem:[%s197 + $0x58] sm:$0xff] %v8918
      %8951 = vst [vmem:[%s197 + $0x60] sm:$0xff] %v8919
      %8952 = vst [vmem:[%s197 + $0x68] sm:$0xff] %v8920
      %8953 = vst [vmem:[%s197 + $0x70] sm:$0xff] %v8921
      %8954 = vst [vmem:[%s197 + $0x78] sm:$0xff] %v8922
      %8955 = vst [vmem:[%s197 + $0x80] sm:$0xff] %v8923
      %8956 = vst [vmem:[%s197 + $0x88] sm:$0xff] %v8924
      %8957 = vst [vmem:[%s197 + $0x90] sm:$0xff] %v8925
      %8958 = vst [vmem:[%s197 + $0x98] sm:$0xff] %v8926
      %8959 = vst [vmem:[%s197 + $0xa0] sm:$0xff] %v8927
      %8960 = vst [vmem:[%s197 + $0xa8] sm:$0xff] %v8928
      %8961 = vst [vmem:[%s197 + $0xb0] sm:$0xff] %v8929
      %8962 = vst [vmem:[%s197 + $0xb8] sm:$0xff] %v8930
      %8963 = vst [vmem:[%s197 + $0xc0] sm:$0xff] %v8931
      %8964 = vst [vmem:[%s197 + $0xc8] sm:$0xff] %v8932
      %8965 = vst [vmem:[%s197 + $0xd0] sm:$0xff] %v8933
      %8966 = vst [vmem:[%s197 + $0xd8] sm:$0xff] %v8934
      %8967 = vst [vmem:[%s197 + $0xe0] sm:$0xff] %v8935
      %8968 = vst [vmem:[%s197 + $0xe8] sm:$0xff] %v8936
      %8969 = vst [vmem:[%s197 + $0xf0] sm:$0xff] %v8937
      %8970 = vst [vmem:[%s197 + $0xf8] sm:$0xff] %v8938
      %p8971 = scmp.lt.s32.totalorder %s15, 1
      %s8972 = scalar_select %p8971, %s15, 1
      %s8973 = smul.addr %s8972, 32
      %s8974 = smul.addr %s8973, 8
      %s8975 = scalar_lea.vmem %s4, %s8974
      // Predicated region
      $region37: #{_lambda_.1} parent=35 // pred_check
        %p8976 = pneg %p122
      $region38: #{_lambda_.1} parent=35 // pred_check_branch
        %8978 = sbr.rel (%p8976) target = $region40
      $region39: #{_lambda_.1} parent=35 // pred_region
        _
      $region40: #{_lambda_.1} parent=35 // pred_fallthru
        _
    $region36: #{_lambda_.1} parent=5 // pred_fallthru
      _
    %p8979 = scmp.le.s32.totalorder 2, %s10
    // Predicated region
    $region41: #{_lambda_.1} parent=5 // pred_check
      %p8980 = pneg %p8979
    $region42: #{_lambda_.1} parent=5 // pred_check_branch
      %8982 = sbr.rel (%p8980) target = $region44
    $region43: #{_lambda_.1} parent=5 // pred_region
      %s8983 = ssub.s32 %s10, 2
      // Predicated region
      $region45: #{_lambda_.1} parent=43 // pred_check
        %p8984 = pneg %p128
      $region46: #{_lambda_.1} parent=43 // pred_check_branch
        %8986 = sbr.rel (%p8984) target = $region48
      $region47: #{_lambda_.1} parent=43 // pred_region
        %p8987 = scmp.lt.s32.totalorder %s16, 1
        %s8988 = scalar_select %p8987, %s16, 1
        %s8989 = smul.addr %s8988, 32
        %s8990 = smul.addr %s8989, 8
        %s8991 = scalar_lea.vmem %s4, %s8990
      $region48: #{_lambda_.1} parent=43 // pred_fallthru
        _
    $region44: #{_lambda_.1} parent=5 // pred_fallthru
      _
  $region6: #{_lambda_.1} parent=0 // loop_footer
    %s14 = sadd.s32 1, %s10
  $region7: #{_lambda_.1} parent=0 // loop_footer_branch
    %9 = sbr.rel target = $region3
  $region8: #{_lambda_.1} parent=0 // loop_exit
    _

</llo_original>
